<compile_context>
chip_gen: v5e
topology: v5e:2x2
jax: 0.10.0
libtpu: 0.0.40
codegen_flags: <defaults>
</compile_context>

<pallas_src>
import functools

import jax
import jax.numpy as jnp
from jax import lax
from jax.experimental import pallas as pl
from jax.experimental.pallas import tpu as pltpu

# ----------------------- synthetic CoreConfig ------------------------------
B = 2            # batch width
T_PROMPT = 8     # prompt sequence length
V = 64           # vocabulary size
D_MODEL = 64     # vocabulary.d_model
NUM_LAYERS = 2   # config.num_layers
D_CORE = 16      # config.d_core
D_ADDR = 8       # config.d_address
D_MEM = 16       # config.d_memory
D_HIDDEN = 64    # config.d_hidden
N_READ = 2       # config.num_read_heads
N_WRITE = 2      # config.num_write_heads
N_MEMORIES = 8   # config.num_memories
WRITE_FACTOR = 0.999   # config.numeric_write_factor
MAX_GEN = 6      # max_gen_tokens (small for the demo)
BOS_ID = 1       # tokenizer.bos_token id (synthetic)
BOR_ID = 2       # AdditionalSpecialTokens.beginning_of_response_token id (synthetic)
EOS_ID = 3       # tokenizer.eos_token_id (synthetic)

N_HEADS = N_READ + N_WRITE
N_SCORE = N_HEADS * N_MEMORIES              # 32: all read+write attention scores
D_ALL = D_CORE + N_SCORE + D_MEM            # 64: fused first-projection width


# ----------------------- deterministic parameter init ----------------------
def init_params(key):
    ks = jax.random.split(key, 12)

    def rnd(k, shape, scale):
        return scale * jax.random.normal(k, shape, dtype=jnp.float32)

    p = {}
    p["emb"] = rnd(ks[0], (V, D_MODEL), 0.02)                     # vocabulary.embeddings
    p["w_logit"] = rnd(ks[1], (D_MODEL, V), 0.02)                 # vocabulary.logit_projector
    p["b_logit"] = jnp.zeros((1, V), jnp.float32)
    p["w_down"] = rnd(ks[2], (NUM_LAYERS, D_MODEL, D_CORE), D_MODEL ** -0.5)
    p["b_down"] = jnp.zeros((NUM_LAYERS, 1, D_CORE), jnp.float32)
    p["w_q"] = rnd(ks[3], (NUM_LAYERS, D_CORE, N_READ * D_ADDR), D_CORE ** -0.5)
    p["mem_keys"] = rnd(ks[4], (NUM_LAYERS, D_ADDR, N_MEMORIES), 0.5)
    p["w_read"] = rnd(ks[5], (NUM_LAYERS, N_READ * D_MEM, D_CORE), (N_READ * D_MEM) ** -0.5)
    p["w_wq"] = rnd(ks[6], (NUM_LAYERS, D_CORE, N_WRITE * D_ADDR), D_CORE ** -0.5)
    p["w_wv"] = rnd(ks[7], (NUM_LAYERS, D_CORE, N_WRITE * D_MEM), D_CORE ** -0.5)
    p["w_h1"] = rnd(ks[8], (NUM_LAYERS, D_CORE, D_HIDDEN), D_CORE ** -0.5)
    p["b_h1"] = jnp.zeros((NUM_LAYERS, 1, D_HIDDEN), jnp.float32)
    p["w_h2"] = rnd(ks[9], (NUM_LAYERS, D_HIDDEN, D_CORE), D_HIDDEN ** -0.5)
    p["b_h2"] = jnp.zeros((NUM_LAYERS, 1, D_CORE), jnp.float32)
    p["w_up"] = rnd(ks[10], (NUM_LAYERS, D_CORE, D_MODEL), D_CORE ** -0.5)
    return p


# ----------------------- host-side kernel-layout preparation ---------------
def prepare_kernel_params(params):
    """Host-side (XLA, f32) weight folding so each decoder step is 5 serial MXU ops:
      1) a0  = x @ w_all            (xc | all read+write scores | write value)
      2) rh  = attn @ mem           (batched read over heads)
      3) rd  = rh_flat @ w_read
      4) zm  = z @ [w_up | w_h1]    (residual up-proj || MLP hidden, in parallel)
      5) x  += h1 @ (w_h2 @ w_up)
    All matmul weights are cast to bf16; biases stay f32 (added post-accumulation)."""
    inv_sqrt = 1.0 / (D_ADDR ** 0.5)
    keys = params["mem_keys"]                                         # [L, DA, M]

    # one block-diagonal key matrix over ALL (read + write) heads
    keys_bd = jnp.zeros((NUM_LAYERS, N_HEADS * D_ADDR, N_HEADS * N_MEMORIES), jnp.float32)
    for h in range(N_HEADS):
        keys_bd = keys_bd.at[:, h * D_ADDR:(h + 1) * D_ADDR,
                             h * N_MEMORIES:(h + 1) * N_MEMORIES].set(keys)

    w_q_cat = jnp.concatenate([params["w_q"], params["w_wq"]], axis=-1)   # [L, Dc, H*DA]
    # fold bottleneck projection + query projection + keys + 1/sqrt(DA) into one matrix
    w_score = jnp.matmul(jnp.matmul(params["w_down"], w_q_cat), keys_bd) * inv_sqrt  # [L, D, H*M]
    b_score = jnp.matmul(jnp.matmul(params["b_down"], w_q_cat), keys_bd) * inv_sqrt  # [L, 1, H*M]

    # head-averaged write value (the synthetic decoder is defined with averaged p, v)
    w_wv_avg = params["w_wv"].reshape(NUM_LAYERS, D_CORE, N_WRITE, D_MEM).mean(axis=2)
    w_vslot = jnp.matmul(params["w_down"], w_wv_avg)                      # [L, D, DM]
    b_vslot = jnp.matmul(params["b_down"], w_wv_avg)                      # [L, 1, DM]

    w_all = jnp.concatenate([params["w_down"], w_score, w_vslot], axis=-1)  # [L, D, D_ALL]
    b_all = jnp.concatenate([params["b_down"], b_score, b_vslot], axis=-1)  # [L, 1, D_ALL]

    w_h2u = jnp.matmul(params["w_h2"], params["w_up"])                    # [L, Dh, D]
    b_h2u = jnp.matmul(params["b_h2"], params["w_up"])                    # [L, 1, D]
    w_uph1 = jnp.concatenate([params["w_up"], params["w_h1"]], axis=-1)   # [L, Dc, D+Dh]
    b_uph1 = jnp.concatenate([b_h2u, params["b_h1"]], axis=-1)            # [L, 1, D+Dh]

    bf = lambda a: a.astype(jnp.bfloat16)
    return {
        "emb": bf(params["emb"]), "w_logit": bf(params["w_logit"]), "b_logit": params["b_logit"],
        "w_all": bf(w_all), "b_all": b_all,
        "w_read": bf(params["w_read"]),
        "w_uph1": bf(w_uph1), "b_uph1": b_uph1,
        "w_h2u": bf(w_h2u),
    }


# ----------------------- one recurrent decoder step (in-kernel) ------------
def _decoder_step(x, mask_f, mem, layer_w):
    """x: [B, D_MODEL] f32; mask_f: [B, 1] f32 (1.0 => padding / seen-EOS: memory frozen);
    mem: list of NUM_LAYERS values [B, N_MEMORIES, D_MEM] f32; layer_w: per-layer weight
    value tuples (hoisted out of the token loops).  Returns (output embedding, new mem)."""
    new_mem = []
    keep = mask_f[:, :, None]                                             # [B, 1, 1]
    for l in range(NUM_LAYERS):
        w_all, b_all, w_read, w_uph1, b_uph1, w_h2u = layer_w[l]
        mem_l = mem[l]                                                    # [B, M, DM] f32

        # ---- fused projection: xc | read+write scores | write value (one MXU op) ----
        a0 = jnp.dot(x.astype(jnp.bfloat16), w_all,
                     preferred_element_type=jnp.float32) + b_all          # [B, D_ALL]
        xc = a0[:, :D_CORE]                                               # [B, Dc]
        s3 = a0[:, D_CORE:D_CORE + N_SCORE].reshape(B, N_HEADS, N_MEMORIES)  # [B, H, M]
        v_slot = a0[:, D_CORE + N_SCORE:]                                 # [B, DM]

        # ---- read heads: per-head softmax over memory slots (lane-local, no MXU) ----
        s_r = s3[:, :N_READ, :]
        s_r = s_r - jnp.max(s_r, axis=-1, keepdims=True)
        e = jnp.exp(s_r)
        attn = e * pl.reciprocal(jnp.sum(e, axis=-1, keepdims=True), approx=True)  # [B, Hr, M]
        read_h = jnp.einsum('bhm,bmd->bhd', attn.astype(jnp.bfloat16),
                            mem_l.astype(jnp.bfloat16),
                            preferred_element_type=jnp.float32)           # [B, Hr, DM]
        read = jnp.dot(read_h.reshape(B, N_READ * D_MEM).astype(jnp.bfloat16),
                       w_read, preferred_element_type=jnp.float32)        # [B, Dc]

        # ---- write heads: bounded, head-averaged write to memory slots ----
        p_slot = WRITE_FACTOR * jnp.mean(jax.nn.sigmoid(s3[:, N_READ:, :]), axis=1)  # [B, M]
        upd = mem_l * (1.0 - p_slot[:, :, None]) + p_slot[:, :, None] * v_slot[:, None, :]
        new_mem.append(keep * mem_l + (1.0 - keep) * upd)

        # ---- bottlenecked MLP + residual up-projection (two branches, one matmul) ----
        z = (xc + read).astype(jnp.bfloat16)
        zm = jnp.dot(z, w_uph1, preferred_element_type=jnp.float32) + b_uph1   # [B, D+Dh]
        zup = zm[:, :D_MODEL]                                             # z @ w_up + b_h2 @ w_up
        h1 = jnp.maximum(zm[:, D_MODEL:], 0.0).astype(jnp.bfloat16)       # relu(z @ w_h1 + b_h1)
        x = x + zup + jnp.dot(h1, w_h2u, preferred_element_type=jnp.float32)
    return x, new_mem


# ----------------------- fused read_prompt + generate kernel ---------------
def _generator_kernel(emb_ref, mask_ref, prime_ref, mem0_ref,
                      embt_ref, wlog_ref, blog_ref,
                      w_all_ref, b_all_ref, w_read_ref, w_uph1_ref, b_uph1_ref, w_h2u_ref,
                      tokens_ref, out_mem_ref, *, max_gen, t_prompt, start_token):
    # Hoist loop-invariant per-layer weights into values (loaded once, not per token).
    layer_w = tuple(
        (w_all_ref[l], b_all_ref[l], w_read_ref[l],
         w_uph1_ref[l], b_uph1_ref[l], w_h2u_ref[l])
        for l in range(NUM_LAYERS))

    # Memory state carried as values (no scratch refs, no per-step copies).
    mem = tuple(mem0_ref[l] for l in range(NUM_LAYERS))

    # ---- read_prompt: in-kernel loop over the prompt tokens (time-major) ----
    def prompt_body(t, mem_carry):
        x = emb_ref[t]                       # [B, D_MODEL]
        mask_f = mask_ref[t]                 # [B, 1] (1.0 = padding)
        _, new_m = _decoder_step(x, mask_f, list(mem_carry), layer_w)   # output discarded
        return tuple(new_m)

    mem = list(lax.fori_loop(0, t_prompt, prompt_body, mem))

    # ---- prime into response mode with the BOS embedding (output discarded) ----
    zero_mask = jnp.zeros((B, 1), jnp.float32)
    _, mem = _decoder_step(prime_ref[...], zero_mask, mem, layer_w)

    # ---- generate_response: fully unrolled autoregressive decode ----
    emb_table = embt_ref[...]                # [V, D_MODEL] bf16 (generation section only)
    w_logit = wlog_ref[...]                  # [D_MODEL, V] bf16
    b_logit = blog_ref[...]                  # [1, V] f32
    iota_bv = lax.broadcasted_iota(jnp.int32, (B, V), 1)

    token = jnp.full((B, 1), start_token, jnp.int32)     # last prompt token (begin-of-response)
    eos = jnp.zeros((B, 1), jnp.int32)                    # has_seen_eos
    cols = []
    for _ in range(max_gen):
        mask_f = (eos > 0).astype(jnp.float32)            # decoder mask = has_seen_eos (pre-step)
        one_hot = (token == iota_bv).astype(jnp.bfloat16)  # embedding lookup as MXU matmul
        x = jnp.dot(one_hot, emb_table, preferred_element_type=jnp.float32)
        x_out, mem = _decoder_step(x, mask_f, mem, layer_w)
        logits = jnp.dot(x_out.astype(jnp.bfloat16), w_logit,
                         preferred_element_type=jnp.float32) + b_logit
        # TODO(synk): SamplingInterface is abstract in the reference; greedy first-argmax is used,
        # so the temperature scaling is a no-op and has been dropped.
        maxv = jnp.max(logits, axis=-1, keepdims=True)
        token = jnp.min(jnp.where(logits >= maxv, iota_bv, V),
                        axis=-1, keepdims=True).astype(jnp.int32)
        cols.append(token)
        eos = jnp.maximum(eos, (token == EOS_ID).astype(jnp.int32))
        # TODO(synk): torch's `if torch.all(has_seen_eos): break` has no cheap in-kernel
        # equivalent at this unroll depth; EOS'd lanes stop updating memory via mask_f.

    # Single stores at the very end (no per-step output traffic).
    tokens_ref[...] = jnp.concatenate(cols, axis=-1)      # [B, max_gen]
    for l in range(NUM_LAYERS):
        out_mem_ref[l] = mem[l]


def _full_spec(a):
    nd = a.ndim
    return pl.BlockSpec(a.shape, lambda *args, _nd=nd: (0,) * _nd)


def generator_pallas(emb_t, mask_t, prime_emb, init_mem, kp, max_gen):
    """emb_t: [T, B, D_MODEL] f32, mask_t: [T, B, 1] f32 (1.0 = padding)."""
    args = [emb_t, mask_t, prime_emb, init_mem,
            kp["emb"], kp["w_logit"], kp["b_logit"],
            kp["w_all"], kp["b_all"], kp["w_read"], kp["w_uph1"], kp["b_uph1"], kp["w_h2u"]]
    kern = functools.partial(_generator_kernel,
                             max_gen=int(max_gen), t_prompt=int(emb_t.shape[0]),
                             start_token=BOR_ID)
    tokens, final_mem = pl.pallas_call(
        kern,
        grid=(1,),
        in_specs=[_full_spec(a) for a in args],
        out_specs=(pl.BlockSpec((B, max_gen), lambda i: (0, 0)),
                   pl.BlockSpec(init_mem.shape, lambda i: (0, 0, 0, 0))),
        out_shape=(jax.ShapeDtypeStruct((B, max_gen), jnp.int32),
                   jax.ShapeDtypeStruct(init_mem.shape, jnp.float32)),
        compiler_params=pltpu.CompilerParams(dimension_semantics=("arbitrary",)),
    )(*args)
    return tokens, final_mem


# ----------------------- forward() analogue --------------------------------
def causal_lm_forward(prompt_tokens, prompt_mask, params, temperature=1.0,
                      max_gen_tokens=MAX_GEN, memories=None):
    """CausalLMGenerator.forward on token ids.
    prompt_tokens: [B, T] int32, prompt_mask: [B, T] bool (True = padding)."""
    # TODO(synk): tokenizer.batch_encode_plus / batch_decode (text <-> ids) has no kernel equivalent.
    del temperature  # greedy argmax sampling is temperature-invariant
    kp = prepare_kernel_params(params)
    emb = jnp.take(params["emb"], prompt_tokens, axis=0)                  # vocabulary.embeddings (glue)
    emb_t = jnp.transpose(emb, (1, 0, 2))                                 # [T, B, D_MODEL] time-major
    mask_t = jnp.transpose(prompt_mask.astype(jnp.float32), (1, 0))[:, :, None]   # [T, B, 1]
    if memories is None:
        memories = jnp.zeros((NUM_LAYERS, B, N_MEMORIES, D_MEM), jnp.float32)      # decoder.create_state
    prime_emb = jnp.take(params["emb"], jnp.full((B,), BOS_ID, jnp.int32), axis=0)  # BOS embedding (glue)

    tokens, final_mem = generator_pallas(emb_t, mask_t, prime_emb, memories, kp, max_gen_tokens)
    return tokens, final_mem


if __name__ == "__main__":
    key = jax.random.PRNGKey(0)
    pkey, tkey = jax.random.split(key)
    params = init_params(pkey)

    prompt_tokens = jax.random.randint(tkey, (B, T_PROMPT), 4, V, dtype=jnp.int32)
    prompt_mask = jnp.zeros((B, T_PROMPT), dtype=jnp.bool_).at[1, -2:].set(True)   # pad last 2 of batch 1

    tokens, final_mem = causal_lm_forward(prompt_tokens, prompt_mask, params,
                                          temperature=1.0, max_gen_tokens=MAX_GEN)
    jax.block_until_ready((tokens, final_mem))

    assert tokens.shape == (B, MAX_GEN) and tokens.dtype == jnp.int32
    assert final_mem.shape == (NUM_LAYERS, B, N_MEMORIES, D_MEM)
    assert bool(jnp.all(jnp.isfinite(final_mem)))
    print("KERNEL_OK")
</pallas_src>

<mosaic_0001>
module attributes {stable_mosaic.version = 11 : i64} {
  func.func @_generator_kernel(%arg0: i32, %arg1: memref<8x2x64xf32, #tpu.memory_space<vmem>>, %arg2: memref<8x2x1xf32, #tpu.memory_space<vmem>>, %arg3: memref<2x64xf32, #tpu.memory_space<vmem>>, %arg4: memref<2x2x8x16xf32, #tpu.memory_space<vmem>>, %arg5: memref<64x64xbf16, #tpu.memory_space<vmem>>, %arg6: memref<64x64xbf16, #tpu.memory_space<vmem>>, %arg7: memref<1x64xf32, #tpu.memory_space<vmem>>, %arg8: memref<2x64x64xbf16, #tpu.memory_space<vmem>>, %arg9: memref<2x1x64xf32, #tpu.memory_space<vmem>>, %arg10: memref<2x32x16xbf16, #tpu.memory_space<vmem>>, %arg11: memref<2x16x128xbf16, #tpu.memory_space<vmem>>, %arg12: memref<2x1x128xf32, #tpu.memory_space<vmem>>, %arg13: memref<2x64x64xbf16, #tpu.memory_space<vmem>>, %arg14: memref<2x6xi32, #tpu.memory_space<vmem>>, %arg15: memref<2x2x8x16xf32, #tpu.memory_space<vmem>>) attributes {dimension_semantics = [#tpu.dimension_semantics<arbitrary>], iteration_bounds = array<i64: 1>, scalar_prefetch = 0 : i64, scratch_operands = 0 : i64, tpu.core_type = #tpu.core_type<tc>, window_params = [{pipeline_mode = #tpu.pipeline_mode<synchronous>, transform_indices = @transform_0, window_bounds = array<i64: 8, 2, 64>}, {pipeline_mode = #tpu.pipeline_mode<synchronous>, transform_indices = @transform_1, window_bounds = array<i64: 8, 2, 1>}, {pipeline_mode = #tpu.pipeline_mode<synchronous>, transform_indices = @transform_2, window_bounds = array<i64: 2, 64>}, {pipeline_mode = #tpu.pipeline_mode<synchronous>, transform_indices = @transform_3, window_bounds = array<i64: 2, 2, 8, 16>}, {pipeline_mode = #tpu.pipeline_mode<synchronous>, transform_indices = @transform_4, window_bounds = array<i64: 64, 64>}, {pipeline_mode = #tpu.pipeline_mode<synchronous>, transform_indices = @transform_5, window_bounds = array<i64: 64, 64>}, {pipeline_mode = #tpu.pipeline_mode<synchronous>, transform_indices = @transform_6, window_bounds = array<i64: 1, 64>}, {pipeline_mode = #tpu.pipeline_mode<synchronous>, transform_indices = @transform_7, window_bounds = array<i64: 2, 64, 64>}, {pipeline_mode = #tpu.pipeline_mode<synchronous>, transform_indices = @transform_8, window_bounds = array<i64: 2, 1, 64>}, {pipeline_mode = #tpu.pipeline_mode<synchronous>, transform_indices = @transform_9, window_bounds = array<i64: 2, 32, 16>}, {pipeline_mode = #tpu.pipeline_mode<synchronous>, transform_indices = @transform_10, window_bounds = array<i64: 2, 16, 128>}, {pipeline_mode = #tpu.pipeline_mode<synchronous>, transform_indices = @transform_11, window_bounds = array<i64: 2, 1, 128>}, {pipeline_mode = #tpu.pipeline_mode<synchronous>, transform_indices = @transform_12, window_bounds = array<i64: 2, 64, 64>}, {pipeline_mode = #tpu.pipeline_mode<synchronous>, transform_indices = @transform_13, window_bounds = array<i64: 2, 6>}, {pipeline_mode = #tpu.pipeline_mode<synchronous>, transform_indices = @transform_14, window_bounds = array<i64: 2, 2, 8, 16>}]} {
    %c0 = arith.constant 0 : index
    %c0_0 = arith.constant 0 : index
    %c0_1 = arith.constant 0 : index
    %0 = vector.load %arg8[%c0, %c0_0, %c0_1] : memref<2x64x64xbf16, #tpu.memory_space<vmem>>, vector<1x64x64xbf16>
    %1 = vector.shape_cast %0 : vector<1x64x64xbf16> to vector<64x64xbf16>
    %c0_2 = arith.constant 0 : index
    %c0_3 = arith.constant 0 : index
    %c0_4 = arith.constant 0 : index
    %2 = vector.load %arg9[%c0_2, %c0_3, %c0_4] : memref<2x1x64xf32, #tpu.memory_space<vmem>>, vector<1x1x64xf32>
    %3 = vector.shape_cast %2 : vector<1x1x64xf32> to vector<1x64xf32>
    %c0_5 = arith.constant 0 : index
    %c0_6 = arith.constant 0 : index
    %c0_7 = arith.constant 0 : index
    %4 = vector.load %arg10[%c0_5, %c0_6, %c0_7] : memref<2x32x16xbf16, #tpu.memory_space<vmem>>, vector<1x32x16xbf16>
    %5 = vector.shape_cast %4 : vector<1x32x16xbf16> to vector<32x16xbf16>
    %c0_8 = arith.constant 0 : index
    %c0_9 = arith.constant 0 : index
    %c0_10 = arith.constant 0 : index
    %6 = vector.load %arg11[%c0_8, %c0_9, %c0_10] : memref<2x16x128xbf16, #tpu.memory_space<vmem>>, vector<1x16x128xbf16>
    %7 = vector.shape_cast %6 : vector<1x16x128xbf16> to vector<16x128xbf16>
    %c0_11 = arith.constant 0 : index
    %c0_12 = arith.constant 0 : index
    %c0_13 = arith.constant 0 : index
    %8 = vector.load %arg12[%c0_11, %c0_12, %c0_13] : memref<2x1x128xf32, #tpu.memory_space<vmem>>, vector<1x1x128xf32>
    %9 = vector.shape_cast %8 : vector<1x1x128xf32> to vector<1x128xf32>
    %c0_14 = arith.constant 0 : index
    %c0_15 = arith.constant 0 : index
    %c0_16 = arith.constant 0 : index
    %10 = vector.load %arg13[%c0_14, %c0_15, %c0_16] : memref<2x64x64xbf16, #tpu.memory_space<vmem>>, vector<1x64x64xbf16>
    %11 = vector.shape_cast %10 : vector<1x64x64xbf16> to vector<64x64xbf16>
    %c1 = arith.constant 1 : index
    %c0_17 = arith.constant 0 : index
    %c0_18 = arith.constant 0 : index
    %12 = vector.load %arg8[%c1, %c0_17, %c0_18] : memref<2x64x64xbf16, #tpu.memory_space<vmem>>, vector<1x64x64xbf16>
    %13 = vector.shape_cast %12 : vector<1x64x64xbf16> to vector<64x64xbf16>
    %c1_19 = arith.constant 1 : index
    %c0_20 = arith.constant 0 : index
    %c0_21 = arith.constant 0 : index
    %14 = vector.load %arg9[%c1_19, %c0_20, %c0_21] : memref<2x1x64xf32, #tpu.memory_space<vmem>>, vector<1x1x64xf32>
    %15 = vector.shape_cast %14 : vector<1x1x64xf32> to vector<1x64xf32>
    %c1_22 = arith.constant 1 : index
    %c0_23 = arith.constant 0 : index
    %c0_24 = arith.constant 0 : index
    %16 = vector.load %arg10[%c1_22, %c0_23, %c0_24] : memref<2x32x16xbf16, #tpu.memory_space<vmem>>, vector<1x32x16xbf16>
    %17 = vector.shape_cast %16 : vector<1x32x16xbf16> to vector<32x16xbf16>
    %c1_25 = arith.constant 1 : index
    %c0_26 = arith.constant 0 : index
    %c0_27 = arith.constant 0 : index
    %18 = vector.load %arg11[%c1_25, %c0_26, %c0_27] : memref<2x16x128xbf16, #tpu.memory_space<vmem>>, vector<1x16x128xbf16>
    %19 = vector.shape_cast %18 : vector<1x16x128xbf16> to vector<16x128xbf16>
    %c1_28 = arith.constant 1 : index
    %c0_29 = arith.constant 0 : index
    %c0_30 = arith.constant 0 : index
    %20 = vector.load %arg12[%c1_28, %c0_29, %c0_30] : memref<2x1x128xf32, #tpu.memory_space<vmem>>, vector<1x1x128xf32>
    %21 = vector.shape_cast %20 : vector<1x1x128xf32> to vector<1x128xf32>
    %c1_31 = arith.constant 1 : index
    %c0_32 = arith.constant 0 : index
    %c0_33 = arith.constant 0 : index
    %22 = vector.load %arg13[%c1_31, %c0_32, %c0_33] : memref<2x64x64xbf16, #tpu.memory_space<vmem>>, vector<1x64x64xbf16>
    %23 = vector.shape_cast %22 : vector<1x64x64xbf16> to vector<64x64xbf16>
    %c0_34 = arith.constant 0 : index
    %c0_35 = arith.constant 0 : index
    %c0_36 = arith.constant 0 : index
    %c0_37 = arith.constant 0 : index
    %24 = vector.load %arg4[%c0_34, %c0_35, %c0_36, %c0_37] : memref<2x2x8x16xf32, #tpu.memory_space<vmem>>, vector<1x2x8x16xf32>
    %25 = vector.shape_cast %24 : vector<1x2x8x16xf32> to vector<2x8x16xf32>
    %c1_38 = arith.constant 1 : index
    %c0_39 = arith.constant 0 : index
    %c0_40 = arith.constant 0 : index
    %c0_41 = arith.constant 0 : index
    %26 = vector.load %arg4[%c1_38, %c0_39, %c0_40, %c0_41] : memref<2x2x8x16xf32, #tpu.memory_space<vmem>>, vector<1x2x8x16xf32>
    %27 = vector.shape_cast %26 : vector<1x2x8x16xf32> to vector<2x8x16xf32>
    %c0_i32 = arith.constant 0 : i32
    %c8_i32 = arith.constant 8 : i32
    %28 = arith.addi %c0_i32, %c8_i32 : i32
    %c1_i32 = arith.constant 1 : i32
    %29:2 = scf.for %arg16 = %c0_i32 to %28 step %c1_i32 iter_args(%arg17 = %25, %arg18 = %27) -> (vector<2x8x16xf32>, vector<2x8x16xf32>)  : i32 {
      %1112 = arith.index_cast %arg16 : i32 to index
      %c0_290 = arith.constant 0 : index
      %c0_291 = arith.constant 0 : index
      %1113 = vector.load %arg1[%1112, %c0_290, %c0_291] : memref<8x2x64xf32, #tpu.memory_space<vmem>>, vector<1x2x64xf32>
      %1114 = vector.shape_cast %1113 : vector<1x2x64xf32> to vector<2x64xf32>
      %1115 = arith.index_cast %arg16 : i32 to index
      %c0_292 = arith.constant 0 : index
      %c0_293 = arith.constant 0 : index
      %1116 = vector.load %arg2[%1115, %c0_292, %c0_293] : memref<8x2x1xf32, #tpu.memory_space<vmem>>, vector<1x2x1xf32>
      %1117 = vector.shape_cast %1116 : vector<1x2x1xf32> to vector<2x1xf32>
      %1118 = vector.shape_cast %1117 : vector<2x1xf32> to vector<2x1x1xf32>
      %1119 = arith.truncf %1114 : vector<2x64xf32> to vector<2x64xbf16>
      %cst_294 = arith.constant dense<0.000000e+00> : vector<2x64xf32>
      %1120 = tpu.matmul %1119, %1, %cst_294 {dimension_numbers = #tpu.dot_dimension_numbers<[1], [0], [0], [1], [0, 0, 1, 1], [], []>} : vector<2x64xbf16>, vector<64x64xbf16>, vector<2x64xf32> -> vector<2x64xf32>
      %1121 = vector.broadcast %3 : vector<1x64xf32> to vector<2x64xf32>
      %1122 = arith.addf %1120, %1121 : vector<2x64xf32>
      %1123 = vector.extract_strided_slice %1122 {offsets = [0, 0], sizes = [2, 16], strides = [1, 1]} : vector<2x64xf32> to vector<2x16xf32>
      %1124 = vector.extract_strided_slice %1122 {offsets = [0, 16], sizes = [2, 32], strides = [1, 1]} : vector<2x64xf32> to vector<2x32xf32>
      %1125 = vector.shape_cast %1124 : vector<2x32xf32> to vector<2x4x8xf32>
      %1126 = vector.extract_strided_slice %1122 {offsets = [0, 48], sizes = [2, 16], strides = [1, 1]} : vector<2x64xf32> to vector<2x16xf32>
      %1127 = vector.extract_strided_slice %1125 {offsets = [0, 0, 0], sizes = [2, 2, 8], strides = [1, 1, 1]} : vector<2x4x8xf32> to vector<2x2x8xf32>
      %cst_295 = arith.constant dense<0xFF800000> : vector<2x2xf32>
      %1128 = vector.multi_reduction <maximumf>, %1127, %cst_295 [2] : vector<2x2x8xf32> to vector<2x2xf32>
      %1129 = vector.shape_cast %1128 : vector<2x2xf32> to vector<2x2x1xf32>
      %1130 = vector.broadcast %1129 : vector<2x2x1xf32> to vector<2x2x8xf32>
      %1131 = arith.subf %1127, %1130 : vector<2x2x8xf32>
      %1132 = math.exp %1131 : vector<2x2x8xf32>
      %cst_296 = arith.constant dense<0.000000e+00> : vector<2x2xf32>
      %1133 = vector.multi_reduction <add>, %1132, %cst_296 [2] : vector<2x2x8xf32> to vector<2x2xf32>
      %1134 = vector.shape_cast %1133 : vector<2x2xf32> to vector<2x2x1xf32>
      %1135 = tpu.reciprocal %1134 {approx = true} : vector<2x2x1xf32> -> vector<2x2x1xf32>
      %1136 = vector.broadcast %1135 : vector<2x2x1xf32> to vector<2x2x8xf32>
      %1137 = arith.mulf %1132, %1136 : vector<2x2x8xf32>
      %1138 = arith.truncf %1137 : vector<2x2x8xf32> to vector<2x2x8xbf16>
      %1139 = arith.truncf %arg17 : vector<2x8x16xf32> to vector<2x8x16xbf16>
      "tpu.trace_start"() <{level = 10 : i32, message = "bhm,bmd->bhd"}> : () -> ()
      %cst_297 = arith.constant dense<0.000000e+00> : vector<2x2x16xf32>
      %1140 = tpu.matmul %1138, %1139, %cst_297 {dimension_numbers = #tpu.dot_dimension_numbers<[2], [1], [1], [2], [0, 0, 0, 1, 1, 2], [0], [0]>} : vector<2x2x8xbf16>, vector<2x8x16xbf16>, vector<2x2x16xf32> -> vector<2x2x16xf32>
      "tpu.trace_stop"() : () -> ()
      %1141 = vector.shape_cast %1140 : vector<2x2x16xf32> to vector<2x32xf32>
      %1142 = arith.truncf %1141 : vector<2x32xf32> to vector<2x32xbf16>
      %cst_298 = arith.constant dense<0.000000e+00> : vector<2x16xf32>
      %1143 = tpu.matmul %1142, %5, %cst_298 {dimension_numbers = #tpu.dot_dimension_numbers<[1], [0], [0], [1], [0, 0, 1, 1], [], []>} : vector<2x32xbf16>, vector<32x16xbf16>, vector<2x16xf32> -> vector<2x16xf32>
      %1144 = vector.extract_strided_slice %1125 {offsets = [0, 2, 0], sizes = [2, 2, 8], strides = [1, 1, 1]} : vector<2x4x8xf32> to vector<2x2x8xf32>
      %1145 = arith.negf %1144 : vector<2x2x8xf32>
      %1146 = math.exp %1145 : vector<2x2x8xf32>
      %cst_299 = arith.constant 1.000000e+00 : f32
      %1147 = vector.broadcast %cst_299 : f32 to vector<2x2x8xf32>
      %1148 = arith.addf %1147, %1146 : vector<2x2x8xf32>
      %1149 = arith.divf %1147, %1148 : vector<2x2x8xf32>
      %cst_300 = arith.constant dense<0.000000e+00> : vector<2x8xf32>
      %1150 = vector.multi_reduction <add>, %1149, %cst_300 [1] : vector<2x2x8xf32> to vector<2x8xf32>
      %cst_301 = arith.constant 2.000000e+00 : f32
      %1151 = vector.broadcast %cst_301 : f32 to vector<2x8xf32>
      %1152 = arith.divf %1150, %1151 : vector<2x8xf32>
      %cst_302 = arith.constant 9.990000e-01 : f32
      %1153 = vector.broadcast %cst_302 : f32 to vector<2x8xf32>
      %1154 = arith.mulf %1153, %1152 : vector<2x8xf32>
      %1155 = vector.shape_cast %1154 : vector<2x8xf32> to vector<2x8x1xf32>
      %cst_303 = arith.constant 1.000000e+00 : f32
      %1156 = vector.broadcast %cst_303 : f32 to vector<2x8x1xf32>
      %1157 = arith.subf %1156, %1155 : vector<2x8x1xf32>
      %1158 = vector.broadcast %1157 : vector<2x8x1xf32> to vector<2x8x16xf32>
      %1159 = arith.mulf %arg17, %1158 : vector<2x8x16xf32>
      %1160 = vector.shape_cast %1154 : vector<2x8xf32> to vector<2x8x1xf32>
      %1161 = vector.shape_cast %1126 : vector<2x16xf32> to vector<2x1x16xf32>
      %1162 = vector.broadcast %1160 : vector<2x8x1xf32> to vector<2x8x16xf32>
      %1163 = vector.broadcast %1161 : vector<2x1x16xf32> to vector<2x8x16xf32>
      %1164 = arith.mulf %1162, %1163 : vector<2x8x16xf32>
      %1165 = arith.addf %1159, %1164 : vector<2x8x16xf32>
      %1166 = vector.broadcast %1118 : vector<2x1x1xf32> to vector<2x8x16xf32>
      %1167 = arith.mulf %1166, %arg17 : vector<2x8x16xf32>
      %cst_304 = arith.constant 1.000000e+00 : f32
      %1168 = vector.broadcast %cst_304 : f32 to vector<2x1x1xf32>
      %1169 = arith.subf %1168, %1118 : vector<2x1x1xf32>
      %1170 = vector.broadcast %1169 : vector<2x1x1xf32> to vector<2x8x16xf32>
      %1171 = arith.mulf %1170, %1165 : vector<2x8x16xf32>
      %1172 = arith.addf %1167, %1171 : vector<2x8x16xf32>
      %1173 = arith.addf %1123, %1143 : vector<2x16xf32>
      %1174 = arith.truncf %1173 : vector<2x16xf32> to vector<2x16xbf16>
      %cst_305 = arith.constant dense<0.000000e+00> : vector<2x128xf32>
      %1175 = tpu.matmul %1174, %7, %cst_305 {dimension_numbers = #tpu.dot_dimension_numbers<[1], [0], [0], [1], [0, 0, 1, 1], [], []>} : vector<2x16xbf16>, vector<16x128xbf16>, vector<2x128xf32> -> vector<2x128xf32>
      %1176 = vector.broadcast %9 : vector<1x128xf32> to vector<2x128xf32>
      %1177 = arith.addf %1175, %1176 : vector<2x128xf32>
      %1178 = vector.extract_strided_slice %1177 {offsets = [0, 0], sizes = [2, 64], strides = [1, 1]} : vector<2x128xf32> to vector<2x64xf32>
      %1179 = vector.extract_strided_slice %1177 {offsets = [0, 64], sizes = [2, 64], strides = [1, 1]} : vector<2x128xf32> to vector<2x64xf32>
      %cst_306 = arith.constant 0.000000e+00 : f32
      %1180 = vector.broadcast %cst_306 : f32 to vector<2x64xf32>
      %1181 = arith.maximumf %1179, %1180 : vector<2x64xf32>
      %1182 = arith.truncf %1181 : vector<2x64xf32> to vector<2x64xbf16>
      %1183 = arith.addf %1114, %1178 : vector<2x64xf32>
      %cst_307 = arith.constant dense<0.000000e+00> : vector<2x64xf32>
      %1184 = tpu.matmul %1182, %11, %cst_307 {dimension_numbers = #tpu.dot_dimension_numbers<[1], [0], [0], [1], [0, 0, 1, 1], [], []>} : vector<2x64xbf16>, vector<64x64xbf16>, vector<2x64xf32> -> vector<2x64xf32>
      %1185 = arith.addf %1183, %1184 : vector<2x64xf32>
      %1186 = arith.truncf %1185 : vector<2x64xf32> to vector<2x64xbf16>
      %cst_308 = arith.constant dense<0.000000e+00> : vector<2x64xf32>
      %1187 = tpu.matmul %1186, %13, %cst_308 {dimension_numbers = #tpu.dot_dimension_numbers<[1], [0], [0], [1], [0, 0, 1, 1], [], []>} : vector<2x64xbf16>, vector<64x64xbf16>, vector<2x64xf32> -> vector<2x64xf32>
      %1188 = vector.broadcast %15 : vector<1x64xf32> to vector<2x64xf32>
      %1189 = arith.addf %1187, %1188 : vector<2x64xf32>
      %1190 = vector.extract_strided_slice %1189 {offsets = [0, 16], sizes = [2, 32], strides = [1, 1]} : vector<2x64xf32> to vector<2x32xf32>
      %1191 = vector.shape_cast %1190 : vector<2x32xf32> to vector<2x4x8xf32>
      %1192 = vector.extract_strided_slice %1189 {offsets = [0, 48], sizes = [2, 16], strides = [1, 1]} : vector<2x64xf32> to vector<2x16xf32>
      %1193 = vector.extract_strided_slice %1191 {offsets = [0, 2, 0], sizes = [2, 2, 8], strides = [1, 1, 1]} : vector<2x4x8xf32> to vector<2x2x8xf32>
      %1194 = arith.negf %1193 : vector<2x2x8xf32>
      %1195 = math.exp %1194 : vector<2x2x8xf32>
      %cst_309 = arith.constant 1.000000e+00 : f32
      %1196 = vector.broadcast %cst_309 : f32 to vector<2x2x8xf32>
      %1197 = arith.addf %1196, %1195 : vector<2x2x8xf32>
      %1198 = arith.divf %1196, %1197 : vector<2x2x8xf32>
      %cst_310 = arith.constant dense<0.000000e+00> : vector<2x8xf32>
      %1199 = vector.multi_reduction <add>, %1198, %cst_310 [1] : vector<2x2x8xf32> to vector<2x8xf32>
      %cst_311 = arith.constant 2.000000e+00 : f32
      %1200 = vector.broadcast %cst_311 : f32 to vector<2x8xf32>
      %1201 = arith.divf %1199, %1200 : vector<2x8xf32>
      %cst_312 = arith.constant 9.990000e-01 : f32
      %1202 = vector.broadcast %cst_312 : f32 to vector<2x8xf32>
      %1203 = arith.mulf %1202, %1201 : vector<2x8xf32>
      %1204 = vector.shape_cast %1203 : vector<2x8xf32> to vector<2x8x1xf32>
      %cst_313 = arith.constant 1.000000e+00 : f32
      %1205 = vector.broadcast %cst_313 : f32 to vector<2x8x1xf32>
      %1206 = arith.subf %1205, %1204 : vector<2x8x1xf32>
      %1207 = vector.broadcast %1206 : vector<2x8x1xf32> to vector<2x8x16xf32>
      %1208 = arith.mulf %arg18, %1207 : vector<2x8x16xf32>
      %1209 = vector.shape_cast %1203 : vector<2x8xf32> to vector<2x8x1xf32>
      %1210 = vector.shape_cast %1192 : vector<2x16xf32> to vector<2x1x16xf32>
      %1211 = vector.broadcast %1209 : vector<2x8x1xf32> to vector<2x8x16xf32>
      %1212 = vector.broadcast %1210 : vector<2x1x16xf32> to vector<2x8x16xf32>
      %1213 = arith.mulf %1211, %1212 : vector<2x8x16xf32>
      %1214 = arith.addf %1208, %1213 : vector<2x8x16xf32>
      %1215 = vector.broadcast %1118 : vector<2x1x1xf32> to vector<2x8x16xf32>
      %1216 = arith.mulf %1215, %arg18 : vector<2x8x16xf32>
      %cst_314 = arith.constant 1.000000e+00 : f32
      %1217 = vector.broadcast %cst_314 : f32 to vector<2x1x1xf32>
      %1218 = arith.subf %1217, %1118 : vector<2x1x1xf32>
      %1219 = vector.broadcast %1218 : vector<2x1x1xf32> to vector<2x8x16xf32>
      %1220 = arith.mulf %1219, %1214 : vector<2x8x16xf32>
      %1221 = arith.addf %1216, %1220 : vector<2x8x16xf32>
      scf.yield %1172, %1221 : vector<2x8x16xf32>, vector<2x8x16xf32>
    }
    %c8_i32_42 = arith.constant 8 : i32
    %cst = arith.constant 0.000000e+00 : f32
    %30 = vector.broadcast %cst : f32 to vector<2x1xf32>
    %c0_43 = arith.constant 0 : index
    %c0_44 = arith.constant 0 : index
    %31 = vector.load %arg3[%c0_43, %c0_44] : memref<2x64xf32, #tpu.memory_space<vmem>>, vector<2x64xf32>
    %32 = vector.shape_cast %30 : vector<2x1xf32> to vector<2x1x1xf32>
    %33 = arith.truncf %31 : vector<2x64xf32> to vector<2x64xbf16>
    %cst_45 = arith.constant dense<0.000000e+00> : vector<2x64xf32>
    %34 = tpu.matmul %33, %1, %cst_45 {dimension_numbers = #tpu.dot_dimension_numbers<[1], [0], [0], [1], [0, 0, 1, 1], [], []>} : vector<2x64xbf16>, vector<64x64xbf16>, vector<2x64xf32> -> vector<2x64xf32>
    %35 = vector.broadcast %3 : vector<1x64xf32> to vector<2x64xf32>
    %36 = arith.addf %34, %35 : vector<2x64xf32>
    %37 = vector.extract_strided_slice %36 {offsets = [0, 0], sizes = [2, 16], strides = [1, 1]} : vector<2x64xf32> to vector<2x16xf32>
    %38 = vector.extract_strided_slice %36 {offsets = [0, 16], sizes = [2, 32], strides = [1, 1]} : vector<2x64xf32> to vector<2x32xf32>
    %39 = vector.shape_cast %38 : vector<2x32xf32> to vector<2x4x8xf32>
    %40 = vector.extract_strided_slice %36 {offsets = [0, 48], sizes = [2, 16], strides = [1, 1]} : vector<2x64xf32> to vector<2x16xf32>
    %41 = vector.extract_strided_slice %39 {offsets = [0, 0, 0], sizes = [2, 2, 8], strides = [1, 1, 1]} : vector<2x4x8xf32> to vector<2x2x8xf32>
    %cst_46 = arith.constant dense<0xFF800000> : vector<2x2xf32>
    %42 = vector.multi_reduction <maximumf>, %41, %cst_46 [2] : vector<2x2x8xf32> to vector<2x2xf32>
    %43 = vector.shape_cast %42 : vector<2x2xf32> to vector<2x2x1xf32>
    %44 = vector.broadcast %43 : vector<2x2x1xf32> to vector<2x2x8xf32>
    %45 = arith.subf %41, %44 : vector<2x2x8xf32>
    %46 = math.exp %45 : vector<2x2x8xf32>
    %cst_47 = arith.constant dense<0.000000e+00> : vector<2x2xf32>
    %47 = vector.multi_reduction <add>, %46, %cst_47 [2] : vector<2x2x8xf32> to vector<2x2xf32>
    %48 = vector.shape_cast %47 : vector<2x2xf32> to vector<2x2x1xf32>
    %49 = tpu.reciprocal %48 {approx = true} : vector<2x2x1xf32> -> vector<2x2x1xf32>
    %50 = vector.broadcast %49 : vector<2x2x1xf32> to vector<2x2x8xf32>
    %51 = arith.mulf %46, %50 : vector<2x2x8xf32>
    %52 = arith.truncf %51 : vector<2x2x8xf32> to vector<2x2x8xbf16>
    %53 = arith.truncf %29#0 : vector<2x8x16xf32> to vector<2x8x16xbf16>
    "tpu.trace_start"() <{level = 10 : i32, message = "bhm,bmd->bhd"}> : () -> ()
    %cst_48 = arith.constant dense<0.000000e+00> : vector<2x2x16xf32>
    %54 = tpu.matmul %52, %53, %cst_48 {dimension_numbers = #tpu.dot_dimension_numbers<[2], [1], [1], [2], [0, 0, 0, 1, 1, 2], [0], [0]>} : vector<2x2x8xbf16>, vector<2x8x16xbf16>, vector<2x2x16xf32> -> vector<2x2x16xf32>
    "tpu.trace_stop"() : () -> ()
    %55 = vector.shape_cast %54 : vector<2x2x16xf32> to vector<2x32xf32>
    %56 = arith.truncf %55 : vector<2x32xf32> to vector<2x32xbf16>
    %cst_49 = arith.constant dense<0.000000e+00> : vector<2x16xf32>
    %57 = tpu.matmul %56, %5, %cst_49 {dimension_numbers = #tpu.dot_dimension_numbers<[1], [0], [0], [1], [0, 0, 1, 1], [], []>} : vector<2x32xbf16>, vector<32x16xbf16>, vector<2x16xf32> -> vector<2x16xf32>
    %58 = vector.extract_strided_slice %39 {offsets = [0, 2, 0], sizes = [2, 2, 8], strides = [1, 1, 1]} : vector<2x4x8xf32> to vector<2x2x8xf32>
    %59 = arith.negf %58 : vector<2x2x8xf32>
    %60 = math.exp %59 : vector<2x2x8xf32>
    %cst_50 = arith.constant 1.000000e+00 : f32
    %61 = vector.broadcast %cst_50 : f32 to vector<2x2x8xf32>
    %62 = arith.addf %61, %60 : vector<2x2x8xf32>
    %63 = arith.divf %61, %62 : vector<2x2x8xf32>
    %cst_51 = arith.constant dense<0.000000e+00> : vector<2x8xf32>
    %64 = vector.multi_reduction <add>, %63, %cst_51 [1] : vector<2x2x8xf32> to vector<2x8xf32>
    %cst_52 = arith.constant 2.000000e+00 : f32
    %65 = vector.broadcast %cst_52 : f32 to vector<2x8xf32>
    %66 = arith.divf %64, %65 : vector<2x8xf32>
    %cst_53 = arith.constant 9.990000e-01 : f32
    %67 = vector.broadcast %cst_53 : f32 to vector<2x8xf32>
    %68 = arith.mulf %67, %66 : vector<2x8xf32>
    %69 = vector.shape_cast %68 : vector<2x8xf32> to vector<2x8x1xf32>
    %cst_54 = arith.constant 1.000000e+00 : f32
    %70 = vector.broadcast %cst_54 : f32 to vector<2x8x1xf32>
    %71 = arith.subf %70, %69 : vector<2x8x1xf32>
    %72 = vector.broadcast %71 : vector<2x8x1xf32> to vector<2x8x16xf32>
    %73 = arith.mulf %29#0, %72 : vector<2x8x16xf32>
    %74 = vector.shape_cast %68 : vector<2x8xf32> to vector<2x8x1xf32>
    %75 = vector.shape_cast %40 : vector<2x16xf32> to vector<2x1x16xf32>
    %76 = vector.broadcast %74 : vector<2x8x1xf32> to vector<2x8x16xf32>
    %77 = vector.broadcast %75 : vector<2x1x16xf32> to vector<2x8x16xf32>
    %78 = arith.mulf %76, %77 : vector<2x8x16xf32>
    %79 = arith.addf %73, %78 : vector<2x8x16xf32>
    %80 = vector.broadcast %32 : vector<2x1x1xf32> to vector<2x8x16xf32>
    %81 = arith.mulf %80, %29#0 : vector<2x8x16xf32>
    %cst_55 = arith.constant 1.000000e+00 : f32
    %82 = vector.broadcast %cst_55 : f32 to vector<2x1x1xf32>
    %83 = arith.subf %82, %32 : vector<2x1x1xf32>
    %84 = vector.broadcast %83 : vector<2x1x1xf32> to vector<2x8x16xf32>
    %85 = arith.mulf %84, %79 : vector<2x8x16xf32>
    %86 = arith.addf %81, %85 : vector<2x8x16xf32>
    %87 = arith.addf %37, %57 : vector<2x16xf32>
    %88 = arith.truncf %87 : vector<2x16xf32> to vector<2x16xbf16>
    %cst_56 = arith.constant dense<0.000000e+00> : vector<2x128xf32>
    %89 = tpu.matmul %88, %7, %cst_56 {dimension_numbers = #tpu.dot_dimension_numbers<[1], [0], [0], [1], [0, 0, 1, 1], [], []>} : vector<2x16xbf16>, vector<16x128xbf16>, vector<2x128xf32> -> vector<2x128xf32>
    %90 = vector.broadcast %9 : vector<1x128xf32> to vector<2x128xf32>
    %91 = arith.addf %89, %90 : vector<2x128xf32>
    %92 = vector.extract_strided_slice %91 {offsets = [0, 0], sizes = [2, 64], strides = [1, 1]} : vector<2x128xf32> to vector<2x64xf32>
    %93 = vector.extract_strided_slice %91 {offsets = [0, 64], sizes = [2, 64], strides = [1, 1]} : vector<2x128xf32> to vector<2x64xf32>
    %cst_57 = arith.constant 0.000000e+00 : f32
    %94 = vector.broadcast %cst_57 : f32 to vector<2x64xf32>
    %95 = arith.maximumf %93, %94 : vector<2x64xf32>
    %96 = arith.truncf %95 : vector<2x64xf32> to vector<2x64xbf16>
    %97 = arith.addf %31, %92 : vector<2x64xf32>
    %cst_58 = arith.constant dense<0.000000e+00> : vector<2x64xf32>
    %98 = tpu.matmul %96, %11, %cst_58 {dimension_numbers = #tpu.dot_dimension_numbers<[1], [0], [0], [1], [0, 0, 1, 1], [], []>} : vector<2x64xbf16>, vector<64x64xbf16>, vector<2x64xf32> -> vector<2x64xf32>
    %99 = arith.addf %97, %98 : vector<2x64xf32>
    %100 = arith.truncf %99 : vector<2x64xf32> to vector<2x64xbf16>
    %cst_59 = arith.constant dense<0.000000e+00> : vector<2x64xf32>
    %101 = tpu.matmul %100, %13, %cst_59 {dimension_numbers = #tpu.dot_dimension_numbers<[1], [0], [0], [1], [0, 0, 1, 1], [], []>} : vector<2x64xbf16>, vector<64x64xbf16>, vector<2x64xf32> -> vector<2x64xf32>
    %102 = vector.broadcast %15 : vector<1x64xf32> to vector<2x64xf32>
    %103 = arith.addf %101, %102 : vector<2x64xf32>
    %104 = vector.extract_strided_slice %103 {offsets = [0, 16], sizes = [2, 32], strides = [1, 1]} : vector<2x64xf32> to vector<2x32xf32>
    %105 = vector.shape_cast %104 : vector<2x32xf32> to vector<2x4x8xf32>
    %106 = vector.extract_strided_slice %103 {offsets = [0, 48], sizes = [2, 16], strides = [1, 1]} : vector<2x64xf32> to vector<2x16xf32>
    %107 = vector.extract_strided_slice %105 {offsets = [0, 2, 0], sizes = [2, 2, 8], strides = [1, 1, 1]} : vector<2x4x8xf32> to vector<2x2x8xf32>
    %108 = arith.negf %107 : vector<2x2x8xf32>
    %109 = math.exp %108 : vector<2x2x8xf32>
    %cst_60 = arith.constant 1.000000e+00 : f32
    %110 = vector.broadcast %cst_60 : f32 to vector<2x2x8xf32>
    %111 = arith.addf %110, %109 : vector<2x2x8xf32>
    %112 = arith.divf %110, %111 : vector<2x2x8xf32>
    %cst_61 = arith.constant dense<0.000000e+00> : vector<2x8xf32>
    %113 = vector.multi_reduction <add>, %112, %cst_61 [1] : vector<2x2x8xf32> to vector<2x8xf32>
    %cst_62 = arith.constant 2.000000e+00 : f32
    %114 = vector.broadcast %cst_62 : f32 to vector<2x8xf32>
    %115 = arith.divf %113, %114 : vector<2x8xf32>
    %cst_63 = arith.constant 9.990000e-01 : f32
    %116 = vector.broadcast %cst_63 : f32 to vector<2x8xf32>
    %117 = arith.mulf %116, %115 : vector<2x8xf32>
    %118 = vector.shape_cast %117 : vector<2x8xf32> to vector<2x8x1xf32>
    %cst_64 = arith.constant 1.000000e+00 : f32
    %119 = vector.broadcast %cst_64 : f32 to vector<2x8x1xf32>
    %120 = arith.subf %119, %118 : vector<2x8x1xf32>
    %121 = vector.broadcast %120 : vector<2x8x1xf32> to vector<2x8x16xf32>
    %122 = arith.mulf %29#1, %121 : vector<2x8x16xf32>
    %123 = vector.shape_cast %117 : vector<2x8xf32> to vector<2x8x1xf32>
    %124 = vector.shape_cast %106 : vector<2x16xf32> to vector<2x1x16xf32>
    %125 = vector.broadcast %123 : vector<2x8x1xf32> to vector<2x8x16xf32>
    %126 = vector.broadcast %124 : vector<2x1x16xf32> to vector<2x8x16xf32>
    %127 = arith.mulf %125, %126 : vector<2x8x16xf32>
    %128 = arith.addf %122, %127 : vector<2x8x16xf32>
    %129 = vector.broadcast %32 : vector<2x1x1xf32> to vector<2x8x16xf32>
    %130 = arith.mulf %129, %29#1 : vector<2x8x16xf32>
    %cst_65 = arith.constant 1.000000e+00 : f32
    %131 = vector.broadcast %cst_65 : f32 to vector<2x1x1xf32>
    %132 = arith.subf %131, %32 : vector<2x1x1xf32>
    %133 = vector.broadcast %132 : vector<2x1x1xf32> to vector<2x8x16xf32>
    %134 = arith.mulf %133, %128 : vector<2x8x16xf32>
    %135 = arith.addf %130, %134 : vector<2x8x16xf32>
    %c0_66 = arith.constant 0 : index
    %c0_67 = arith.constant 0 : index
    %136 = vector.load %arg5[%c0_66, %c0_67] : memref<64x64xbf16, #tpu.memory_space<vmem>>, vector<64x64xbf16>
    %c0_68 = arith.constant 0 : index
    %c0_69 = arith.constant 0 : index
    %137 = vector.load %arg6[%c0_68, %c0_69] : memref<64x64xbf16, #tpu.memory_space<vmem>>, vector<64x64xbf16>
    %c0_70 = arith.constant 0 : index
    %c0_71 = arith.constant 0 : index
    %138 = vector.load %arg7[%c0_70, %c0_71] : memref<1x64xf32, #tpu.memory_space<vmem>>, vector<1x64xf32>
    %139 = tpu.iota {dimensions = array<i32: 1>} : vector<2x64xi32>
    %c2_i32 = arith.constant 2 : i32
    %140 = vector.broadcast %c2_i32 : i32 to vector<2x1xi32>
    %c0_i32_72 = arith.constant 0 : i32
    %141 = vector.broadcast %c0_i32_72 : i32 to vector<2x1xi32>
    %c0_i32_73 = arith.constant 0 : i32
    %142 = vector.broadcast %c0_i32_73 : i32 to vector<2x1xi32>
    %143 = arith.cmpi sgt, %141, %142 : vector<2x1xi32>
    %144 = arith.extui %143 : vector<2x1xi1> to vector<2x1xi32>
    %145 = arith.sitofp %144 : vector<2x1xi32> to vector<2x1xf32>
    %146 = vector.broadcast %140 : vector<2x1xi32> to vector<2x64xi32>
    %147 = arith.cmpi eq, %146, %139 : vector<2x64xi32>
    %148 = arith.extui %147 : vector<2x64xi1> to vector<2x64xi32>
    %149 = arith.sitofp %148 : vector<2x64xi32> to vector<2x64xf32>
    %150 = arith.truncf %149 : vector<2x64xf32> to vector<2x64xbf16>
    %cst_74 = arith.constant dense<0.000000e+00> : vector<2x64xf32>
    %151 = tpu.matmul %150, %136, %cst_74 {dimension_numbers = #tpu.dot_dimension_numbers<[1], [0], [0], [1], [0, 0, 1, 1], [], []>} : vector<2x64xbf16>, vector<64x64xbf16>, vector<2x64xf32> -> vector<2x64xf32>
    %152 = vector.shape_cast %145 : vector<2x1xf32> to vector<2x1x1xf32>
    %153 = arith.truncf %151 : vector<2x64xf32> to vector<2x64xbf16>
    %cst_75 = arith.constant dense<0.000000e+00> : vector<2x64xf32>
    %154 = tpu.matmul %153, %1, %cst_75 {dimension_numbers = #tpu.dot_dimension_numbers<[1], [0], [0], [1], [0, 0, 1, 1], [], []>} : vector<2x64xbf16>, vector<64x64xbf16>, vector<2x64xf32> -> vector<2x64xf32>
    %155 = vector.broadcast %3 : vector<1x64xf32> to vector<2x64xf32>
    %156 = arith.addf %154, %155 : vector<2x64xf32>
    %157 = vector.extract_strided_slice %156 {offsets = [0, 0], sizes = [2, 16], strides = [1, 1]} : vector<2x64xf32> to vector<2x16xf32>
    %158 = vector.extract_strided_slice %156 {offsets = [0, 16], sizes = [2, 32], strides = [1, 1]} : vector<2x64xf32> to vector<2x32xf32>
    %159 = vector.shape_cast %158 : vector<2x32xf32> to vector<2x4x8xf32>
    %160 = vector.extract_strided_slice %156 {offsets = [0, 48], sizes = [2, 16], strides = [1, 1]} : vector<2x64xf32> to vector<2x16xf32>
    %161 = vector.extract_strided_slice %159 {offsets = [0, 0, 0], sizes = [2, 2, 8], strides = [1, 1, 1]} : vector<2x4x8xf32> to vector<2x2x8xf32>
    %cst_76 = arith.constant dense<0xFF800000> : vector<2x2xf32>
    %162 = vector.multi_reduction <maximumf>, %161, %cst_76 [2] : vector<2x2x8xf32> to vector<2x2xf32>
    %163 = vector.shape_cast %162 : vector<2x2xf32> to vector<2x2x1xf32>
    %164 = vector.broadcast %163 : vector<2x2x1xf32> to vector<2x2x8xf32>
    %165 = arith.subf %161, %164 : vector<2x2x8xf32>
    %166 = math.exp %165 : vector<2x2x8xf32>
    %cst_77 = arith.constant dense<0.000000e+00> : vector<2x2xf32>
    %167 = vector.multi_reduction <add>, %166, %cst_77 [2] : vector<2x2x8xf32> to vector<2x2xf32>
    %168 = vector.shape_cast %167 : vector<2x2xf32> to vector<2x2x1xf32>
    %169 = tpu.reciprocal %168 {approx = true} : vector<2x2x1xf32> -> vector<2x2x1xf32>
    %170 = vector.broadcast %169 : vector<2x2x1xf32> to vector<2x2x8xf32>
    %171 = arith.mulf %166, %170 : vector<2x2x8xf32>
    %172 = arith.truncf %171 : vector<2x2x8xf32> to vector<2x2x8xbf16>
    %173 = arith.truncf %86 : vector<2x8x16xf32> to vector<2x8x16xbf16>
    "tpu.trace_start"() <{level = 10 : i32, message = "bhm,bmd->bhd"}> : () -> ()
    %cst_78 = arith.constant dense<0.000000e+00> : vector<2x2x16xf32>
    %174 = tpu.matmul %172, %173, %cst_78 {dimension_numbers = #tpu.dot_dimension_numbers<[2], [1], [1], [2], [0, 0, 0, 1, 1, 2], [0], [0]>} : vector<2x2x8xbf16>, vector<2x8x16xbf16>, vector<2x2x16xf32> -> vector<2x2x16xf32>
    "tpu.trace_stop"() : () -> ()
    %175 = vector.shape_cast %174 : vector<2x2x16xf32> to vector<2x32xf32>
    %176 = arith.truncf %175 : vector<2x32xf32> to vector<2x32xbf16>
    %cst_79 = arith.constant dense<0.000000e+00> : vector<2x16xf32>
    %177 = tpu.matmul %176, %5, %cst_79 {dimension_numbers = #tpu.dot_dimension_numbers<[1], [0], [0], [1], [0, 0, 1, 1], [], []>} : vector<2x32xbf16>, vector<32x16xbf16>, vector<2x16xf32> -> vector<2x16xf32>
    %178 = vector.extract_strided_slice %159 {offsets = [0, 2, 0], sizes = [2, 2, 8], strides = [1, 1, 1]} : vector<2x4x8xf32> to vector<2x2x8xf32>
    %179 = arith.negf %178 : vector<2x2x8xf32>
    %180 = math.exp %179 : vector<2x2x8xf32>
    %cst_80 = arith.constant 1.000000e+00 : f32
    %181 = vector.broadcast %cst_80 : f32 to vector<2x2x8xf32>
    %182 = arith.addf %181, %180 : vector<2x2x8xf32>
    %183 = arith.divf %181, %182 : vector<2x2x8xf32>
    %cst_81 = arith.constant dense<0.000000e+00> : vector<2x8xf32>
    %184 = vector.multi_reduction <add>, %183, %cst_81 [1] : vector<2x2x8xf32> to vector<2x8xf32>
    %cst_82 = arith.constant 2.000000e+00 : f32
    %185 = vector.broadcast %cst_82 : f32 to vector<2x8xf32>
    %186 = arith.divf %184, %185 : vector<2x8xf32>
    %cst_83 = arith.constant 9.990000e-01 : f32
    %187 = vector.broadcast %cst_83 : f32 to vector<2x8xf32>
    %188 = arith.mulf %187, %186 : vector<2x8xf32>
    %189 = vector.shape_cast %188 : vector<2x8xf32> to vector<2x8x1xf32>
    %cst_84 = arith.constant 1.000000e+00 : f32
    %190 = vector.broadcast %cst_84 : f32 to vector<2x8x1xf32>
    %191 = arith.subf %190, %189 : vector<2x8x1xf32>
    %192 = vector.broadcast %191 : vector<2x8x1xf32> to vector<2x8x16xf32>
    %193 = arith.mulf %86, %192 : vector<2x8x16xf32>
    %194 = vector.shape_cast %188 : vector<2x8xf32> to vector<2x8x1xf32>
    %195 = vector.shape_cast %160 : vector<2x16xf32> to vector<2x1x16xf32>
    %196 = vector.broadcast %194 : vector<2x8x1xf32> to vector<2x8x16xf32>
    %197 = vector.broadcast %195 : vector<2x1x16xf32> to vector<2x8x16xf32>
    %198 = arith.mulf %196, %197 : vector<2x8x16xf32>
    %199 = arith.addf %193, %198 : vector<2x8x16xf32>
    %200 = vector.broadcast %152 : vector<2x1x1xf32> to vector<2x8x16xf32>
    %201 = arith.mulf %200, %86 : vector<2x8x16xf32>
    %cst_85 = arith.constant 1.000000e+00 : f32
    %202 = vector.broadcast %cst_85 : f32 to vector<2x1x1xf32>
    %203 = arith.subf %202, %152 : vector<2x1x1xf32>
    %204 = vector.broadcast %203 : vector<2x1x1xf32> to vector<2x8x16xf32>
    %205 = arith.mulf %204, %199 : vector<2x8x16xf32>
    %206 = arith.addf %201, %205 : vector<2x8x16xf32>
    %207 = arith.addf %157, %177 : vector<2x16xf32>
    %208 = arith.truncf %207 : vector<2x16xf32> to vector<2x16xbf16>
    %cst_86 = arith.constant dense<0.000000e+00> : vector<2x128xf32>
    %209 = tpu.matmul %208, %7, %cst_86 {dimension_numbers = #tpu.dot_dimension_numbers<[1], [0], [0], [1], [0, 0, 1, 1], [], []>} : vector<2x16xbf16>, vector<16x128xbf16>, vector<2x128xf32> -> vector<2x128xf32>
    %210 = vector.broadcast %9 : vector<1x128xf32> to vector<2x128xf32>
    %211 = arith.addf %209, %210 : vector<2x128xf32>
    %212 = vector.extract_strided_slice %211 {offsets = [0, 0], sizes = [2, 64], strides = [1, 1]} : vector<2x128xf32> to vector<2x64xf32>
    %213 = vector.extract_strided_slice %211 {offsets = [0, 64], sizes = [2, 64], strides = [1, 1]} : vector<2x128xf32> to vector<2x64xf32>
    %cst_87 = arith.constant 0.000000e+00 : f32
    %214 = vector.broadcast %cst_87 : f32 to vector<2x64xf32>
    %215 = arith.maximumf %213, %214 : vector<2x64xf32>
    %216 = arith.truncf %215 : vector<2x64xf32> to vector<2x64xbf16>
    %217 = arith.addf %151, %212 : vector<2x64xf32>
    %cst_88 = arith.constant dense<0.000000e+00> : vector<2x64xf32>
    %218 = tpu.matmul %216, %11, %cst_88 {dimension_numbers = #tpu.dot_dimension_numbers<[1], [0], [0], [1], [0, 0, 1, 1], [], []>} : vector<2x64xbf16>, vector<64x64xbf16>, vector<2x64xf32> -> vector<2x64xf32>
    %219 = arith.addf %217, %218 : vector<2x64xf32>
    %220 = arith.truncf %219 : vector<2x64xf32> to vector<2x64xbf16>
    %cst_89 = arith.constant dense<0.000000e+00> : vector<2x64xf32>
    %221 = tpu.matmul %220, %13, %cst_89 {dimension_numbers = #tpu.dot_dimension_numbers<[1], [0], [0], [1], [0, 0, 1, 1], [], []>} : vector<2x64xbf16>, vector<64x64xbf16>, vector<2x64xf32> -> vector<2x64xf32>
    %222 = vector.broadcast %15 : vector<1x64xf32> to vector<2x64xf32>
    %223 = arith.addf %221, %222 : vector<2x64xf32>
    %224 = vector.extract_strided_slice %223 {offsets = [0, 0], sizes = [2, 16], strides = [1, 1]} : vector<2x64xf32> to vector<2x16xf32>
    %225 = vector.extract_strided_slice %223 {offsets = [0, 16], sizes = [2, 32], strides = [1, 1]} : vector<2x64xf32> to vector<2x32xf32>
    %226 = vector.shape_cast %225 : vector<2x32xf32> to vector<2x4x8xf32>
    %227 = vector.extract_strided_slice %223 {offsets = [0, 48], sizes = [2, 16], strides = [1, 1]} : vector<2x64xf32> to vector<2x16xf32>
    %228 = vector.extract_strided_slice %226 {offsets = [0, 0, 0], sizes = [2, 2, 8], strides = [1, 1, 1]} : vector<2x4x8xf32> to vector<2x2x8xf32>
    %cst_90 = arith.constant dense<0xFF800000> : vector<2x2xf32>
    %229 = vector.multi_reduction <maximumf>, %228, %cst_90 [2] : vector<2x2x8xf32> to vector<2x2xf32>
    %230 = vector.shape_cast %229 : vector<2x2xf32> to vector<2x2x1xf32>
    %231 = vector.broadcast %230 : vector<2x2x1xf32> to vector<2x2x8xf32>
    %232 = arith.subf %228, %231 : vector<2x2x8xf32>
    %233 = math.exp %232 : vector<2x2x8xf32>
    %cst_91 = arith.constant dense<0.000000e+00> : vector<2x2xf32>
    %234 = vector.multi_reduction <add>, %233, %cst_91 [2] : vector<2x2x8xf32> to vector<2x2xf32>
    %235 = vector.shape_cast %234 : vector<2x2xf32> to vector<2x2x1xf32>
    %236 = tpu.reciprocal %235 {approx = true} : vector<2x2x1xf32> -> vector<2x2x1xf32>
    %237 = vector.broadcast %236 : vector<2x2x1xf32> to vector<2x2x8xf32>
    %238 = arith.mulf %233, %237 : vector<2x2x8xf32>
    %239 = arith.truncf %238 : vector<2x2x8xf32> to vector<2x2x8xbf16>
    %240 = arith.truncf %135 : vector<2x8x16xf32> to vector<2x8x16xbf16>
    "tpu.trace_start"() <{level = 10 : i32, message = "bhm,bmd->bhd"}> : () -> ()
    %cst_92 = arith.constant dense<0.000000e+00> : vector<2x2x16xf32>
    %241 = tpu.matmul %239, %240, %cst_92 {dimension_numbers = #tpu.dot_dimension_numbers<[2], [1], [1], [2], [0, 0, 0, 1, 1, 2], [0], [0]>} : vector<2x2x8xbf16>, vector<2x8x16xbf16>, vector<2x2x16xf32> -> vector<2x2x16xf32>
    "tpu.trace_stop"() : () -> ()
    %242 = vector.shape_cast %241 : vector<2x2x16xf32> to vector<2x32xf32>
    %243 = arith.truncf %242 : vector<2x32xf32> to vector<2x32xbf16>
    %cst_93 = arith.constant dense<0.000000e+00> : vector<2x16xf32>
    %244 = tpu.matmul %243, %17, %cst_93 {dimension_numbers = #tpu.dot_dimension_numbers<[1], [0], [0], [1], [0, 0, 1, 1], [], []>} : vector<2x32xbf16>, vector<32x16xbf16>, vector<2x16xf32> -> vector<2x16xf32>
    %245 = vector.extract_strided_slice %226 {offsets = [0, 2, 0], sizes = [2, 2, 8], strides = [1, 1, 1]} : vector<2x4x8xf32> to vector<2x2x8xf32>
    %246 = arith.negf %245 : vector<2x2x8xf32>
    %247 = math.exp %246 : vector<2x2x8xf32>
    %cst_94 = arith.constant 1.000000e+00 : f32
    %248 = vector.broadcast %cst_94 : f32 to vector<2x2x8xf32>
    %249 = arith.addf %248, %247 : vector<2x2x8xf32>
    %250 = arith.divf %248, %249 : vector<2x2x8xf32>
    %cst_95 = arith.constant dense<0.000000e+00> : vector<2x8xf32>
    %251 = vector.multi_reduction <add>, %250, %cst_95 [1] : vector<2x2x8xf32> to vector<2x8xf32>
    %cst_96 = arith.constant 2.000000e+00 : f32
    %252 = vector.broadcast %cst_96 : f32 to vector<2x8xf32>
    %253 = arith.divf %251, %252 : vector<2x8xf32>
    %cst_97 = arith.constant 9.990000e-01 : f32
    %254 = vector.broadcast %cst_97 : f32 to vector<2x8xf32>
    %255 = arith.mulf %254, %253 : vector<2x8xf32>
    %256 = vector.shape_cast %255 : vector<2x8xf32> to vector<2x8x1xf32>
    %cst_98 = arith.constant 1.000000e+00 : f32
    %257 = vector.broadcast %cst_98 : f32 to vector<2x8x1xf32>
    %258 = arith.subf %257, %256 : vector<2x8x1xf32>
    %259 = vector.broadcast %258 : vector<2x8x1xf32> to vector<2x8x16xf32>
    %260 = arith.mulf %135, %259 : vector<2x8x16xf32>
    %261 = vector.shape_cast %255 : vector<2x8xf32> to vector<2x8x1xf32>
    %262 = vector.shape_cast %227 : vector<2x16xf32> to vector<2x1x16xf32>
    %263 = vector.broadcast %261 : vector<2x8x1xf32> to vector<2x8x16xf32>
    %264 = vector.broadcast %262 : vector<2x1x16xf32> to vector<2x8x16xf32>
    %265 = arith.mulf %263, %264 : vector<2x8x16xf32>
    %266 = arith.addf %260, %265 : vector<2x8x16xf32>
    %267 = vector.broadcast %152 : vector<2x1x1xf32> to vector<2x8x16xf32>
    %268 = arith.mulf %267, %135 : vector<2x8x16xf32>
    %cst_99 = arith.constant 1.000000e+00 : f32
    %269 = vector.broadcast %cst_99 : f32 to vector<2x1x1xf32>
    %270 = arith.subf %269, %152 : vector<2x1x1xf32>
    %271 = vector.broadcast %270 : vector<2x1x1xf32> to vector<2x8x16xf32>
    %272 = arith.mulf %271, %266 : vector<2x8x16xf32>
    %273 = arith.addf %268, %272 : vector<2x8x16xf32>
    %274 = arith.addf %224, %244 : vector<2x16xf32>
    %275 = arith.truncf %274 : vector<2x16xf32> to vector<2x16xbf16>
    %cst_100 = arith.constant dense<0.000000e+00> : vector<2x128xf32>
    %276 = tpu.matmul %275, %19, %cst_100 {dimension_numbers = #tpu.dot_dimension_numbers<[1], [0], [0], [1], [0, 0, 1, 1], [], []>} : vector<2x16xbf16>, vector<16x128xbf16>, vector<2x128xf32> -> vector<2x128xf32>
    %277 = vector.broadcast %21 : vector<1x128xf32> to vector<2x128xf32>
    %278 = arith.addf %276, %277 : vector<2x128xf32>
    %279 = vector.extract_strided_slice %278 {offsets = [0, 0], sizes = [2, 64], strides = [1, 1]} : vector<2x128xf32> to vector<2x64xf32>
    %280 = vector.extract_strided_slice %278 {offsets = [0, 64], sizes = [2, 64], strides = [1, 1]} : vector<2x128xf32> to vector<2x64xf32>
    %cst_101 = arith.constant 0.000000e+00 : f32
    %281 = vector.broadcast %cst_101 : f32 to vector<2x64xf32>
    %282 = arith.maximumf %280, %281 : vector<2x64xf32>
    %283 = arith.truncf %282 : vector<2x64xf32> to vector<2x64xbf16>
    %284 = arith.addf %219, %279 : vector<2x64xf32>
    %cst_102 = arith.constant dense<0.000000e+00> : vector<2x64xf32>
    %285 = tpu.matmul %283, %23, %cst_102 {dimension_numbers = #tpu.dot_dimension_numbers<[1], [0], [0], [1], [0, 0, 1, 1], [], []>} : vector<2x64xbf16>, vector<64x64xbf16>, vector<2x64xf32> -> vector<2x64xf32>
    %286 = arith.addf %284, %285 : vector<2x64xf32>
    %287 = arith.truncf %286 : vector<2x64xf32> to vector<2x64xbf16>
    %cst_103 = arith.constant dense<0.000000e+00> : vector<2x64xf32>
    %288 = tpu.matmul %287, %137, %cst_103 {dimension_numbers = #tpu.dot_dimension_numbers<[1], [0], [0], [1], [0, 0, 1, 1], [], []>} : vector<2x64xbf16>, vector<64x64xbf16>, vector<2x64xf32> -> vector<2x64xf32>
    %289 = vector.broadcast %138 : vector<1x64xf32> to vector<2x64xf32>
    %290 = arith.addf %288, %289 : vector<2x64xf32>
    %cst_104 = arith.constant dense<0xFF800000> : vector<2xf32>
    %291 = vector.multi_reduction <maximumf>, %290, %cst_104 [1] : vector<2x64xf32> to vector<2xf32>
    %292 = vector.shape_cast %291 : vector<2xf32> to vector<2x1xf32>
    %293 = vector.broadcast %292 : vector<2x1xf32> to vector<2x64xf32>
    %294 = arith.cmpf oge, %290, %293 : vector<2x64xf32>
    %c64_i32 = arith.constant 64 : i32
    %295 = vector.broadcast %c64_i32 : i32 to vector<2x64xi32>
    %296 = arith.select %294, %139, %295 : vector<2x64xi1>, vector<2x64xi32>
    %cst_105 = arith.constant dense<2147483647> : vector<2xi32>
    %297 = vector.multi_reduction <minsi>, %296, %cst_105 [1] : vector<2x64xi32> to vector<2xi32>
    %298 = vector.shape_cast %297 : vector<2xi32> to vector<2x1xi32>
    %c3_i32 = arith.constant 3 : i32
    %299 = vector.broadcast %c3_i32 : i32 to vector<2x1xi32>
    %300 = arith.cmpi eq, %298, %299 : vector<2x1xi32>
    %301 = arith.extui %300 : vector<2x1xi1> to vector<2x1xi32>
    %302 = arith.maxsi %141, %301 : vector<2x1xi32>
    %c0_i32_106 = arith.constant 0 : i32
    %303 = vector.broadcast %c0_i32_106 : i32 to vector<2x1xi32>
    %304 = arith.cmpi sgt, %302, %303 : vector<2x1xi32>
    %305 = arith.extui %304 : vector<2x1xi1> to vector<2x1xi32>
    %306 = arith.sitofp %305 : vector<2x1xi32> to vector<2x1xf32>
    %307 = vector.broadcast %298 : vector<2x1xi32> to vector<2x64xi32>
    %308 = arith.cmpi eq, %307, %139 : vector<2x64xi32>
    %309 = arith.extui %308 : vector<2x64xi1> to vector<2x64xi32>
    %310 = arith.sitofp %309 : vector<2x64xi32> to vector<2x64xf32>
    %311 = arith.truncf %310 : vector<2x64xf32> to vector<2x64xbf16>
    %cst_107 = arith.constant dense<0.000000e+00> : vector<2x64xf32>
    %312 = tpu.matmul %311, %136, %cst_107 {dimension_numbers = #tpu.dot_dimension_numbers<[1], [0], [0], [1], [0, 0, 1, 1], [], []>} : vector<2x64xbf16>, vector<64x64xbf16>, vector<2x64xf32> -> vector<2x64xf32>
    %313 = vector.shape_cast %306 : vector<2x1xf32> to vector<2x1x1xf32>
    %314 = arith.truncf %312 : vector<2x64xf32> to vector<2x64xbf16>
    %cst_108 = arith.constant dense<0.000000e+00> : vector<2x64xf32>
    %315 = tpu.matmul %314, %1, %cst_108 {dimension_numbers = #tpu.dot_dimension_numbers<[1], [0], [0], [1], [0, 0, 1, 1], [], []>} : vector<2x64xbf16>, vector<64x64xbf16>, vector<2x64xf32> -> vector<2x64xf32>
    %316 = vector.broadcast %3 : vector<1x64xf32> to vector<2x64xf32>
    %317 = arith.addf %315, %316 : vector<2x64xf32>
    %318 = vector.extract_strided_slice %317 {offsets = [0, 0], sizes = [2, 16], strides = [1, 1]} : vector<2x64xf32> to vector<2x16xf32>
    %319 = vector.extract_strided_slice %317 {offsets = [0, 16], sizes = [2, 32], strides = [1, 1]} : vector<2x64xf32> to vector<2x32xf32>
    %320 = vector.shape_cast %319 : vector<2x32xf32> to vector<2x4x8xf32>
    %321 = vector.extract_strided_slice %317 {offsets = [0, 48], sizes = [2, 16], strides = [1, 1]} : vector<2x64xf32> to vector<2x16xf32>
    %322 = vector.extract_strided_slice %320 {offsets = [0, 0, 0], sizes = [2, 2, 8], strides = [1, 1, 1]} : vector<2x4x8xf32> to vector<2x2x8xf32>
    %cst_109 = arith.constant dense<0xFF800000> : vector<2x2xf32>
    %323 = vector.multi_reduction <maximumf>, %322, %cst_109 [2] : vector<2x2x8xf32> to vector<2x2xf32>
    %324 = vector.shape_cast %323 : vector<2x2xf32> to vector<2x2x1xf32>
    %325 = vector.broadcast %324 : vector<2x2x1xf32> to vector<2x2x8xf32>
    %326 = arith.subf %322, %325 : vector<2x2x8xf32>
    %327 = math.exp %326 : vector<2x2x8xf32>
    %cst_110 = arith.constant dense<0.000000e+00> : vector<2x2xf32>
    %328 = vector.multi_reduction <add>, %327, %cst_110 [2] : vector<2x2x8xf32> to vector<2x2xf32>
    %329 = vector.shape_cast %328 : vector<2x2xf32> to vector<2x2x1xf32>
    %330 = tpu.reciprocal %329 {approx = true} : vector<2x2x1xf32> -> vector<2x2x1xf32>
    %331 = vector.broadcast %330 : vector<2x2x1xf32> to vector<2x2x8xf32>
    %332 = arith.mulf %327, %331 : vector<2x2x8xf32>
    %333 = arith.truncf %332 : vector<2x2x8xf32> to vector<2x2x8xbf16>
    %334 = arith.truncf %206 : vector<2x8x16xf32> to vector<2x8x16xbf16>
    "tpu.trace_start"() <{level = 10 : i32, message = "bhm,bmd->bhd"}> : () -> ()
    %cst_111 = arith.constant dense<0.000000e+00> : vector<2x2x16xf32>
    %335 = tpu.matmul %333, %334, %cst_111 {dimension_numbers = #tpu.dot_dimension_numbers<[2], [1], [1], [2], [0, 0, 0, 1, 1, 2], [0], [0]>} : vector<2x2x8xbf16>, vector<2x8x16xbf16>, vector<2x2x16xf32> -> vector<2x2x16xf32>
    "tpu.trace_stop"() : () -> ()
    %336 = vector.shape_cast %335 : vector<2x2x16xf32> to vector<2x32xf32>
    %337 = arith.truncf %336 : vector<2x32xf32> to vector<2x32xbf16>
    %cst_112 = arith.constant dense<0.000000e+00> : vector<2x16xf32>
    %338 = tpu.matmul %337, %5, %cst_112 {dimension_numbers = #tpu.dot_dimension_numbers<[1], [0], [0], [1], [0, 0, 1, 1], [], []>} : vector<2x32xbf16>, vector<32x16xbf16>, vector<2x16xf32> -> vector<2x16xf32>
    %339 = vector.extract_strided_slice %320 {offsets = [0, 2, 0], sizes = [2, 2, 8], strides = [1, 1, 1]} : vector<2x4x8xf32> to vector<2x2x8xf32>
    %340 = arith.negf %339 : vector<2x2x8xf32>
    %341 = math.exp %340 : vector<2x2x8xf32>
    %cst_113 = arith.constant 1.000000e+00 : f32
    %342 = vector.broadcast %cst_113 : f32 to vector<2x2x8xf32>
    %343 = arith.addf %342, %341 : vector<2x2x8xf32>
    %344 = arith.divf %342, %343 : vector<2x2x8xf32>
    %cst_114 = arith.constant dense<0.000000e+00> : vector<2x8xf32>
    %345 = vector.multi_reduction <add>, %344, %cst_114 [1] : vector<2x2x8xf32> to vector<2x8xf32>
    %cst_115 = arith.constant 2.000000e+00 : f32
    %346 = vector.broadcast %cst_115 : f32 to vector<2x8xf32>
    %347 = arith.divf %345, %346 : vector<2x8xf32>
    %cst_116 = arith.constant 9.990000e-01 : f32
    %348 = vector.broadcast %cst_116 : f32 to vector<2x8xf32>
    %349 = arith.mulf %348, %347 : vector<2x8xf32>
    %350 = vector.shape_cast %349 : vector<2x8xf32> to vector<2x8x1xf32>
    %cst_117 = arith.constant 1.000000e+00 : f32
    %351 = vector.broadcast %cst_117 : f32 to vector<2x8x1xf32>
    %352 = arith.subf %351, %350 : vector<2x8x1xf32>
    %353 = vector.broadcast %352 : vector<2x8x1xf32> to vector<2x8x16xf32>
    %354 = arith.mulf %206, %353 : vector<2x8x16xf32>
    %355 = vector.shape_cast %349 : vector<2x8xf32> to vector<2x8x1xf32>
    %356 = vector.shape_cast %321 : vector<2x16xf32> to vector<2x1x16xf32>
    %357 = vector.broadcast %355 : vector<2x8x1xf32> to vector<2x8x16xf32>
    %358 = vector.broadcast %356 : vector<2x1x16xf32> to vector<2x8x16xf32>
    %359 = arith.mulf %357, %358 : vector<2x8x16xf32>
    %360 = arith.addf %354, %359 : vector<2x8x16xf32>
    %361 = vector.broadcast %313 : vector<2x1x1xf32> to vector<2x8x16xf32>
    %362 = arith.mulf %361, %206 : vector<2x8x16xf32>
    %cst_118 = arith.constant 1.000000e+00 : f32
    %363 = vector.broadcast %cst_118 : f32 to vector<2x1x1xf32>
    %364 = arith.subf %363, %313 : vector<2x1x1xf32>
    %365 = vector.broadcast %364 : vector<2x1x1xf32> to vector<2x8x16xf32>
    %366 = arith.mulf %365, %360 : vector<2x8x16xf32>
    %367 = arith.addf %362, %366 : vector<2x8x16xf32>
    %368 = arith.addf %318, %338 : vector<2x16xf32>
    %369 = arith.truncf %368 : vector<2x16xf32> to vector<2x16xbf16>
    %cst_119 = arith.constant dense<0.000000e+00> : vector<2x128xf32>
    %370 = tpu.matmul %369, %7, %cst_119 {dimension_numbers = #tpu.dot_dimension_numbers<[1], [0], [0], [1], [0, 0, 1, 1], [], []>} : vector<2x16xbf16>, vector<16x128xbf16>, vector<2x128xf32> -> vector<2x128xf32>
    %371 = vector.broadcast %9 : vector<1x128xf32> to vector<2x128xf32>
    %372 = arith.addf %370, %371 : vector<2x128xf32>
    %373 = vector.extract_strided_slice %372 {offsets = [0, 0], sizes = [2, 64], strides = [1, 1]} : vector<2x128xf32> to vector<2x64xf32>
    %374 = vector.extract_strided_slice %372 {offsets = [0, 64], sizes = [2, 64], strides = [1, 1]} : vector<2x128xf32> to vector<2x64xf32>
    %cst_120 = arith.constant 0.000000e+00 : f32
    %375 = vector.broadcast %cst_120 : f32 to vector<2x64xf32>
    %376 = arith.maximumf %374, %375 : vector<2x64xf32>
    %377 = arith.truncf %376 : vector<2x64xf32> to vector<2x64xbf16>
    %378 = arith.addf %312, %373 : vector<2x64xf32>
    %cst_121 = arith.constant dense<0.000000e+00> : vector<2x64xf32>
    %379 = tpu.matmul %377, %11, %cst_121 {dimension_numbers = #tpu.dot_dimension_numbers<[1], [0], [0], [1], [0, 0, 1, 1], [], []>} : vector<2x64xbf16>, vector<64x64xbf16>, vector<2x64xf32> -> vector<2x64xf32>
    %380 = arith.addf %378, %379 : vector<2x64xf32>
    %381 = arith.truncf %380 : vector<2x64xf32> to vector<2x64xbf16>
    %cst_122 = arith.constant dense<0.000000e+00> : vector<2x64xf32>
    %382 = tpu.matmul %381, %13, %cst_122 {dimension_numbers = #tpu.dot_dimension_numbers<[1], [0], [0], [1], [0, 0, 1, 1], [], []>} : vector<2x64xbf16>, vector<64x64xbf16>, vector<2x64xf32> -> vector<2x64xf32>
    %383 = vector.broadcast %15 : vector<1x64xf32> to vector<2x64xf32>
    %384 = arith.addf %382, %383 : vector<2x64xf32>
    %385 = vector.extract_strided_slice %384 {offsets = [0, 0], sizes = [2, 16], strides = [1, 1]} : vector<2x64xf32> to vector<2x16xf32>
    %386 = vector.extract_strided_slice %384 {offsets = [0, 16], sizes = [2, 32], strides = [1, 1]} : vector<2x64xf32> to vector<2x32xf32>
    %387 = vector.shape_cast %386 : vector<2x32xf32> to vector<2x4x8xf32>
    %388 = vector.extract_strided_slice %384 {offsets = [0, 48], sizes = [2, 16], strides = [1, 1]} : vector<2x64xf32> to vector<2x16xf32>
    %389 = vector.extract_strided_slice %387 {offsets = [0, 0, 0], sizes = [2, 2, 8], strides = [1, 1, 1]} : vector<2x4x8xf32> to vector<2x2x8xf32>
    %cst_123 = arith.constant dense<0xFF800000> : vector<2x2xf32>
    %390 = vector.multi_reduction <maximumf>, %389, %cst_123 [2] : vector<2x2x8xf32> to vector<2x2xf32>
    %391 = vector.shape_cast %390 : vector<2x2xf32> to vector<2x2x1xf32>
    %392 = vector.broadcast %391 : vector<2x2x1xf32> to vector<2x2x8xf32>
    %393 = arith.subf %389, %392 : vector<2x2x8xf32>
    %394 = math.exp %393 : vector<2x2x8xf32>
    %cst_124 = arith.constant dense<0.000000e+00> : vector<2x2xf32>
    %395 = vector.multi_reduction <add>, %394, %cst_124 [2] : vector<2x2x8xf32> to vector<2x2xf32>
    %396 = vector.shape_cast %395 : vector<2x2xf32> to vector<2x2x1xf32>
    %397 = tpu.reciprocal %396 {approx = true} : vector<2x2x1xf32> -> vector<2x2x1xf32>
    %398 = vector.broadcast %397 : vector<2x2x1xf32> to vector<2x2x8xf32>
    %399 = arith.mulf %394, %398 : vector<2x2x8xf32>
    %400 = arith.truncf %399 : vector<2x2x8xf32> to vector<2x2x8xbf16>
    %401 = arith.truncf %273 : vector<2x8x16xf32> to vector<2x8x16xbf16>
    "tpu.trace_start"() <{level = 10 : i32, message = "bhm,bmd->bhd"}> : () -> ()
    %cst_125 = arith.constant dense<0.000000e+00> : vector<2x2x16xf32>
    %402 = tpu.matmul %400, %401, %cst_125 {dimension_numbers = #tpu.dot_dimension_numbers<[2], [1], [1], [2], [0, 0, 0, 1, 1, 2], [0], [0]>} : vector<2x2x8xbf16>, vector<2x8x16xbf16>, vector<2x2x16xf32> -> vector<2x2x16xf32>
    "tpu.trace_stop"() : () -> ()
    %403 = vector.shape_cast %402 : vector<2x2x16xf32> to vector<2x32xf32>
    %404 = arith.truncf %403 : vector<2x32xf32> to vector<2x32xbf16>
    %cst_126 = arith.constant dense<0.000000e+00> : vector<2x16xf32>
    %405 = tpu.matmul %404, %17, %cst_126 {dimension_numbers = #tpu.dot_dimension_numbers<[1], [0], [0], [1], [0, 0, 1, 1], [], []>} : vector<2x32xbf16>, vector<32x16xbf16>, vector<2x16xf32> -> vector<2x16xf32>
    %406 = vector.extract_strided_slice %387 {offsets = [0, 2, 0], sizes = [2, 2, 8], strides = [1, 1, 1]} : vector<2x4x8xf32> to vector<2x2x8xf32>
    %407 = arith.negf %406 : vector<2x2x8xf32>
    %408 = math.exp %407 : vector<2x2x8xf32>
    %cst_127 = arith.constant 1.000000e+00 : f32
    %409 = vector.broadcast %cst_127 : f32 to vector<2x2x8xf32>
    %410 = arith.addf %409, %408 : vector<2x2x8xf32>
    %411 = arith.divf %409, %410 : vector<2x2x8xf32>
    %cst_128 = arith.constant dense<0.000000e+00> : vector<2x8xf32>
    %412 = vector.multi_reduction <add>, %411, %cst_128 [1] : vector<2x2x8xf32> to vector<2x8xf32>
    %cst_129 = arith.constant 2.000000e+00 : f32
    %413 = vector.broadcast %cst_129 : f32 to vector<2x8xf32>
    %414 = arith.divf %412, %413 : vector<2x8xf32>
    %cst_130 = arith.constant 9.990000e-01 : f32
    %415 = vector.broadcast %cst_130 : f32 to vector<2x8xf32>
    %416 = arith.mulf %415, %414 : vector<2x8xf32>
    %417 = vector.shape_cast %416 : vector<2x8xf32> to vector<2x8x1xf32>
    %cst_131 = arith.constant 1.000000e+00 : f32
    %418 = vector.broadcast %cst_131 : f32 to vector<2x8x1xf32>
    %419 = arith.subf %418, %417 : vector<2x8x1xf32>
    %420 = vector.broadcast %419 : vector<2x8x1xf32> to vector<2x8x16xf32>
    %421 = arith.mulf %273, %420 : vector<2x8x16xf32>
    %422 = vector.shape_cast %416 : vector<2x8xf32> to vector<2x8x1xf32>
    %423 = vector.shape_cast %388 : vector<2x16xf32> to vector<2x1x16xf32>
    %424 = vector.broadcast %422 : vector<2x8x1xf32> to vector<2x8x16xf32>
    %425 = vector.broadcast %423 : vector<2x1x16xf32> to vector<2x8x16xf32>
    %426 = arith.mulf %424, %425 : vector<2x8x16xf32>
    %427 = arith.addf %421, %426 : vector<2x8x16xf32>
    %428 = vector.broadcast %313 : vector<2x1x1xf32> to vector<2x8x16xf32>
    %429 = arith.mulf %428, %273 : vector<2x8x16xf32>
    %cst_132 = arith.constant 1.000000e+00 : f32
    %430 = vector.broadcast %cst_132 : f32 to vector<2x1x1xf32>
    %431 = arith.subf %430, %313 : vector<2x1x1xf32>
    %432 = vector.broadcast %431 : vector<2x1x1xf32> to vector<2x8x16xf32>
    %433 = arith.mulf %432, %427 : vector<2x8x16xf32>
    %434 = arith.addf %429, %433 : vector<2x8x16xf32>
    %435 = arith.addf %385, %405 : vector<2x16xf32>
    %436 = arith.truncf %435 : vector<2x16xf32> to vector<2x16xbf16>
    %cst_133 = arith.constant dense<0.000000e+00> : vector<2x128xf32>
    %437 = tpu.matmul %436, %19, %cst_133 {dimension_numbers = #tpu.dot_dimension_numbers<[1], [0], [0], [1], [0, 0, 1, 1], [], []>} : vector<2x16xbf16>, vector<16x128xbf16>, vector<2x128xf32> -> vector<2x128xf32>
    %438 = vector.broadcast %21 : vector<1x128xf32> to vector<2x128xf32>
    %439 = arith.addf %437, %438 : vector<2x128xf32>
    %440 = vector.extract_strided_slice %439 {offsets = [0, 0], sizes = [2, 64], strides = [1, 1]} : vector<2x128xf32> to vector<2x64xf32>
    %441 = vector.extract_strided_slice %439 {offsets = [0, 64], sizes = [2, 64], strides = [1, 1]} : vector<2x128xf32> to vector<2x64xf32>
    %cst_134 = arith.constant 0.000000e+00 : f32
    %442 = vector.broadcast %cst_134 : f32 to vector<2x64xf32>
    %443 = arith.maximumf %441, %442 : vector<2x64xf32>
    %444 = arith.truncf %443 : vector<2x64xf32> to vector<2x64xbf16>
    %445 = arith.addf %380, %440 : vector<2x64xf32>
    %cst_135 = arith.constant dense<0.000000e+00> : vector<2x64xf32>
    %446 = tpu.matmul %444, %23, %cst_135 {dimension_numbers = #tpu.dot_dimension_numbers<[1], [0], [0], [1], [0, 0, 1, 1], [], []>} : vector<2x64xbf16>, vector<64x64xbf16>, vector<2x64xf32> -> vector<2x64xf32>
    %447 = arith.addf %445, %446 : vector<2x64xf32>
    %448 = arith.truncf %447 : vector<2x64xf32> to vector<2x64xbf16>
    %cst_136 = arith.constant dense<0.000000e+00> : vector<2x64xf32>
    %449 = tpu.matmul %448, %137, %cst_136 {dimension_numbers = #tpu.dot_dimension_numbers<[1], [0], [0], [1], [0, 0, 1, 1], [], []>} : vector<2x64xbf16>, vector<64x64xbf16>, vector<2x64xf32> -> vector<2x64xf32>
    %450 = vector.broadcast %138 : vector<1x64xf32> to vector<2x64xf32>
    %451 = arith.addf %449, %450 : vector<2x64xf32>
    %cst_137 = arith.constant dense<0xFF800000> : vector<2xf32>
    %452 = vector.multi_reduction <maximumf>, %451, %cst_137 [1] : vector<2x64xf32> to vector<2xf32>
    %453 = vector.shape_cast %452 : vector<2xf32> to vector<2x1xf32>
    %454 = vector.broadcast %453 : vector<2x1xf32> to vector<2x64xf32>
    %455 = arith.cmpf oge, %451, %454 : vector<2x64xf32>
    %c64_i32_138 = arith.constant 64 : i32
    %456 = vector.broadcast %c64_i32_138 : i32 to vector<2x64xi32>
    %457 = arith.select %455, %139, %456 : vector<2x64xi1>, vector<2x64xi32>
    %cst_139 = arith.constant dense<2147483647> : vector<2xi32>
    %458 = vector.multi_reduction <minsi>, %457, %cst_139 [1] : vector<2x64xi32> to vector<2xi32>
    %459 = vector.shape_cast %458 : vector<2xi32> to vector<2x1xi32>
    %c3_i32_140 = arith.constant 3 : i32
    %460 = vector.broadcast %c3_i32_140 : i32 to vector<2x1xi32>
    %461 = arith.cmpi eq, %459, %460 : vector<2x1xi32>
    %462 = arith.extui %461 : vector<2x1xi1> to vector<2x1xi32>
    %463 = arith.maxsi %302, %462 : vector<2x1xi32>
    %c0_i32_141 = arith.constant 0 : i32
    %464 = vector.broadcast %c0_i32_141 : i32 to vector<2x1xi32>
    %465 = arith.cmpi sgt, %463, %464 : vector<2x1xi32>
    %466 = arith.extui %465 : vector<2x1xi1> to vector<2x1xi32>
    %467 = arith.sitofp %466 : vector<2x1xi32> to vector<2x1xf32>
    %468 = vector.broadcast %459 : vector<2x1xi32> to vector<2x64xi32>
    %469 = arith.cmpi eq, %468, %139 : vector<2x64xi32>
    %470 = arith.extui %469 : vector<2x64xi1> to vector<2x64xi32>
    %471 = arith.sitofp %470 : vector<2x64xi32> to vector<2x64xf32>
    %472 = arith.truncf %471 : vector<2x64xf32> to vector<2x64xbf16>
    %cst_142 = arith.constant dense<0.000000e+00> : vector<2x64xf32>
    %473 = tpu.matmul %472, %136, %cst_142 {dimension_numbers = #tpu.dot_dimension_numbers<[1], [0], [0], [1], [0, 0, 1, 1], [], []>} : vector<2x64xbf16>, vector<64x64xbf16>, vector<2x64xf32> -> vector<2x64xf32>
    %474 = vector.shape_cast %467 : vector<2x1xf32> to vector<2x1x1xf32>
    %475 = arith.truncf %473 : vector<2x64xf32> to vector<2x64xbf16>
    %cst_143 = arith.constant dense<0.000000e+00> : vector<2x64xf32>
    %476 = tpu.matmul %475, %1, %cst_143 {dimension_numbers = #tpu.dot_dimension_numbers<[1], [0], [0], [1], [0, 0, 1, 1], [], []>} : vector<2x64xbf16>, vector<64x64xbf16>, vector<2x64xf32> -> vector<2x64xf32>
    %477 = vector.broadcast %3 : vector<1x64xf32> to vector<2x64xf32>
    %478 = arith.addf %476, %477 : vector<2x64xf32>
    %479 = vector.extract_strided_slice %478 {offsets = [0, 0], sizes = [2, 16], strides = [1, 1]} : vector<2x64xf32> to vector<2x16xf32>
    %480 = vector.extract_strided_slice %478 {offsets = [0, 16], sizes = [2, 32], strides = [1, 1]} : vector<2x64xf32> to vector<2x32xf32>
    %481 = vector.shape_cast %480 : vector<2x32xf32> to vector<2x4x8xf32>
    %482 = vector.extract_strided_slice %478 {offsets = [0, 48], sizes = [2, 16], strides = [1, 1]} : vector<2x64xf32> to vector<2x16xf32>
    %483 = vector.extract_strided_slice %481 {offsets = [0, 0, 0], sizes = [2, 2, 8], strides = [1, 1, 1]} : vector<2x4x8xf32> to vector<2x2x8xf32>
    %cst_144 = arith.constant dense<0xFF800000> : vector<2x2xf32>
    %484 = vector.multi_reduction <maximumf>, %483, %cst_144 [2] : vector<2x2x8xf32> to vector<2x2xf32>
    %485 = vector.shape_cast %484 : vector<2x2xf32> to vector<2x2x1xf32>
    %486 = vector.broadcast %485 : vector<2x2x1xf32> to vector<2x2x8xf32>
    %487 = arith.subf %483, %486 : vector<2x2x8xf32>
    %488 = math.exp %487 : vector<2x2x8xf32>
    %cst_145 = arith.constant dense<0.000000e+00> : vector<2x2xf32>
    %489 = vector.multi_reduction <add>, %488, %cst_145 [2] : vector<2x2x8xf32> to vector<2x2xf32>
    %490 = vector.shape_cast %489 : vector<2x2xf32> to vector<2x2x1xf32>
    %491 = tpu.reciprocal %490 {approx = true} : vector<2x2x1xf32> -> vector<2x2x1xf32>
    %492 = vector.broadcast %491 : vector<2x2x1xf32> to vector<2x2x8xf32>
    %493 = arith.mulf %488, %492 : vector<2x2x8xf32>
    %494 = arith.truncf %493 : vector<2x2x8xf32> to vector<2x2x8xbf16>
    %495 = arith.truncf %367 : vector<2x8x16xf32> to vector<2x8x16xbf16>
    "tpu.trace_start"() <{level = 10 : i32, message = "bhm,bmd->bhd"}> : () -> ()
    %cst_146 = arith.constant dense<0.000000e+00> : vector<2x2x16xf32>
    %496 = tpu.matmul %494, %495, %cst_146 {dimension_numbers = #tpu.dot_dimension_numbers<[2], [1], [1], [2], [0, 0, 0, 1, 1, 2], [0], [0]>} : vector<2x2x8xbf16>, vector<2x8x16xbf16>, vector<2x2x16xf32> -> vector<2x2x16xf32>
    "tpu.trace_stop"() : () -> ()
    %497 = vector.shape_cast %496 : vector<2x2x16xf32> to vector<2x32xf32>
    %498 = arith.truncf %497 : vector<2x32xf32> to vector<2x32xbf16>
    %cst_147 = arith.constant dense<0.000000e+00> : vector<2x16xf32>
    %499 = tpu.matmul %498, %5, %cst_147 {dimension_numbers = #tpu.dot_dimension_numbers<[1], [0], [0], [1], [0, 0, 1, 1], [], []>} : vector<2x32xbf16>, vector<32x16xbf16>, vector<2x16xf32> -> vector<2x16xf32>
    %500 = vector.extract_strided_slice %481 {offsets = [0, 2, 0], sizes = [2, 2, 8], strides = [1, 1, 1]} : vector<2x4x8xf32> to vector<2x2x8xf32>
    %501 = arith.negf %500 : vector<2x2x8xf32>
    %502 = math.exp %501 : vector<2x2x8xf32>
    %cst_148 = arith.constant 1.000000e+00 : f32
    %503 = vector.broadcast %cst_148 : f32 to vector<2x2x8xf32>
    %504 = arith.addf %503, %502 : vector<2x2x8xf32>
    %505 = arith.divf %503, %504 : vector<2x2x8xf32>
    %cst_149 = arith.constant dense<0.000000e+00> : vector<2x8xf32>
    %506 = vector.multi_reduction <add>, %505, %cst_149 [1] : vector<2x2x8xf32> to vector<2x8xf32>
    %cst_150 = arith.constant 2.000000e+00 : f32
    %507 = vector.broadcast %cst_150 : f32 to vector<2x8xf32>
    %508 = arith.divf %506, %507 : vector<2x8xf32>
    %cst_151 = arith.constant 9.990000e-01 : f32
    %509 = vector.broadcast %cst_151 : f32 to vector<2x8xf32>
    %510 = arith.mulf %509, %508 : vector<2x8xf32>
    %511 = vector.shape_cast %510 : vector<2x8xf32> to vector<2x8x1xf32>
    %cst_152 = arith.constant 1.000000e+00 : f32
    %512 = vector.broadcast %cst_152 : f32 to vector<2x8x1xf32>
    %513 = arith.subf %512, %511 : vector<2x8x1xf32>
    %514 = vector.broadcast %513 : vector<2x8x1xf32> to vector<2x8x16xf32>
    %515 = arith.mulf %367, %514 : vector<2x8x16xf32>
    %516 = vector.shape_cast %510 : vector<2x8xf32> to vector<2x8x1xf32>
    %517 = vector.shape_cast %482 : vector<2x16xf32> to vector<2x1x16xf32>
    %518 = vector.broadcast %516 : vector<2x8x1xf32> to vector<2x8x16xf32>
    %519 = vector.broadcast %517 : vector<2x1x16xf32> to vector<2x8x16xf32>
    %520 = arith.mulf %518, %519 : vector<2x8x16xf32>
    %521 = arith.addf %515, %520 : vector<2x8x16xf32>
    %522 = vector.broadcast %474 : vector<2x1x1xf32> to vector<2x8x16xf32>
    %523 = arith.mulf %522, %367 : vector<2x8x16xf32>
    %cst_153 = arith.constant 1.000000e+00 : f32
    %524 = vector.broadcast %cst_153 : f32 to vector<2x1x1xf32>
    %525 = arith.subf %524, %474 : vector<2x1x1xf32>
    %526 = vector.broadcast %525 : vector<2x1x1xf32> to vector<2x8x16xf32>
    %527 = arith.mulf %526, %521 : vector<2x8x16xf32>
    %528 = arith.addf %523, %527 : vector<2x8x16xf32>
    %529 = arith.addf %479, %499 : vector<2x16xf32>
    %530 = arith.truncf %529 : vector<2x16xf32> to vector<2x16xbf16>
    %cst_154 = arith.constant dense<0.000000e+00> : vector<2x128xf32>
    %531 = tpu.matmul %530, %7, %cst_154 {dimension_numbers = #tpu.dot_dimension_numbers<[1], [0], [0], [1], [0, 0, 1, 1], [], []>} : vector<2x16xbf16>, vector<16x128xbf16>, vector<2x128xf32> -> vector<2x128xf32>
    %532 = vector.broadcast %9 : vector<1x128xf32> to vector<2x128xf32>
    %533 = arith.addf %531, %532 : vector<2x128xf32>
    %534 = vector.extract_strided_slice %533 {offsets = [0, 0], sizes = [2, 64], strides = [1, 1]} : vector<2x128xf32> to vector<2x64xf32>
    %535 = vector.extract_strided_slice %533 {offsets = [0, 64], sizes = [2, 64], strides = [1, 1]} : vector<2x128xf32> to vector<2x64xf32>
    %cst_155 = arith.constant 0.000000e+00 : f32
    %536 = vector.broadcast %cst_155 : f32 to vector<2x64xf32>
    %537 = arith.maximumf %535, %536 : vector<2x64xf32>
    %538 = arith.truncf %537 : vector<2x64xf32> to vector<2x64xbf16>
    %539 = arith.addf %473, %534 : vector<2x64xf32>
    %cst_156 = arith.constant dense<0.000000e+00> : vector<2x64xf32>
    %540 = tpu.matmul %538, %11, %cst_156 {dimension_numbers = #tpu.dot_dimension_numbers<[1], [0], [0], [1], [0, 0, 1, 1], [], []>} : vector<2x64xbf16>, vector<64x64xbf16>, vector<2x64xf32> -> vector<2x64xf32>
    %541 = arith.addf %539, %540 : vector<2x64xf32>
    %542 = arith.truncf %541 : vector<2x64xf32> to vector<2x64xbf16>
    %cst_157 = arith.constant dense<0.000000e+00> : vector<2x64xf32>
    %543 = tpu.matmul %542, %13, %cst_157 {dimension_numbers = #tpu.dot_dimension_numbers<[1], [0], [0], [1], [0, 0, 1, 1], [], []>} : vector<2x64xbf16>, vector<64x64xbf16>, vector<2x64xf32> -> vector<2x64xf32>
    %544 = vector.broadcast %15 : vector<1x64xf32> to vector<2x64xf32>
    %545 = arith.addf %543, %544 : vector<2x64xf32>
    %546 = vector.extract_strided_slice %545 {offsets = [0, 0], sizes = [2, 16], strides = [1, 1]} : vector<2x64xf32> to vector<2x16xf32>
    %547 = vector.extract_strided_slice %545 {offsets = [0, 16], sizes = [2, 32], strides = [1, 1]} : vector<2x64xf32> to vector<2x32xf32>
    %548 = vector.shape_cast %547 : vector<2x32xf32> to vector<2x4x8xf32>
    %549 = vector.extract_strided_slice %545 {offsets = [0, 48], sizes = [2, 16], strides = [1, 1]} : vector<2x64xf32> to vector<2x16xf32>
    %550 = vector.extract_strided_slice %548 {offsets = [0, 0, 0], sizes = [2, 2, 8], strides = [1, 1, 1]} : vector<2x4x8xf32> to vector<2x2x8xf32>
    %cst_158 = arith.constant dense<0xFF800000> : vector<2x2xf32>
    %551 = vector.multi_reduction <maximumf>, %550, %cst_158 [2] : vector<2x2x8xf32> to vector<2x2xf32>
    %552 = vector.shape_cast %551 : vector<2x2xf32> to vector<2x2x1xf32>
    %553 = vector.broadcast %552 : vector<2x2x1xf32> to vector<2x2x8xf32>
    %554 = arith.subf %550, %553 : vector<2x2x8xf32>
    %555 = math.exp %554 : vector<2x2x8xf32>
    %cst_159 = arith.constant dense<0.000000e+00> : vector<2x2xf32>
    %556 = vector.multi_reduction <add>, %555, %cst_159 [2] : vector<2x2x8xf32> to vector<2x2xf32>
    %557 = vector.shape_cast %556 : vector<2x2xf32> to vector<2x2x1xf32>
    %558 = tpu.reciprocal %557 {approx = true} : vector<2x2x1xf32> -> vector<2x2x1xf32>
    %559 = vector.broadcast %558 : vector<2x2x1xf32> to vector<2x2x8xf32>
    %560 = arith.mulf %555, %559 : vector<2x2x8xf32>
    %561 = arith.truncf %560 : vector<2x2x8xf32> to vector<2x2x8xbf16>
    %562 = arith.truncf %434 : vector<2x8x16xf32> to vector<2x8x16xbf16>
    "tpu.trace_start"() <{level = 10 : i32, message = "bhm,bmd->bhd"}> : () -> ()
    %cst_160 = arith.constant dense<0.000000e+00> : vector<2x2x16xf32>
    %563 = tpu.matmul %561, %562, %cst_160 {dimension_numbers = #tpu.dot_dimension_numbers<[2], [1], [1], [2], [0, 0, 0, 1, 1, 2], [0], [0]>} : vector<2x2x8xbf16>, vector<2x8x16xbf16>, vector<2x2x16xf32> -> vector<2x2x16xf32>
    "tpu.trace_stop"() : () -> ()
    %564 = vector.shape_cast %563 : vector<2x2x16xf32> to vector<2x32xf32>
    %565 = arith.truncf %564 : vector<2x32xf32> to vector<2x32xbf16>
    %cst_161 = arith.constant dense<0.000000e+00> : vector<2x16xf32>
    %566 = tpu.matmul %565, %17, %cst_161 {dimension_numbers = #tpu.dot_dimension_numbers<[1], [0], [0], [1], [0, 0, 1, 1], [], []>} : vector<2x32xbf16>, vector<32x16xbf16>, vector<2x16xf32> -> vector<2x16xf32>
    %567 = vector.extract_strided_slice %548 {offsets = [0, 2, 0], sizes = [2, 2, 8], strides = [1, 1, 1]} : vector<2x4x8xf32> to vector<2x2x8xf32>
    %568 = arith.negf %567 : vector<2x2x8xf32>
    %569 = math.exp %568 : vector<2x2x8xf32>
    %cst_162 = arith.constant 1.000000e+00 : f32
    %570 = vector.broadcast %cst_162 : f32 to vector<2x2x8xf32>
    %571 = arith.addf %570, %569 : vector<2x2x8xf32>
    %572 = arith.divf %570, %571 : vector<2x2x8xf32>
    %cst_163 = arith.constant dense<0.000000e+00> : vector<2x8xf32>
    %573 = vector.multi_reduction <add>, %572, %cst_163 [1] : vector<2x2x8xf32> to vector<2x8xf32>
    %cst_164 = arith.constant 2.000000e+00 : f32
    %574 = vector.broadcast %cst_164 : f32 to vector<2x8xf32>
    %575 = arith.divf %573, %574 : vector<2x8xf32>
    %cst_165 = arith.constant 9.990000e-01 : f32
    %576 = vector.broadcast %cst_165 : f32 to vector<2x8xf32>
    %577 = arith.mulf %576, %575 : vector<2x8xf32>
    %578 = vector.shape_cast %577 : vector<2x8xf32> to vector<2x8x1xf32>
    %cst_166 = arith.constant 1.000000e+00 : f32
    %579 = vector.broadcast %cst_166 : f32 to vector<2x8x1xf32>
    %580 = arith.subf %579, %578 : vector<2x8x1xf32>
    %581 = vector.broadcast %580 : vector<2x8x1xf32> to vector<2x8x16xf32>
    %582 = arith.mulf %434, %581 : vector<2x8x16xf32>
    %583 = vector.shape_cast %577 : vector<2x8xf32> to vector<2x8x1xf32>
    %584 = vector.shape_cast %549 : vector<2x16xf32> to vector<2x1x16xf32>
    %585 = vector.broadcast %583 : vector<2x8x1xf32> to vector<2x8x16xf32>
    %586 = vector.broadcast %584 : vector<2x1x16xf32> to vector<2x8x16xf32>
    %587 = arith.mulf %585, %586 : vector<2x8x16xf32>
    %588 = arith.addf %582, %587 : vector<2x8x16xf32>
    %589 = vector.broadcast %474 : vector<2x1x1xf32> to vector<2x8x16xf32>
    %590 = arith.mulf %589, %434 : vector<2x8x16xf32>
    %cst_167 = arith.constant 1.000000e+00 : f32
    %591 = vector.broadcast %cst_167 : f32 to vector<2x1x1xf32>
    %592 = arith.subf %591, %474 : vector<2x1x1xf32>
    %593 = vector.broadcast %592 : vector<2x1x1xf32> to vector<2x8x16xf32>
    %594 = arith.mulf %593, %588 : vector<2x8x16xf32>
    %595 = arith.addf %590, %594 : vector<2x8x16xf32>
    %596 = arith.addf %546, %566 : vector<2x16xf32>
    %597 = arith.truncf %596 : vector<2x16xf32> to vector<2x16xbf16>
    %cst_168 = arith.constant dense<0.000000e+00> : vector<2x128xf32>
    %598 = tpu.matmul %597, %19, %cst_168 {dimension_numbers = #tpu.dot_dimension_numbers<[1], [0], [0], [1], [0, 0, 1, 1], [], []>} : vector<2x16xbf16>, vector<16x128xbf16>, vector<2x128xf32> -> vector<2x128xf32>
    %599 = vector.broadcast %21 : vector<1x128xf32> to vector<2x128xf32>
    %600 = arith.addf %598, %599 : vector<2x128xf32>
    %601 = vector.extract_strided_slice %600 {offsets = [0, 0], sizes = [2, 64], strides = [1, 1]} : vector<2x128xf32> to vector<2x64xf32>
    %602 = vector.extract_strided_slice %600 {offsets = [0, 64], sizes = [2, 64], strides = [1, 1]} : vector<2x128xf32> to vector<2x64xf32>
    %cst_169 = arith.constant 0.000000e+00 : f32
    %603 = vector.broadcast %cst_169 : f32 to vector<2x64xf32>
    %604 = arith.maximumf %602, %603 : vector<2x64xf32>
    %605 = arith.truncf %604 : vector<2x64xf32> to vector<2x64xbf16>
    %606 = arith.addf %541, %601 : vector<2x64xf32>
    %cst_170 = arith.constant dense<0.000000e+00> : vector<2x64xf32>
    %607 = tpu.matmul %605, %23, %cst_170 {dimension_numbers = #tpu.dot_dimension_numbers<[1], [0], [0], [1], [0, 0, 1, 1], [], []>} : vector<2x64xbf16>, vector<64x64xbf16>, vector<2x64xf32> -> vector<2x64xf32>
    %608 = arith.addf %606, %607 : vector<2x64xf32>
    %609 = arith.truncf %608 : vector<2x64xf32> to vector<2x64xbf16>
    %cst_171 = arith.constant dense<0.000000e+00> : vector<2x64xf32>
    %610 = tpu.matmul %609, %137, %cst_171 {dimension_numbers = #tpu.dot_dimension_numbers<[1], [0], [0], [1], [0, 0, 1, 1], [], []>} : vector<2x64xbf16>, vector<64x64xbf16>, vector<2x64xf32> -> vector<2x64xf32>
    %611 = vector.broadcast %138 : vector<1x64xf32> to vector<2x64xf32>
    %612 = arith.addf %610, %611 : vector<2x64xf32>
    %cst_172 = arith.constant dense<0xFF800000> : vector<2xf32>
    %613 = vector.multi_reduction <maximumf>, %612, %cst_172 [1] : vector<2x64xf32> to vector<2xf32>
    %614 = vector.shape_cast %613 : vector<2xf32> to vector<2x1xf32>
    %615 = vector.broadcast %614 : vector<2x1xf32> to vector<2x64xf32>
    %616 = arith.cmpf oge, %612, %615 : vector<2x64xf32>
    %c64_i32_173 = arith.constant 64 : i32
    %617 = vector.broadcast %c64_i32_173 : i32 to vector<2x64xi32>
    %618 = arith.select %616, %139, %617 : vector<2x64xi1>, vector<2x64xi32>
    %cst_174 = arith.constant dense<2147483647> : vector<2xi32>
    %619 = vector.multi_reduction <minsi>, %618, %cst_174 [1] : vector<2x64xi32> to vector<2xi32>
    %620 = vector.shape_cast %619 : vector<2xi32> to vector<2x1xi32>
    %c3_i32_175 = arith.constant 3 : i32
    %621 = vector.broadcast %c3_i32_175 : i32 to vector<2x1xi32>
    %622 = arith.cmpi eq, %620, %621 : vector<2x1xi32>
    %623 = arith.extui %622 : vector<2x1xi1> to vector<2x1xi32>
    %624 = arith.maxsi %463, %623 : vector<2x1xi32>
    %c0_i32_176 = arith.constant 0 : i32
    %625 = vector.broadcast %c0_i32_176 : i32 to vector<2x1xi32>
    %626 = arith.cmpi sgt, %624, %625 : vector<2x1xi32>
    %627 = arith.extui %626 : vector<2x1xi1> to vector<2x1xi32>
    %628 = arith.sitofp %627 : vector<2x1xi32> to vector<2x1xf32>
    %629 = vector.broadcast %620 : vector<2x1xi32> to vector<2x64xi32>
    %630 = arith.cmpi eq, %629, %139 : vector<2x64xi32>
    %631 = arith.extui %630 : vector<2x64xi1> to vector<2x64xi32>
    %632 = arith.sitofp %631 : vector<2x64xi32> to vector<2x64xf32>
    %633 = arith.truncf %632 : vector<2x64xf32> to vector<2x64xbf16>
    %cst_177 = arith.constant dense<0.000000e+00> : vector<2x64xf32>
    %634 = tpu.matmul %633, %136, %cst_177 {dimension_numbers = #tpu.dot_dimension_numbers<[1], [0], [0], [1], [0, 0, 1, 1], [], []>} : vector<2x64xbf16>, vector<64x64xbf16>, vector<2x64xf32> -> vector<2x64xf32>
    %635 = vector.shape_cast %628 : vector<2x1xf32> to vector<2x1x1xf32>
    %636 = arith.truncf %634 : vector<2x64xf32> to vector<2x64xbf16>
    %cst_178 = arith.constant dense<0.000000e+00> : vector<2x64xf32>
    %637 = tpu.matmul %636, %1, %cst_178 {dimension_numbers = #tpu.dot_dimension_numbers<[1], [0], [0], [1], [0, 0, 1, 1], [], []>} : vector<2x64xbf16>, vector<64x64xbf16>, vector<2x64xf32> -> vector<2x64xf32>
    %638 = vector.broadcast %3 : vector<1x64xf32> to vector<2x64xf32>
    %639 = arith.addf %637, %638 : vector<2x64xf32>
    %640 = vector.extract_strided_slice %639 {offsets = [0, 0], sizes = [2, 16], strides = [1, 1]} : vector<2x64xf32> to vector<2x16xf32>
    %641 = vector.extract_strided_slice %639 {offsets = [0, 16], sizes = [2, 32], strides = [1, 1]} : vector<2x64xf32> to vector<2x32xf32>
    %642 = vector.shape_cast %641 : vector<2x32xf32> to vector<2x4x8xf32>
    %643 = vector.extract_strided_slice %639 {offsets = [0, 48], sizes = [2, 16], strides = [1, 1]} : vector<2x64xf32> to vector<2x16xf32>
    %644 = vector.extract_strided_slice %642 {offsets = [0, 0, 0], sizes = [2, 2, 8], strides = [1, 1, 1]} : vector<2x4x8xf32> to vector<2x2x8xf32>
    %cst_179 = arith.constant dense<0xFF800000> : vector<2x2xf32>
    %645 = vector.multi_reduction <maximumf>, %644, %cst_179 [2] : vector<2x2x8xf32> to vector<2x2xf32>
    %646 = vector.shape_cast %645 : vector<2x2xf32> to vector<2x2x1xf32>
    %647 = vector.broadcast %646 : vector<2x2x1xf32> to vector<2x2x8xf32>
    %648 = arith.subf %644, %647 : vector<2x2x8xf32>
    %649 = math.exp %648 : vector<2x2x8xf32>
    %cst_180 = arith.constant dense<0.000000e+00> : vector<2x2xf32>
    %650 = vector.multi_reduction <add>, %649, %cst_180 [2] : vector<2x2x8xf32> to vector<2x2xf32>
    %651 = vector.shape_cast %650 : vector<2x2xf32> to vector<2x2x1xf32>
    %652 = tpu.reciprocal %651 {approx = true} : vector<2x2x1xf32> -> vector<2x2x1xf32>
    %653 = vector.broadcast %652 : vector<2x2x1xf32> to vector<2x2x8xf32>
    %654 = arith.mulf %649, %653 : vector<2x2x8xf32>
    %655 = arith.truncf %654 : vector<2x2x8xf32> to vector<2x2x8xbf16>
    %656 = arith.truncf %528 : vector<2x8x16xf32> to vector<2x8x16xbf16>
    "tpu.trace_start"() <{level = 10 : i32, message = "bhm,bmd->bhd"}> : () -> ()
    %cst_181 = arith.constant dense<0.000000e+00> : vector<2x2x16xf32>
    %657 = tpu.matmul %655, %656, %cst_181 {dimension_numbers = #tpu.dot_dimension_numbers<[2], [1], [1], [2], [0, 0, 0, 1, 1, 2], [0], [0]>} : vector<2x2x8xbf16>, vector<2x8x16xbf16>, vector<2x2x16xf32> -> vector<2x2x16xf32>
    "tpu.trace_stop"() : () -> ()
    %658 = vector.shape_cast %657 : vector<2x2x16xf32> to vector<2x32xf32>
    %659 = arith.truncf %658 : vector<2x32xf32> to vector<2x32xbf16>
    %cst_182 = arith.constant dense<0.000000e+00> : vector<2x16xf32>
    %660 = tpu.matmul %659, %5, %cst_182 {dimension_numbers = #tpu.dot_dimension_numbers<[1], [0], [0], [1], [0, 0, 1, 1], [], []>} : vector<2x32xbf16>, vector<32x16xbf16>, vector<2x16xf32> -> vector<2x16xf32>
    %661 = vector.extract_strided_slice %642 {offsets = [0, 2, 0], sizes = [2, 2, 8], strides = [1, 1, 1]} : vector<2x4x8xf32> to vector<2x2x8xf32>
    %662 = arith.negf %661 : vector<2x2x8xf32>
    %663 = math.exp %662 : vector<2x2x8xf32>
    %cst_183 = arith.constant 1.000000e+00 : f32
    %664 = vector.broadcast %cst_183 : f32 to vector<2x2x8xf32>
    %665 = arith.addf %664, %663 : vector<2x2x8xf32>
    %666 = arith.divf %664, %665 : vector<2x2x8xf32>
    %cst_184 = arith.constant dense<0.000000e+00> : vector<2x8xf32>
    %667 = vector.multi_reduction <add>, %666, %cst_184 [1] : vector<2x2x8xf32> to vector<2x8xf32>
    %cst_185 = arith.constant 2.000000e+00 : f32
    %668 = vector.broadcast %cst_185 : f32 to vector<2x8xf32>
    %669 = arith.divf %667, %668 : vector<2x8xf32>
    %cst_186 = arith.constant 9.990000e-01 : f32
    %670 = vector.broadcast %cst_186 : f32 to vector<2x8xf32>
    %671 = arith.mulf %670, %669 : vector<2x8xf32>
    %672 = vector.shape_cast %671 : vector<2x8xf32> to vector<2x8x1xf32>
    %cst_187 = arith.constant 1.000000e+00 : f32
    %673 = vector.broadcast %cst_187 : f32 to vector<2x8x1xf32>
    %674 = arith.subf %673, %672 : vector<2x8x1xf32>
    %675 = vector.broadcast %674 : vector<2x8x1xf32> to vector<2x8x16xf32>
    %676 = arith.mulf %528, %675 : vector<2x8x16xf32>
    %677 = vector.shape_cast %671 : vector<2x8xf32> to vector<2x8x1xf32>
    %678 = vector.shape_cast %643 : vector<2x16xf32> to vector<2x1x16xf32>
    %679 = vector.broadcast %677 : vector<2x8x1xf32> to vector<2x8x16xf32>
    %680 = vector.broadcast %678 : vector<2x1x16xf32> to vector<2x8x16xf32>
    %681 = arith.mulf %679, %680 : vector<2x8x16xf32>
    %682 = arith.addf %676, %681 : vector<2x8x16xf32>
    %683 = vector.broadcast %635 : vector<2x1x1xf32> to vector<2x8x16xf32>
    %684 = arith.mulf %683, %528 : vector<2x8x16xf32>
    %cst_188 = arith.constant 1.000000e+00 : f32
    %685 = vector.broadcast %cst_188 : f32 to vector<2x1x1xf32>
    %686 = arith.subf %685, %635 : vector<2x1x1xf32>
    %687 = vector.broadcast %686 : vector<2x1x1xf32> to vector<2x8x16xf32>
    %688 = arith.mulf %687, %682 : vector<2x8x16xf32>
    %689 = arith.addf %684, %688 : vector<2x8x16xf32>
    %690 = arith.addf %640, %660 : vector<2x16xf32>
    %691 = arith.truncf %690 : vector<2x16xf32> to vector<2x16xbf16>
    %cst_189 = arith.constant dense<0.000000e+00> : vector<2x128xf32>
    %692 = tpu.matmul %691, %7, %cst_189 {dimension_numbers = #tpu.dot_dimension_numbers<[1], [0], [0], [1], [0, 0, 1, 1], [], []>} : vector<2x16xbf16>, vector<16x128xbf16>, vector<2x128xf32> -> vector<2x128xf32>
    %693 = vector.broadcast %9 : vector<1x128xf32> to vector<2x128xf32>
    %694 = arith.addf %692, %693 : vector<2x128xf32>
    %695 = vector.extract_strided_slice %694 {offsets = [0, 0], sizes = [2, 64], strides = [1, 1]} : vector<2x128xf32> to vector<2x64xf32>
    %696 = vector.extract_strided_slice %694 {offsets = [0, 64], sizes = [2, 64], strides = [1, 1]} : vector<2x128xf32> to vector<2x64xf32>
    %cst_190 = arith.constant 0.000000e+00 : f32
    %697 = vector.broadcast %cst_190 : f32 to vector<2x64xf32>
    %698 = arith.maximumf %696, %697 : vector<2x64xf32>
    %699 = arith.truncf %698 : vector<2x64xf32> to vector<2x64xbf16>
    %700 = arith.addf %634, %695 : vector<2x64xf32>
    %cst_191 = arith.constant dense<0.000000e+00> : vector<2x64xf32>
    %701 = tpu.matmul %699, %11, %cst_191 {dimension_numbers = #tpu.dot_dimension_numbers<[1], [0], [0], [1], [0, 0, 1, 1], [], []>} : vector<2x64xbf16>, vector<64x64xbf16>, vector<2x64xf32> -> vector<2x64xf32>
    %702 = arith.addf %700, %701 : vector<2x64xf32>
    %703 = arith.truncf %702 : vector<2x64xf32> to vector<2x64xbf16>
    %cst_192 = arith.constant dense<0.000000e+00> : vector<2x64xf32>
    %704 = tpu.matmul %703, %13, %cst_192 {dimension_numbers = #tpu.dot_dimension_numbers<[1], [0], [0], [1], [0, 0, 1, 1], [], []>} : vector<2x64xbf16>, vector<64x64xbf16>, vector<2x64xf32> -> vector<2x64xf32>
    %705 = vector.broadcast %15 : vector<1x64xf32> to vector<2x64xf32>
    %706 = arith.addf %704, %705 : vector<2x64xf32>
    %707 = vector.extract_strided_slice %706 {offsets = [0, 0], sizes = [2, 16], strides = [1, 1]} : vector<2x64xf32> to vector<2x16xf32>
    %708 = vector.extract_strided_slice %706 {offsets = [0, 16], sizes = [2, 32], strides = [1, 1]} : vector<2x64xf32> to vector<2x32xf32>
    %709 = vector.shape_cast %708 : vector<2x32xf32> to vector<2x4x8xf32>
    %710 = vector.extract_strided_slice %706 {offsets = [0, 48], sizes = [2, 16], strides = [1, 1]} : vector<2x64xf32> to vector<2x16xf32>
    %711 = vector.extract_strided_slice %709 {offsets = [0, 0, 0], sizes = [2, 2, 8], strides = [1, 1, 1]} : vector<2x4x8xf32> to vector<2x2x8xf32>
    %cst_193 = arith.constant dense<0xFF800000> : vector<2x2xf32>
    %712 = vector.multi_reduction <maximumf>, %711, %cst_193 [2] : vector<2x2x8xf32> to vector<2x2xf32>
    %713 = vector.shape_cast %712 : vector<2x2xf32> to vector<2x2x1xf32>
    %714 = vector.broadcast %713 : vector<2x2x1xf32> to vector<2x2x8xf32>
    %715 = arith.subf %711, %714 : vector<2x2x8xf32>
    %716 = math.exp %715 : vector<2x2x8xf32>
    %cst_194 = arith.constant dense<0.000000e+00> : vector<2x2xf32>
    %717 = vector.multi_reduction <add>, %716, %cst_194 [2] : vector<2x2x8xf32> to vector<2x2xf32>
    %718 = vector.shape_cast %717 : vector<2x2xf32> to vector<2x2x1xf32>
    %719 = tpu.reciprocal %718 {approx = true} : vector<2x2x1xf32> -> vector<2x2x1xf32>
    %720 = vector.broadcast %719 : vector<2x2x1xf32> to vector<2x2x8xf32>
    %721 = arith.mulf %716, %720 : vector<2x2x8xf32>
    %722 = arith.truncf %721 : vector<2x2x8xf32> to vector<2x2x8xbf16>
    %723 = arith.truncf %595 : vector<2x8x16xf32> to vector<2x8x16xbf16>
    "tpu.trace_start"() <{level = 10 : i32, message = "bhm,bmd->bhd"}> : () -> ()
    %cst_195 = arith.constant dense<0.000000e+00> : vector<2x2x16xf32>
    %724 = tpu.matmul %722, %723, %cst_195 {dimension_numbers = #tpu.dot_dimension_numbers<[2], [1], [1], [2], [0, 0, 0, 1, 1, 2], [0], [0]>} : vector<2x2x8xbf16>, vector<2x8x16xbf16>, vector<2x2x16xf32> -> vector<2x2x16xf32>
    "tpu.trace_stop"() : () -> ()
    %725 = vector.shape_cast %724 : vector<2x2x16xf32> to vector<2x32xf32>
    %726 = arith.truncf %725 : vector<2x32xf32> to vector<2x32xbf16>
    %cst_196 = arith.constant dense<0.000000e+00> : vector<2x16xf32>
    %727 = tpu.matmul %726, %17, %cst_196 {dimension_numbers = #tpu.dot_dimension_numbers<[1], [0], [0], [1], [0, 0, 1, 1], [], []>} : vector<2x32xbf16>, vector<32x16xbf16>, vector<2x16xf32> -> vector<2x16xf32>
    %728 = vector.extract_strided_slice %709 {offsets = [0, 2, 0], sizes = [2, 2, 8], strides = [1, 1, 1]} : vector<2x4x8xf32> to vector<2x2x8xf32>
    %729 = arith.negf %728 : vector<2x2x8xf32>
    %730 = math.exp %729 : vector<2x2x8xf32>
    %cst_197 = arith.constant 1.000000e+00 : f32
    %731 = vector.broadcast %cst_197 : f32 to vector<2x2x8xf32>
    %732 = arith.addf %731, %730 : vector<2x2x8xf32>
    %733 = arith.divf %731, %732 : vector<2x2x8xf32>
    %cst_198 = arith.constant dense<0.000000e+00> : vector<2x8xf32>
    %734 = vector.multi_reduction <add>, %733, %cst_198 [1] : vector<2x2x8xf32> to vector<2x8xf32>
    %cst_199 = arith.constant 2.000000e+00 : f32
    %735 = vector.broadcast %cst_199 : f32 to vector<2x8xf32>
    %736 = arith.divf %734, %735 : vector<2x8xf32>
    %cst_200 = arith.constant 9.990000e-01 : f32
    %737 = vector.broadcast %cst_200 : f32 to vector<2x8xf32>
    %738 = arith.mulf %737, %736 : vector<2x8xf32>
    %739 = vector.shape_cast %738 : vector<2x8xf32> to vector<2x8x1xf32>
    %cst_201 = arith.constant 1.000000e+00 : f32
    %740 = vector.broadcast %cst_201 : f32 to vector<2x8x1xf32>
    %741 = arith.subf %740, %739 : vector<2x8x1xf32>
    %742 = vector.broadcast %741 : vector<2x8x1xf32> to vector<2x8x16xf32>
    %743 = arith.mulf %595, %742 : vector<2x8x16xf32>
    %744 = vector.shape_cast %738 : vector<2x8xf32> to vector<2x8x1xf32>
    %745 = vector.shape_cast %710 : vector<2x16xf32> to vector<2x1x16xf32>
    %746 = vector.broadcast %744 : vector<2x8x1xf32> to vector<2x8x16xf32>
    %747 = vector.broadcast %745 : vector<2x1x16xf32> to vector<2x8x16xf32>
    %748 = arith.mulf %746, %747 : vector<2x8x16xf32>
    %749 = arith.addf %743, %748 : vector<2x8x16xf32>
    %750 = vector.broadcast %635 : vector<2x1x1xf32> to vector<2x8x16xf32>
    %751 = arith.mulf %750, %595 : vector<2x8x16xf32>
    %cst_202 = arith.constant 1.000000e+00 : f32
    %752 = vector.broadcast %cst_202 : f32 to vector<2x1x1xf32>
    %753 = arith.subf %752, %635 : vector<2x1x1xf32>
    %754 = vector.broadcast %753 : vector<2x1x1xf32> to vector<2x8x16xf32>
    %755 = arith.mulf %754, %749 : vector<2x8x16xf32>
    %756 = arith.addf %751, %755 : vector<2x8x16xf32>
    %757 = arith.addf %707, %727 : vector<2x16xf32>
    %758 = arith.truncf %757 : vector<2x16xf32> to vector<2x16xbf16>
    %cst_203 = arith.constant dense<0.000000e+00> : vector<2x128xf32>
    %759 = tpu.matmul %758, %19, %cst_203 {dimension_numbers = #tpu.dot_dimension_numbers<[1], [0], [0], [1], [0, 0, 1, 1], [], []>} : vector<2x16xbf16>, vector<16x128xbf16>, vector<2x128xf32> -> vector<2x128xf32>
    %760 = vector.broadcast %21 : vector<1x128xf32> to vector<2x128xf32>
    %761 = arith.addf %759, %760 : vector<2x128xf32>
    %762 = vector.extract_strided_slice %761 {offsets = [0, 0], sizes = [2, 64], strides = [1, 1]} : vector<2x128xf32> to vector<2x64xf32>
    %763 = vector.extract_strided_slice %761 {offsets = [0, 64], sizes = [2, 64], strides = [1, 1]} : vector<2x128xf32> to vector<2x64xf32>
    %cst_204 = arith.constant 0.000000e+00 : f32
    %764 = vector.broadcast %cst_204 : f32 to vector<2x64xf32>
    %765 = arith.maximumf %763, %764 : vector<2x64xf32>
    %766 = arith.truncf %765 : vector<2x64xf32> to vector<2x64xbf16>
    %767 = arith.addf %702, %762 : vector<2x64xf32>
    %cst_205 = arith.constant dense<0.000000e+00> : vector<2x64xf32>
    %768 = tpu.matmul %766, %23, %cst_205 {dimension_numbers = #tpu.dot_dimension_numbers<[1], [0], [0], [1], [0, 0, 1, 1], [], []>} : vector<2x64xbf16>, vector<64x64xbf16>, vector<2x64xf32> -> vector<2x64xf32>
    %769 = arith.addf %767, %768 : vector<2x64xf32>
    %770 = arith.truncf %769 : vector<2x64xf32> to vector<2x64xbf16>
    %cst_206 = arith.constant dense<0.000000e+00> : vector<2x64xf32>
    %771 = tpu.matmul %770, %137, %cst_206 {dimension_numbers = #tpu.dot_dimension_numbers<[1], [0], [0], [1], [0, 0, 1, 1], [], []>} : vector<2x64xbf16>, vector<64x64xbf16>, vector<2x64xf32> -> vector<2x64xf32>
    %772 = vector.broadcast %138 : vector<1x64xf32> to vector<2x64xf32>
    %773 = arith.addf %771, %772 : vector<2x64xf32>
    %cst_207 = arith.constant dense<0xFF800000> : vector<2xf32>
    %774 = vector.multi_reduction <maximumf>, %773, %cst_207 [1] : vector<2x64xf32> to vector<2xf32>
    %775 = vector.shape_cast %774 : vector<2xf32> to vector<2x1xf32>
    %776 = vector.broadcast %775 : vector<2x1xf32> to vector<2x64xf32>
    %777 = arith.cmpf oge, %773, %776 : vector<2x64xf32>
    %c64_i32_208 = arith.constant 64 : i32
    %778 = vector.broadcast %c64_i32_208 : i32 to vector<2x64xi32>
    %779 = arith.select %777, %139, %778 : vector<2x64xi1>, vector<2x64xi32>
    %cst_209 = arith.constant dense<2147483647> : vector<2xi32>
    %780 = vector.multi_reduction <minsi>, %779, %cst_209 [1] : vector<2x64xi32> to vector<2xi32>
    %781 = vector.shape_cast %780 : vector<2xi32> to vector<2x1xi32>
    %c3_i32_210 = arith.constant 3 : i32
    %782 = vector.broadcast %c3_i32_210 : i32 to vector<2x1xi32>
    %783 = arith.cmpi eq, %781, %782 : vector<2x1xi32>
    %784 = arith.extui %783 : vector<2x1xi1> to vector<2x1xi32>
    %785 = arith.maxsi %624, %784 : vector<2x1xi32>
    %c0_i32_211 = arith.constant 0 : i32
    %786 = vector.broadcast %c0_i32_211 : i32 to vector<2x1xi32>
    %787 = arith.cmpi sgt, %785, %786 : vector<2x1xi32>
    %788 = arith.extui %787 : vector<2x1xi1> to vector<2x1xi32>
    %789 = arith.sitofp %788 : vector<2x1xi32> to vector<2x1xf32>
    %790 = vector.broadcast %781 : vector<2x1xi32> to vector<2x64xi32>
    %791 = arith.cmpi eq, %790, %139 : vector<2x64xi32>
    %792 = arith.extui %791 : vector<2x64xi1> to vector<2x64xi32>
    %793 = arith.sitofp %792 : vector<2x64xi32> to vector<2x64xf32>
    %794 = arith.truncf %793 : vector<2x64xf32> to vector<2x64xbf16>
    %cst_212 = arith.constant dense<0.000000e+00> : vector<2x64xf32>
    %795 = tpu.matmul %794, %136, %cst_212 {dimension_numbers = #tpu.dot_dimension_numbers<[1], [0], [0], [1], [0, 0, 1, 1], [], []>} : vector<2x64xbf16>, vector<64x64xbf16>, vector<2x64xf32> -> vector<2x64xf32>
    %796 = vector.shape_cast %789 : vector<2x1xf32> to vector<2x1x1xf32>
    %797 = arith.truncf %795 : vector<2x64xf32> to vector<2x64xbf16>
    %cst_213 = arith.constant dense<0.000000e+00> : vector<2x64xf32>
    %798 = tpu.matmul %797, %1, %cst_213 {dimension_numbers = #tpu.dot_dimension_numbers<[1], [0], [0], [1], [0, 0, 1, 1], [], []>} : vector<2x64xbf16>, vector<64x64xbf16>, vector<2x64xf32> -> vector<2x64xf32>
    %799 = vector.broadcast %3 : vector<1x64xf32> to vector<2x64xf32>
    %800 = arith.addf %798, %799 : vector<2x64xf32>
    %801 = vector.extract_strided_slice %800 {offsets = [0, 0], sizes = [2, 16], strides = [1, 1]} : vector<2x64xf32> to vector<2x16xf32>
    %802 = vector.extract_strided_slice %800 {offsets = [0, 16], sizes = [2, 32], strides = [1, 1]} : vector<2x64xf32> to vector<2x32xf32>
    %803 = vector.shape_cast %802 : vector<2x32xf32> to vector<2x4x8xf32>
    %804 = vector.extract_strided_slice %800 {offsets = [0, 48], sizes = [2, 16], strides = [1, 1]} : vector<2x64xf32> to vector<2x16xf32>
    %805 = vector.extract_strided_slice %803 {offsets = [0, 0, 0], sizes = [2, 2, 8], strides = [1, 1, 1]} : vector<2x4x8xf32> to vector<2x2x8xf32>
    %cst_214 = arith.constant dense<0xFF800000> : vector<2x2xf32>
    %806 = vector.multi_reduction <maximumf>, %805, %cst_214 [2] : vector<2x2x8xf32> to vector<2x2xf32>
    %807 = vector.shape_cast %806 : vector<2x2xf32> to vector<2x2x1xf32>
    %808 = vector.broadcast %807 : vector<2x2x1xf32> to vector<2x2x8xf32>
    %809 = arith.subf %805, %808 : vector<2x2x8xf32>
    %810 = math.exp %809 : vector<2x2x8xf32>
    %cst_215 = arith.constant dense<0.000000e+00> : vector<2x2xf32>
    %811 = vector.multi_reduction <add>, %810, %cst_215 [2] : vector<2x2x8xf32> to vector<2x2xf32>
    %812 = vector.shape_cast %811 : vector<2x2xf32> to vector<2x2x1xf32>
    %813 = tpu.reciprocal %812 {approx = true} : vector<2x2x1xf32> -> vector<2x2x1xf32>
    %814 = vector.broadcast %813 : vector<2x2x1xf32> to vector<2x2x8xf32>
    %815 = arith.mulf %810, %814 : vector<2x2x8xf32>
    %816 = arith.truncf %815 : vector<2x2x8xf32> to vector<2x2x8xbf16>
    %817 = arith.truncf %689 : vector<2x8x16xf32> to vector<2x8x16xbf16>
    "tpu.trace_start"() <{level = 10 : i32, message = "bhm,bmd->bhd"}> : () -> ()
    %cst_216 = arith.constant dense<0.000000e+00> : vector<2x2x16xf32>
    %818 = tpu.matmul %816, %817, %cst_216 {dimension_numbers = #tpu.dot_dimension_numbers<[2], [1], [1], [2], [0, 0, 0, 1, 1, 2], [0], [0]>} : vector<2x2x8xbf16>, vector<2x8x16xbf16>, vector<2x2x16xf32> -> vector<2x2x16xf32>
    "tpu.trace_stop"() : () -> ()
    %819 = vector.shape_cast %818 : vector<2x2x16xf32> to vector<2x32xf32>
    %820 = arith.truncf %819 : vector<2x32xf32> to vector<2x32xbf16>
    %cst_217 = arith.constant dense<0.000000e+00> : vector<2x16xf32>
    %821 = tpu.matmul %820, %5, %cst_217 {dimension_numbers = #tpu.dot_dimension_numbers<[1], [0], [0], [1], [0, 0, 1, 1], [], []>} : vector<2x32xbf16>, vector<32x16xbf16>, vector<2x16xf32> -> vector<2x16xf32>
    %822 = vector.extract_strided_slice %803 {offsets = [0, 2, 0], sizes = [2, 2, 8], strides = [1, 1, 1]} : vector<2x4x8xf32> to vector<2x2x8xf32>
    %823 = arith.negf %822 : vector<2x2x8xf32>
    %824 = math.exp %823 : vector<2x2x8xf32>
    %cst_218 = arith.constant 1.000000e+00 : f32
    %825 = vector.broadcast %cst_218 : f32 to vector<2x2x8xf32>
    %826 = arith.addf %825, %824 : vector<2x2x8xf32>
    %827 = arith.divf %825, %826 : vector<2x2x8xf32>
    %cst_219 = arith.constant dense<0.000000e+00> : vector<2x8xf32>
    %828 = vector.multi_reduction <add>, %827, %cst_219 [1] : vector<2x2x8xf32> to vector<2x8xf32>
    %cst_220 = arith.constant 2.000000e+00 : f32
    %829 = vector.broadcast %cst_220 : f32 to vector<2x8xf32>
    %830 = arith.divf %828, %829 : vector<2x8xf32>
    %cst_221 = arith.constant 9.990000e-01 : f32
    %831 = vector.broadcast %cst_221 : f32 to vector<2x8xf32>
    %832 = arith.mulf %831, %830 : vector<2x8xf32>
    %833 = vector.shape_cast %832 : vector<2x8xf32> to vector<2x8x1xf32>
    %cst_222 = arith.constant 1.000000e+00 : f32
    %834 = vector.broadcast %cst_222 : f32 to vector<2x8x1xf32>
    %835 = arith.subf %834, %833 : vector<2x8x1xf32>
    %836 = vector.broadcast %835 : vector<2x8x1xf32> to vector<2x8x16xf32>
    %837 = arith.mulf %689, %836 : vector<2x8x16xf32>
    %838 = vector.shape_cast %832 : vector<2x8xf32> to vector<2x8x1xf32>
    %839 = vector.shape_cast %804 : vector<2x16xf32> to vector<2x1x16xf32>
    %840 = vector.broadcast %838 : vector<2x8x1xf32> to vector<2x8x16xf32>
    %841 = vector.broadcast %839 : vector<2x1x16xf32> to vector<2x8x16xf32>
    %842 = arith.mulf %840, %841 : vector<2x8x16xf32>
    %843 = arith.addf %837, %842 : vector<2x8x16xf32>
    %844 = vector.broadcast %796 : vector<2x1x1xf32> to vector<2x8x16xf32>
    %845 = arith.mulf %844, %689 : vector<2x8x16xf32>
    %cst_223 = arith.constant 1.000000e+00 : f32
    %846 = vector.broadcast %cst_223 : f32 to vector<2x1x1xf32>
    %847 = arith.subf %846, %796 : vector<2x1x1xf32>
    %848 = vector.broadcast %847 : vector<2x1x1xf32> to vector<2x8x16xf32>
    %849 = arith.mulf %848, %843 : vector<2x8x16xf32>
    %850 = arith.addf %845, %849 : vector<2x8x16xf32>
    %851 = arith.addf %801, %821 : vector<2x16xf32>
    %852 = arith.truncf %851 : vector<2x16xf32> to vector<2x16xbf16>
    %cst_224 = arith.constant dense<0.000000e+00> : vector<2x128xf32>
    %853 = tpu.matmul %852, %7, %cst_224 {dimension_numbers = #tpu.dot_dimension_numbers<[1], [0], [0], [1], [0, 0, 1, 1], [], []>} : vector<2x16xbf16>, vector<16x128xbf16>, vector<2x128xf32> -> vector<2x128xf32>
    %854 = vector.broadcast %9 : vector<1x128xf32> to vector<2x128xf32>
    %855 = arith.addf %853, %854 : vector<2x128xf32>
    %856 = vector.extract_strided_slice %855 {offsets = [0, 0], sizes = [2, 64], strides = [1, 1]} : vector<2x128xf32> to vector<2x64xf32>
    %857 = vector.extract_strided_slice %855 {offsets = [0, 64], sizes = [2, 64], strides = [1, 1]} : vector<2x128xf32> to vector<2x64xf32>
    %cst_225 = arith.constant 0.000000e+00 : f32
    %858 = vector.broadcast %cst_225 : f32 to vector<2x64xf32>
    %859 = arith.maximumf %857, %858 : vector<2x64xf32>
    %860 = arith.truncf %859 : vector<2x64xf32> to vector<2x64xbf16>
    %861 = arith.addf %795, %856 : vector<2x64xf32>
    %cst_226 = arith.constant dense<0.000000e+00> : vector<2x64xf32>
    %862 = tpu.matmul %860, %11, %cst_226 {dimension_numbers = #tpu.dot_dimension_numbers<[1], [0], [0], [1], [0, 0, 1, 1], [], []>} : vector<2x64xbf16>, vector<64x64xbf16>, vector<2x64xf32> -> vector<2x64xf32>
    %863 = arith.addf %861, %862 : vector<2x64xf32>
    %864 = arith.truncf %863 : vector<2x64xf32> to vector<2x64xbf16>
    %cst_227 = arith.constant dense<0.000000e+00> : vector<2x64xf32>
    %865 = tpu.matmul %864, %13, %cst_227 {dimension_numbers = #tpu.dot_dimension_numbers<[1], [0], [0], [1], [0, 0, 1, 1], [], []>} : vector<2x64xbf16>, vector<64x64xbf16>, vector<2x64xf32> -> vector<2x64xf32>
    %866 = vector.broadcast %15 : vector<1x64xf32> to vector<2x64xf32>
    %867 = arith.addf %865, %866 : vector<2x64xf32>
    %868 = vector.extract_strided_slice %867 {offsets = [0, 0], sizes = [2, 16], strides = [1, 1]} : vector<2x64xf32> to vector<2x16xf32>
    %869 = vector.extract_strided_slice %867 {offsets = [0, 16], sizes = [2, 32], strides = [1, 1]} : vector<2x64xf32> to vector<2x32xf32>
    %870 = vector.shape_cast %869 : vector<2x32xf32> to vector<2x4x8xf32>
    %871 = vector.extract_strided_slice %867 {offsets = [0, 48], sizes = [2, 16], strides = [1, 1]} : vector<2x64xf32> to vector<2x16xf32>
    %872 = vector.extract_strided_slice %870 {offsets = [0, 0, 0], sizes = [2, 2, 8], strides = [1, 1, 1]} : vector<2x4x8xf32> to vector<2x2x8xf32>
    %cst_228 = arith.constant dense<0xFF800000> : vector<2x2xf32>
    %873 = vector.multi_reduction <maximumf>, %872, %cst_228 [2] : vector<2x2x8xf32> to vector<2x2xf32>
    %874 = vector.shape_cast %873 : vector<2x2xf32> to vector<2x2x1xf32>
    %875 = vector.broadcast %874 : vector<2x2x1xf32> to vector<2x2x8xf32>
    %876 = arith.subf %872, %875 : vector<2x2x8xf32>
    %877 = math.exp %876 : vector<2x2x8xf32>
    %cst_229 = arith.constant dense<0.000000e+00> : vector<2x2xf32>
    %878 = vector.multi_reduction <add>, %877, %cst_229 [2] : vector<2x2x8xf32> to vector<2x2xf32>
    %879 = vector.shape_cast %878 : vector<2x2xf32> to vector<2x2x1xf32>
    %880 = tpu.reciprocal %879 {approx = true} : vector<2x2x1xf32> -> vector<2x2x1xf32>
    %881 = vector.broadcast %880 : vector<2x2x1xf32> to vector<2x2x8xf32>
    %882 = arith.mulf %877, %881 : vector<2x2x8xf32>
    %883 = arith.truncf %882 : vector<2x2x8xf32> to vector<2x2x8xbf16>
    %884 = arith.truncf %756 : vector<2x8x16xf32> to vector<2x8x16xbf16>
    "tpu.trace_start"() <{level = 10 : i32, message = "bhm,bmd->bhd"}> : () -> ()
    %cst_230 = arith.constant dense<0.000000e+00> : vector<2x2x16xf32>
    %885 = tpu.matmul %883, %884, %cst_230 {dimension_numbers = #tpu.dot_dimension_numbers<[2], [1], [1], [2], [0, 0, 0, 1, 1, 2], [0], [0]>} : vector<2x2x8xbf16>, vector<2x8x16xbf16>, vector<2x2x16xf32> -> vector<2x2x16xf32>
    "tpu.trace_stop"() : () -> ()
    %886 = vector.shape_cast %885 : vector<2x2x16xf32> to vector<2x32xf32>
    %887 = arith.truncf %886 : vector<2x32xf32> to vector<2x32xbf16>
    %cst_231 = arith.constant dense<0.000000e+00> : vector<2x16xf32>
    %888 = tpu.matmul %887, %17, %cst_231 {dimension_numbers = #tpu.dot_dimension_numbers<[1], [0], [0], [1], [0, 0, 1, 1], [], []>} : vector<2x32xbf16>, vector<32x16xbf16>, vector<2x16xf32> -> vector<2x16xf32>
    %889 = vector.extract_strided_slice %870 {offsets = [0, 2, 0], sizes = [2, 2, 8], strides = [1, 1, 1]} : vector<2x4x8xf32> to vector<2x2x8xf32>
    %890 = arith.negf %889 : vector<2x2x8xf32>
    %891 = math.exp %890 : vector<2x2x8xf32>
    %cst_232 = arith.constant 1.000000e+00 : f32
    %892 = vector.broadcast %cst_232 : f32 to vector<2x2x8xf32>
    %893 = arith.addf %892, %891 : vector<2x2x8xf32>
    %894 = arith.divf %892, %893 : vector<2x2x8xf32>
    %cst_233 = arith.constant dense<0.000000e+00> : vector<2x8xf32>
    %895 = vector.multi_reduction <add>, %894, %cst_233 [1] : vector<2x2x8xf32> to vector<2x8xf32>
    %cst_234 = arith.constant 2.000000e+00 : f32
    %896 = vector.broadcast %cst_234 : f32 to vector<2x8xf32>
    %897 = arith.divf %895, %896 : vector<2x8xf32>
    %cst_235 = arith.constant 9.990000e-01 : f32
    %898 = vector.broadcast %cst_235 : f32 to vector<2x8xf32>
    %899 = arith.mulf %898, %897 : vector<2x8xf32>
    %900 = vector.shape_cast %899 : vector<2x8xf32> to vector<2x8x1xf32>
    %cst_236 = arith.constant 1.000000e+00 : f32
    %901 = vector.broadcast %cst_236 : f32 to vector<2x8x1xf32>
    %902 = arith.subf %901, %900 : vector<2x8x1xf32>
    %903 = vector.broadcast %902 : vector<2x8x1xf32> to vector<2x8x16xf32>
    %904 = arith.mulf %756, %903 : vector<2x8x16xf32>
    %905 = vector.shape_cast %899 : vector<2x8xf32> to vector<2x8x1xf32>
    %906 = vector.shape_cast %871 : vector<2x16xf32> to vector<2x1x16xf32>
    %907 = vector.broadcast %905 : vector<2x8x1xf32> to vector<2x8x16xf32>
    %908 = vector.broadcast %906 : vector<2x1x16xf32> to vector<2x8x16xf32>
    %909 = arith.mulf %907, %908 : vector<2x8x16xf32>
    %910 = arith.addf %904, %909 : vector<2x8x16xf32>
    %911 = vector.broadcast %796 : vector<2x1x1xf32> to vector<2x8x16xf32>
    %912 = arith.mulf %911, %756 : vector<2x8x16xf32>
    %cst_237 = arith.constant 1.000000e+00 : f32
    %913 = vector.broadcast %cst_237 : f32 to vector<2x1x1xf32>
    %914 = arith.subf %913, %796 : vector<2x1x1xf32>
    %915 = vector.broadcast %914 : vector<2x1x1xf32> to vector<2x8x16xf32>
    %916 = arith.mulf %915, %910 : vector<2x8x16xf32>
    %917 = arith.addf %912, %916 : vector<2x8x16xf32>
    %918 = arith.addf %868, %888 : vector<2x16xf32>
    %919 = arith.truncf %918 : vector<2x16xf32> to vector<2x16xbf16>
    %cst_238 = arith.constant dense<0.000000e+00> : vector<2x128xf32>
    %920 = tpu.matmul %919, %19, %cst_238 {dimension_numbers = #tpu.dot_dimension_numbers<[1], [0], [0], [1], [0, 0, 1, 1], [], []>} : vector<2x16xbf16>, vector<16x128xbf16>, vector<2x128xf32> -> vector<2x128xf32>
    %921 = vector.broadcast %21 : vector<1x128xf32> to vector<2x128xf32>
    %922 = arith.addf %920, %921 : vector<2x128xf32>
    %923 = vector.extract_strided_slice %922 {offsets = [0, 0], sizes = [2, 64], strides = [1, 1]} : vector<2x128xf32> to vector<2x64xf32>
    %924 = vector.extract_strided_slice %922 {offsets = [0, 64], sizes = [2, 64], strides = [1, 1]} : vector<2x128xf32> to vector<2x64xf32>
    %cst_239 = arith.constant 0.000000e+00 : f32
    %925 = vector.broadcast %cst_239 : f32 to vector<2x64xf32>
    %926 = arith.maximumf %924, %925 : vector<2x64xf32>
    %927 = arith.truncf %926 : vector<2x64xf32> to vector<2x64xbf16>
    %928 = arith.addf %863, %923 : vector<2x64xf32>
    %cst_240 = arith.constant dense<0.000000e+00> : vector<2x64xf32>
    %929 = tpu.matmul %927, %23, %cst_240 {dimension_numbers = #tpu.dot_dimension_numbers<[1], [0], [0], [1], [0, 0, 1, 1], [], []>} : vector<2x64xbf16>, vector<64x64xbf16>, vector<2x64xf32> -> vector<2x64xf32>
    %930 = arith.addf %928, %929 : vector<2x64xf32>
    %931 = arith.truncf %930 : vector<2x64xf32> to vector<2x64xbf16>
    %cst_241 = arith.constant dense<0.000000e+00> : vector<2x64xf32>
    %932 = tpu.matmul %931, %137, %cst_241 {dimension_numbers = #tpu.dot_dimension_numbers<[1], [0], [0], [1], [0, 0, 1, 1], [], []>} : vector<2x64xbf16>, vector<64x64xbf16>, vector<2x64xf32> -> vector<2x64xf32>
    %933 = vector.broadcast %138 : vector<1x64xf32> to vector<2x64xf32>
    %934 = arith.addf %932, %933 : vector<2x64xf32>
    %cst_242 = arith.constant dense<0xFF800000> : vector<2xf32>
    %935 = vector.multi_reduction <maximumf>, %934, %cst_242 [1] : vector<2x64xf32> to vector<2xf32>
    %936 = vector.shape_cast %935 : vector<2xf32> to vector<2x1xf32>
    %937 = vector.broadcast %936 : vector<2x1xf32> to vector<2x64xf32>
    %938 = arith.cmpf oge, %934, %937 : vector<2x64xf32>
    %c64_i32_243 = arith.constant 64 : i32
    %939 = vector.broadcast %c64_i32_243 : i32 to vector<2x64xi32>
    %940 = arith.select %938, %139, %939 : vector<2x64xi1>, vector<2x64xi32>
    %cst_244 = arith.constant dense<2147483647> : vector<2xi32>
    %941 = vector.multi_reduction <minsi>, %940, %cst_244 [1] : vector<2x64xi32> to vector<2xi32>
    %942 = vector.shape_cast %941 : vector<2xi32> to vector<2x1xi32>
    %c3_i32_245 = arith.constant 3 : i32
    %943 = vector.broadcast %c3_i32_245 : i32 to vector<2x1xi32>
    %944 = arith.cmpi eq, %942, %943 : vector<2x1xi32>
    %945 = arith.extui %944 : vector<2x1xi1> to vector<2x1xi32>
    %946 = arith.maxsi %785, %945 : vector<2x1xi32>
    %c0_i32_246 = arith.constant 0 : i32
    %947 = vector.broadcast %c0_i32_246 : i32 to vector<2x1xi32>
    %948 = arith.cmpi sgt, %946, %947 : vector<2x1xi32>
    %949 = arith.extui %948 : vector<2x1xi1> to vector<2x1xi32>
    %950 = arith.sitofp %949 : vector<2x1xi32> to vector<2x1xf32>
    %951 = vector.broadcast %942 : vector<2x1xi32> to vector<2x64xi32>
    %952 = arith.cmpi eq, %951, %139 : vector<2x64xi32>
    %953 = arith.extui %952 : vector<2x64xi1> to vector<2x64xi32>
    %954 = arith.sitofp %953 : vector<2x64xi32> to vector<2x64xf32>
    %955 = arith.truncf %954 : vector<2x64xf32> to vector<2x64xbf16>
    %cst_247 = arith.constant dense<0.000000e+00> : vector<2x64xf32>
    %956 = tpu.matmul %955, %136, %cst_247 {dimension_numbers = #tpu.dot_dimension_numbers<[1], [0], [0], [1], [0, 0, 1, 1], [], []>} : vector<2x64xbf16>, vector<64x64xbf16>, vector<2x64xf32> -> vector<2x64xf32>
    %957 = vector.shape_cast %950 : vector<2x1xf32> to vector<2x1x1xf32>
    %958 = arith.truncf %956 : vector<2x64xf32> to vector<2x64xbf16>
    %cst_248 = arith.constant dense<0.000000e+00> : vector<2x64xf32>
    %959 = tpu.matmul %958, %1, %cst_248 {dimension_numbers = #tpu.dot_dimension_numbers<[1], [0], [0], [1], [0, 0, 1, 1], [], []>} : vector<2x64xbf16>, vector<64x64xbf16>, vector<2x64xf32> -> vector<2x64xf32>
    %960 = vector.broadcast %3 : vector<1x64xf32> to vector<2x64xf32>
    %961 = arith.addf %959, %960 : vector<2x64xf32>
    %962 = vector.extract_strided_slice %961 {offsets = [0, 0], sizes = [2, 16], strides = [1, 1]} : vector<2x64xf32> to vector<2x16xf32>
    %963 = vector.extract_strided_slice %961 {offsets = [0, 16], sizes = [2, 32], strides = [1, 1]} : vector<2x64xf32> to vector<2x32xf32>
    %964 = vector.shape_cast %963 : vector<2x32xf32> to vector<2x4x8xf32>
    %965 = vector.extract_strided_slice %961 {offsets = [0, 48], sizes = [2, 16], strides = [1, 1]} : vector<2x64xf32> to vector<2x16xf32>
    %966 = vector.extract_strided_slice %964 {offsets = [0, 0, 0], sizes = [2, 2, 8], strides = [1, 1, 1]} : vector<2x4x8xf32> to vector<2x2x8xf32>
    %cst_249 = arith.constant dense<0xFF800000> : vector<2x2xf32>
    %967 = vector.multi_reduction <maximumf>, %966, %cst_249 [2] : vector<2x2x8xf32> to vector<2x2xf32>
    %968 = vector.shape_cast %967 : vector<2x2xf32> to vector<2x2x1xf32>
    %969 = vector.broadcast %968 : vector<2x2x1xf32> to vector<2x2x8xf32>
    %970 = arith.subf %966, %969 : vector<2x2x8xf32>
    %971 = math.exp %970 : vector<2x2x8xf32>
    %cst_250 = arith.constant dense<0.000000e+00> : vector<2x2xf32>
    %972 = vector.multi_reduction <add>, %971, %cst_250 [2] : vector<2x2x8xf32> to vector<2x2xf32>
    %973 = vector.shape_cast %972 : vector<2x2xf32> to vector<2x2x1xf32>
    %974 = tpu.reciprocal %973 {approx = true} : vector<2x2x1xf32> -> vector<2x2x1xf32>
    %975 = vector.broadcast %974 : vector<2x2x1xf32> to vector<2x2x8xf32>
    %976 = arith.mulf %971, %975 : vector<2x2x8xf32>
    %977 = arith.truncf %976 : vector<2x2x8xf32> to vector<2x2x8xbf16>
    %978 = arith.truncf %850 : vector<2x8x16xf32> to vector<2x8x16xbf16>
    "tpu.trace_start"() <{level = 10 : i32, message = "bhm,bmd->bhd"}> : () -> ()
    %cst_251 = arith.constant dense<0.000000e+00> : vector<2x2x16xf32>
    %979 = tpu.matmul %977, %978, %cst_251 {dimension_numbers = #tpu.dot_dimension_numbers<[2], [1], [1], [2], [0, 0, 0, 1, 1, 2], [0], [0]>} : vector<2x2x8xbf16>, vector<2x8x16xbf16>, vector<2x2x16xf32> -> vector<2x2x16xf32>
    "tpu.trace_stop"() : () -> ()
    %980 = vector.shape_cast %979 : vector<2x2x16xf32> to vector<2x32xf32>
    %981 = arith.truncf %980 : vector<2x32xf32> to vector<2x32xbf16>
    %cst_252 = arith.constant dense<0.000000e+00> : vector<2x16xf32>
    %982 = tpu.matmul %981, %5, %cst_252 {dimension_numbers = #tpu.dot_dimension_numbers<[1], [0], [0], [1], [0, 0, 1, 1], [], []>} : vector<2x32xbf16>, vector<32x16xbf16>, vector<2x16xf32> -> vector<2x16xf32>
    %983 = vector.extract_strided_slice %964 {offsets = [0, 2, 0], sizes = [2, 2, 8], strides = [1, 1, 1]} : vector<2x4x8xf32> to vector<2x2x8xf32>
    %984 = arith.negf %983 : vector<2x2x8xf32>
    %985 = math.exp %984 : vector<2x2x8xf32>
    %cst_253 = arith.constant 1.000000e+00 : f32
    %986 = vector.broadcast %cst_253 : f32 to vector<2x2x8xf32>
    %987 = arith.addf %986, %985 : vector<2x2x8xf32>
    %988 = arith.divf %986, %987 : vector<2x2x8xf32>
    %cst_254 = arith.constant dense<0.000000e+00> : vector<2x8xf32>
    %989 = vector.multi_reduction <add>, %988, %cst_254 [1] : vector<2x2x8xf32> to vector<2x8xf32>
    %cst_255 = arith.constant 2.000000e+00 : f32
    %990 = vector.broadcast %cst_255 : f32 to vector<2x8xf32>
    %991 = arith.divf %989, %990 : vector<2x8xf32>
    %cst_256 = arith.constant 9.990000e-01 : f32
    %992 = vector.broadcast %cst_256 : f32 to vector<2x8xf32>
    %993 = arith.mulf %992, %991 : vector<2x8xf32>
    %994 = vector.shape_cast %993 : vector<2x8xf32> to vector<2x8x1xf32>
    %cst_257 = arith.constant 1.000000e+00 : f32
    %995 = vector.broadcast %cst_257 : f32 to vector<2x8x1xf32>
    %996 = arith.subf %995, %994 : vector<2x8x1xf32>
    %997 = vector.broadcast %996 : vector<2x8x1xf32> to vector<2x8x16xf32>
    %998 = arith.mulf %850, %997 : vector<2x8x16xf32>
    %999 = vector.shape_cast %993 : vector<2x8xf32> to vector<2x8x1xf32>
    %1000 = vector.shape_cast %965 : vector<2x16xf32> to vector<2x1x16xf32>
    %1001 = vector.broadcast %999 : vector<2x8x1xf32> to vector<2x8x16xf32>
    %1002 = vector.broadcast %1000 : vector<2x1x16xf32> to vector<2x8x16xf32>
    %1003 = arith.mulf %1001, %1002 : vector<2x8x16xf32>
    %1004 = arith.addf %998, %1003 : vector<2x8x16xf32>
    %1005 = vector.broadcast %957 : vector<2x1x1xf32> to vector<2x8x16xf32>
    %1006 = arith.mulf %1005, %850 : vector<2x8x16xf32>
    %cst_258 = arith.constant 1.000000e+00 : f32
    %1007 = vector.broadcast %cst_258 : f32 to vector<2x1x1xf32>
    %1008 = arith.subf %1007, %957 : vector<2x1x1xf32>
    %1009 = vector.broadcast %1008 : vector<2x1x1xf32> to vector<2x8x16xf32>
    %1010 = arith.mulf %1009, %1004 : vector<2x8x16xf32>
    %1011 = arith.addf %1006, %1010 : vector<2x8x16xf32>
    %1012 = arith.addf %962, %982 : vector<2x16xf32>
    %1013 = arith.truncf %1012 : vector<2x16xf32> to vector<2x16xbf16>
    %cst_259 = arith.constant dense<0.000000e+00> : vector<2x128xf32>
    %1014 = tpu.matmul %1013, %7, %cst_259 {dimension_numbers = #tpu.dot_dimension_numbers<[1], [0], [0], [1], [0, 0, 1, 1], [], []>} : vector<2x16xbf16>, vector<16x128xbf16>, vector<2x128xf32> -> vector<2x128xf32>
    %1015 = vector.broadcast %9 : vector<1x128xf32> to vector<2x128xf32>
    %1016 = arith.addf %1014, %1015 : vector<2x128xf32>
    %1017 = vector.extract_strided_slice %1016 {offsets = [0, 0], sizes = [2, 64], strides = [1, 1]} : vector<2x128xf32> to vector<2x64xf32>
    %1018 = vector.extract_strided_slice %1016 {offsets = [0, 64], sizes = [2, 64], strides = [1, 1]} : vector<2x128xf32> to vector<2x64xf32>
    %cst_260 = arith.constant 0.000000e+00 : f32
    %1019 = vector.broadcast %cst_260 : f32 to vector<2x64xf32>
    %1020 = arith.maximumf %1018, %1019 : vector<2x64xf32>
    %1021 = arith.truncf %1020 : vector<2x64xf32> to vector<2x64xbf16>
    %1022 = arith.addf %956, %1017 : vector<2x64xf32>
    %cst_261 = arith.constant dense<0.000000e+00> : vector<2x64xf32>
    %1023 = tpu.matmul %1021, %11, %cst_261 {dimension_numbers = #tpu.dot_dimension_numbers<[1], [0], [0], [1], [0, 0, 1, 1], [], []>} : vector<2x64xbf16>, vector<64x64xbf16>, vector<2x64xf32> -> vector<2x64xf32>
    %1024 = arith.addf %1022, %1023 : vector<2x64xf32>
    %1025 = arith.truncf %1024 : vector<2x64xf32> to vector<2x64xbf16>
    %cst_262 = arith.constant dense<0.000000e+00> : vector<2x64xf32>
    %1026 = tpu.matmul %1025, %13, %cst_262 {dimension_numbers = #tpu.dot_dimension_numbers<[1], [0], [0], [1], [0, 0, 1, 1], [], []>} : vector<2x64xbf16>, vector<64x64xbf16>, vector<2x64xf32> -> vector<2x64xf32>
    %1027 = vector.broadcast %15 : vector<1x64xf32> to vector<2x64xf32>
    %1028 = arith.addf %1026, %1027 : vector<2x64xf32>
    %1029 = vector.extract_strided_slice %1028 {offsets = [0, 0], sizes = [2, 16], strides = [1, 1]} : vector<2x64xf32> to vector<2x16xf32>
    %1030 = vector.extract_strided_slice %1028 {offsets = [0, 16], sizes = [2, 32], strides = [1, 1]} : vector<2x64xf32> to vector<2x32xf32>
    %1031 = vector.shape_cast %1030 : vector<2x32xf32> to vector<2x4x8xf32>
    %1032 = vector.extract_strided_slice %1028 {offsets = [0, 48], sizes = [2, 16], strides = [1, 1]} : vector<2x64xf32> to vector<2x16xf32>
    %1033 = vector.extract_strided_slice %1031 {offsets = [0, 0, 0], sizes = [2, 2, 8], strides = [1, 1, 1]} : vector<2x4x8xf32> to vector<2x2x8xf32>
    %cst_263 = arith.constant dense<0xFF800000> : vector<2x2xf32>
    %1034 = vector.multi_reduction <maximumf>, %1033, %cst_263 [2] : vector<2x2x8xf32> to vector<2x2xf32>
    %1035 = vector.shape_cast %1034 : vector<2x2xf32> to vector<2x2x1xf32>
    %1036 = vector.broadcast %1035 : vector<2x2x1xf32> to vector<2x2x8xf32>
    %1037 = arith.subf %1033, %1036 : vector<2x2x8xf32>
    %1038 = math.exp %1037 : vector<2x2x8xf32>
    %cst_264 = arith.constant dense<0.000000e+00> : vector<2x2xf32>
    %1039 = vector.multi_reduction <add>, %1038, %cst_264 [2] : vector<2x2x8xf32> to vector<2x2xf32>
    %1040 = vector.shape_cast %1039 : vector<2x2xf32> to vector<2x2x1xf32>
    %1041 = tpu.reciprocal %1040 {approx = true} : vector<2x2x1xf32> -> vector<2x2x1xf32>
    %1042 = vector.broadcast %1041 : vector<2x2x1xf32> to vector<2x2x8xf32>
    %1043 = arith.mulf %1038, %1042 : vector<2x2x8xf32>
    %1044 = arith.truncf %1043 : vector<2x2x8xf32> to vector<2x2x8xbf16>
    %1045 = arith.truncf %917 : vector<2x8x16xf32> to vector<2x8x16xbf16>
    "tpu.trace_start"() <{level = 10 : i32, message = "bhm,bmd->bhd"}> : () -> ()
    %cst_265 = arith.constant dense<0.000000e+00> : vector<2x2x16xf32>
    %1046 = tpu.matmul %1044, %1045, %cst_265 {dimension_numbers = #tpu.dot_dimension_numbers<[2], [1], [1], [2], [0, 0, 0, 1, 1, 2], [0], [0]>} : vector<2x2x8xbf16>, vector<2x8x16xbf16>, vector<2x2x16xf32> -> vector<2x2x16xf32>
    "tpu.trace_stop"() : () -> ()
    %1047 = vector.shape_cast %1046 : vector<2x2x16xf32> to vector<2x32xf32>
    %1048 = arith.truncf %1047 : vector<2x32xf32> to vector<2x32xbf16>
    %cst_266 = arith.constant dense<0.000000e+00> : vector<2x16xf32>
    %1049 = tpu.matmul %1048, %17, %cst_266 {dimension_numbers = #tpu.dot_dimension_numbers<[1], [0], [0], [1], [0, 0, 1, 1], [], []>} : vector<2x32xbf16>, vector<32x16xbf16>, vector<2x16xf32> -> vector<2x16xf32>
    %1050 = vector.extract_strided_slice %1031 {offsets = [0, 2, 0], sizes = [2, 2, 8], strides = [1, 1, 1]} : vector<2x4x8xf32> to vector<2x2x8xf32>
    %1051 = arith.negf %1050 : vector<2x2x8xf32>
    %1052 = math.exp %1051 : vector<2x2x8xf32>
    %cst_267 = arith.constant 1.000000e+00 : f32
    %1053 = vector.broadcast %cst_267 : f32 to vector<2x2x8xf32>
    %1054 = arith.addf %1053, %1052 : vector<2x2x8xf32>
    %1055 = arith.divf %1053, %1054 : vector<2x2x8xf32>
    %cst_268 = arith.constant dense<0.000000e+00> : vector<2x8xf32>
    %1056 = vector.multi_reduction <add>, %1055, %cst_268 [1] : vector<2x2x8xf32> to vector<2x8xf32>
    %cst_269 = arith.constant 2.000000e+00 : f32
    %1057 = vector.broadcast %cst_269 : f32 to vector<2x8xf32>
    %1058 = arith.divf %1056, %1057 : vector<2x8xf32>
    %cst_270 = arith.constant 9.990000e-01 : f32
    %1059 = vector.broadcast %cst_270 : f32 to vector<2x8xf32>
    %1060 = arith.mulf %1059, %1058 : vector<2x8xf32>
    %1061 = vector.shape_cast %1060 : vector<2x8xf32> to vector<2x8x1xf32>
    %cst_271 = arith.constant 1.000000e+00 : f32
    %1062 = vector.broadcast %cst_271 : f32 to vector<2x8x1xf32>
    %1063 = arith.subf %1062, %1061 : vector<2x8x1xf32>
    %1064 = vector.broadcast %1063 : vector<2x8x1xf32> to vector<2x8x16xf32>
    %1065 = arith.mulf %917, %1064 : vector<2x8x16xf32>
    %1066 = vector.shape_cast %1060 : vector<2x8xf32> to vector<2x8x1xf32>
    %1067 = vector.shape_cast %1032 : vector<2x16xf32> to vector<2x1x16xf32>
    %1068 = vector.broadcast %1066 : vector<2x8x1xf32> to vector<2x8x16xf32>
    %1069 = vector.broadcast %1067 : vector<2x1x16xf32> to vector<2x8x16xf32>
    %1070 = arith.mulf %1068, %1069 : vector<2x8x16xf32>
    %1071 = arith.addf %1065, %1070 : vector<2x8x16xf32>
    %1072 = vector.broadcast %957 : vector<2x1x1xf32> to vector<2x8x16xf32>
    %1073 = arith.mulf %1072, %917 : vector<2x8x16xf32>
    %cst_272 = arith.constant 1.000000e+00 : f32
    %1074 = vector.broadcast %cst_272 : f32 to vector<2x1x1xf32>
    %1075 = arith.subf %1074, %957 : vector<2x1x1xf32>
    %1076 = vector.broadcast %1075 : vector<2x1x1xf32> to vector<2x8x16xf32>
    %1077 = arith.mulf %1076, %1071 : vector<2x8x16xf32>
    %1078 = arith.addf %1073, %1077 : vector<2x8x16xf32>
    %1079 = arith.addf %1029, %1049 : vector<2x16xf32>
    %1080 = arith.truncf %1079 : vector<2x16xf32> to vector<2x16xbf16>
    %cst_273 = arith.constant dense<0.000000e+00> : vector<2x128xf32>
    %1081 = tpu.matmul %1080, %19, %cst_273 {dimension_numbers = #tpu.dot_dimension_numbers<[1], [0], [0], [1], [0, 0, 1, 1], [], []>} : vector<2x16xbf16>, vector<16x128xbf16>, vector<2x128xf32> -> vector<2x128xf32>
    %1082 = vector.broadcast %21 : vector<1x128xf32> to vector<2x128xf32>
    %1083 = arith.addf %1081, %1082 : vector<2x128xf32>
    %1084 = vector.extract_strided_slice %1083 {offsets = [0, 0], sizes = [2, 64], strides = [1, 1]} : vector<2x128xf32> to vector<2x64xf32>
    %1085 = vector.extract_strided_slice %1083 {offsets = [0, 64], sizes = [2, 64], strides = [1, 1]} : vector<2x128xf32> to vector<2x64xf32>
    %cst_274 = arith.constant 0.000000e+00 : f32
    %1086 = vector.broadcast %cst_274 : f32 to vector<2x64xf32>
    %1087 = arith.maximumf %1085, %1086 : vector<2x64xf32>
    %1088 = arith.truncf %1087 : vector<2x64xf32> to vector<2x64xbf16>
    %1089 = arith.addf %1024, %1084 : vector<2x64xf32>
    %cst_275 = arith.constant dense<0.000000e+00> : vector<2x64xf32>
    %1090 = tpu.matmul %1088, %23, %cst_275 {dimension_numbers = #tpu.dot_dimension_numbers<[1], [0], [0], [1], [0, 0, 1, 1], [], []>} : vector<2x64xbf16>, vector<64x64xbf16>, vector<2x64xf32> -> vector<2x64xf32>
    %1091 = arith.addf %1089, %1090 : vector<2x64xf32>
    %1092 = arith.truncf %1091 : vector<2x64xf32> to vector<2x64xbf16>
    %cst_276 = arith.constant dense<0.000000e+00> : vector<2x64xf32>
    %1093 = tpu.matmul %1092, %137, %cst_276 {dimension_numbers = #tpu.dot_dimension_numbers<[1], [0], [0], [1], [0, 0, 1, 1], [], []>} : vector<2x64xbf16>, vector<64x64xbf16>, vector<2x64xf32> -> vector<2x64xf32>
    %1094 = vector.broadcast %138 : vector<1x64xf32> to vector<2x64xf32>
    %1095 = arith.addf %1093, %1094 : vector<2x64xf32>
    %cst_277 = arith.constant dense<0xFF800000> : vector<2xf32>
    %1096 = vector.multi_reduction <maximumf>, %1095, %cst_277 [1] : vector<2x64xf32> to vector<2xf32>
    %1097 = vector.shape_cast %1096 : vector<2xf32> to vector<2x1xf32>
    %1098 = vector.broadcast %1097 : vector<2x1xf32> to vector<2x64xf32>
    %1099 = arith.cmpf oge, %1095, %1098 : vector<2x64xf32>
    %c64_i32_278 = arith.constant 64 : i32
    %1100 = vector.broadcast %c64_i32_278 : i32 to vector<2x64xi32>
    %1101 = arith.select %1099, %139, %1100 : vector<2x64xi1>, vector<2x64xi32>
    %cst_279 = arith.constant dense<2147483647> : vector<2xi32>
    %1102 = vector.multi_reduction <minsi>, %1101, %cst_279 [1] : vector<2x64xi32> to vector<2xi32>
    %1103 = vector.shape_cast %1102 : vector<2xi32> to vector<2x1xi32>
    %1104 = tpu.concatenate %298, %459, %620, %781, %942, %1103 in 1 : vector<2x1xi32>, vector<2x1xi32>, vector<2x1xi32>, vector<2x1xi32>, vector<2x1xi32>, vector<2x1xi32> -> vector<2x6xi32>
    %c0_280 = arith.constant 0 : index
    %c0_281 = arith.constant 0 : index
    %1105 = vector.load %arg14[%c0_280, %c0_281] : memref<2x6xi32, #tpu.memory_space<vmem>>, vector<2x6xi32>
    tpu.vector_store %arg14[%c0_280, %c0_281], %1104 {strides = array<i32>} : memref<2x6xi32, #tpu.memory_space<vmem>>, vector<2x6xi32>,
    %c0_282 = arith.constant 0 : index
    %c0_283 = arith.constant 0 : index
    %c0_284 = arith.constant 0 : index
    %c0_285 = arith.constant 0 : index
    %1106 = vector.load %arg15[%c0_282, %c0_283, %c0_284, %c0_285] : memref<2x2x8x16xf32, #tpu.memory_space<vmem>>, vector<1x2x8x16xf32>
    %1107 = vector.shape_cast %1106 : vector<1x2x8x16xf32> to vector<2x8x16xf32>
    %1108 = vector.shape_cast %1011 : vector<2x8x16xf32> to vector<1x2x8x16xf32>
    tpu.vector_store %arg15[%c0_282, %c0_283, %c0_284, %c0_285], %1108 {strides = array<i32>} : memref<2x2x8x16xf32, #tpu.memory_space<vmem>>, vector<1x2x8x16xf32>,
    %c1_286 = arith.constant 1 : index
    %c0_287 = arith.constant 0 : index
    %c0_288 = arith.constant 0 : index
    %c0_289 = arith.constant 0 : index
    %1109 = vector.load %arg15[%c1_286, %c0_287, %c0_288, %c0_289] : memref<2x2x8x16xf32, #tpu.memory_space<vmem>>, vector<1x2x8x16xf32>
    %1110 = vector.shape_cast %1109 : vector<1x2x8x16xf32> to vector<2x8x16xf32>
    %1111 = vector.shape_cast %1078 : vector<2x8x16xf32> to vector<1x2x8x16xf32>
    tpu.vector_store %arg15[%c1_286, %c0_287, %c0_288, %c0_289], %1111 {strides = array<i32>} : memref<2x2x8x16xf32, #tpu.memory_space<vmem>>, vector<1x2x8x16xf32>,
    return
  }
  func.func @transform_0(%arg0: i32) -> (i32, i32, i32) {
    %c0_i32 = arith.constant 0 : i32
    %c0_i32_0 = arith.constant 0 : i32
    %c0_i32_1 = arith.constant 0 : i32
    %c0_i32_2 = arith.constant 0 : i32
    return %c0_i32, %c0_i32_0, %c0_i32_1 : i32, i32, i32
  }
  func.func @transform_1(%arg0: i32) -> (i32, i32, i32) {
    %c0_i32 = arith.constant 0 : i32
    %c0_i32_0 = arith.constant 0 : i32
    %c0_i32_1 = arith.constant 0 : i32
    %c0_i32_2 = arith.constant 0 : i32
    return %c0_i32, %c0_i32_0, %c0_i32_1 : i32, i32, i32
  }
  func.func @transform_2(%arg0: i32) -> (i32, i32) {
    %c0_i32 = arith.constant 0 : i32
    %c0_i32_0 = arith.constant 0 : i32
    %c0_i32_1 = arith.constant 0 : i32
    return %c0_i32, %c0_i32_0 : i32, i32
  }
  func.func @transform_3(%arg0: i32) -> (i32, i32, i32, i32) {
    %c0_i32 = arith.constant 0 : i32
    %c0_i32_0 = arith.constant 0 : i32
    %c0_i32_1 = arith.constant 0 : i32
    %c0_i32_2 = arith.constant 0 : i32
    %c0_i32_3 = arith.constant 0 : i32
    return %c0_i32, %c0_i32_0, %c0_i32_1, %c0_i32_2 : i32, i32, i32, i32
  }
  func.func @transform_4(%arg0: i32) -> (i32, i32) {
    %c0_i32 = arith.constant 0 : i32
    %c0_i32_0 = arith.constant 0 : i32
    %c0_i32_1 = arith.constant 0 : i32
    return %c0_i32, %c0_i32_0 : i32, i32
  }
  func.func @transform_5(%arg0: i32) -> (i32, i32) {
    %c0_i32 = arith.constant 0 : i32
    %c0_i32_0 = arith.constant 0 : i32
    %c0_i32_1 = arith.constant 0 : i32
    return %c0_i32, %c0_i32_0 : i32, i32
  }
  func.func @transform_6(%arg0: i32) -> (i32, i32) {
    %c0_i32 = arith.constant 0 : i32
    %c0_i32_0 = arith.constant 0 : i32
    %c0_i32_1 = arith.constant 0 : i32
    return %c0_i32, %c0_i32_0 : i32, i32
  }
  func.func @transform_7(%arg0: i32) -> (i32, i32, i32) {
    %c0_i32 = arith.constant 0 : i32
    %c0_i32_0 = arith.constant 0 : i32
    %c0_i32_1 = arith.constant 0 : i32
    %c0_i32_2 = arith.constant 0 : i32
    return %c0_i32, %c0_i32_0, %c0_i32_1 : i32, i32, i32
  }
  func.func @transform_8(%arg0: i32) -> (i32, i32, i32) {
    %c0_i32 = arith.constant 0 : i32
    %c0_i32_0 = arith.constant 0 : i32
    %c0_i32_1 = arith.constant 0 : i32
    %c0_i32_2 = arith.constant 0 : i32
    return %c0_i32, %c0_i32_0, %c0_i32_1 : i32, i32, i32
  }
  func.func @transform_9(%arg0: i32) -> (i32, i32, i32) {
    %c0_i32 = arith.constant 0 : i32
    %c0_i32_0 = arith.constant 0 : i32
    %c0_i32_1 = arith.constant 0 : i32
    %c0_i32_2 = arith.constant 0 : i32
    return %c0_i32, %c0_i32_0, %c0_i32_1 : i32, i32, i32
  }
  func.func @transform_10(%arg0: i32) -> (i32, i32, i32) {
    %c0_i32 = arith.constant 0 : i32
    %c0_i32_0 = arith.constant 0 : i32
    %c0_i32_1 = arith.constant 0 : i32
    %c0_i32_2 = arith.constant 0 : i32
    return %c0_i32, %c0_i32_0, %c0_i32_1 : i32, i32, i32
  }
  func.func @transform_11(%arg0: i32) -> (i32, i32, i32) {
    %c0_i32 = arith.constant 0 : i32
    %c0_i32_0 = arith.constant 0 : i32
    %c0_i32_1 = arith.constant 0 : i32
    %c0_i32_2 = arith.constant 0 : i32
    return %c0_i32, %c0_i32_0, %c0_i32_1 : i32, i32, i32
  }
  func.func @transform_12(%arg0: i32) -> (i32, i32, i32) {
    %c0_i32 = arith.constant 0 : i32
    %c0_i32_0 = arith.constant 0 : i32
    %c0_i32_1 = arith.constant 0 : i32
    %c0_i32_2 = arith.constant 0 : i32
    return %c0_i32, %c0_i32_0, %c0_i32_1 : i32, i32, i32
  }
  func.func @transform_13(%arg0: i32) -> (i32, i32) {
    %c0_i32 = arith.constant 0 : i32
    %c0_i32_0 = arith.constant 0 : i32
    %c0_i32_1 = arith.constant 0 : i32
    return %c0_i32, %c0_i32_0 : i32, i32
  }
  func.func @transform_14(%arg0: i32) -> (i32, i32, i32, i32) {
    %c0_i32 = arith.constant 0 : i32
    %c0_i32_0 = arith.constant 0 : i32
    %c0_i32_1 = arith.constant 0 : i32
    %c0_i32_2 = arith.constant 0 : i32
    %c0_i32_3 = arith.constant 0 : i32
    return %c0_i32, %c0_i32_0, %c0_i32_1, %c0_i32_2 : i32, i32, i32, i32
  }
}

</mosaic_0001>

<llo_original>
// kernel: tpu_custom_call.1
$region0: #{tpu_custom_call.1}
  #allocation0 [shape = 'u32[]', space=smem, size = 0x4, offset = 0x4, fixed_abs, tag = 'smem constant byte address 0x4 - core index']
  #allocation1 [shape = 'u32[72,128]{1,0:T(1,128)}', space=vmem, size = 0x9000, scoped, tag = 'internal scratch']
  %s0 = inlined_call_operand.vmem [shape: f32[8,2,64], index: 0, kind: input, shape index: {}]
  %s1 = inlined_call_operand.vmem [shape: f32[8,2,1], index: 1, kind: input, shape index: {}]
  %s2 = inlined_call_operand.vmem [shape: f32[2,64], index: 2, kind: input, shape index: {}]
  %s3 = inlined_call_operand.vmem [shape: f32[2,2,8,16], index: 3, kind: input, shape index: {}]
  %s4 = inlined_call_operand.hbm [shape: bf16[64,64], index: 4, kind: input, shape index: {}]
  %s5 = inlined_call_operand.hbm [shape: bf16[64,64], index: 5, kind: input, shape index: {}]
  %s6 = inlined_call_operand.vmem [shape: f32[1,64], index: 6, kind: input, shape index: {}]
  %s7 = inlined_call_operand.hbm [shape: bf16[2,64,64], index: 7, kind: input, shape index: {}]
  %s8 = inlined_call_operand.vmem [shape: f32[2,1,64], index: 8, kind: input, shape index: {}]
  %s9 = inlined_call_operand.vmem [shape: bf16[2,32,16], index: 9, kind: input, shape index: {}]
  %s10 = inlined_call_operand.hbm [shape: bf16[2,16,128], index: 10, kind: input, shape index: {}]
  %s11 = inlined_call_operand.vmem [shape: f32[2,1,128], index: 11, kind: input, shape index: {}]
  %s12 = inlined_call_operand.hbm [shape: bf16[2,64,64], index: 12, kind: input, shape index: {}]
  %s13 = inlined_call_operand.hbm [shape: s32[2,6], index: 13, kind: output, shape index: {0}]
  %s14 = inlined_call_operand.hbm [shape: f32[2,2,8,16], index: 14, kind: output, shape index: {1}]
  %15 = xla_tuple %s13, %s14
  %s16 = sld [smem:[#allocation0]]
  $region97: #{tpu_custom_call.1} parent=0
    _
  %s18 = ssub.s32 1, %s16
  %s19 = scalar_select 0, %s18, %s16
  $region1: #{tpu_custom_call.1} parent=0
    #allocation2 [shape = 'u8[16384]{0}', space=vmem, size = 0x4000, scoped, tag = 'input window, operand 4, single buffered']
    #allocation3 [shape = 's32[1]{0}', space=sflag, size = 0x4, scoped, tag = 'scoped memory for tpu_custom_call.1']
    #allocation4 [shape = 's32[1]{0}', space=sflag, size = 0x4, scoped, tag = 'scoped memory for tpu_custom_call.1']
    #allocation5 [shape = 'u8[16384]{0}', space=vmem, size = 0x4000, scoped, tag = 'input window, operand 5, single buffered']
    #allocation6 [shape = 's32[1]{0}', space=sflag, size = 0x4, scoped, tag = 'scoped memory for tpu_custom_call.1']
    #allocation7 [shape = 'u8[32768]{0}', space=vmem, size = 0x8000, scoped, tag = 'input window, operand 7, single buffered']
    #allocation8 [shape = 'u8[8192]{0}', space=vmem, size = 0x2000, scoped, tag = 'input window, operand 10, single buffered']
    #allocation9 [shape = 's32[1]{0}', space=sflag, size = 0x4, scoped, tag = 'scoped memory for tpu_custom_call.1']
    #allocation10 [shape = 'u8[32768]{0}', space=vmem, size = 0x8000, scoped, tag = 'input window, operand 12, single buffered']
    #allocation11 [shape = 'u8[1024]{0}', space=vmem, size = 0x400, scoped, tag = 'output window, operand 0, single buffered']
    #allocation12 [shape = 'u8[16384]{0}', space=vmem, size = 0x4000, scoped, tag = 'output window, operand 1, single buffered']
    #allocation13 [shape = 's32[1]{0}', space=sflag, size = 0x4, scoped, tag = 'scoped memory for tpu_custom_call.1']
    %20 = vsyncpa [#allocation3], 0
    %21 = vsyncpa [#allocation6], 0
    %22 = vsyncpa [#allocation9], 0
    %23 = vsyncpa [#allocation4], 0
    %24 = vsyncpa [#allocation13], 0
    // Predicated region
    $region2: #{tpu_custom_call.1} parent=1 // pred_check
      _
    $region3: #{tpu_custom_call.1} parent=1 // pred_check_branch
      %26 = sbr.rel (0) target = $region5
    $region4: #{tpu_custom_call.1} parent=1 // pred_region
      _
    $region5: #{tpu_custom_call.1} parent=1 // pred_fallthru
      _
    // Predicated region
    $region6: #{tpu_custom_call.1} parent=1 // pred_check
      _
    $region7: #{tpu_custom_call.1} parent=1 // pred_check_branch
      %28 = sbr.rel (0) target = $region9
    $region8: #{tpu_custom_call.1} parent=1 // pred_region
      _
    $region9: #{tpu_custom_call.1} parent=1 // pred_fallthru
      _
    // Predicated region
    $region10: #{tpu_custom_call.1} parent=1 // pred_check
      _
    $region11: #{tpu_custom_call.1} parent=1 // pred_check_branch
      %30 = sbr.rel (0) target = $region13
    $region12: #{tpu_custom_call.1} parent=1 // pred_region
      _
    $region13: #{tpu_custom_call.1} parent=1 // pred_fallthru
      _
    // Predicated region
    $region14: #{tpu_custom_call.1} parent=1 // pred_check
      _
    $region15: #{tpu_custom_call.1} parent=1 // pred_check_branch
      %32 = sbr.rel (0) target = $region17
    $region16: #{tpu_custom_call.1} parent=1 // pred_region
      _
    $region17: #{tpu_custom_call.1} parent=1 // pred_fallthru
      _
    // Predicated region
    $region18: #{tpu_custom_call.1} parent=1 // pred_check
      _
    $region19: #{tpu_custom_call.1} parent=1 // pred_check_branch
      %34 = sbr.rel (0) target = $region21
    $region20: #{tpu_custom_call.1} parent=1 // pred_region
      %36 = vsyncadd [#allocation3], 0
      %s37 = sshll.u32 %s4, 4
      %s38 = int_to_ptr.hbm [resolvable:$true] %s37
      %s39 = sshll.u32 [#allocation2], 4
      %s40 = int_to_ptr.vmem [resolvable:$true] %s39
      %45 = dma.hbm_to_vmem [thread:$0]  %s38, 512, %s40, [#allocation3], 64, 64, 4
    $region21: #{tpu_custom_call.1} parent=1 // pred_fallthru
      _
    // Predicated region
    $region22: #{tpu_custom_call.1} parent=1 // pred_check
      _
    $region23: #{tpu_custom_call.1} parent=1 // pred_check_branch
      %47 = sbr.rel (0) target = $region25
    $region24: #{tpu_custom_call.1} parent=1 // pred_region
      %49 = vsyncadd [#allocation6], 0
      %s50 = sshll.u32 %s5, 4
      %s51 = int_to_ptr.hbm [resolvable:$true] %s50
      %s52 = sshll.u32 [#allocation5], 4
      %s53 = int_to_ptr.vmem [resolvable:$true] %s52
      %58 = dma.hbm_to_vmem [thread:$0]  %s51, 512, %s53, [#allocation6], 64, 64, 4
    $region25: #{tpu_custom_call.1} parent=1 // pred_fallthru
      _
    // Predicated region
    $region26: #{tpu_custom_call.1} parent=1 // pred_check
      _
    $region27: #{tpu_custom_call.1} parent=1 // pred_check_branch
      %60 = sbr.rel (0) target = $region29
    $region28: #{tpu_custom_call.1} parent=1 // pred_region
      _
    $region29: #{tpu_custom_call.1} parent=1 // pred_fallthru
      _
    // Predicated region
    $region30: #{tpu_custom_call.1} parent=1 // pred_check
      _
    $region31: #{tpu_custom_call.1} parent=1 // pred_check_branch
      %62 = sbr.rel (0) target = $region33
    $region32: #{tpu_custom_call.1} parent=1 // pred_region
      %64 = vsyncadd [#allocation6], 0
      %s65 = sshll.u32 %s7, 4
      %s66 = int_to_ptr.hbm [resolvable:$true] %s65
      %s67 = sshll.u32 [#allocation7], 4
      %s68 = int_to_ptr.vmem [resolvable:$true] %s67
      %73 = dma.hbm_to_vmem [thread:$0]  %s66, 1024, %s68, [#allocation6], 64, 64, 4
    $region33: #{tpu_custom_call.1} parent=1 // pred_fallthru
      _
    // Predicated region
    $region34: #{tpu_custom_call.1} parent=1 // pred_check
      _
    $region35: #{tpu_custom_call.1} parent=1 // pred_check_branch
      %75 = sbr.rel (0) target = $region37
    $region36: #{tpu_custom_call.1} parent=1 // pred_region
      _
    $region37: #{tpu_custom_call.1} parent=1 // pred_fallthru
      _
    // Predicated region
    $region38: #{tpu_custom_call.1} parent=1 // pred_check
      _
    $region39: #{tpu_custom_call.1} parent=1 // pred_check_branch
      %77 = sbr.rel (0) target = $region41
    $region40: #{tpu_custom_call.1} parent=1 // pred_region
      _
    $region41: #{tpu_custom_call.1} parent=1 // pred_fallthru
      _
    // Predicated region
    $region42: #{tpu_custom_call.1} parent=1 // pred_check
      _
    $region43: #{tpu_custom_call.1} parent=1 // pred_check_branch
      %79 = sbr.rel (0) target = $region45
    $region44: #{tpu_custom_call.1} parent=1 // pred_region
      %81 = vsyncadd [#allocation9], 0
      %s82 = sshll.u32 %s10, 4
      %s83 = int_to_ptr.hbm [resolvable:$true] %s82
      %s84 = sshll.u32 [#allocation8], 4
      %s85 = int_to_ptr.vmem [resolvable:$true] %s84
      %90 = dma.hbm_to_vmem [thread:$0]  %s83, 256, %s85, [#allocation9], 64, 64, 4
    $region45: #{tpu_custom_call.1} parent=1 // pred_fallthru
      _
    // Predicated region
    $region46: #{tpu_custom_call.1} parent=1 // pred_check
      _
    $region47: #{tpu_custom_call.1} parent=1 // pred_check_branch
      %92 = sbr.rel (0) target = $region49
    $region48: #{tpu_custom_call.1} parent=1 // pred_region
      _
    $region49: #{tpu_custom_call.1} parent=1 // pred_fallthru
      _
    // Predicated region
    $region50: #{tpu_custom_call.1} parent=1 // pred_check
      _
    $region51: #{tpu_custom_call.1} parent=1 // pred_check_branch
      %94 = sbr.rel (0) target = $region53
    $region52: #{tpu_custom_call.1} parent=1 // pred_region
      %96 = vsyncadd [#allocation9], 0
      %s97 = sshll.u32 %s12, 4
      %s98 = int_to_ptr.hbm [resolvable:$true] %s97
      %s99 = sshll.u32 [#allocation10], 4
      %s100 = int_to_ptr.vmem [resolvable:$true] %s99
      %105 = dma.hbm_to_vmem [thread:$0]  %s98, 1024, %s100, [#allocation9], 64, 64, 4
    $region53: #{tpu_custom_call.1} parent=1 // pred_fallthru
      _
    // Predicated region
    $region54: #{tpu_custom_call.1} parent=1 // pred_check
      _
    $region55: #{tpu_custom_call.1} parent=1 // pred_check_branch
      %107 = sbr.rel (0) target = $region57
    $region56: #{tpu_custom_call.1} parent=1 // pred_region
      %109 = dma.done [#allocation3], 512
    $region57: #{tpu_custom_call.1} parent=1 // pred_fallthru
      _
    // Predicated region
    $region58: #{tpu_custom_call.1} parent=1 // pred_check
      _
    $region59: #{tpu_custom_call.1} parent=1 // pred_check_branch
      %111 = sbr.rel (0) target = $region61
    $region60: #{tpu_custom_call.1} parent=1 // pred_region
      %113 = dma.done [#allocation6], 512
    $region61: #{tpu_custom_call.1} parent=1 // pred_fallthru
      _
    // Predicated region
    $region62: #{tpu_custom_call.1} parent=1 // pred_check
      _
    $region63: #{tpu_custom_call.1} parent=1 // pred_check_branch
      %115 = sbr.rel (0) target = $region65
    $region64: #{tpu_custom_call.1} parent=1 // pred_region
      %117 = dma.done [#allocation6], 1024
    $region65: #{tpu_custom_call.1} parent=1 // pred_fallthru
      _
    // Predicated region
    $region66: #{tpu_custom_call.1} parent=1 // pred_check
      _
    $region67: #{tpu_custom_call.1} parent=1 // pred_check_branch
      %119 = sbr.rel (0) target = $region69
    $region68: #{tpu_custom_call.1} parent=1 // pred_region
      %121 = dma.done [#allocation9], 256
    $region69: #{tpu_custom_call.1} parent=1 // pred_fallthru
      _
    // Predicated region
    $region70: #{tpu_custom_call.1} parent=1 // pred_check
      _
    $region71: #{tpu_custom_call.1} parent=1 // pred_check_branch
      %123 = sbr.rel (0) target = $region73
    $region72: #{tpu_custom_call.1} parent=1 // pred_region
      %125 = dma.done [#allocation9], 1024
    $region73: #{tpu_custom_call.1} parent=1 // pred_fallthru
      _
    %v127 = vld [vmem:[#allocation7] sm:$0xf]
    %v128 = vld [vmem:[#allocation7 + $0x4] sm:$0xf]
    %v129 = vld [vmem:[#allocation7 + $0x8] sm:$0xf]
    %v130 = vld [vmem:[#allocation7 + $0xc] sm:$0xf]
    %v131 = vld [vmem:[#allocation7 + $0x10] sm:$0xf]
    %v132 = vld [vmem:[#allocation7 + $0x14] sm:$0xf]
    %v133 = vld [vmem:[#allocation7 + $0x18] sm:$0xf]
    %v134 = vld [vmem:[#allocation7 + $0x1c] sm:$0xf]
    %v135 = vld [vmem:[%s8] sm:$0x1]
    %v136 = vld [vmem:[%s9] sm:$0xf]
    %v137 = vld [vmem:[%s9 + $0x4] sm:$0xf]
    %v138 = vld [vmem:[%s9 + $0x8] sm:$0xf]
    %v139 = vld [vmem:[%s9 + $0xc] sm:$0xf]
    %v140 = vld [vmem:[#allocation8] sm:$0xf]
    %v141 = vld [vmem:[#allocation8 + $0x4] sm:$0xf]
    %v142 = vld [vmem:[%s11] sm:$0x1]
    %v143 = vld [vmem:[#allocation10] sm:$0xf]
    %v144 = vld [vmem:[#allocation10 + $0x4] sm:$0xf]
    %v145 = vld [vmem:[#allocation10 + $0x8] sm:$0xf]
    %v146 = vld [vmem:[#allocation10 + $0xc] sm:$0xf]
    %v147 = vld [vmem:[#allocation10 + $0x10] sm:$0xf]
    %v148 = vld [vmem:[#allocation10 + $0x14] sm:$0xf]
    %v149 = vld [vmem:[#allocation10 + $0x18] sm:$0xf]
    %v150 = vld [vmem:[#allocation10 + $0x1c] sm:$0xf]
    %s151 = scalar_lea.vmem [#allocation7], 32
    %v152 = vld [vmem:[%s151] sm:$0xf]
    %v153 = vld [vmem:[%s151 + $0x4] sm:$0xf]
    %v154 = vld [vmem:[%s151 + $0x8] sm:$0xf]
    %v155 = vld [vmem:[%s151 + $0xc] sm:$0xf]
    %v156 = vld [vmem:[%s151 + $0x10] sm:$0xf]
    %v157 = vld [vmem:[%s151 + $0x14] sm:$0xf]
    %v158 = vld [vmem:[%s151 + $0x18] sm:$0xf]
    %v159 = vld [vmem:[%s151 + $0x1c] sm:$0xf]
    %s160 = scalar_lea.vmem %s8, 1
    %v161 = vld [vmem:[%s160] sm:$0x1]
    %s162 = scalar_lea.vmem %s9, 16
    %v163 = vld [vmem:[%s162] sm:$0xf]
    %v164 = vld [vmem:[%s162 + $0x4] sm:$0xf]
    %v165 = vld [vmem:[%s162 + $0x8] sm:$0xf]
    %v166 = vld [vmem:[%s162 + $0xc] sm:$0xf]
    %s167 = scalar_lea.vmem [#allocation8], 8
    %v168 = vld [vmem:[%s167] sm:$0xf]
    %v169 = vld [vmem:[%s167 + $0x4] sm:$0xf]
    %s170 = scalar_lea.vmem %s11, 1
    %v171 = vld [vmem:[%s170] sm:$0x1]
    %s172 = scalar_lea.vmem [#allocation10], 32
    %v173 = vld [vmem:[%s172] sm:$0xf]
    %v174 = vld [vmem:[%s172 + $0x4] sm:$0xf]
    %v175 = vld [vmem:[%s172 + $0x8] sm:$0xf]
    %v176 = vld [vmem:[%s172 + $0xc] sm:$0xf]
    %v177 = vld [vmem:[%s172 + $0x10] sm:$0xf]
    %v178 = vld [vmem:[%s172 + $0x14] sm:$0xf]
    %v179 = vld [vmem:[%s172 + $0x18] sm:$0xf]
    %v180 = vld [vmem:[%s172 + $0x1c] sm:$0xf]
    %v181 = vld [vmem:[%s3] sm:$0xff]
    %v182 = vld [vmem:[%s3 + $0x8] sm:$0xff]
    %s183 = scalar_lea.vmem %s3, 16
    %v184 = vld [vmem:[%s183] sm:$0xff]
    %v185 = vld [vmem:[%s183 + $0x8] sm:$0xff]
    loop: start=0, step=1, limit=8
    $region74: #{tpu_custom_call.1} parent=1 // loop_pre_header
      _
    $region75: #{tpu_custom_call.1} parent=1 // loop_header
      %s187 = sphi 0, %s191
      %p188 = scmp.ge.s32.totalorder %s187, 8
      %v192 = vphi %v181, %v528
      %v193 = vphi %v182, %v529
      %v194 = vphi %v184, %v784
      %v195 = vphi %v185, %v785
    $region76: #{tpu_custom_call.1} parent=1 // loop_header_branch
      %190 = sbr.rel (%p188) target = $region80
    $region77: #{tpu_custom_call.1} parent=1 // loop_body
      %s196 = smul.u32 %s187, 2
      %s197 = scalar_lea.vmem %s0, %s196
      %v198 = vld [vmem:[%s197] sm:$0x3]
      %s199 = scalar_lea.vmem %s1, %s196
      %v200 = vld [vmem:[%s199] sm:$0x3]
      %v202 = vrot.slane %v200, 1
      %v204 = vpack.c.bf16 %v198, %v198
      %v206 = vperm.slane %v135, 0
      %v216 = vunpack.c.l.b16 %v127
      %v217 = vunpack.c.l.b16 %v128
      %v218 = vunpack.c.l.b16 %v129
      %v219 = vunpack.c.l.b16 %v130
      %v220 = vunpack.c.l.b16 %v131
      %v221 = vunpack.c.l.b16 %v132
      %v222 = vunpack.c.l.b16 %v133
      %v223 = vunpack.c.l.b16 %v134
      %v224 = vpack.c.b16 %v217, %v216
      %v225 = vpack.c.b16 %v219, %v218
      %v226 = vpack.c.b16 %v221, %v220
      %v227 = vpack.c.b16 %v223, %v222
      %vm232 = vcmask 523264
      %v234 = vsel %vm232, %v204, 0
      %236 = vmatpush.bf16.msra.mxu0 0
      %237 = vmatpush.bf16.msra.mxu0 0
      %238 = vmatpush.bf16.msra.mxu0 0
      %239 = vmatpush.bf16.msra.mxu0 0
      %240 = vmatpush.bf16.msra.mxu0 %v227
      %241 = vmatpush.bf16.msra.mxu0 %v226
      %242 = vmatpush.bf16.msra.mxu0 %v225
      %243 = vmatpush.bf16.msra.mxu0 %v224
      %244 = vmatmul.bf16.gmra.mxu0 %v234
      %v245 = vpop.f32.mrf.mxu0
      %v246 = vadd.f32 %v206, %v245
      %v247 = vpop.f32.mrf.mxu0
      %248 = vdwg.mxu0
      %250 = vrot.lane.b32.xlu0 %v246, 120
      %v251 = vpop.permute.xlu0 %250
      %252 = vrot.lane.b32.xlu0 %v246, 112
      %v253 = vpop.permute.xlu0 %252
      %254 = vrot.lane.b32.xlu0 %v246, 104
      %v255 = vpop.permute.xlu0 %254
      %256 = vrot.lane.b32.xlu0 %v251, 112
      %v257 = vpop.permute.xlu0 %256
      %258 = vrot.lane.b32.xlu0 %v253, 112
      %v259 = vpop.permute.xlu0 %258
      %260 = vrot.lane.b32.xlu0 %v255, 112
      %v261 = vpop.permute.xlu0 %260
      %v266 = vrot.slane %v259, 4
      %vm267 = vcmask 1047556
      %v268 = vsel %vm267, %v266, %v253
      %v270 = vunpack.c.l.s4 1983009808
      %v271 = vunpack.c.0.s8 %v270
      %v272 = vperm.slane %v268, %v271
      %v273 = vrot.slane %v261, 4
      %v274 = vsel %vm267, %v273, %v257
      %v276 = vunpack.c.l.s4 1983009808
      %v277 = vunpack.c.0.s8 %v276
      %v278 = vperm.slane %v274, %v277
      %v279 = vrot.slane %v278, 4
      %v280 = vsel %vm267, %v279, %v272
      %v282 = vunpack.c.l.s4 1934713408
      %v283 = vunpack.c.0.s8 %v282
      %v284 = vperm.slane %v280, %v283
      %v285 = vrot.slane %v284, 4
      %v286 = vsel %vm267, 0.0, %v285
      %vm287 = vcmask 58368
      %v288 = vsel %vm287, %v284, -inf
      %289 = vmax.xlane.f32.xlu0 %v288
      %v290 = vpop.xlane.xlu0 %289
      %v291 = vsel %vm287, %v286, -inf
      %292 = vmax.xlane.f32.xlu0 %v291
      %v293 = vpop.xlane.xlu0 %292
      %v294 = vsub.f32 %v284, %v290
      %v295 = vsub.f32 %v286, %v293
      %v296 = vmul.f32 %v294, 1.442695
      %v297 = vpow.pop %v296
      %v298 = vmul.f32 %v295, 1.442695
      %v299 = vpow.pop %v298
      %v300 = vsel %vm287, %v297, 0.0
      %301 = vadd.xlane.f32.xlu0 %v300
      %v302 = vpop.xlane.xlu0 %301
      %v303 = vsel %vm287, %v299, 0.0
      %304 = vadd.xlane.f32.xlu0 %v303
      %v305 = vpop.xlane.xlu0 %304
      %v306 = vrcp.pop %v302
      %v307 = vrcp.pop %v305
      %v308 = vmul.f32 %v297, %v306
      %v309 = vmul.f32 %v299, %v307
      %v310 = vpack.c.bf16 %v308, %v308
      %v311 = vpack.c.bf16 %v309, %v309
      %v312 = vpack.c.bf16 %v192, %v192
      %v313 = vpack.c.bf16 %v193, %v193
      %vm314 = vcmask 64512
      %v316 = vsel %vm314, %v310, 0
      %vm318 = vcmask 1043456
      %v320 = vsel %vm318, %v312, 0
      %322 = vmatpush.bf16.msra.mxu0 0
      %323 = vmatpush.bf16.msra.mxu0 0
      %324 = vmatpush.bf16.msra.mxu0 0
      %325 = vmatpush.bf16.msra.mxu0 0
      %326 = vmatpush.bf16.msra.mxu0 0
      %327 = vmatpush.bf16.msra.mxu0 0
      %328 = vmatpush.bf16.msra.mxu0 0
      %329 = vmatpush.bf16.msra.mxu0 %v320
      %330 = vmatmul.bf16.gmra.mxu0 %v316
      %v331 = vpop.f32.mrf.mxu0
      %v332 = vadd.f32 0.0, %v331
      %v333 = vpop.f32.mrf.mxu0
      %334 = vdwg.mxu0
      %v336 = vsel %vm314, %v311, 0
      %v339 = vsel %vm318, %v313, 0
      %341 = vmatpush.bf16.msra.mxu0 0
      %342 = vmatpush.bf16.msra.mxu0 0
      %343 = vmatpush.bf16.msra.mxu0 0
      %344 = vmatpush.bf16.msra.mxu0 0
      %345 = vmatpush.bf16.msra.mxu0 0
      %346 = vmatpush.bf16.msra.mxu0 0
      %347 = vmatpush.bf16.msra.mxu0 0
      %348 = vmatpush.bf16.msra.mxu0 %v339
      %349 = vmatmul.bf16.gmra.mxu0 %v336
      %v350 = vpop.f32.mrf.mxu0
      %v351 = vadd.f32 0.0, %v350
      %v352 = vpop.f32.mrf.mxu0
      %353 = vdwg.mxu0
      %v354 = vrot.slane %v351, 4
      %v355 = vsel %vm267, %v354, %v332
      %v357 = vunpack.c.l.s4 1934713408
      %v358 = vunpack.c.0.s8 %v357
      %v359 = vperm.slane %v355, %v358
      %v360 = vrot.slane %v359, 4
      %v361 = vsel %vm267, 0.0, %v360
      %363 = vrot.lane.b32.xlu0 %v361, 16
      %v364 = vpop.permute.xlu0 %363
      %vm366 = vcmask 130048
      %v367 = vsel %vm366, %v359, %v364
      %v368 = vpack.c.bf16 %v367, %v367
      %v373 = vunpack.c.l.b16 %v136
      %v374 = vunpack.c.l.b16 %v137
      %v375 = vunpack.c.l.b16 %v138
      %v376 = vunpack.c.l.b16 %v139
      %v377 = vpack.c.b16 %v374, %v373
      %v378 = vpack.c.b16 %v376, %v375
      %vm381 = vcmask 261120
      %v383 = vsel %vm381, %v368, 0
      %385 = vmatpush.bf16.msra.mxu0 0
      %386 = vmatpush.bf16.msra.mxu0 0
      %387 = vmatpush.bf16.msra.mxu0 0
      %388 = vmatpush.bf16.msra.mxu0 0
      %389 = vmatpush.bf16.msra.mxu0 0
      %390 = vmatpush.bf16.msra.mxu0 0
      %391 = vmatpush.bf16.msra.mxu0 %v378
      %392 = vmatpush.bf16.msra.mxu0 %v377
      %393 = vmatmul.bf16.gmra.mxu0 %v383
      %v394 = vpop.f32.mrf.mxu0
      %v395 = vadd.f32 0.0, %v394
      %v396 = vpop.f32.mrf.mxu0
      %397 = vdwg.mxu0
      %v398 = vxor.u32 %v284, 2147483648
      %v399 = vxor.u32 %v286, 2147483648
      %v400 = vmul.f32 %v398, 1.442695
      %v401 = vpow.pop %v400
      %v402 = vmul.f32 %v399, 1.442695
      %v403 = vpow.pop %v402
      %v404 = vadd.f32 %v401, 1.0
      %v405 = vadd.f32 %v403, 1.0
      %v406 = vrcp.pop %v404
      %v407 = vmul.f32 %v404, %v406
      %v408 = vsub.f32 1.0, %v407
      %v409 = vmul.f32 %v406, %v408
      %v410 = vadd.f32 %v406, %v409
      %vm411 = vweird.f32 %v404
      %vm412 = vweird.f32 %v406
      %vm413 = vmor %vm411, %vm412
      %v414 = vsel %vm413, %v406, %v410
      %v415 = vand.u32 2147483647, %v404
      %vm416 = vcmp.eq.f32.partialorder %v415, 8.507059e+37
      %v417 = vand.u32 %v404, 2147483648
      %v418 = vor.u32 1.1754944e-38, %v417
      %v419 = vsel %vm416, %v418, %v414
      %v420 = vmul.f32 1.0, %v419
      %v421 = vrcp.pop %v405
      %v422 = vmul.f32 %v405, %v421
      %v423 = vsub.f32 1.0, %v422
      %v424 = vmul.f32 %v421, %v423
      %v425 = vadd.f32 %v421, %v424
      %vm426 = vweird.f32 %v405
      %vm427 = vweird.f32 %v421
      %vm428 = vmor %vm426, %vm427
      %v429 = vsel %vm428, %v421, %v425
      %v430 = vand.u32 2147483647, %v405
      %vm431 = vcmp.eq.f32.partialorder %v430, 8.507059e+37
      %v432 = vand.u32 %v405, 2147483648
      %v433 = vor.u32 1.1754944e-38, %v432
      %v434 = vsel %vm431, %v433, %v429
      %v435 = vmul.f32 1.0, %v434
      %v438 = vrot.slane %v420, 2
      %v439 = vrot.slane %v435, 2
      %v442 = vsel %vm287, %v438, 0.0
      %v443 = vrot.slane %v442, 4
      %v444 = vadd.f32 %v442, %v443
      %v445 = vrot.slane %v444, 2
      %v446 = vadd.f32 %v444, %v445
      %v447 = vrot.slane %v446, 1
      %v448 = vadd.f32 %v446, %v447
      %v449 = vsel %vm287, %v439, 0.0
      %v450 = vrot.slane %v449, 4
      %v451 = vadd.f32 %v449, %v450
      %v452 = vrot.slane %v451, 2
      %v453 = vadd.f32 %v451, %v452
      %v454 = vrot.slane %v453, 1
      %v455 = vadd.f32 %v453, %v454
      %v456 = vrcp.pop 2.0
      %v457 = vmul.f32 2.0, %v456
      %v458 = vsub.f32 1.0, %v457
      %v459 = vmul.f32 %v456, %v458
      %v460 = vadd.f32 %v456, %v459
      %vm461 = vweird.f32 %v456
      %v462 = vsel %vm461, %v456, %v460
      %v463 = vmul.f32 %v448, %v462
      %v464 = vmul.f32 %v455, %v462
      %v465 = vmul.f32 %v463, 0.999
      %v466 = vmul.f32 %v464, 0.999
      %v467 = vlaneseq
      %v468 = vshrl.u32 %v467, 7
      %470 = vset.pattern.permute.xlu0 %v468
      %471 = vperm.xlu0 %470, %v465
      %v472 = vpop.permute.xlu0 %471
      %v473 = vlaneseq
      %v474 = vshrl.u32 %v473, 7
      %476 = vset.pattern.permute.xlu0 %v474
      %477 = vperm.xlu0 %476, %v466
      %v478 = vpop.permute.xlu0 %477
      %v479 = vsub.f32 1.0, %v472
      %v480 = vsub.f32 1.0, %v478
      %v481 = vmul.f32 %v192, %v479
      %v482 = vmul.f32 %v193, %v480
      %v483 = vrot.slane %v246, 1
      %v484 = vperm.slane %v246, 0
      %v485 = vperm.slane %v483, 0
      %v488 = vmul.f32 %v472, %v484
      %v489 = vmul.f32 %v478, %v485
      %492 = vrot.lane.b32.xlu0 %v488, 80
      %v493 = vpop.permute.xlu0 %492
      %494 = vrot.lane.b32.xlu0 %v489, 80
      %v495 = vpop.permute.xlu0 %494
      %v498 = vadd.f32 %v481, %v493
      %v499 = vadd.f32 %v482, %v495
      %v500 = vperm.slane %v200, 0
      %v501 = vperm.slane %v202, 0
      %502 = vset.pattern.permute.xlu0 0
      %503 = vperm.xlu0 %502, %v500
      %v504 = vpop.permute.xlu0 %503
      %506 = vset.pattern.permute.xlu0 0
      %507 = vperm.xlu0 %506, %v501
      %v508 = vpop.permute.xlu0 %507
      %v510 = vmul.f32 %v504, %v192
      %v511 = vmul.f32 %v508, %v193
      %v512 = vsub.f32 1.0, %v200
      %v513 = vsub.f32 1.0, %v202
      %v516 = vperm.slane %v512, 0
      %v517 = vperm.slane %v513, 0
      %518 = vset.pattern.permute.xlu0 0
      %519 = vperm.xlu0 %518, %v516
      %v520 = vpop.permute.xlu0 %519
      %522 = vset.pattern.permute.xlu0 0
      %523 = vperm.xlu0 %522, %v517
      %v524 = vpop.permute.xlu0 %523
      %v526 = vmul.f32 %v520, %v498
      %v527 = vmul.f32 %v524, %v499
      %v528 = vadd.f32 %v510, %v526
      %v529 = vadd.f32 %v511, %v527
      %v530 = vadd.f32 %v246, %v395
      %v531 = vpack.c.bf16 %v530, %v530
      %v533 = vperm.slane %v142, 0
      %v537 = vunpack.c.l.b16 %v140
      %v538 = vunpack.c.l.b16 %v141
      %v539 = vpack.c.b16 %v538, %v537
      %v542 = vsel %vm366, %v531, 0
      %544 = vmatpush.bf16.msra.mxu0 0
      %545 = vmatpush.bf16.msra.mxu0 0
      %546 = vmatpush.bf16.msra.mxu0 0
      %547 = vmatpush.bf16.msra.mxu0 0
      %548 = vmatpush.bf16.msra.mxu0 0
      %549 = vmatpush.bf16.msra.mxu0 0
      %550 = vmatpush.bf16.msra.mxu0 0
      %551 = vmatpush.bf16.msra.mxu0 %v539
      %552 = vmatmul.bf16.gmra.mxu0 %v542
      %v553 = vpop.f32.mrf.mxu0
      %v554 = vadd.f32 %v533, %v553
      %v555 = vpop.f32.mrf.mxu0
      %556 = vdwg.mxu0
      %v557 = vmax.f32 %v554, 0.0
      %v558 = vpack.c.bf16 %v557, %v557
      %v559 = vadd.f32 %v198, %v554
      %561 = vrot.lane.b32.xlu0 %v558, 64
      %v562 = vpop.permute.xlu0 %561
      %v571 = vunpack.c.l.b16 %v143
      %v572 = vunpack.c.l.b16 %v144
      %v573 = vunpack.c.l.b16 %v145
      %v574 = vunpack.c.l.b16 %v146
      %v575 = vunpack.c.l.b16 %v147
      %v576 = vunpack.c.l.b16 %v148
      %v577 = vunpack.c.l.b16 %v149
      %v578 = vunpack.c.l.b16 %v150
      %v579 = vpack.c.b16 %v572, %v571
      %v580 = vpack.c.b16 %v574, %v573
      %v581 = vpack.c.b16 %v576, %v575
      %v582 = vpack.c.b16 %v578, %v577
      %v588 = vsel %vm232, %v562, 0
      %590 = vmatpush.bf16.msra.mxu0 0
      %591 = vmatpush.bf16.msra.mxu0 0
      %592 = vmatpush.bf16.msra.mxu0 0
      %593 = vmatpush.bf16.msra.mxu0 0
      %594 = vmatpush.bf16.msra.mxu0 %v582
      %595 = vmatpush.bf16.msra.mxu0 %v581
      %596 = vmatpush.bf16.msra.mxu0 %v580
      %597 = vmatpush.bf16.msra.mxu0 %v579
      %598 = vmatmul.bf16.gmra.mxu0 %v588
      %v599 = vpop.f32.mrf.mxu0
      %v600 = vadd.f32 0.0, %v599
      %v601 = vpop.f32.mrf.mxu0
      %602 = vdwg.mxu0
      %v603 = vadd.f32 %v559, %v600
      %v604 = vpack.c.bf16 %v603, %v603
      %v606 = vperm.slane %v161, 0
      %v616 = vunpack.c.l.b16 %v152
      %v617 = vunpack.c.l.b16 %v153
      %v618 = vunpack.c.l.b16 %v154
      %v619 = vunpack.c.l.b16 %v155
      %v620 = vunpack.c.l.b16 %v156
      %v621 = vunpack.c.l.b16 %v157
      %v622 = vunpack.c.l.b16 %v158
      %v623 = vunpack.c.l.b16 %v159
      %v624 = vpack.c.b16 %v617, %v616
      %v625 = vpack.c.b16 %v619, %v618
      %v626 = vpack.c.b16 %v621, %v620
      %v627 = vpack.c.b16 %v623, %v622
      %v633 = vsel %vm232, %v604, 0
      %635 = vmatpush.bf16.msra.mxu0 0
      %636 = vmatpush.bf16.msra.mxu0 0
      %637 = vmatpush.bf16.msra.mxu0 0
      %638 = vmatpush.bf16.msra.mxu0 0
      %639 = vmatpush.bf16.msra.mxu0 %v627
      %640 = vmatpush.bf16.msra.mxu0 %v626
      %641 = vmatpush.bf16.msra.mxu0 %v625
      %642 = vmatpush.bf16.msra.mxu0 %v624
      %643 = vmatmul.bf16.gmra.mxu0 %v633
      %v644 = vpop.f32.mrf.mxu0
      %v645 = vadd.f32 %v606, %v644
      %v646 = vpop.f32.mrf.mxu0
      %647 = vdwg.mxu0
      %649 = vrot.lane.b32.xlu0 %v645, 120
      %v650 = vpop.permute.xlu0 %649
      %651 = vrot.lane.b32.xlu0 %v645, 112
      %v652 = vpop.permute.xlu0 %651
      %653 = vrot.lane.b32.xlu0 %v645, 104
      %v654 = vpop.permute.xlu0 %653
      %655 = vrot.lane.b32.xlu0 %v650, 112
      %v656 = vpop.permute.xlu0 %655
      %657 = vrot.lane.b32.xlu0 %v652, 112
      %v658 = vpop.permute.xlu0 %657
      %659 = vrot.lane.b32.xlu0 %v654, 112
      %v660 = vpop.permute.xlu0 %659
      %v665 = vrot.slane %v658, 4
      %v666 = vsel %vm267, %v665, %v652
      %v668 = vunpack.c.l.s4 1983009808
      %v669 = vunpack.c.0.s8 %v668
      %v670 = vperm.slane %v666, %v669
      %v671 = vrot.slane %v660, 4
      %v672 = vsel %vm267, %v671, %v656
      %v674 = vunpack.c.l.s4 1983009808
      %v675 = vunpack.c.0.s8 %v674
      %v676 = vperm.slane %v672, %v675
      %v677 = vrot.slane %v676, 4
      %v678 = vsel %vm267, %v677, %v670
      %v680 = vunpack.c.l.s4 1934713408
      %v681 = vunpack.c.0.s8 %v680
      %v682 = vperm.slane %v678, %v681
      %v683 = vrot.slane %v682, 4
      %v684 = vsel %vm267, 0.0, %v683
      %v685 = vxor.u32 %v682, 2147483648
      %v686 = vxor.u32 %v684, 2147483648
      %v687 = vmul.f32 %v685, 1.442695
      %v688 = vpow.pop %v687
      %v689 = vmul.f32 %v686, 1.442695
      %v690 = vpow.pop %v689
      %v691 = vadd.f32 %v688, 1.0
      %v692 = vadd.f32 %v690, 1.0
      %v693 = vrcp.pop %v691
      %v694 = vmul.f32 %v691, %v693
      %v695 = vsub.f32 1.0, %v694
      %v696 = vmul.f32 %v693, %v695
      %v697 = vadd.f32 %v693, %v696
      %vm698 = vweird.f32 %v691
      %vm699 = vweird.f32 %v693
      %vm700 = vmor %vm698, %vm699
      %v701 = vsel %vm700, %v693, %v697
      %v702 = vand.u32 2147483647, %v691
      %vm703 = vcmp.eq.f32.partialorder %v702, 8.507059e+37
      %v704 = vand.u32 %v691, 2147483648
      %v705 = vor.u32 1.1754944e-38, %v704
      %v706 = vsel %vm703, %v705, %v701
      %v707 = vmul.f32 1.0, %v706
      %v708 = vrcp.pop %v692
      %v709 = vmul.f32 %v692, %v708
      %v710 = vsub.f32 1.0, %v709
      %v711 = vmul.f32 %v708, %v710
      %v712 = vadd.f32 %v708, %v711
      %vm713 = vweird.f32 %v692
      %vm714 = vweird.f32 %v708
      %vm715 = vmor %vm713, %vm714
      %v716 = vsel %vm715, %v708, %v712
      %v717 = vand.u32 2147483647, %v692
      %vm718 = vcmp.eq.f32.partialorder %v717, 8.507059e+37
      %v719 = vand.u32 %v692, 2147483648
      %v720 = vor.u32 1.1754944e-38, %v719
      %v721 = vsel %vm718, %v720, %v716
      %v722 = vmul.f32 1.0, %v721
      %v725 = vrot.slane %v707, 2
      %v726 = vrot.slane %v722, 2
      %v729 = vsel %vm287, %v725, 0.0
      %v730 = vrot.slane %v729, 4
      %v731 = vadd.f32 %v729, %v730
      %v732 = vrot.slane %v731, 2
      %v733 = vadd.f32 %v731, %v732
      %v734 = vrot.slane %v733, 1
      %v735 = vadd.f32 %v733, %v734
      %v736 = vsel %vm287, %v726, 0.0
      %v737 = vrot.slane %v736, 4
      %v738 = vadd.f32 %v736, %v737
      %v739 = vrot.slane %v738, 2
      %v740 = vadd.f32 %v738, %v739
      %v741 = vrot.slane %v740, 1
      %v742 = vadd.f32 %v740, %v741
      %v743 = vmul.f32 %v735, %v462
      %v744 = vmul.f32 %v742, %v462
      %v745 = vmul.f32 %v743, 0.999
      %v746 = vmul.f32 %v744, 0.999
      %v747 = vlaneseq
      %v748 = vshrl.u32 %v747, 7
      %750 = vset.pattern.permute.xlu0 %v748
      %751 = vperm.xlu0 %750, %v745
      %v752 = vpop.permute.xlu0 %751
      %v753 = vlaneseq
      %v754 = vshrl.u32 %v753, 7
      %756 = vset.pattern.permute.xlu0 %v754
      %757 = vperm.xlu0 %756, %v746
      %v758 = vpop.permute.xlu0 %757
      %v759 = vsub.f32 1.0, %v752
      %v760 = vsub.f32 1.0, %v758
      %v761 = vmul.f32 %v194, %v759
      %v762 = vmul.f32 %v195, %v760
      %v763 = vrot.slane %v645, 1
      %v764 = vperm.slane %v645, 0
      %v765 = vperm.slane %v763, 0
      %v768 = vmul.f32 %v752, %v764
      %v769 = vmul.f32 %v758, %v765
      %772 = vrot.lane.b32.xlu0 %v768, 80
      %v773 = vpop.permute.xlu0 %772
      %774 = vrot.lane.b32.xlu0 %v769, 80
      %v775 = vpop.permute.xlu0 %774
      %v778 = vadd.f32 %v761, %v773
      %v779 = vadd.f32 %v762, %v775
      %v780 = vmul.f32 %v504, %v194
      %v781 = vmul.f32 %v508, %v195
      %v782 = vmul.f32 %v520, %v778
      %v783 = vmul.f32 %v524, %v779
      %v784 = vadd.f32 %v780, %v782
      %v785 = vadd.f32 %v781, %v783
    $region78: #{tpu_custom_call.1} parent=1 // loop_footer
      %s191 = sadd.s32 1, %s187
    $region79: #{tpu_custom_call.1} parent=1 // loop_footer_branch
      %186 = sbr.rel target = $region75
    $region80: #{tpu_custom_call.1} parent=1 // loop_exit
      _
    %v786 = vld [vmem:[%s2] sm:$0x3]
    %v787 = vpack.c.bf16 %v786, %v786
    %v789 = vperm.slane %v135, 0
    %v799 = vunpack.c.l.b16 %v127
    %v800 = vunpack.c.l.b16 %v128
    %v801 = vunpack.c.l.b16 %v129
    %v802 = vunpack.c.l.b16 %v130
    %v803 = vunpack.c.l.b16 %v131
    %v804 = vunpack.c.l.b16 %v132
    %v805 = vunpack.c.l.b16 %v133
    %v806 = vunpack.c.l.b16 %v134
    %v807 = vpack.c.b16 %v800, %v799
    %v808 = vpack.c.b16 %v802, %v801
    %v809 = vpack.c.b16 %v804, %v803
    %v810 = vpack.c.b16 %v806, %v805
    %vm815 = vcmask 523264
    %v817 = vsel %vm815, %v787, 0
    %819 = vmatpush.bf16.msra.mxu0 0
    %820 = vmatpush.bf16.msra.mxu0 0
    %821 = vmatpush.bf16.msra.mxu0 0
    %822 = vmatpush.bf16.msra.mxu0 0
    %823 = vmatpush.bf16.msra.mxu0 %v810
    %824 = vmatpush.bf16.msra.mxu0 %v809
    %825 = vmatpush.bf16.msra.mxu0 %v808
    %826 = vmatpush.bf16.msra.mxu0 %v807
    %827 = vmatmul.bf16.gmra.mxu0 %v817
    %v828 = vpop.f32.mrf.mxu0
    %v829 = vadd.f32 %v789, %v828
    %v830 = vpop.f32.mrf.mxu0
    %831 = vdwg.mxu0
    %833 = vrot.lane.b32.xlu0 %v829, 120
    %v834 = vpop.permute.xlu0 %833
    %835 = vrot.lane.b32.xlu0 %v829, 112
    %v836 = vpop.permute.xlu0 %835
    %837 = vrot.lane.b32.xlu0 %v829, 104
    %v838 = vpop.permute.xlu0 %837
    %839 = vrot.lane.b32.xlu0 %v834, 112
    %v840 = vpop.permute.xlu0 %839
    %841 = vrot.lane.b32.xlu0 %v836, 112
    %v842 = vpop.permute.xlu0 %841
    %843 = vrot.lane.b32.xlu0 %v838, 112
    %v844 = vpop.permute.xlu0 %843
    %v849 = vrot.slane %v842, 4
    %vm850 = vcmask 1047556
    %v851 = vsel %vm850, %v849, %v836
    %v853 = vunpack.c.l.s4 1983009808
    %v854 = vunpack.c.0.s8 %v853
    %v855 = vperm.slane %v851, %v854
    %v856 = vrot.slane %v844, 4
    %v857 = vsel %vm850, %v856, %v840
    %v859 = vunpack.c.l.s4 1983009808
    %v860 = vunpack.c.0.s8 %v859
    %v861 = vperm.slane %v857, %v860
    %v862 = vrot.slane %v861, 4
    %v863 = vsel %vm850, %v862, %v855
    %v865 = vunpack.c.l.s4 1934713408
    %v866 = vunpack.c.0.s8 %v865
    %v867 = vperm.slane %v863, %v866
    %v868 = vrot.slane %v867, 4
    %v869 = vsel %vm850, 0.0, %v868
    %vm870 = vcmask 58368
    %v871 = vsel %vm870, %v867, -inf
    %872 = vmax.xlane.f32.xlu0 %v871
    %v873 = vpop.xlane.xlu0 %872
    %v874 = vsel %vm870, %v869, -inf
    %875 = vmax.xlane.f32.xlu0 %v874
    %v876 = vpop.xlane.xlu0 %875
    %v877 = vsub.f32 %v867, %v873
    %v878 = vsub.f32 %v869, %v876
    %v879 = vmul.f32 %v877, 1.442695
    %v880 = vpow.pop %v879
    %v881 = vmul.f32 %v878, 1.442695
    %v882 = vpow.pop %v881
    %v883 = vsel %vm870, %v880, 0.0
    %884 = vadd.xlane.f32.xlu0 %v883
    %v885 = vpop.xlane.xlu0 %884
    %v886 = vsel %vm870, %v882, 0.0
    %887 = vadd.xlane.f32.xlu0 %v886
    %v888 = vpop.xlane.xlu0 %887
    %v889 = vrcp.pop %v885
    %v890 = vrcp.pop %v888
    %v891 = vmul.f32 %v880, %v889
    %v892 = vmul.f32 %v882, %v890
    %v893 = vpack.c.bf16 %v891, %v891
    %v894 = vpack.c.bf16 %v892, %v892
    %v895 = vpack.c.bf16 %v192, %v192
    %v896 = vpack.c.bf16 %v193, %v193
    %vm897 = vcmask 64512
    %v899 = vsel %vm897, %v893, 0
    %vm901 = vcmask 1043456
    %v903 = vsel %vm901, %v895, 0
    %905 = vmatpush.bf16.msra.mxu0 0
    %906 = vmatpush.bf16.msra.mxu0 0
    %907 = vmatpush.bf16.msra.mxu0 0
    %908 = vmatpush.bf16.msra.mxu0 0
    %909 = vmatpush.bf16.msra.mxu0 0
    %910 = vmatpush.bf16.msra.mxu0 0
    %911 = vmatpush.bf16.msra.mxu0 0
    %912 = vmatpush.bf16.msra.mxu0 %v903
    %913 = vmatmul.bf16.gmra.mxu0 %v899
    %v914 = vpop.f32.mrf.mxu0
    %v915 = vadd.f32 0.0, %v914
    %v916 = vpop.f32.mrf.mxu0
    %917 = vdwg.mxu0
    %v919 = vsel %vm897, %v894, 0
    %v922 = vsel %vm901, %v896, 0
    %924 = vmatpush.bf16.msra.mxu0 0
    %925 = vmatpush.bf16.msra.mxu0 0
    %926 = vmatpush.bf16.msra.mxu0 0
    %927 = vmatpush.bf16.msra.mxu0 0
    %928 = vmatpush.bf16.msra.mxu0 0
    %929 = vmatpush.bf16.msra.mxu0 0
    %930 = vmatpush.bf16.msra.mxu0 0
    %931 = vmatpush.bf16.msra.mxu0 %v922
    %932 = vmatmul.bf16.gmra.mxu0 %v919
    %v933 = vpop.f32.mrf.mxu0
    %v934 = vadd.f32 0.0, %v933
    %v935 = vpop.f32.mrf.mxu0
    %936 = vdwg.mxu0
    %v937 = vrot.slane %v934, 4
    %v938 = vsel %vm850, %v937, %v915
    %v940 = vunpack.c.l.s4 1934713408
    %v941 = vunpack.c.0.s8 %v940
    %v942 = vperm.slane %v938, %v941
    %v943 = vrot.slane %v942, 4
    %v944 = vsel %vm850, 0.0, %v943
    %946 = vrot.lane.b32.xlu0 %v944, 16
    %v947 = vpop.permute.xlu0 %946
    %vm949 = vcmask 130048
    %v950 = vsel %vm949, %v942, %v947
    %v951 = vpack.c.bf16 %v950, %v950
    %v956 = vunpack.c.l.b16 %v136
    %v957 = vunpack.c.l.b16 %v137
    %v958 = vunpack.c.l.b16 %v138
    %v959 = vunpack.c.l.b16 %v139
    %v960 = vpack.c.b16 %v957, %v956
    %v961 = vpack.c.b16 %v959, %v958
    %vm964 = vcmask 261120
    %v966 = vsel %vm964, %v951, 0
    %968 = vmatpush.bf16.msra.mxu0 0
    %969 = vmatpush.bf16.msra.mxu0 0
    %970 = vmatpush.bf16.msra.mxu0 0
    %971 = vmatpush.bf16.msra.mxu0 0
    %972 = vmatpush.bf16.msra.mxu0 0
    %973 = vmatpush.bf16.msra.mxu0 0
    %974 = vmatpush.bf16.msra.mxu0 %v961
    %975 = vmatpush.bf16.msra.mxu0 %v960
    %976 = vmatmul.bf16.gmra.mxu0 %v966
    %v977 = vpop.f32.mrf.mxu0
    %v978 = vadd.f32 0.0, %v977
    %v979 = vpop.f32.mrf.mxu0
    %980 = vdwg.mxu0
    %v981 = vxor.u32 %v867, 2147483648
    %v982 = vxor.u32 %v869, 2147483648
    %v983 = vmul.f32 %v981, 1.442695
    %v984 = vpow.pop %v983
    %v985 = vmul.f32 %v982, 1.442695
    %v986 = vpow.pop %v985
    %v987 = vadd.f32 %v984, 1.0
    %v988 = vadd.f32 %v986, 1.0
    %v989 = vrcp.pop %v987
    %v990 = vmul.f32 %v987, %v989
    %v991 = vsub.f32 1.0, %v990
    %v992 = vmul.f32 %v989, %v991
    %v993 = vadd.f32 %v989, %v992
    %vm994 = vweird.f32 %v987
    %vm995 = vweird.f32 %v989
    %vm996 = vmor %vm994, %vm995
    %v997 = vsel %vm996, %v989, %v993
    %v998 = vand.u32 2147483647, %v987
    %vm999 = vcmp.eq.f32.partialorder %v998, 8.507059e+37
    %v1000 = vand.u32 %v987, 2147483648
    %v1001 = vor.u32 1.1754944e-38, %v1000
    %v1002 = vsel %vm999, %v1001, %v997
    %v1003 = vmul.f32 1.0, %v1002
    %v1004 = vrcp.pop %v988
    %v1005 = vmul.f32 %v988, %v1004
    %v1006 = vsub.f32 1.0, %v1005
    %v1007 = vmul.f32 %v1004, %v1006
    %v1008 = vadd.f32 %v1004, %v1007
    %vm1009 = vweird.f32 %v988
    %vm1010 = vweird.f32 %v1004
    %vm1011 = vmor %vm1009, %vm1010
    %v1012 = vsel %vm1011, %v1004, %v1008
    %v1013 = vand.u32 2147483647, %v988
    %vm1014 = vcmp.eq.f32.partialorder %v1013, 8.507059e+37
    %v1015 = vand.u32 %v988, 2147483648
    %v1016 = vor.u32 1.1754944e-38, %v1015
    %v1017 = vsel %vm1014, %v1016, %v1012
    %v1018 = vmul.f32 1.0, %v1017
    %v1021 = vrot.slane %v1003, 2
    %v1022 = vrot.slane %v1018, 2
    %v1025 = vsel %vm870, %v1021, 0.0
    %v1026 = vrot.slane %v1025, 4
    %v1027 = vadd.f32 %v1025, %v1026
    %v1028 = vrot.slane %v1027, 2
    %v1029 = vadd.f32 %v1027, %v1028
    %v1030 = vrot.slane %v1029, 1
    %v1031 = vadd.f32 %v1029, %v1030
    %v1032 = vsel %vm870, %v1022, 0.0
    %v1033 = vrot.slane %v1032, 4
    %v1034 = vadd.f32 %v1032, %v1033
    %v1035 = vrot.slane %v1034, 2
    %v1036 = vadd.f32 %v1034, %v1035
    %v1037 = vrot.slane %v1036, 1
    %v1038 = vadd.f32 %v1036, %v1037
    %v1039 = vrcp.pop 2.0
    %v1040 = vmul.f32 2.0, %v1039
    %v1041 = vsub.f32 1.0, %v1040
    %v1042 = vmul.f32 %v1039, %v1041
    %v1043 = vadd.f32 %v1039, %v1042
    %vm1044 = vweird.f32 %v1039
    %v1045 = vsel %vm1044, %v1039, %v1043
    %v1046 = vmul.f32 %v1031, %v1045
    %v1047 = vmul.f32 %v1038, %v1045
    %v1048 = vmul.f32 %v1046, 0.999
    %v1049 = vmul.f32 %v1047, 0.999
    %v1050 = vlaneseq
    %v1051 = vshrl.u32 %v1050, 7
    %1053 = vset.pattern.permute.xlu0 %v1051
    %1054 = vperm.xlu0 %1053, %v1048
    %v1055 = vpop.permute.xlu0 %1054
    %v1056 = vlaneseq
    %v1057 = vshrl.u32 %v1056, 7
    %1059 = vset.pattern.permute.xlu0 %v1057
    %1060 = vperm.xlu0 %1059, %v1049
    %v1061 = vpop.permute.xlu0 %1060
    %v1062 = vsub.f32 1.0, %v1055
    %v1063 = vsub.f32 1.0, %v1061
    %v1064 = vmul.f32 %v192, %v1062
    %v1065 = vmul.f32 %v193, %v1063
    %v1066 = vrot.slane %v829, 1
    %v1067 = vperm.slane %v829, 0
    %v1068 = vperm.slane %v1066, 0
    %v1071 = vmul.f32 %v1055, %v1067
    %v1072 = vmul.f32 %v1061, %v1068
    %1075 = vrot.lane.b32.xlu0 %v1071, 80
    %v1076 = vpop.permute.xlu0 %1075
    %1077 = vrot.lane.b32.xlu0 %v1072, 80
    %v1078 = vpop.permute.xlu0 %1077
    %v1081 = vadd.f32 %v1064, %v1076
    %v1082 = vadd.f32 %v1065, %v1078
    %v1083 = vmul.f32 %v192, 0.0
    %v1084 = vmul.f32 %v193, 0.0
    %v1085 = vadd.f32 %v1083, %v1081
    %v1086 = vadd.f32 %v1084, %v1082
    %v1087 = vadd.f32 %v829, %v978
    %v1088 = vpack.c.bf16 %v1087, %v1087
    %v1090 = vperm.slane %v142, 0
    %v1094 = vunpack.c.l.b16 %v140
    %v1095 = vunpack.c.l.b16 %v141
    %v1096 = vpack.c.b16 %v1095, %v1094
    %v1099 = vsel %vm949, %v1088, 0
    %1101 = vmatpush.bf16.msra.mxu0 0
    %1102 = vmatpush.bf16.msra.mxu0 0
    %1103 = vmatpush.bf16.msra.mxu0 0
    %1104 = vmatpush.bf16.msra.mxu0 0
    %1105 = vmatpush.bf16.msra.mxu0 0
    %1106 = vmatpush.bf16.msra.mxu0 0
    %1107 = vmatpush.bf16.msra.mxu0 0
    %1108 = vmatpush.bf16.msra.mxu0 %v1096
    %1109 = vmatmul.bf16.gmra.mxu0 %v1099
    %v1110 = vpop.f32.mrf.mxu0
    %v1111 = vadd.f32 %v1090, %v1110
    %v1112 = vpop.f32.mrf.mxu0
    %1113 = vdwg.mxu0
    %v1114 = vmax.f32 %v1111, 0.0
    %v1115 = vpack.c.bf16 %v1114, %v1114
    %v1116 = vadd.f32 %v786, %v1111
    %1118 = vrot.lane.b32.xlu0 %v1115, 64
    %v1119 = vpop.permute.xlu0 %1118
    %v1128 = vunpack.c.l.b16 %v143
    %v1129 = vunpack.c.l.b16 %v144
    %v1130 = vunpack.c.l.b16 %v145
    %v1131 = vunpack.c.l.b16 %v146
    %v1132 = vunpack.c.l.b16 %v147
    %v1133 = vunpack.c.l.b16 %v148
    %v1134 = vunpack.c.l.b16 %v149
    %v1135 = vunpack.c.l.b16 %v150
    %v1136 = vpack.c.b16 %v1129, %v1128
    %v1137 = vpack.c.b16 %v1131, %v1130
    %v1138 = vpack.c.b16 %v1133, %v1132
    %v1139 = vpack.c.b16 %v1135, %v1134
    %v1145 = vsel %vm815, %v1119, 0
    %1147 = vmatpush.bf16.msra.mxu0 0
    %1148 = vmatpush.bf16.msra.mxu0 0
    %1149 = vmatpush.bf16.msra.mxu0 0
    %1150 = vmatpush.bf16.msra.mxu0 0
    %1151 = vmatpush.bf16.msra.mxu0 %v1139
    %1152 = vmatpush.bf16.msra.mxu0 %v1138
    %1153 = vmatpush.bf16.msra.mxu0 %v1137
    %1154 = vmatpush.bf16.msra.mxu0 %v1136
    %1155 = vmatmul.bf16.gmra.mxu0 %v1145
    %v1156 = vpop.f32.mrf.mxu0
    %v1157 = vadd.f32 0.0, %v1156
    %v1158 = vpop.f32.mrf.mxu0
    %1159 = vdwg.mxu0
    %v1160 = vadd.f32 %v1116, %v1157
    %v1161 = vpack.c.bf16 %v1160, %v1160
    %v1163 = vperm.slane %v161, 0
    %v1173 = vunpack.c.l.b16 %v152
    %v1174 = vunpack.c.l.b16 %v153
    %v1175 = vunpack.c.l.b16 %v154
    %v1176 = vunpack.c.l.b16 %v155
    %v1177 = vunpack.c.l.b16 %v156
    %v1178 = vunpack.c.l.b16 %v157
    %v1179 = vunpack.c.l.b16 %v158
    %v1180 = vunpack.c.l.b16 %v159
    %v1181 = vpack.c.b16 %v1174, %v1173
    %v1182 = vpack.c.b16 %v1176, %v1175
    %v1183 = vpack.c.b16 %v1178, %v1177
    %v1184 = vpack.c.b16 %v1180, %v1179
    %v1190 = vsel %vm815, %v1161, 0
    %1192 = vmatpush.bf16.msra.mxu0 0
    %1193 = vmatpush.bf16.msra.mxu0 0
    %1194 = vmatpush.bf16.msra.mxu0 0
    %1195 = vmatpush.bf16.msra.mxu0 0
    %1196 = vmatpush.bf16.msra.mxu0 %v1184
    %1197 = vmatpush.bf16.msra.mxu0 %v1183
    %1198 = vmatpush.bf16.msra.mxu0 %v1182
    %1199 = vmatpush.bf16.msra.mxu0 %v1181
    %1200 = vmatmul.bf16.gmra.mxu0 %v1190
    %v1201 = vpop.f32.mrf.mxu0
    %v1202 = vadd.f32 %v1163, %v1201
    %v1203 = vpop.f32.mrf.mxu0
    %1204 = vdwg.mxu0
    %1206 = vrot.lane.b32.xlu0 %v1202, 120
    %v1207 = vpop.permute.xlu0 %1206
    %1208 = vrot.lane.b32.xlu0 %v1202, 112
    %v1209 = vpop.permute.xlu0 %1208
    %1210 = vrot.lane.b32.xlu0 %v1202, 104
    %v1211 = vpop.permute.xlu0 %1210
    %1212 = vrot.lane.b32.xlu0 %v1207, 112
    %v1213 = vpop.permute.xlu0 %1212
    %1214 = vrot.lane.b32.xlu0 %v1209, 112
    %v1215 = vpop.permute.xlu0 %1214
    %1216 = vrot.lane.b32.xlu0 %v1211, 112
    %v1217 = vpop.permute.xlu0 %1216
    %v1222 = vrot.slane %v1215, 4
    %v1223 = vsel %vm850, %v1222, %v1209
    %v1225 = vunpack.c.l.s4 1983009808
    %v1226 = vunpack.c.0.s8 %v1225
    %v1227 = vperm.slane %v1223, %v1226
    %v1228 = vrot.slane %v1217, 4
    %v1229 = vsel %vm850, %v1228, %v1213
    %v1231 = vunpack.c.l.s4 1983009808
    %v1232 = vunpack.c.0.s8 %v1231
    %v1233 = vperm.slane %v1229, %v1232
    %v1234 = vrot.slane %v1233, 4
    %v1235 = vsel %vm850, %v1234, %v1227
    %v1237 = vunpack.c.l.s4 1934713408
    %v1238 = vunpack.c.0.s8 %v1237
    %v1239 = vperm.slane %v1235, %v1238
    %v1240 = vrot.slane %v1239, 4
    %v1241 = vsel %vm850, 0.0, %v1240
    %v1242 = vxor.u32 %v1239, 2147483648
    %v1243 = vxor.u32 %v1241, 2147483648
    %v1244 = vmul.f32 %v1242, 1.442695
    %v1245 = vpow.pop %v1244
    %v1246 = vmul.f32 %v1243, 1.442695
    %v1247 = vpow.pop %v1246
    %v1248 = vadd.f32 %v1245, 1.0
    %v1249 = vadd.f32 %v1247, 1.0
    %v1250 = vrcp.pop %v1248
    %v1251 = vmul.f32 %v1248, %v1250
    %v1252 = vsub.f32 1.0, %v1251
    %v1253 = vmul.f32 %v1250, %v1252
    %v1254 = vadd.f32 %v1250, %v1253
    %vm1255 = vweird.f32 %v1248
    %vm1256 = vweird.f32 %v1250
    %vm1257 = vmor %vm1255, %vm1256
    %v1258 = vsel %vm1257, %v1250, %v1254
    %v1259 = vand.u32 2147483647, %v1248
    %vm1260 = vcmp.eq.f32.partialorder %v1259, 8.507059e+37
    %v1261 = vand.u32 %v1248, 2147483648
    %v1262 = vor.u32 1.1754944e-38, %v1261
    %v1263 = vsel %vm1260, %v1262, %v1258
    %v1264 = vmul.f32 1.0, %v1263
    %v1265 = vrcp.pop %v1249
    %v1266 = vmul.f32 %v1249, %v1265
    %v1267 = vsub.f32 1.0, %v1266
    %v1268 = vmul.f32 %v1265, %v1267
    %v1269 = vadd.f32 %v1265, %v1268
    %vm1270 = vweird.f32 %v1249
    %vm1271 = vweird.f32 %v1265
    %vm1272 = vmor %vm1270, %vm1271
    %v1273 = vsel %vm1272, %v1265, %v1269
    %v1274 = vand.u32 2147483647, %v1249
    %vm1275 = vcmp.eq.f32.partialorder %v1274, 8.507059e+37
    %v1276 = vand.u32 %v1249, 2147483648
    %v1277 = vor.u32 1.1754944e-38, %v1276
    %v1278 = vsel %vm1275, %v1277, %v1273
    %v1279 = vmul.f32 1.0, %v1278
    %v1282 = vrot.slane %v1264, 2
    %v1283 = vrot.slane %v1279, 2
    %v1286 = vsel %vm870, %v1282, 0.0
    %v1287 = vrot.slane %v1286, 4
    %v1288 = vadd.f32 %v1286, %v1287
    %v1289 = vrot.slane %v1288, 2
    %v1290 = vadd.f32 %v1288, %v1289
    %v1291 = vrot.slane %v1290, 1
    %v1292 = vadd.f32 %v1290, %v1291
    %v1293 = vsel %vm870, %v1283, 0.0
    %v1294 = vrot.slane %v1293, 4
    %v1295 = vadd.f32 %v1293, %v1294
    %v1296 = vrot.slane %v1295, 2
    %v1297 = vadd.f32 %v1295, %v1296
    %v1298 = vrot.slane %v1297, 1
    %v1299 = vadd.f32 %v1297, %v1298
    %v1300 = vmul.f32 %v1292, %v1045
    %v1301 = vmul.f32 %v1299, %v1045
    %v1302 = vmul.f32 %v1300, 0.999
    %v1303 = vmul.f32 %v1301, 0.999
    %v1304 = vlaneseq
    %v1305 = vshrl.u32 %v1304, 7
    %1307 = vset.pattern.permute.xlu0 %v1305
    %1308 = vperm.xlu0 %1307, %v1302
    %v1309 = vpop.permute.xlu0 %1308
    %v1310 = vlaneseq
    %v1311 = vshrl.u32 %v1310, 7
    %1313 = vset.pattern.permute.xlu0 %v1311
    %1314 = vperm.xlu0 %1313, %v1303
    %v1315 = vpop.permute.xlu0 %1314
    %v1316 = vsub.f32 1.0, %v1309
    %v1317 = vsub.f32 1.0, %v1315
    %v1318 = vmul.f32 %v194, %v1316
    %v1319 = vmul.f32 %v195, %v1317
    %v1320 = vrot.slane %v1202, 1
    %v1321 = vperm.slane %v1202, 0
    %v1322 = vperm.slane %v1320, 0
    %v1325 = vmul.f32 %v1309, %v1321
    %v1326 = vmul.f32 %v1315, %v1322
    %1329 = vrot.lane.b32.xlu0 %v1325, 80
    %v1330 = vpop.permute.xlu0 %1329
    %1331 = vrot.lane.b32.xlu0 %v1326, 80
    %v1332 = vpop.permute.xlu0 %1331
    %v1335 = vadd.f32 %v1318, %v1330
    %v1336 = vadd.f32 %v1319, %v1332
    %v1337 = vmul.f32 %v194, 0.0
    %v1338 = vmul.f32 %v195, 0.0
    %v1339 = vadd.f32 %v1337, %v1335
    %v1340 = vadd.f32 %v1338, %v1336
    %v1341 = vld [vmem:[#allocation2] sm:$0xf]
    %v1342 = vld [vmem:[#allocation2 + $0x4] sm:$0xf]
    %v1343 = vld [vmem:[#allocation2 + $0x8] sm:$0xf]
    %v1344 = vld [vmem:[#allocation2 + $0xc] sm:$0xf]
    %v1345 = vld [vmem:[#allocation2 + $0x10] sm:$0xf]
    %v1346 = vld [vmem:[#allocation2 + $0x14] sm:$0xf]
    %v1347 = vld [vmem:[#allocation2 + $0x18] sm:$0xf]
    %v1348 = vld [vmem:[#allocation2 + $0x1c] sm:$0xf]
    %v1349 = vld [vmem:[#allocation5] sm:$0xf]
    %v1350 = vld [vmem:[#allocation5 + $0x4] sm:$0xf]
    %v1351 = vld [vmem:[#allocation5 + $0x8] sm:$0xf]
    %v1352 = vld [vmem:[#allocation5 + $0xc] sm:$0xf]
    %v1353 = vld [vmem:[#allocation5 + $0x10] sm:$0xf]
    %v1354 = vld [vmem:[#allocation5 + $0x14] sm:$0xf]
    %v1355 = vld [vmem:[#allocation5 + $0x18] sm:$0xf]
    %v1356 = vld [vmem:[#allocation5 + $0x1c] sm:$0xf]
    %v1357 = vld [vmem:[%s6] sm:$0x1]
    %v1358 = vlaneseq
    %v1359 = vand.u32 %v1358, 127
    %vm1360 = vcmp.eq.s32.totalorder %v1359, 2
    %v1361 = vsel %vm1360, 1, 0
    %v1362 = vcvt.s32.f32 %v1361
    %v1363 = vpack.c.bf16 %v1362, %v1362
    %v1372 = vunpack.c.l.b16 %v1341
    %v1373 = vunpack.c.l.b16 %v1342
    %v1374 = vunpack.c.l.b16 %v1343
    %v1375 = vunpack.c.l.b16 %v1344
    %v1376 = vunpack.c.l.b16 %v1345
    %v1377 = vunpack.c.l.b16 %v1346
    %v1378 = vunpack.c.l.b16 %v1347
    %v1379 = vunpack.c.l.b16 %v1348
    %v1380 = vpack.c.b16 %v1373, %v1372
    %v1381 = vpack.c.b16 %v1375, %v1374
    %v1382 = vpack.c.b16 %v1377, %v1376
    %v1383 = vpack.c.b16 %v1379, %v1378
    %v1389 = vsel %vm815, %v1363, 0
    %1391 = vmatpush.bf16.msra.mxu0 0
    %1392 = vmatpush.bf16.msra.mxu0 0
    %1393 = vmatpush.bf16.msra.mxu0 0
    %1394 = vmatpush.bf16.msra.mxu0 0
    %1395 = vmatpush.bf16.msra.mxu0 %v1383
    %1396 = vmatpush.bf16.msra.mxu0 %v1382
    %1397 = vmatpush.bf16.msra.mxu0 %v1381
    %1398 = vmatpush.bf16.msra.mxu0 %v1380
    %1399 = vmatmul.bf16.gmra.mxu0 %v1389
    %v1400 = vpop.f32.mrf.mxu0
    %v1401 = vadd.f32 0.0, %v1400
    %v1402 = vpop.f32.mrf.mxu0
    %1403 = vdwg.mxu0
    %v1404 = vpack.c.bf16 %v1401, %v1401
    %v1406 = vsel %vm815, %v1404, 0
    %1408 = vmatpush.bf16.msra.mxu0 0
    %1409 = vmatpush.bf16.msra.mxu0 0
    %1410 = vmatpush.bf16.msra.mxu0 0
    %1411 = vmatpush.bf16.msra.mxu0 0
    %1412 = vmatpush.bf16.msra.mxu0 %v810
    %1413 = vmatpush.bf16.msra.mxu0 %v809
    %1414 = vmatpush.bf16.msra.mxu0 %v808
    %1415 = vmatpush.bf16.msra.mxu0 %v807
    %1416 = vmatmul.bf16.gmra.mxu0 %v1406
    %v1417 = vpop.f32.mrf.mxu0
    %v1418 = vadd.f32 %v789, %v1417
    %v1419 = vpop.f32.mrf.mxu0
    %1420 = vdwg.mxu0
    %1422 = vrot.lane.b32.xlu0 %v1418, 120
    %v1423 = vpop.permute.xlu0 %1422
    %1424 = vrot.lane.b32.xlu0 %v1418, 112
    %v1425 = vpop.permute.xlu0 %1424
    %1426 = vrot.lane.b32.xlu0 %v1418, 104
    %v1427 = vpop.permute.xlu0 %1426
    %1428 = vrot.lane.b32.xlu0 %v1423, 112
    %v1429 = vpop.permute.xlu0 %1428
    %1430 = vrot.lane.b32.xlu0 %v1425, 112
    %v1431 = vpop.permute.xlu0 %1430
    %1432 = vrot.lane.b32.xlu0 %v1427, 112
    %v1433 = vpop.permute.xlu0 %1432
    %v1438 = vrot.slane %v1431, 4
    %v1439 = vsel %vm850, %v1438, %v1425
    %v1441 = vunpack.c.l.s4 1983009808
    %v1442 = vunpack.c.0.s8 %v1441
    %v1443 = vperm.slane %v1439, %v1442
    %v1444 = vrot.slane %v1433, 4
    %v1445 = vsel %vm850, %v1444, %v1429
    %v1447 = vunpack.c.l.s4 1983009808
    %v1448 = vunpack.c.0.s8 %v1447
    %v1449 = vperm.slane %v1445, %v1448
    %v1450 = vrot.slane %v1449, 4
    %v1451 = vsel %vm850, %v1450, %v1443
    %v1453 = vunpack.c.l.s4 1934713408
    %v1454 = vunpack.c.0.s8 %v1453
    %v1455 = vperm.slane %v1451, %v1454
    %v1456 = vrot.slane %v1455, 4
    %v1457 = vsel %vm850, 0.0, %v1456
    %v1458 = vsel %vm870, %v1455, -inf
    %1459 = vmax.xlane.f32.xlu0 %v1458
    %v1460 = vpop.xlane.xlu0 %1459
    %v1461 = vsel %vm870, %v1457, -inf
    %1462 = vmax.xlane.f32.xlu0 %v1461
    %v1463 = vpop.xlane.xlu0 %1462
    %v1464 = vsub.f32 %v1455, %v1460
    %v1465 = vsub.f32 %v1457, %v1463
    %v1466 = vmul.f32 %v1464, 1.442695
    %v1467 = vpow.pop %v1466
    %v1468 = vmul.f32 %v1465, 1.442695
    %v1469 = vpow.pop %v1468
    %v1470 = vsel %vm870, %v1467, 0.0
    %1471 = vadd.xlane.f32.xlu0 %v1470
    %v1472 = vpop.xlane.xlu0 %1471
    %v1473 = vsel %vm870, %v1469, 0.0
    %1474 = vadd.xlane.f32.xlu0 %v1473
    %v1475 = vpop.xlane.xlu0 %1474
    %v1476 = vrcp.pop %v1472
    %v1477 = vrcp.pop %v1475
    %v1478 = vmul.f32 %v1467, %v1476
    %v1479 = vmul.f32 %v1469, %v1477
    %v1480 = vpack.c.bf16 %v1478, %v1478
    %v1481 = vpack.c.bf16 %v1479, %v1479
    %v1482 = vpack.c.bf16 %v1085, %v1085
    %v1483 = vpack.c.bf16 %v1086, %v1086
    %v1485 = vsel %vm897, %v1480, 0
    %v1488 = vsel %vm901, %v1482, 0
    %1490 = vmatpush.bf16.msra.mxu0 0
    %1491 = vmatpush.bf16.msra.mxu0 0
    %1492 = vmatpush.bf16.msra.mxu0 0
    %1493 = vmatpush.bf16.msra.mxu0 0
    %1494 = vmatpush.bf16.msra.mxu0 0
    %1495 = vmatpush.bf16.msra.mxu0 0
    %1496 = vmatpush.bf16.msra.mxu0 0
    %1497 = vmatpush.bf16.msra.mxu0 %v1488
    %1498 = vmatmul.bf16.gmra.mxu0 %v1485
    %v1499 = vpop.f32.mrf.mxu0
    %v1500 = vadd.f32 0.0, %v1499
    %v1501 = vpop.f32.mrf.mxu0
    %1502 = vdwg.mxu0
    %v1504 = vsel %vm897, %v1481, 0
    %v1507 = vsel %vm901, %v1483, 0
    %1509 = vmatpush.bf16.msra.mxu0 0
    %1510 = vmatpush.bf16.msra.mxu0 0
    %1511 = vmatpush.bf16.msra.mxu0 0
    %1512 = vmatpush.bf16.msra.mxu0 0
    %1513 = vmatpush.bf16.msra.mxu0 0
    %1514 = vmatpush.bf16.msra.mxu0 0
    %1515 = vmatpush.bf16.msra.mxu0 0
    %1516 = vmatpush.bf16.msra.mxu0 %v1507
    %1517 = vmatmul.bf16.gmra.mxu0 %v1504
    %v1518 = vpop.f32.mrf.mxu0
    %v1519 = vadd.f32 0.0, %v1518
    %v1520 = vpop.f32.mrf.mxu0
    %1521 = vdwg.mxu0
    %v1522 = vrot.slane %v1519, 4
    %v1523 = vsel %vm850, %v1522, %v1500
    %v1525 = vunpack.c.l.s4 1934713408
    %v1526 = vunpack.c.0.s8 %v1525
    %v1527 = vperm.slane %v1523, %v1526
    %v1528 = vrot.slane %v1527, 4
    %v1529 = vsel %vm850, 0.0, %v1528
    %1531 = vrot.lane.b32.xlu0 %v1529, 16
    %v1532 = vpop.permute.xlu0 %1531
    %v1534 = vsel %vm949, %v1527, %v1532
    %v1535 = vpack.c.bf16 %v1534, %v1534
    %v1537 = vsel %vm964, %v1535, 0
    %1539 = vmatpush.bf16.msra.mxu0 0
    %1540 = vmatpush.bf16.msra.mxu0 0
    %1541 = vmatpush.bf16.msra.mxu0 0
    %1542 = vmatpush.bf16.msra.mxu0 0
    %1543 = vmatpush.bf16.msra.mxu0 0
    %1544 = vmatpush.bf16.msra.mxu0 0
    %1545 = vmatpush.bf16.msra.mxu0 %v961
    %1546 = vmatpush.bf16.msra.mxu0 %v960
    %1547 = vmatmul.bf16.gmra.mxu0 %v1537
    %v1548 = vpop.f32.mrf.mxu0
    %v1549 = vadd.f32 0.0, %v1548
    %v1550 = vpop.f32.mrf.mxu0
    %1551 = vdwg.mxu0
    %v1552 = vxor.u32 %v1455, 2147483648
    %v1553 = vxor.u32 %v1457, 2147483648
    %v1554 = vmul.f32 %v1552, 1.442695
    %v1555 = vpow.pop %v1554
    %v1556 = vmul.f32 %v1553, 1.442695
    %v1557 = vpow.pop %v1556
    %v1558 = vadd.f32 %v1555, 1.0
    %v1559 = vadd.f32 %v1557, 1.0
    %v1560 = vrcp.pop %v1558
    %v1561 = vmul.f32 %v1558, %v1560
    %v1562 = vsub.f32 1.0, %v1561
    %v1563 = vmul.f32 %v1560, %v1562
    %v1564 = vadd.f32 %v1560, %v1563
    %vm1565 = vweird.f32 %v1558
    %vm1566 = vweird.f32 %v1560
    %vm1567 = vmor %vm1565, %vm1566
    %v1568 = vsel %vm1567, %v1560, %v1564
    %v1569 = vand.u32 2147483647, %v1558
    %vm1570 = vcmp.eq.f32.partialorder %v1569, 8.507059e+37
    %v1571 = vand.u32 %v1558, 2147483648
    %v1572 = vor.u32 1.1754944e-38, %v1571
    %v1573 = vsel %vm1570, %v1572, %v1568
    %v1574 = vmul.f32 1.0, %v1573
    %v1575 = vrcp.pop %v1559
    %v1576 = vmul.f32 %v1559, %v1575
    %v1577 = vsub.f32 1.0, %v1576
    %v1578 = vmul.f32 %v1575, %v1577
    %v1579 = vadd.f32 %v1575, %v1578
    %vm1580 = vweird.f32 %v1559
    %vm1581 = vweird.f32 %v1575
    %vm1582 = vmor %vm1580, %vm1581
    %v1583 = vsel %vm1582, %v1575, %v1579
    %v1584 = vand.u32 2147483647, %v1559
    %vm1585 = vcmp.eq.f32.partialorder %v1584, 8.507059e+37
    %v1586 = vand.u32 %v1559, 2147483648
    %v1587 = vor.u32 1.1754944e-38, %v1586
    %v1588 = vsel %vm1585, %v1587, %v1583
    %v1589 = vmul.f32 1.0, %v1588
    %v1592 = vrot.slane %v1574, 2
    %v1593 = vrot.slane %v1589, 2
    %v1596 = vsel %vm870, %v1592, 0.0
    %v1597 = vrot.slane %v1596, 4
    %v1598 = vadd.f32 %v1596, %v1597
    %v1599 = vrot.slane %v1598, 2
    %v1600 = vadd.f32 %v1598, %v1599
    %v1601 = vrot.slane %v1600, 1
    %v1602 = vadd.f32 %v1600, %v1601
    %v1603 = vsel %vm870, %v1593, 0.0
    %v1604 = vrot.slane %v1603, 4
    %v1605 = vadd.f32 %v1603, %v1604
    %v1606 = vrot.slane %v1605, 2
    %v1607 = vadd.f32 %v1605, %v1606
    %v1608 = vrot.slane %v1607, 1
    %v1609 = vadd.f32 %v1607, %v1608
    %v1610 = vmul.f32 %v1602, %v1045
    %v1611 = vmul.f32 %v1609, %v1045
    %v1612 = vmul.f32 %v1610, 0.999
    %v1613 = vmul.f32 %v1611, 0.999
    %v1614 = vlaneseq
    %v1615 = vshrl.u32 %v1614, 7
    %1617 = vset.pattern.permute.xlu0 %v1615
    %1618 = vperm.xlu0 %1617, %v1612
    %v1619 = vpop.permute.xlu0 %1618
    %v1620 = vlaneseq
    %v1621 = vshrl.u32 %v1620, 7
    %1623 = vset.pattern.permute.xlu0 %v1621
    %1624 = vperm.xlu0 %1623, %v1613
    %v1625 = vpop.permute.xlu0 %1624
    %v1626 = vsub.f32 1.0, %v1619
    %v1627 = vsub.f32 1.0, %v1625
    %v1628 = vmul.f32 %v1085, %v1626
    %v1629 = vmul.f32 %v1086, %v1627
    %v1630 = vrot.slane %v1418, 1
    %v1631 = vperm.slane %v1418, 0
    %v1632 = vperm.slane %v1630, 0
    %v1635 = vmul.f32 %v1619, %v1631
    %v1636 = vmul.f32 %v1625, %v1632
    %1639 = vrot.lane.b32.xlu0 %v1635, 80
    %v1640 = vpop.permute.xlu0 %1639
    %1641 = vrot.lane.b32.xlu0 %v1636, 80
    %v1642 = vpop.permute.xlu0 %1641
    %v1645 = vadd.f32 %v1628, %v1640
    %v1646 = vadd.f32 %v1629, %v1642
    %v1647 = vmul.f32 %v1085, 0.0
    %v1648 = vmul.f32 %v1086, 0.0
    %v1649 = vadd.f32 %v1647, %v1645
    %v1650 = vadd.f32 %v1648, %v1646
    %v1651 = vadd.f32 %v1418, %v1549
    %v1652 = vpack.c.bf16 %v1651, %v1651
    %v1654 = vsel %vm949, %v1652, 0
    %1656 = vmatpush.bf16.msra.mxu0 0
    %1657 = vmatpush.bf16.msra.mxu0 0
    %1658 = vmatpush.bf16.msra.mxu0 0
    %1659 = vmatpush.bf16.msra.mxu0 0
    %1660 = vmatpush.bf16.msra.mxu0 0
    %1661 = vmatpush.bf16.msra.mxu0 0
    %1662 = vmatpush.bf16.msra.mxu0 0
    %1663 = vmatpush.bf16.msra.mxu0 %v1096
    %1664 = vmatmul.bf16.gmra.mxu0 %v1654
    %v1665 = vpop.f32.mrf.mxu0
    %v1666 = vadd.f32 %v1090, %v1665
    %v1667 = vpop.f32.mrf.mxu0
    %1668 = vdwg.mxu0
    %v1669 = vmax.f32 %v1666, 0.0
    %v1670 = vpack.c.bf16 %v1669, %v1669
    %v1671 = vadd.f32 %v1401, %v1666
    %1673 = vrot.lane.b32.xlu0 %v1670, 64
    %v1674 = vpop.permute.xlu0 %1673
    %v1676 = vsel %vm815, %v1674, 0
    %1678 = vmatpush.bf16.msra.mxu0 0
    %1679 = vmatpush.bf16.msra.mxu0 0
    %1680 = vmatpush.bf16.msra.mxu0 0
    %1681 = vmatpush.bf16.msra.mxu0 0
    %1682 = vmatpush.bf16.msra.mxu0 %v1139
    %1683 = vmatpush.bf16.msra.mxu0 %v1138
    %1684 = vmatpush.bf16.msra.mxu0 %v1137
    %1685 = vmatpush.bf16.msra.mxu0 %v1136
    %1686 = vmatmul.bf16.gmra.mxu0 %v1676
    %v1687 = vpop.f32.mrf.mxu0
    %v1688 = vadd.f32 0.0, %v1687
    %v1689 = vpop.f32.mrf.mxu0
    %1690 = vdwg.mxu0
    %v1691 = vadd.f32 %v1671, %v1688
    %v1692 = vpack.c.bf16 %v1691, %v1691
    %v1694 = vsel %vm815, %v1692, 0
    %1696 = vmatpush.bf16.msra.mxu0 0
    %1697 = vmatpush.bf16.msra.mxu0 0
    %1698 = vmatpush.bf16.msra.mxu0 0
    %1699 = vmatpush.bf16.msra.mxu0 0
    %1700 = vmatpush.bf16.msra.mxu0 %v1184
    %1701 = vmatpush.bf16.msra.mxu0 %v1183
    %1702 = vmatpush.bf16.msra.mxu0 %v1182
    %1703 = vmatpush.bf16.msra.mxu0 %v1181
    %1704 = vmatmul.bf16.gmra.mxu0 %v1694
    %v1705 = vpop.f32.mrf.mxu0
    %v1706 = vadd.f32 %v1163, %v1705
    %v1707 = vpop.f32.mrf.mxu0
    %1708 = vdwg.mxu0
    %1710 = vrot.lane.b32.xlu0 %v1706, 120
    %v1711 = vpop.permute.xlu0 %1710
    %1712 = vrot.lane.b32.xlu0 %v1706, 112
    %v1713 = vpop.permute.xlu0 %1712
    %1714 = vrot.lane.b32.xlu0 %v1706, 104
    %v1715 = vpop.permute.xlu0 %1714
    %1716 = vrot.lane.b32.xlu0 %v1711, 112
    %v1717 = vpop.permute.xlu0 %1716
    %1718 = vrot.lane.b32.xlu0 %v1713, 112
    %v1719 = vpop.permute.xlu0 %1718
    %1720 = vrot.lane.b32.xlu0 %v1715, 112
    %v1721 = vpop.permute.xlu0 %1720
    %v1726 = vrot.slane %v1719, 4
    %v1727 = vsel %vm850, %v1726, %v1713
    %v1729 = vunpack.c.l.s4 1983009808
    %v1730 = vunpack.c.0.s8 %v1729
    %v1731 = vperm.slane %v1727, %v1730
    %v1732 = vrot.slane %v1721, 4
    %v1733 = vsel %vm850, %v1732, %v1717
    %v1735 = vunpack.c.l.s4 1983009808
    %v1736 = vunpack.c.0.s8 %v1735
    %v1737 = vperm.slane %v1733, %v1736
    %v1738 = vrot.slane %v1737, 4
    %v1739 = vsel %vm850, %v1738, %v1731
    %v1741 = vunpack.c.l.s4 1934713408
    %v1742 = vunpack.c.0.s8 %v1741
    %v1743 = vperm.slane %v1739, %v1742
    %v1744 = vrot.slane %v1743, 4
    %v1745 = vsel %vm850, 0.0, %v1744
    %v1746 = vsel %vm870, %v1743, -inf
    %1747 = vmax.xlane.f32.xlu0 %v1746
    %v1748 = vpop.xlane.xlu0 %1747
    %v1749 = vsel %vm870, %v1745, -inf
    %1750 = vmax.xlane.f32.xlu0 %v1749
    %v1751 = vpop.xlane.xlu0 %1750
    %v1752 = vsub.f32 %v1743, %v1748
    %v1753 = vsub.f32 %v1745, %v1751
    %v1754 = vmul.f32 %v1752, 1.442695
    %v1755 = vpow.pop %v1754
    %v1756 = vmul.f32 %v1753, 1.442695
    %v1757 = vpow.pop %v1756
    %v1758 = vsel %vm870, %v1755, 0.0
    %1759 = vadd.xlane.f32.xlu0 %v1758
    %v1760 = vpop.xlane.xlu0 %1759
    %v1761 = vsel %vm870, %v1757, 0.0
    %1762 = vadd.xlane.f32.xlu0 %v1761
    %v1763 = vpop.xlane.xlu0 %1762
    %v1764 = vrcp.pop %v1760
    %v1765 = vrcp.pop %v1763
    %v1766 = vmul.f32 %v1755, %v1764
    %v1767 = vmul.f32 %v1757, %v1765
    %v1768 = vpack.c.bf16 %v1766, %v1766
    %v1769 = vpack.c.bf16 %v1767, %v1767
    %v1770 = vpack.c.bf16 %v1339, %v1339
    %v1771 = vpack.c.bf16 %v1340, %v1340
    %v1773 = vsel %vm897, %v1768, 0
    %v1776 = vsel %vm901, %v1770, 0
    %1778 = vmatpush.bf16.msra.mxu0 0
    %1779 = vmatpush.bf16.msra.mxu0 0
    %1780 = vmatpush.bf16.msra.mxu0 0
    %1781 = vmatpush.bf16.msra.mxu0 0
    %1782 = vmatpush.bf16.msra.mxu0 0
    %1783 = vmatpush.bf16.msra.mxu0 0
    %1784 = vmatpush.bf16.msra.mxu0 0
    %1785 = vmatpush.bf16.msra.mxu0 %v1776
    %1786 = vmatmul.bf16.gmra.mxu0 %v1773
    %v1787 = vpop.f32.mrf.mxu0
    %v1788 = vadd.f32 0.0, %v1787
    %v1789 = vpop.f32.mrf.mxu0
    %1790 = vdwg.mxu0
    %v1792 = vsel %vm897, %v1769, 0
    %v1795 = vsel %vm901, %v1771, 0
    %1797 = vmatpush.bf16.msra.mxu0 0
    %1798 = vmatpush.bf16.msra.mxu0 0
    %1799 = vmatpush.bf16.msra.mxu0 0
    %1800 = vmatpush.bf16.msra.mxu0 0
    %1801 = vmatpush.bf16.msra.mxu0 0
    %1802 = vmatpush.bf16.msra.mxu0 0
    %1803 = vmatpush.bf16.msra.mxu0 0
    %1804 = vmatpush.bf16.msra.mxu0 %v1795
    %1805 = vmatmul.bf16.gmra.mxu0 %v1792
    %v1806 = vpop.f32.mrf.mxu0
    %v1807 = vadd.f32 0.0, %v1806
    %v1808 = vpop.f32.mrf.mxu0
    %1809 = vdwg.mxu0
    %v1810 = vrot.slane %v1807, 4
    %v1811 = vsel %vm850, %v1810, %v1788
    %v1813 = vunpack.c.l.s4 1934713408
    %v1814 = vunpack.c.0.s8 %v1813
    %v1815 = vperm.slane %v1811, %v1814
    %v1816 = vrot.slane %v1815, 4
    %v1817 = vsel %vm850, 0.0, %v1816
    %1819 = vrot.lane.b32.xlu0 %v1817, 16
    %v1820 = vpop.permute.xlu0 %1819
    %v1822 = vsel %vm949, %v1815, %v1820
    %v1823 = vpack.c.bf16 %v1822, %v1822
    %v1828 = vunpack.c.l.b16 %v163
    %v1829 = vunpack.c.l.b16 %v164
    %v1830 = vunpack.c.l.b16 %v165
    %v1831 = vunpack.c.l.b16 %v166
    %v1832 = vpack.c.b16 %v1829, %v1828
    %v1833 = vpack.c.b16 %v1831, %v1830
    %v1837 = vsel %vm964, %v1823, 0
    %1839 = vmatpush.bf16.msra.mxu0 0
    %1840 = vmatpush.bf16.msra.mxu0 0
    %1841 = vmatpush.bf16.msra.mxu0 0
    %1842 = vmatpush.bf16.msra.mxu0 0
    %1843 = vmatpush.bf16.msra.mxu0 0
    %1844 = vmatpush.bf16.msra.mxu0 0
    %1845 = vmatpush.bf16.msra.mxu0 %v1833
    %1846 = vmatpush.bf16.msra.mxu0 %v1832
    %1847 = vmatmul.bf16.gmra.mxu0 %v1837
    %v1848 = vpop.f32.mrf.mxu0
    %v1849 = vadd.f32 0.0, %v1848
    %v1850 = vpop.f32.mrf.mxu0
    %1851 = vdwg.mxu0
    %v1852 = vxor.u32 %v1743, 2147483648
    %v1853 = vxor.u32 %v1745, 2147483648
    %v1854 = vmul.f32 %v1852, 1.442695
    %v1855 = vpow.pop %v1854
    %v1856 = vmul.f32 %v1853, 1.442695
    %v1857 = vpow.pop %v1856
    %v1858 = vadd.f32 %v1855, 1.0
    %v1859 = vadd.f32 %v1857, 1.0
    %v1860 = vrcp.pop %v1858
    %v1861 = vmul.f32 %v1858, %v1860
    %v1862 = vsub.f32 1.0, %v1861
    %v1863 = vmul.f32 %v1860, %v1862
    %v1864 = vadd.f32 %v1860, %v1863
    %vm1865 = vweird.f32 %v1858
    %vm1866 = vweird.f32 %v1860
    %vm1867 = vmor %vm1865, %vm1866
    %v1868 = vsel %vm1867, %v1860, %v1864
    %v1869 = vand.u32 2147483647, %v1858
    %vm1870 = vcmp.eq.f32.partialorder %v1869, 8.507059e+37
    %v1871 = vand.u32 %v1858, 2147483648
    %v1872 = vor.u32 1.1754944e-38, %v1871
    %v1873 = vsel %vm1870, %v1872, %v1868
    %v1874 = vmul.f32 1.0, %v1873
    %v1875 = vrcp.pop %v1859
    %v1876 = vmul.f32 %v1859, %v1875
    %v1877 = vsub.f32 1.0, %v1876
    %v1878 = vmul.f32 %v1875, %v1877
    %v1879 = vadd.f32 %v1875, %v1878
    %vm1880 = vweird.f32 %v1859
    %vm1881 = vweird.f32 %v1875
    %vm1882 = vmor %vm1880, %vm1881
    %v1883 = vsel %vm1882, %v1875, %v1879
    %v1884 = vand.u32 2147483647, %v1859
    %vm1885 = vcmp.eq.f32.partialorder %v1884, 8.507059e+37
    %v1886 = vand.u32 %v1859, 2147483648
    %v1887 = vor.u32 1.1754944e-38, %v1886
    %v1888 = vsel %vm1885, %v1887, %v1883
    %v1889 = vmul.f32 1.0, %v1888
    %v1892 = vrot.slane %v1874, 2
    %v1893 = vrot.slane %v1889, 2
    %v1896 = vsel %vm870, %v1892, 0.0
    %v1897 = vrot.slane %v1896, 4
    %v1898 = vadd.f32 %v1896, %v1897
    %v1899 = vrot.slane %v1898, 2
    %v1900 = vadd.f32 %v1898, %v1899
    %v1901 = vrot.slane %v1900, 1
    %v1902 = vadd.f32 %v1900, %v1901
    %v1903 = vsel %vm870, %v1893, 0.0
    %v1904 = vrot.slane %v1903, 4
    %v1905 = vadd.f32 %v1903, %v1904
    %v1906 = vrot.slane %v1905, 2
    %v1907 = vadd.f32 %v1905, %v1906
    %v1908 = vrot.slane %v1907, 1
    %v1909 = vadd.f32 %v1907, %v1908
    %v1910 = vmul.f32 %v1902, %v1045
    %v1911 = vmul.f32 %v1909, %v1045
    %v1912 = vmul.f32 %v1910, 0.999
    %v1913 = vmul.f32 %v1911, 0.999
    %v1914 = vlaneseq
    %v1915 = vshrl.u32 %v1914, 7
    %1917 = vset.pattern.permute.xlu0 %v1915
    %1918 = vperm.xlu0 %1917, %v1912
    %v1919 = vpop.permute.xlu0 %1918
    %v1920 = vlaneseq
    %v1921 = vshrl.u32 %v1920, 7
    %1923 = vset.pattern.permute.xlu0 %v1921
    %1924 = vperm.xlu0 %1923, %v1913
    %v1925 = vpop.permute.xlu0 %1924
    %v1926 = vsub.f32 1.0, %v1919
    %v1927 = vsub.f32 1.0, %v1925
    %v1928 = vmul.f32 %v1339, %v1926
    %v1929 = vmul.f32 %v1340, %v1927
    %v1930 = vrot.slane %v1706, 1
    %v1931 = vperm.slane %v1706, 0
    %v1932 = vperm.slane %v1930, 0
    %v1935 = vmul.f32 %v1919, %v1931
    %v1936 = vmul.f32 %v1925, %v1932
    %1939 = vrot.lane.b32.xlu0 %v1935, 80
    %v1940 = vpop.permute.xlu0 %1939
    %1941 = vrot.lane.b32.xlu0 %v1936, 80
    %v1942 = vpop.permute.xlu0 %1941
    %v1945 = vadd.f32 %v1928, %v1940
    %v1946 = vadd.f32 %v1929, %v1942
    %v1947 = vmul.f32 %v1339, 0.0
    %v1948 = vmul.f32 %v1340, 0.0
    %v1949 = vadd.f32 %v1947, %v1945
    %v1950 = vadd.f32 %v1948, %v1946
    %v1951 = vadd.f32 %v1706, %v1849
    %v1952 = vpack.c.bf16 %v1951, %v1951
    %v1954 = vperm.slane %v171, 0
    %v1958 = vunpack.c.l.b16 %v168
    %v1959 = vunpack.c.l.b16 %v169
    %v1960 = vpack.c.b16 %v1959, %v1958
    %v1963 = vsel %vm949, %v1952, 0
    %1965 = vmatpush.bf16.msra.mxu0 0
    %1966 = vmatpush.bf16.msra.mxu0 0
    %1967 = vmatpush.bf16.msra.mxu0 0
    %1968 = vmatpush.bf16.msra.mxu0 0
    %1969 = vmatpush.bf16.msra.mxu0 0
    %1970 = vmatpush.bf16.msra.mxu0 0
    %1971 = vmatpush.bf16.msra.mxu0 0
    %1972 = vmatpush.bf16.msra.mxu0 %v1960
    %1973 = vmatmul.bf16.gmra.mxu0 %v1963
    %v1974 = vpop.f32.mrf.mxu0
    %v1975 = vadd.f32 %v1954, %v1974
    %v1976 = vpop.f32.mrf.mxu0
    %1977 = vdwg.mxu0
    %v1978 = vmax.f32 %v1975, 0.0
    %v1979 = vpack.c.bf16 %v1978, %v1978
    %v1980 = vadd.f32 %v1691, %v1975
    %1982 = vrot.lane.b32.xlu0 %v1979, 64
    %v1983 = vpop.permute.xlu0 %1982
    %v1992 = vunpack.c.l.b16 %v173
    %v1993 = vunpack.c.l.b16 %v174
    %v1994 = vunpack.c.l.b16 %v175
    %v1995 = vunpack.c.l.b16 %v176
    %v1996 = vunpack.c.l.b16 %v177
    %v1997 = vunpack.c.l.b16 %v178
    %v1998 = vunpack.c.l.b16 %v179
    %v1999 = vunpack.c.l.b16 %v180
    %v2000 = vpack.c.b16 %v1993, %v1992
    %v2001 = vpack.c.b16 %v1995, %v1994
    %v2002 = vpack.c.b16 %v1997, %v1996
    %v2003 = vpack.c.b16 %v1999, %v1998
    %v2009 = vsel %vm815, %v1983, 0
    %2011 = vmatpush.bf16.msra.mxu0 0
    %2012 = vmatpush.bf16.msra.mxu0 0
    %2013 = vmatpush.bf16.msra.mxu0 0
    %2014 = vmatpush.bf16.msra.mxu0 0
    %2015 = vmatpush.bf16.msra.mxu0 %v2003
    %2016 = vmatpush.bf16.msra.mxu0 %v2002
    %2017 = vmatpush.bf16.msra.mxu0 %v2001
    %2018 = vmatpush.bf16.msra.mxu0 %v2000
    %2019 = vmatmul.bf16.gmra.mxu0 %v2009
    %v2020 = vpop.f32.mrf.mxu0
    %v2021 = vadd.f32 0.0, %v2020
    %v2022 = vpop.f32.mrf.mxu0
    %2023 = vdwg.mxu0
    %v2024 = vadd.f32 %v1980, %v2021
    %v2025 = vpack.c.bf16 %v2024, %v2024
    %v2027 = vperm.slane %v1357, 0
    %v2037 = vunpack.c.l.b16 %v1349
    %v2038 = vunpack.c.l.b16 %v1350
    %v2039 = vunpack.c.l.b16 %v1351
    %v2040 = vunpack.c.l.b16 %v1352
    %v2041 = vunpack.c.l.b16 %v1353
    %v2042 = vunpack.c.l.b16 %v1354
    %v2043 = vunpack.c.l.b16 %v1355
    %v2044 = vunpack.c.l.b16 %v1356
    %v2045 = vpack.c.b16 %v2038, %v2037
    %v2046 = vpack.c.b16 %v2040, %v2039
    %v2047 = vpack.c.b16 %v2042, %v2041
    %v2048 = vpack.c.b16 %v2044, %v2043
    %v2054 = vsel %vm815, %v2025, 0
    %2056 = vmatpush.bf16.msra.mxu0 0
    %2057 = vmatpush.bf16.msra.mxu0 0
    %2058 = vmatpush.bf16.msra.mxu0 0
    %2059 = vmatpush.bf16.msra.mxu0 0
    %2060 = vmatpush.bf16.msra.mxu0 %v2048
    %2061 = vmatpush.bf16.msra.mxu0 %v2047
    %2062 = vmatpush.bf16.msra.mxu0 %v2046
    %2063 = vmatpush.bf16.msra.mxu0 %v2045
    %2064 = vmatmul.bf16.gmra.mxu0 %v2054
    %v2065 = vpop.f32.mrf.mxu0
    %v2066 = vadd.f32 %v2027, %v2065
    %v2067 = vpop.f32.mrf.mxu0
    %2068 = vdwg.mxu0
    %vm2069 = vcmask 517120
    %v2070 = vsel %vm2069, %v2066, -inf
    %2071 = vmax.xlane.f32.xlu0 %v2070
    %v2072 = vpop.xlane.xlu0 %2071
    %vm2073 = vcmp.ge.f32.partialorder %v2066, %v2072
    %v2074 = vsel %vm2073, %v1359, 64
    %v2075 = vsel %vm2069, %v2074, 2147483647
    %v2076 = vand.u32 %v2075, 65535
    %v2077 = vshra.s32 %v2075, 16
    %v2078 = vcvt.s32.f32 %v2076
    %v2079 = vcvt.s32.f32 %v2077
    %2080 = vmin.xlane.f32.xlu0 %v2079
    %v2081 = vpop.xlane.xlu0 %2080
    %vm2082 = vcmp.eq.f32.partialorder %v2079, %v2081
    %v2083 = vsel %vm2082, %v2078, inf
    %2084 = vmin.xlane.f32.xlu0 %v2083
    %v2085 = vpop.xlane.xlu0 %2084
    %v2086 = vcvt.f32.s32 %v2085
    %v2087 = vcvt.f32.s32 %v2081
    %v2088 = vshll.u32 %v2087, 16
    %v2089 = vadd.s32 %v2088, %v2086
    %vm2090 = vcmp.eq.s32.totalorder %v2089, 3
    %v2091 = vsel %vm2090, 1, 0
    %v2092 = vsel %vm2090, %v2091, 0
    %vm2093 = vcmp.gt.s32.totalorder %v2092, 0
    %v2094 = vsel %vm2093, 1, 0
    %v2095 = vcvt.s32.f32 %v2094
    %vm2096 = vcmp.eq.s32.totalorder %v2089, %v1359
    %v2097 = vsel %vm2096, 1, 0
    %v2098 = vcvt.s32.f32 %v2097
    %v2099 = vpack.c.bf16 %v2098, %v2098
    %v2101 = vsel %vm815, %v2099, 0
    %2103 = vmatpush.bf16.msra.mxu0 0
    %2104 = vmatpush.bf16.msra.mxu0 0
    %2105 = vmatpush.bf16.msra.mxu0 0
    %2106 = vmatpush.bf16.msra.mxu0 0
    %2107 = vmatpush.bf16.msra.mxu0 %v1383
    %2108 = vmatpush.bf16.msra.mxu0 %v1382
    %2109 = vmatpush.bf16.msra.mxu0 %v1381
    %2110 = vmatpush.bf16.msra.mxu0 %v1380
    %2111 = vmatmul.bf16.gmra.mxu0 %v2101
    %v2112 = vpop.f32.mrf.mxu0
    %v2113 = vadd.f32 0.0, %v2112
    %v2114 = vpop.f32.mrf.mxu0
    %2115 = vdwg.mxu0
    %v2117 = vperm.slane %v2095, 0
    %v2118 = vperm.slane %v2095, 1
    %v2121 = vpack.c.bf16 %v2113, %v2113
    %v2123 = vsel %vm815, %v2121, 0
    %2125 = vmatpush.bf16.msra.mxu0 0
    %2126 = vmatpush.bf16.msra.mxu0 0
    %2127 = vmatpush.bf16.msra.mxu0 0
    %2128 = vmatpush.bf16.msra.mxu0 0
    %2129 = vmatpush.bf16.msra.mxu0 %v810
    %2130 = vmatpush.bf16.msra.mxu0 %v809
    %2131 = vmatpush.bf16.msra.mxu0 %v808
    %2132 = vmatpush.bf16.msra.mxu0 %v807
    %2133 = vmatmul.bf16.gmra.mxu0 %v2123
    %v2134 = vpop.f32.mrf.mxu0
    %v2135 = vadd.f32 %v789, %v2134
    %v2136 = vpop.f32.mrf.mxu0
    %2137 = vdwg.mxu0
    %2139 = vrot.lane.b32.xlu0 %v2135, 120
    %v2140 = vpop.permute.xlu0 %2139
    %2141 = vrot.lane.b32.xlu0 %v2135, 112
    %v2142 = vpop.permute.xlu0 %2141
    %2143 = vrot.lane.b32.xlu0 %v2135, 104
    %v2144 = vpop.permute.xlu0 %2143
    %2145 = vrot.lane.b32.xlu0 %v2140, 112
    %v2146 = vpop.permute.xlu0 %2145
    %2147 = vrot.lane.b32.xlu0 %v2142, 112
    %v2148 = vpop.permute.xlu0 %2147
    %2149 = vrot.lane.b32.xlu0 %v2144, 112
    %v2150 = vpop.permute.xlu0 %2149
    %v2155 = vrot.slane %v2148, 4
    %v2156 = vsel %vm850, %v2155, %v2142
    %v2158 = vunpack.c.l.s4 1983009808
    %v2159 = vunpack.c.0.s8 %v2158
    %v2160 = vperm.slane %v2156, %v2159
    %v2161 = vrot.slane %v2150, 4
    %v2162 = vsel %vm850, %v2161, %v2146
    %v2164 = vunpack.c.l.s4 1983009808
    %v2165 = vunpack.c.0.s8 %v2164
    %v2166 = vperm.slane %v2162, %v2165
    %v2167 = vrot.slane %v2166, 4
    %v2168 = vsel %vm850, %v2167, %v2160
    %v2170 = vunpack.c.l.s4 1934713408
    %v2171 = vunpack.c.0.s8 %v2170
    %v2172 = vperm.slane %v2168, %v2171
    %v2173 = vrot.slane %v2172, 4
    %v2174 = vsel %vm850, 0.0, %v2173
    %v2175 = vsel %vm870, %v2172, -inf
    %2176 = vmax.xlane.f32.xlu0 %v2175
    %v2177 = vpop.xlane.xlu0 %2176
    %v2178 = vsel %vm870, %v2174, -inf
    %2179 = vmax.xlane.f32.xlu0 %v2178
    %v2180 = vpop.xlane.xlu0 %2179
    %v2181 = vsub.f32 %v2172, %v2177
    %v2182 = vsub.f32 %v2174, %v2180
    %v2183 = vmul.f32 %v2181, 1.442695
    %v2184 = vpow.pop %v2183
    %v2185 = vmul.f32 %v2182, 1.442695
    %v2186 = vpow.pop %v2185
    %v2187 = vsel %vm870, %v2184, 0.0
    %2188 = vadd.xlane.f32.xlu0 %v2187
    %v2189 = vpop.xlane.xlu0 %2188
    %v2190 = vsel %vm870, %v2186, 0.0
    %2191 = vadd.xlane.f32.xlu0 %v2190
    %v2192 = vpop.xlane.xlu0 %2191
    %v2193 = vrcp.pop %v2189
    %v2194 = vrcp.pop %v2192
    %v2195 = vmul.f32 %v2184, %v2193
    %v2196 = vmul.f32 %v2186, %v2194
    %v2197 = vpack.c.bf16 %v2195, %v2195
    %v2198 = vpack.c.bf16 %v2196, %v2196
    %v2199 = vpack.c.bf16 %v1649, %v1649
    %v2200 = vpack.c.bf16 %v1650, %v1650
    %v2202 = vsel %vm897, %v2197, 0
    %v2205 = vsel %vm901, %v2199, 0
    %2207 = vmatpush.bf16.msra.mxu0 0
    %2208 = vmatpush.bf16.msra.mxu0 0
    %2209 = vmatpush.bf16.msra.mxu0 0
    %2210 = vmatpush.bf16.msra.mxu0 0
    %2211 = vmatpush.bf16.msra.mxu0 0
    %2212 = vmatpush.bf16.msra.mxu0 0
    %2213 = vmatpush.bf16.msra.mxu0 0
    %2214 = vmatpush.bf16.msra.mxu0 %v2205
    %2215 = vmatmul.bf16.gmra.mxu0 %v2202
    %v2216 = vpop.f32.mrf.mxu0
    %v2217 = vadd.f32 0.0, %v2216
    %v2218 = vpop.f32.mrf.mxu0
    %2219 = vdwg.mxu0
    %v2221 = vsel %vm897, %v2198, 0
    %v2224 = vsel %vm901, %v2200, 0
    %2226 = vmatpush.bf16.msra.mxu0 0
    %2227 = vmatpush.bf16.msra.mxu0 0
    %2228 = vmatpush.bf16.msra.mxu0 0
    %2229 = vmatpush.bf16.msra.mxu0 0
    %2230 = vmatpush.bf16.msra.mxu0 0
    %2231 = vmatpush.bf16.msra.mxu0 0
    %2232 = vmatpush.bf16.msra.mxu0 0
    %2233 = vmatpush.bf16.msra.mxu0 %v2224
    %2234 = vmatmul.bf16.gmra.mxu0 %v2221
    %v2235 = vpop.f32.mrf.mxu0
    %v2236 = vadd.f32 0.0, %v2235
    %v2237 = vpop.f32.mrf.mxu0
    %2238 = vdwg.mxu0
    %v2239 = vrot.slane %v2236, 4
    %v2240 = vsel %vm850, %v2239, %v2217
    %v2242 = vunpack.c.l.s4 1934713408
    %v2243 = vunpack.c.0.s8 %v2242
    %v2244 = vperm.slane %v2240, %v2243
    %v2245 = vrot.slane %v2244, 4
    %v2246 = vsel %vm850, 0.0, %v2245
    %2248 = vrot.lane.b32.xlu0 %v2246, 16
    %v2249 = vpop.permute.xlu0 %2248
    %v2251 = vsel %vm949, %v2244, %v2249
    %v2252 = vpack.c.bf16 %v2251, %v2251
    %v2254 = vsel %vm964, %v2252, 0
    %2256 = vmatpush.bf16.msra.mxu0 0
    %2257 = vmatpush.bf16.msra.mxu0 0
    %2258 = vmatpush.bf16.msra.mxu0 0
    %2259 = vmatpush.bf16.msra.mxu0 0
    %2260 = vmatpush.bf16.msra.mxu0 0
    %2261 = vmatpush.bf16.msra.mxu0 0
    %2262 = vmatpush.bf16.msra.mxu0 %v961
    %2263 = vmatpush.bf16.msra.mxu0 %v960
    %2264 = vmatmul.bf16.gmra.mxu0 %v2254
    %v2265 = vpop.f32.mrf.mxu0
    %v2266 = vadd.f32 0.0, %v2265
    %v2267 = vpop.f32.mrf.mxu0
    %2268 = vdwg.mxu0
    %v2269 = vxor.u32 %v2172, 2147483648
    %v2270 = vxor.u32 %v2174, 2147483648
    %v2271 = vmul.f32 %v2269, 1.442695
    %v2272 = vpow.pop %v2271
    %v2273 = vmul.f32 %v2270, 1.442695
    %v2274 = vpow.pop %v2273
    %v2275 = vadd.f32 %v2272, 1.0
    %v2276 = vadd.f32 %v2274, 1.0
    %v2277 = vrcp.pop %v2275
    %v2278 = vmul.f32 %v2275, %v2277
    %v2279 = vsub.f32 1.0, %v2278
    %v2280 = vmul.f32 %v2277, %v2279
    %v2281 = vadd.f32 %v2277, %v2280
    %vm2282 = vweird.f32 %v2275
    %vm2283 = vweird.f32 %v2277
    %vm2284 = vmor %vm2282, %vm2283
    %v2285 = vsel %vm2284, %v2277, %v2281
    %v2286 = vand.u32 2147483647, %v2275
    %vm2287 = vcmp.eq.f32.partialorder %v2286, 8.507059e+37
    %v2288 = vand.u32 %v2275, 2147483648
    %v2289 = vor.u32 1.1754944e-38, %v2288
    %v2290 = vsel %vm2287, %v2289, %v2285
    %v2291 = vmul.f32 1.0, %v2290
    %v2292 = vrcp.pop %v2276
    %v2293 = vmul.f32 %v2276, %v2292
    %v2294 = vsub.f32 1.0, %v2293
    %v2295 = vmul.f32 %v2292, %v2294
    %v2296 = vadd.f32 %v2292, %v2295
    %vm2297 = vweird.f32 %v2276
    %vm2298 = vweird.f32 %v2292
    %vm2299 = vmor %vm2297, %vm2298
    %v2300 = vsel %vm2299, %v2292, %v2296
    %v2301 = vand.u32 2147483647, %v2276
    %vm2302 = vcmp.eq.f32.partialorder %v2301, 8.507059e+37
    %v2303 = vand.u32 %v2276, 2147483648
    %v2304 = vor.u32 1.1754944e-38, %v2303
    %v2305 = vsel %vm2302, %v2304, %v2300
    %v2306 = vmul.f32 1.0, %v2305
    %v2309 = vrot.slane %v2291, 2
    %v2310 = vrot.slane %v2306, 2
    %v2313 = vsel %vm870, %v2309, 0.0
    %v2314 = vrot.slane %v2313, 4
    %v2315 = vadd.f32 %v2313, %v2314
    %v2316 = vrot.slane %v2315, 2
    %v2317 = vadd.f32 %v2315, %v2316
    %v2318 = vrot.slane %v2317, 1
    %v2319 = vadd.f32 %v2317, %v2318
    %v2320 = vsel %vm870, %v2310, 0.0
    %v2321 = vrot.slane %v2320, 4
    %v2322 = vadd.f32 %v2320, %v2321
    %v2323 = vrot.slane %v2322, 2
    %v2324 = vadd.f32 %v2322, %v2323
    %v2325 = vrot.slane %v2324, 1
    %v2326 = vadd.f32 %v2324, %v2325
    %v2327 = vmul.f32 %v2319, %v1045
    %v2328 = vmul.f32 %v2326, %v1045
    %v2329 = vmul.f32 %v2327, 0.999
    %v2330 = vmul.f32 %v2328, 0.999
    %v2331 = vlaneseq
    %v2332 = vshrl.u32 %v2331, 7
    %2334 = vset.pattern.permute.xlu0 %v2332
    %2335 = vperm.xlu0 %2334, %v2329
    %v2336 = vpop.permute.xlu0 %2335
    %v2337 = vlaneseq
    %v2338 = vshrl.u32 %v2337, 7
    %2340 = vset.pattern.permute.xlu0 %v2338
    %2341 = vperm.xlu0 %2340, %v2330
    %v2342 = vpop.permute.xlu0 %2341
    %v2343 = vsub.f32 1.0, %v2336
    %v2344 = vsub.f32 1.0, %v2342
    %v2345 = vmul.f32 %v1649, %v2343
    %v2346 = vmul.f32 %v1650, %v2344
    %v2347 = vrot.slane %v2135, 1
    %v2348 = vperm.slane %v2135, 0
    %v2349 = vperm.slane %v2347, 0
    %v2352 = vmul.f32 %v2336, %v2348
    %v2353 = vmul.f32 %v2342, %v2349
    %2356 = vrot.lane.b32.xlu0 %v2352, 80
    %v2357 = vpop.permute.xlu0 %2356
    %2358 = vrot.lane.b32.xlu0 %v2353, 80
    %v2359 = vpop.permute.xlu0 %2358
    %v2362 = vadd.f32 %v2345, %v2357
    %v2363 = vadd.f32 %v2346, %v2359
    %v2364 = vmul.f32 %v2117, %v1649
    %v2365 = vmul.f32 %v2118, %v1650
    %v2366 = vsub.f32 1.0, %v2117
    %v2367 = vsub.f32 1.0, %v2118
    %v2368 = vmul.f32 %v2366, %v2362
    %v2369 = vmul.f32 %v2367, %v2363
    %v2370 = vadd.f32 %v2364, %v2368
    %v2371 = vadd.f32 %v2365, %v2369
    %v2372 = vadd.f32 %v2135, %v2266
    %v2373 = vpack.c.bf16 %v2372, %v2372
    %v2375 = vsel %vm949, %v2373, 0
    %2377 = vmatpush.bf16.msra.mxu0 0
    %2378 = vmatpush.bf16.msra.mxu0 0
    %2379 = vmatpush.bf16.msra.mxu0 0
    %2380 = vmatpush.bf16.msra.mxu0 0
    %2381 = vmatpush.bf16.msra.mxu0 0
    %2382 = vmatpush.bf16.msra.mxu0 0
    %2383 = vmatpush.bf16.msra.mxu0 0
    %2384 = vmatpush.bf16.msra.mxu0 %v1096
    %2385 = vmatmul.bf16.gmra.mxu0 %v2375
    %v2386 = vpop.f32.mrf.mxu0
    %v2387 = vadd.f32 %v1090, %v2386
    %v2388 = vpop.f32.mrf.mxu0
    %2389 = vdwg.mxu0
    %v2390 = vmax.f32 %v2387, 0.0
    %v2391 = vpack.c.bf16 %v2390, %v2390
    %v2392 = vadd.f32 %v2113, %v2387
    %2394 = vrot.lane.b32.xlu0 %v2391, 64
    %v2395 = vpop.permute.xlu0 %2394
    %v2397 = vsel %vm815, %v2395, 0
    %2399 = vmatpush.bf16.msra.mxu0 0
    %2400 = vmatpush.bf16.msra.mxu0 0
    %2401 = vmatpush.bf16.msra.mxu0 0
    %2402 = vmatpush.bf16.msra.mxu0 0
    %2403 = vmatpush.bf16.msra.mxu0 %v1139
    %2404 = vmatpush.bf16.msra.mxu0 %v1138
    %2405 = vmatpush.bf16.msra.mxu0 %v1137
    %2406 = vmatpush.bf16.msra.mxu0 %v1136
    %2407 = vmatmul.bf16.gmra.mxu0 %v2397
    %v2408 = vpop.f32.mrf.mxu0
    %v2409 = vadd.f32 0.0, %v2408
    %v2410 = vpop.f32.mrf.mxu0
    %2411 = vdwg.mxu0
    %v2412 = vadd.f32 %v2392, %v2409
    %v2413 = vpack.c.bf16 %v2412, %v2412
    %v2415 = vsel %vm815, %v2413, 0
    %2417 = vmatpush.bf16.msra.mxu0 0
    %2418 = vmatpush.bf16.msra.mxu0 0
    %2419 = vmatpush.bf16.msra.mxu0 0
    %2420 = vmatpush.bf16.msra.mxu0 0
    %2421 = vmatpush.bf16.msra.mxu0 %v1184
    %2422 = vmatpush.bf16.msra.mxu0 %v1183
    %2423 = vmatpush.bf16.msra.mxu0 %v1182
    %2424 = vmatpush.bf16.msra.mxu0 %v1181
    %2425 = vmatmul.bf16.gmra.mxu0 %v2415
    %v2426 = vpop.f32.mrf.mxu0
    %v2427 = vadd.f32 %v1163, %v2426
    %v2428 = vpop.f32.mrf.mxu0
    %2429 = vdwg.mxu0
    %2431 = vrot.lane.b32.xlu0 %v2427, 120
    %v2432 = vpop.permute.xlu0 %2431
    %2433 = vrot.lane.b32.xlu0 %v2427, 112
    %v2434 = vpop.permute.xlu0 %2433
    %2435 = vrot.lane.b32.xlu0 %v2427, 104
    %v2436 = vpop.permute.xlu0 %2435
    %2437 = vrot.lane.b32.xlu0 %v2432, 112
    %v2438 = vpop.permute.xlu0 %2437
    %2439 = vrot.lane.b32.xlu0 %v2434, 112
    %v2440 = vpop.permute.xlu0 %2439
    %2441 = vrot.lane.b32.xlu0 %v2436, 112
    %v2442 = vpop.permute.xlu0 %2441
    %v2447 = vrot.slane %v2440, 4
    %v2448 = vsel %vm850, %v2447, %v2434
    %v2450 = vunpack.c.l.s4 1983009808
    %v2451 = vunpack.c.0.s8 %v2450
    %v2452 = vperm.slane %v2448, %v2451
    %v2453 = vrot.slane %v2442, 4
    %v2454 = vsel %vm850, %v2453, %v2438
    %v2456 = vunpack.c.l.s4 1983009808
    %v2457 = vunpack.c.0.s8 %v2456
    %v2458 = vperm.slane %v2454, %v2457
    %v2459 = vrot.slane %v2458, 4
    %v2460 = vsel %vm850, %v2459, %v2452
    %v2462 = vunpack.c.l.s4 1934713408
    %v2463 = vunpack.c.0.s8 %v2462
    %v2464 = vperm.slane %v2460, %v2463
    %v2465 = vrot.slane %v2464, 4
    %v2466 = vsel %vm850, 0.0, %v2465
    %v2467 = vsel %vm870, %v2464, -inf
    %2468 = vmax.xlane.f32.xlu0 %v2467
    %v2469 = vpop.xlane.xlu0 %2468
    %v2470 = vsel %vm870, %v2466, -inf
    %2471 = vmax.xlane.f32.xlu0 %v2470
    %v2472 = vpop.xlane.xlu0 %2471
    %v2473 = vsub.f32 %v2464, %v2469
    %v2474 = vsub.f32 %v2466, %v2472
    %v2475 = vmul.f32 %v2473, 1.442695
    %v2476 = vpow.pop %v2475
    %v2477 = vmul.f32 %v2474, 1.442695
    %v2478 = vpow.pop %v2477
    %v2479 = vsel %vm870, %v2476, 0.0
    %2480 = vadd.xlane.f32.xlu0 %v2479
    %v2481 = vpop.xlane.xlu0 %2480
    %v2482 = vsel %vm870, %v2478, 0.0
    %2483 = vadd.xlane.f32.xlu0 %v2482
    %v2484 = vpop.xlane.xlu0 %2483
    %v2485 = vrcp.pop %v2481
    %v2486 = vrcp.pop %v2484
    %v2487 = vmul.f32 %v2476, %v2485
    %v2488 = vmul.f32 %v2478, %v2486
    %v2489 = vpack.c.bf16 %v2487, %v2487
    %v2490 = vpack.c.bf16 %v2488, %v2488
    %v2491 = vpack.c.bf16 %v1949, %v1949
    %v2492 = vpack.c.bf16 %v1950, %v1950
    %v2494 = vsel %vm897, %v2489, 0
    %v2497 = vsel %vm901, %v2491, 0
    %2499 = vmatpush.bf16.msra.mxu0 0
    %2500 = vmatpush.bf16.msra.mxu0 0
    %2501 = vmatpush.bf16.msra.mxu0 0
    %2502 = vmatpush.bf16.msra.mxu0 0
    %2503 = vmatpush.bf16.msra.mxu0 0
    %2504 = vmatpush.bf16.msra.mxu0 0
    %2505 = vmatpush.bf16.msra.mxu0 0
    %2506 = vmatpush.bf16.msra.mxu0 %v2497
    %2507 = vmatmul.bf16.gmra.mxu0 %v2494
    %v2508 = vpop.f32.mrf.mxu0
    %v2509 = vadd.f32 0.0, %v2508
    %v2510 = vpop.f32.mrf.mxu0
    %2511 = vdwg.mxu0
    %v2513 = vsel %vm897, %v2490, 0
    %v2516 = vsel %vm901, %v2492, 0
    %2518 = vmatpush.bf16.msra.mxu0 0
    %2519 = vmatpush.bf16.msra.mxu0 0
    %2520 = vmatpush.bf16.msra.mxu0 0
    %2521 = vmatpush.bf16.msra.mxu0 0
    %2522 = vmatpush.bf16.msra.mxu0 0
    %2523 = vmatpush.bf16.msra.mxu0 0
    %2524 = vmatpush.bf16.msra.mxu0 0
    %2525 = vmatpush.bf16.msra.mxu0 %v2516
    %2526 = vmatmul.bf16.gmra.mxu0 %v2513
    %v2527 = vpop.f32.mrf.mxu0
    %v2528 = vadd.f32 0.0, %v2527
    %v2529 = vpop.f32.mrf.mxu0
    %2530 = vdwg.mxu0
    %v2531 = vrot.slane %v2528, 4
    %v2532 = vsel %vm850, %v2531, %v2509
    %v2534 = vunpack.c.l.s4 1934713408
    %v2535 = vunpack.c.0.s8 %v2534
    %v2536 = vperm.slane %v2532, %v2535
    %v2537 = vrot.slane %v2536, 4
    %v2538 = vsel %vm850, 0.0, %v2537
    %2540 = vrot.lane.b32.xlu0 %v2538, 16
    %v2541 = vpop.permute.xlu0 %2540
    %v2543 = vsel %vm949, %v2536, %v2541
    %v2544 = vpack.c.bf16 %v2543, %v2543
    %v2546 = vsel %vm964, %v2544, 0
    %2548 = vmatpush.bf16.msra.mxu0 0
    %2549 = vmatpush.bf16.msra.mxu0 0
    %2550 = vmatpush.bf16.msra.mxu0 0
    %2551 = vmatpush.bf16.msra.mxu0 0
    %2552 = vmatpush.bf16.msra.mxu0 0
    %2553 = vmatpush.bf16.msra.mxu0 0
    %2554 = vmatpush.bf16.msra.mxu0 %v1833
    %2555 = vmatpush.bf16.msra.mxu0 %v1832
    %2556 = vmatmul.bf16.gmra.mxu0 %v2546
    %v2557 = vpop.f32.mrf.mxu0
    %v2558 = vadd.f32 0.0, %v2557
    %v2559 = vpop.f32.mrf.mxu0
    %2560 = vdwg.mxu0
    %v2561 = vxor.u32 %v2464, 2147483648
    %v2562 = vxor.u32 %v2466, 2147483648
    %v2563 = vmul.f32 %v2561, 1.442695
    %v2564 = vpow.pop %v2563
    %v2565 = vmul.f32 %v2562, 1.442695
    %v2566 = vpow.pop %v2565
    %v2567 = vadd.f32 %v2564, 1.0
    %v2568 = vadd.f32 %v2566, 1.0
    %v2569 = vrcp.pop %v2567
    %v2570 = vmul.f32 %v2567, %v2569
    %v2571 = vsub.f32 1.0, %v2570
    %v2572 = vmul.f32 %v2569, %v2571
    %v2573 = vadd.f32 %v2569, %v2572
    %vm2574 = vweird.f32 %v2567
    %vm2575 = vweird.f32 %v2569
    %vm2576 = vmor %vm2574, %vm2575
    %v2577 = vsel %vm2576, %v2569, %v2573
    %v2578 = vand.u32 2147483647, %v2567
    %vm2579 = vcmp.eq.f32.partialorder %v2578, 8.507059e+37
    %v2580 = vand.u32 %v2567, 2147483648
    %v2581 = vor.u32 1.1754944e-38, %v2580
    %v2582 = vsel %vm2579, %v2581, %v2577
    %v2583 = vmul.f32 1.0, %v2582
    %v2584 = vrcp.pop %v2568
    %v2585 = vmul.f32 %v2568, %v2584
    %v2586 = vsub.f32 1.0, %v2585
    %v2587 = vmul.f32 %v2584, %v2586
    %v2588 = vadd.f32 %v2584, %v2587
    %vm2589 = vweird.f32 %v2568
    %vm2590 = vweird.f32 %v2584
    %vm2591 = vmor %vm2589, %vm2590
    %v2592 = vsel %vm2591, %v2584, %v2588
    %v2593 = vand.u32 2147483647, %v2568
    %vm2594 = vcmp.eq.f32.partialorder %v2593, 8.507059e+37
    %v2595 = vand.u32 %v2568, 2147483648
    %v2596 = vor.u32 1.1754944e-38, %v2595
    %v2597 = vsel %vm2594, %v2596, %v2592
    %v2598 = vmul.f32 1.0, %v2597
    %v2601 = vrot.slane %v2583, 2
    %v2602 = vrot.slane %v2598, 2
    %v2605 = vsel %vm870, %v2601, 0.0
    %v2606 = vrot.slane %v2605, 4
    %v2607 = vadd.f32 %v2605, %v2606
    %v2608 = vrot.slane %v2607, 2
    %v2609 = vadd.f32 %v2607, %v2608
    %v2610 = vrot.slane %v2609, 1
    %v2611 = vadd.f32 %v2609, %v2610
    %v2612 = vsel %vm870, %v2602, 0.0
    %v2613 = vrot.slane %v2612, 4
    %v2614 = vadd.f32 %v2612, %v2613
    %v2615 = vrot.slane %v2614, 2
    %v2616 = vadd.f32 %v2614, %v2615
    %v2617 = vrot.slane %v2616, 1
    %v2618 = vadd.f32 %v2616, %v2617
    %v2619 = vmul.f32 %v2611, %v1045
    %v2620 = vmul.f32 %v2618, %v1045
    %v2621 = vmul.f32 %v2619, 0.999
    %v2622 = vmul.f32 %v2620, 0.999
    %v2623 = vlaneseq
    %v2624 = vshrl.u32 %v2623, 7
    %2626 = vset.pattern.permute.xlu0 %v2624
    %2627 = vperm.xlu0 %2626, %v2621
    %v2628 = vpop.permute.xlu0 %2627
    %v2629 = vlaneseq
    %v2630 = vshrl.u32 %v2629, 7
    %2632 = vset.pattern.permute.xlu0 %v2630
    %2633 = vperm.xlu0 %2632, %v2622
    %v2634 = vpop.permute.xlu0 %2633
    %v2635 = vsub.f32 1.0, %v2628
    %v2636 = vsub.f32 1.0, %v2634
    %v2637 = vmul.f32 %v1949, %v2635
    %v2638 = vmul.f32 %v1950, %v2636
    %v2639 = vrot.slane %v2427, 1
    %v2640 = vperm.slane %v2427, 0
    %v2641 = vperm.slane %v2639, 0
    %v2644 = vmul.f32 %v2628, %v2640
    %v2645 = vmul.f32 %v2634, %v2641
    %2648 = vrot.lane.b32.xlu0 %v2644, 80
    %v2649 = vpop.permute.xlu0 %2648
    %2650 = vrot.lane.b32.xlu0 %v2645, 80
    %v2651 = vpop.permute.xlu0 %2650
    %v2654 = vadd.f32 %v2637, %v2649
    %v2655 = vadd.f32 %v2638, %v2651
    %v2656 = vmul.f32 %v2117, %v1949
    %v2657 = vmul.f32 %v2118, %v1950
    %v2658 = vmul.f32 %v2366, %v2654
    %v2659 = vmul.f32 %v2367, %v2655
    %v2660 = vadd.f32 %v2656, %v2658
    %v2661 = vadd.f32 %v2657, %v2659
    %v2662 = vadd.f32 %v2427, %v2558
    %v2663 = vpack.c.bf16 %v2662, %v2662
    %v2665 = vsel %vm949, %v2663, 0
    %2667 = vmatpush.bf16.msra.mxu0 0
    %2668 = vmatpush.bf16.msra.mxu0 0
    %2669 = vmatpush.bf16.msra.mxu0 0
    %2670 = vmatpush.bf16.msra.mxu0 0
    %2671 = vmatpush.bf16.msra.mxu0 0
    %2672 = vmatpush.bf16.msra.mxu0 0
    %2673 = vmatpush.bf16.msra.mxu0 0
    %2674 = vmatpush.bf16.msra.mxu0 %v1960
    %2675 = vmatmul.bf16.gmra.mxu0 %v2665
    %v2676 = vpop.f32.mrf.mxu0
    %v2677 = vadd.f32 %v1954, %v2676
    %v2678 = vpop.f32.mrf.mxu0
    %2679 = vdwg.mxu0
    %v2680 = vmax.f32 %v2677, 0.0
    %v2681 = vpack.c.bf16 %v2680, %v2680
    %v2682 = vadd.f32 %v2412, %v2677
    %2684 = vrot.lane.b32.xlu0 %v2681, 64
    %v2685 = vpop.permute.xlu0 %2684
    %v2687 = vsel %vm815, %v2685, 0
    %2689 = vmatpush.bf16.msra.mxu0 0
    %2690 = vmatpush.bf16.msra.mxu0 0
    %2691 = vmatpush.bf16.msra.mxu0 0
    %2692 = vmatpush.bf16.msra.mxu0 0
    %2693 = vmatpush.bf16.msra.mxu0 %v2003
    %2694 = vmatpush.bf16.msra.mxu0 %v2002
    %2695 = vmatpush.bf16.msra.mxu0 %v2001
    %2696 = vmatpush.bf16.msra.mxu0 %v2000
    %2697 = vmatmul.bf16.gmra.mxu0 %v2687
    %v2698 = vpop.f32.mrf.mxu0
    %v2699 = vadd.f32 0.0, %v2698
    %v2700 = vpop.f32.mrf.mxu0
    %2701 = vdwg.mxu0
    %v2702 = vadd.f32 %v2682, %v2699
    %v2703 = vpack.c.bf16 %v2702, %v2702
    %v2705 = vsel %vm815, %v2703, 0
    %2707 = vmatpush.bf16.msra.mxu0 0
    %2708 = vmatpush.bf16.msra.mxu0 0
    %2709 = vmatpush.bf16.msra.mxu0 0
    %2710 = vmatpush.bf16.msra.mxu0 0
    %2711 = vmatpush.bf16.msra.mxu0 %v2048
    %2712 = vmatpush.bf16.msra.mxu0 %v2047
    %2713 = vmatpush.bf16.msra.mxu0 %v2046
    %2714 = vmatpush.bf16.msra.mxu0 %v2045
    %2715 = vmatmul.bf16.gmra.mxu0 %v2705
    %v2716 = vpop.f32.mrf.mxu0
    %v2717 = vadd.f32 %v2027, %v2716
    %v2718 = vpop.f32.mrf.mxu0
    %2719 = vdwg.mxu0
    %v2720 = vsel %vm2069, %v2717, -inf
    %2721 = vmax.xlane.f32.xlu0 %v2720
    %v2722 = vpop.xlane.xlu0 %2721
    %vm2723 = vcmp.ge.f32.partialorder %v2717, %v2722
    %v2724 = vsel %vm2723, %v1359, 64
    %v2725 = vsel %vm2069, %v2724, 2147483647
    %v2726 = vand.u32 %v2725, 65535
    %v2727 = vshra.s32 %v2725, 16
    %v2728 = vcvt.s32.f32 %v2726
    %v2729 = vcvt.s32.f32 %v2727
    %2730 = vmin.xlane.f32.xlu0 %v2729
    %v2731 = vpop.xlane.xlu0 %2730
    %vm2732 = vcmp.eq.f32.partialorder %v2729, %v2731
    %v2733 = vsel %vm2732, %v2728, inf
    %2734 = vmin.xlane.f32.xlu0 %v2733
    %v2735 = vpop.xlane.xlu0 %2734
    %v2736 = vcvt.f32.s32 %v2735
    %v2737 = vcvt.f32.s32 %v2731
    %v2738 = vshll.u32 %v2737, 16
    %v2739 = vadd.s32 %v2738, %v2736
    %vm2740 = vcmp.eq.s32.totalorder %v2739, 3
    %v2741 = vsel %vm2740, 1, 0
    %vm2742 = vcmp.gt.s32.totalorder %v2092, %v2741
    %v2743 = vsel %vm2742, %v2092, %v2741
    %vm2744 = vcmp.gt.s32.totalorder %v2743, 0
    %v2745 = vsel %vm2744, 1, 0
    %v2746 = vcvt.s32.f32 %v2745
    %vm2747 = vcmp.eq.s32.totalorder %v2739, %v1359
    %v2748 = vsel %vm2747, 1, 0
    %v2749 = vcvt.s32.f32 %v2748
    %v2750 = vpack.c.bf16 %v2749, %v2749
    %v2752 = vsel %vm815, %v2750, 0
    %2754 = vmatpush.bf16.msra.mxu0 0
    %2755 = vmatpush.bf16.msra.mxu0 0
    %2756 = vmatpush.bf16.msra.mxu0 0
    %2757 = vmatpush.bf16.msra.mxu0 0
    %2758 = vmatpush.bf16.msra.mxu0 %v1383
    %2759 = vmatpush.bf16.msra.mxu0 %v1382
    %2760 = vmatpush.bf16.msra.mxu0 %v1381
    %2761 = vmatpush.bf16.msra.mxu0 %v1380
    %2762 = vmatmul.bf16.gmra.mxu0 %v2752
    %v2763 = vpop.f32.mrf.mxu0
    %v2764 = vadd.f32 0.0, %v2763
    %v2765 = vpop.f32.mrf.mxu0
    %2766 = vdwg.mxu0
    %v2768 = vperm.slane %v2746, 0
    %v2769 = vperm.slane %v2746, 1
    %v2772 = vpack.c.bf16 %v2764, %v2764
    %v2774 = vsel %vm815, %v2772, 0
    %2776 = vmatpush.bf16.msra.mxu0 0
    %2777 = vmatpush.bf16.msra.mxu0 0
    %2778 = vmatpush.bf16.msra.mxu0 0
    %2779 = vmatpush.bf16.msra.mxu0 0
    %2780 = vmatpush.bf16.msra.mxu0 %v810
    %2781 = vmatpush.bf16.msra.mxu0 %v809
    %2782 = vmatpush.bf16.msra.mxu0 %v808
    %2783 = vmatpush.bf16.msra.mxu0 %v807
    %2784 = vmatmul.bf16.gmra.mxu0 %v2774
    %v2785 = vpop.f32.mrf.mxu0
    %v2786 = vadd.f32 %v789, %v2785
    %v2787 = vpop.f32.mrf.mxu0
    %2788 = vdwg.mxu0
    %2790 = vrot.lane.b32.xlu0 %v2786, 120
    %v2791 = vpop.permute.xlu0 %2790
    %2792 = vrot.lane.b32.xlu0 %v2786, 112
    %v2793 = vpop.permute.xlu0 %2792
    %2794 = vrot.lane.b32.xlu0 %v2786, 104
    %v2795 = vpop.permute.xlu0 %2794
    %2796 = vrot.lane.b32.xlu0 %v2791, 112
    %v2797 = vpop.permute.xlu0 %2796
    %2798 = vrot.lane.b32.xlu0 %v2793, 112
    %v2799 = vpop.permute.xlu0 %2798
    %2800 = vrot.lane.b32.xlu0 %v2795, 112
    %v2801 = vpop.permute.xlu0 %2800
    %v2806 = vrot.slane %v2799, 4
    %v2807 = vsel %vm850, %v2806, %v2793
    %v2809 = vunpack.c.l.s4 1983009808
    %v2810 = vunpack.c.0.s8 %v2809
    %v2811 = vperm.slane %v2807, %v2810
    %v2812 = vrot.slane %v2801, 4
    %v2813 = vsel %vm850, %v2812, %v2797
    %v2815 = vunpack.c.l.s4 1983009808
    %v2816 = vunpack.c.0.s8 %v2815
    %v2817 = vperm.slane %v2813, %v2816
    %v2818 = vrot.slane %v2817, 4
    %v2819 = vsel %vm850, %v2818, %v2811
    %v2821 = vunpack.c.l.s4 1934713408
    %v2822 = vunpack.c.0.s8 %v2821
    %v2823 = vperm.slane %v2819, %v2822
    %v2824 = vrot.slane %v2823, 4
    %v2825 = vsel %vm850, 0.0, %v2824
    %v2826 = vsel %vm870, %v2823, -inf
    %2827 = vmax.xlane.f32.xlu0 %v2826
    %v2828 = vpop.xlane.xlu0 %2827
    %v2829 = vsel %vm870, %v2825, -inf
    %2830 = vmax.xlane.f32.xlu0 %v2829
    %v2831 = vpop.xlane.xlu0 %2830
    %v2832 = vsub.f32 %v2823, %v2828
    %v2833 = vsub.f32 %v2825, %v2831
    %v2834 = vmul.f32 %v2832, 1.442695
    %v2835 = vpow.pop %v2834
    %v2836 = vmul.f32 %v2833, 1.442695
    %v2837 = vpow.pop %v2836
    %v2838 = vsel %vm870, %v2835, 0.0
    %2839 = vadd.xlane.f32.xlu0 %v2838
    %v2840 = vpop.xlane.xlu0 %2839
    %v2841 = vsel %vm870, %v2837, 0.0
    %2842 = vadd.xlane.f32.xlu0 %v2841
    %v2843 = vpop.xlane.xlu0 %2842
    %v2844 = vrcp.pop %v2840
    %v2845 = vrcp.pop %v2843
    %v2846 = vmul.f32 %v2835, %v2844
    %v2847 = vmul.f32 %v2837, %v2845
    %v2848 = vpack.c.bf16 %v2846, %v2846
    %v2849 = vpack.c.bf16 %v2847, %v2847
    %v2850 = vpack.c.bf16 %v2370, %v2370
    %v2851 = vpack.c.bf16 %v2371, %v2371
    %v2853 = vsel %vm897, %v2848, 0
    %v2856 = vsel %vm901, %v2850, 0
    %2858 = vmatpush.bf16.msra.mxu0 0
    %2859 = vmatpush.bf16.msra.mxu0 0
    %2860 = vmatpush.bf16.msra.mxu0 0
    %2861 = vmatpush.bf16.msra.mxu0 0
    %2862 = vmatpush.bf16.msra.mxu0 0
    %2863 = vmatpush.bf16.msra.mxu0 0
    %2864 = vmatpush.bf16.msra.mxu0 0
    %2865 = vmatpush.bf16.msra.mxu0 %v2856
    %2866 = vmatmul.bf16.gmra.mxu0 %v2853
    %v2867 = vpop.f32.mrf.mxu0
    %v2868 = vadd.f32 0.0, %v2867
    %v2869 = vpop.f32.mrf.mxu0
    %2870 = vdwg.mxu0
    %v2872 = vsel %vm897, %v2849, 0
    %v2875 = vsel %vm901, %v2851, 0
    %2877 = vmatpush.bf16.msra.mxu0 0
    %2878 = vmatpush.bf16.msra.mxu0 0
    %2879 = vmatpush.bf16.msra.mxu0 0
    %2880 = vmatpush.bf16.msra.mxu0 0
    %2881 = vmatpush.bf16.msra.mxu0 0
    %2882 = vmatpush.bf16.msra.mxu0 0
    %2883 = vmatpush.bf16.msra.mxu0 0
    %2884 = vmatpush.bf16.msra.mxu0 %v2875
    %2885 = vmatmul.bf16.gmra.mxu0 %v2872
    %v2886 = vpop.f32.mrf.mxu0
    %v2887 = vadd.f32 0.0, %v2886
    %v2888 = vpop.f32.mrf.mxu0
    %2889 = vdwg.mxu0
    %v2890 = vrot.slane %v2887, 4
    %v2891 = vsel %vm850, %v2890, %v2868
    %v2893 = vunpack.c.l.s4 1934713408
    %v2894 = vunpack.c.0.s8 %v2893
    %v2895 = vperm.slane %v2891, %v2894
    %v2896 = vrot.slane %v2895, 4
    %v2897 = vsel %vm850, 0.0, %v2896
    %2899 = vrot.lane.b32.xlu0 %v2897, 16
    %v2900 = vpop.permute.xlu0 %2899
    %v2902 = vsel %vm949, %v2895, %v2900
    %v2903 = vpack.c.bf16 %v2902, %v2902
    %v2905 = vsel %vm964, %v2903, 0
    %2907 = vmatpush.bf16.msra.mxu0 0
    %2908 = vmatpush.bf16.msra.mxu0 0
    %2909 = vmatpush.bf16.msra.mxu0 0
    %2910 = vmatpush.bf16.msra.mxu0 0
    %2911 = vmatpush.bf16.msra.mxu0 0
    %2912 = vmatpush.bf16.msra.mxu0 0
    %2913 = vmatpush.bf16.msra.mxu0 %v961
    %2914 = vmatpush.bf16.msra.mxu0 %v960
    %2915 = vmatmul.bf16.gmra.mxu0 %v2905
    %v2916 = vpop.f32.mrf.mxu0
    %v2917 = vadd.f32 0.0, %v2916
    %v2918 = vpop.f32.mrf.mxu0
    %2919 = vdwg.mxu0
    %v2920 = vxor.u32 %v2823, 2147483648
    %v2921 = vxor.u32 %v2825, 2147483648
    %v2922 = vmul.f32 %v2920, 1.442695
    %v2923 = vpow.pop %v2922
    %v2924 = vmul.f32 %v2921, 1.442695
    %v2925 = vpow.pop %v2924
    %v2926 = vadd.f32 %v2923, 1.0
    %v2927 = vadd.f32 %v2925, 1.0
    %v2928 = vrcp.pop %v2926
    %v2929 = vmul.f32 %v2926, %v2928
    %v2930 = vsub.f32 1.0, %v2929
    %v2931 = vmul.f32 %v2928, %v2930
    %v2932 = vadd.f32 %v2928, %v2931
    %vm2933 = vweird.f32 %v2926
    %vm2934 = vweird.f32 %v2928
    %vm2935 = vmor %vm2933, %vm2934
    %v2936 = vsel %vm2935, %v2928, %v2932
    %v2937 = vand.u32 2147483647, %v2926
    %vm2938 = vcmp.eq.f32.partialorder %v2937, 8.507059e+37
    %v2939 = vand.u32 %v2926, 2147483648
    %v2940 = vor.u32 1.1754944e-38, %v2939
    %v2941 = vsel %vm2938, %v2940, %v2936
    %v2942 = vmul.f32 1.0, %v2941
    %v2943 = vrcp.pop %v2927
    %v2944 = vmul.f32 %v2927, %v2943
    %v2945 = vsub.f32 1.0, %v2944
    %v2946 = vmul.f32 %v2943, %v2945
    %v2947 = vadd.f32 %v2943, %v2946
    %vm2948 = vweird.f32 %v2927
    %vm2949 = vweird.f32 %v2943
    %vm2950 = vmor %vm2948, %vm2949
    %v2951 = vsel %vm2950, %v2943, %v2947
    %v2952 = vand.u32 2147483647, %v2927
    %vm2953 = vcmp.eq.f32.partialorder %v2952, 8.507059e+37
    %v2954 = vand.u32 %v2927, 2147483648
    %v2955 = vor.u32 1.1754944e-38, %v2954
    %v2956 = vsel %vm2953, %v2955, %v2951
    %v2957 = vmul.f32 1.0, %v2956
    %v2960 = vrot.slane %v2942, 2
    %v2961 = vrot.slane %v2957, 2
    %v2964 = vsel %vm870, %v2960, 0.0
    %v2965 = vrot.slane %v2964, 4
    %v2966 = vadd.f32 %v2964, %v2965
    %v2967 = vrot.slane %v2966, 2
    %v2968 = vadd.f32 %v2966, %v2967
    %v2969 = vrot.slane %v2968, 1
    %v2970 = vadd.f32 %v2968, %v2969
    %v2971 = vsel %vm870, %v2961, 0.0
    %v2972 = vrot.slane %v2971, 4
    %v2973 = vadd.f32 %v2971, %v2972
    %v2974 = vrot.slane %v2973, 2
    %v2975 = vadd.f32 %v2973, %v2974
    %v2976 = vrot.slane %v2975, 1
    %v2977 = vadd.f32 %v2975, %v2976
    %v2978 = vmul.f32 %v2970, %v1045
    %v2979 = vmul.f32 %v2977, %v1045
    %v2980 = vmul.f32 %v2978, 0.999
    %v2981 = vmul.f32 %v2979, 0.999
    %v2982 = vlaneseq
    %v2983 = vshrl.u32 %v2982, 7
    %2985 = vset.pattern.permute.xlu0 %v2983
    %2986 = vperm.xlu0 %2985, %v2980
    %v2987 = vpop.permute.xlu0 %2986
    %v2988 = vlaneseq
    %v2989 = vshrl.u32 %v2988, 7
    %2991 = vset.pattern.permute.xlu0 %v2989
    %2992 = vperm.xlu0 %2991, %v2981
    %v2993 = vpop.permute.xlu0 %2992
    %v2994 = vsub.f32 1.0, %v2987
    %v2995 = vsub.f32 1.0, %v2993
    %v2996 = vmul.f32 %v2370, %v2994
    %v2997 = vmul.f32 %v2371, %v2995
    %v2998 = vrot.slane %v2786, 1
    %v2999 = vperm.slane %v2786, 0
    %v3000 = vperm.slane %v2998, 0
    %v3003 = vmul.f32 %v2987, %v2999
    %v3004 = vmul.f32 %v2993, %v3000
    %3007 = vrot.lane.b32.xlu0 %v3003, 80
    %v3008 = vpop.permute.xlu0 %3007
    %3009 = vrot.lane.b32.xlu0 %v3004, 80
    %v3010 = vpop.permute.xlu0 %3009
    %v3013 = vadd.f32 %v2996, %v3008
    %v3014 = vadd.f32 %v2997, %v3010
    %v3015 = vmul.f32 %v2768, %v2370
    %v3016 = vmul.f32 %v2769, %v2371
    %v3017 = vsub.f32 1.0, %v2768
    %v3018 = vsub.f32 1.0, %v2769
    %v3019 = vmul.f32 %v3017, %v3013
    %v3020 = vmul.f32 %v3018, %v3014
    %v3021 = vadd.f32 %v3015, %v3019
    %v3022 = vadd.f32 %v3016, %v3020
    %v3023 = vadd.f32 %v2786, %v2917
    %v3024 = vpack.c.bf16 %v3023, %v3023
    %v3026 = vsel %vm949, %v3024, 0
    %3028 = vmatpush.bf16.msra.mxu0 0
    %3029 = vmatpush.bf16.msra.mxu0 0
    %3030 = vmatpush.bf16.msra.mxu0 0
    %3031 = vmatpush.bf16.msra.mxu0 0
    %3032 = vmatpush.bf16.msra.mxu0 0
    %3033 = vmatpush.bf16.msra.mxu0 0
    %3034 = vmatpush.bf16.msra.mxu0 0
    %3035 = vmatpush.bf16.msra.mxu0 %v1096
    %3036 = vmatmul.bf16.gmra.mxu0 %v3026
    %v3037 = vpop.f32.mrf.mxu0
    %v3038 = vadd.f32 %v1090, %v3037
    %v3039 = vpop.f32.mrf.mxu0
    %3040 = vdwg.mxu0
    %v3041 = vmax.f32 %v3038, 0.0
    %v3042 = vpack.c.bf16 %v3041, %v3041
    %v3043 = vadd.f32 %v2764, %v3038
    %3045 = vrot.lane.b32.xlu0 %v3042, 64
    %v3046 = vpop.permute.xlu0 %3045
    %v3048 = vsel %vm815, %v3046, 0
    %3050 = vmatpush.bf16.msra.mxu0 0
    %3051 = vmatpush.bf16.msra.mxu0 0
    %3052 = vmatpush.bf16.msra.mxu0 0
    %3053 = vmatpush.bf16.msra.mxu0 0
    %3054 = vmatpush.bf16.msra.mxu0 %v1139
    %3055 = vmatpush.bf16.msra.mxu0 %v1138
    %3056 = vmatpush.bf16.msra.mxu0 %v1137
    %3057 = vmatpush.bf16.msra.mxu0 %v1136
    %3058 = vmatmul.bf16.gmra.mxu0 %v3048
    %v3059 = vpop.f32.mrf.mxu0
    %v3060 = vadd.f32 0.0, %v3059
    %v3061 = vpop.f32.mrf.mxu0
    %3062 = vdwg.mxu0
    %v3063 = vadd.f32 %v3043, %v3060
    %v3064 = vpack.c.bf16 %v3063, %v3063
    %v3066 = vsel %vm815, %v3064, 0
    %3068 = vmatpush.bf16.msra.mxu0 0
    %3069 = vmatpush.bf16.msra.mxu0 0
    %3070 = vmatpush.bf16.msra.mxu0 0
    %3071 = vmatpush.bf16.msra.mxu0 0
    %3072 = vmatpush.bf16.msra.mxu0 %v1184
    %3073 = vmatpush.bf16.msra.mxu0 %v1183
    %3074 = vmatpush.bf16.msra.mxu0 %v1182
    %3075 = vmatpush.bf16.msra.mxu0 %v1181
    %3076 = vmatmul.bf16.gmra.mxu0 %v3066
    %v3077 = vpop.f32.mrf.mxu0
    %v3078 = vadd.f32 %v1163, %v3077
    %v3079 = vpop.f32.mrf.mxu0
    %3080 = vdwg.mxu0
    %3082 = vrot.lane.b32.xlu0 %v3078, 120
    %v3083 = vpop.permute.xlu0 %3082
    %3084 = vrot.lane.b32.xlu0 %v3078, 112
    %v3085 = vpop.permute.xlu0 %3084
    %3086 = vrot.lane.b32.xlu0 %v3078, 104
    %v3087 = vpop.permute.xlu0 %3086
    %3088 = vrot.lane.b32.xlu0 %v3083, 112
    %v3089 = vpop.permute.xlu0 %3088
    %3090 = vrot.lane.b32.xlu0 %v3085, 112
    %v3091 = vpop.permute.xlu0 %3090
    %3092 = vrot.lane.b32.xlu0 %v3087, 112
    %v3093 = vpop.permute.xlu0 %3092
    %v3098 = vrot.slane %v3091, 4
    %v3099 = vsel %vm850, %v3098, %v3085
    %v3101 = vunpack.c.l.s4 1983009808
    %v3102 = vunpack.c.0.s8 %v3101
    %v3103 = vperm.slane %v3099, %v3102
    %v3104 = vrot.slane %v3093, 4
    %v3105 = vsel %vm850, %v3104, %v3089
    %v3107 = vunpack.c.l.s4 1983009808
    %v3108 = vunpack.c.0.s8 %v3107
    %v3109 = vperm.slane %v3105, %v3108
    %v3110 = vrot.slane %v3109, 4
    %v3111 = vsel %vm850, %v3110, %v3103
    %v3113 = vunpack.c.l.s4 1934713408
    %v3114 = vunpack.c.0.s8 %v3113
    %v3115 = vperm.slane %v3111, %v3114
    %v3116 = vrot.slane %v3115, 4
    %v3117 = vsel %vm850, 0.0, %v3116
    %v3118 = vsel %vm870, %v3115, -inf
    %3119 = vmax.xlane.f32.xlu0 %v3118
    %v3120 = vpop.xlane.xlu0 %3119
    %v3121 = vsel %vm870, %v3117, -inf
    %3122 = vmax.xlane.f32.xlu0 %v3121
    %v3123 = vpop.xlane.xlu0 %3122
    %v3124 = vsub.f32 %v3115, %v3120
    %v3125 = vsub.f32 %v3117, %v3123
    %v3126 = vmul.f32 %v3124, 1.442695
    %v3127 = vpow.pop %v3126
    %v3128 = vmul.f32 %v3125, 1.442695
    %v3129 = vpow.pop %v3128
    %v3130 = vsel %vm870, %v3127, 0.0
    %3131 = vadd.xlane.f32.xlu0 %v3130
    %v3132 = vpop.xlane.xlu0 %3131
    %v3133 = vsel %vm870, %v3129, 0.0
    %3134 = vadd.xlane.f32.xlu0 %v3133
    %v3135 = vpop.xlane.xlu0 %3134
    %v3136 = vrcp.pop %v3132
    %v3137 = vrcp.pop %v3135
    %v3138 = vmul.f32 %v3127, %v3136
    %v3139 = vmul.f32 %v3129, %v3137
    %v3140 = vpack.c.bf16 %v3138, %v3138
    %v3141 = vpack.c.bf16 %v3139, %v3139
    %v3142 = vpack.c.bf16 %v2660, %v2660
    %v3143 = vpack.c.bf16 %v2661, %v2661
    %v3145 = vsel %vm897, %v3140, 0
    %v3148 = vsel %vm901, %v3142, 0
    %3150 = vmatpush.bf16.msra.mxu0 0
    %3151 = vmatpush.bf16.msra.mxu0 0
    %3152 = vmatpush.bf16.msra.mxu0 0
    %3153 = vmatpush.bf16.msra.mxu0 0
    %3154 = vmatpush.bf16.msra.mxu0 0
    %3155 = vmatpush.bf16.msra.mxu0 0
    %3156 = vmatpush.bf16.msra.mxu0 0
    %3157 = vmatpush.bf16.msra.mxu0 %v3148
    %3158 = vmatmul.bf16.gmra.mxu0 %v3145
    %v3159 = vpop.f32.mrf.mxu0
    %v3160 = vadd.f32 0.0, %v3159
    %v3161 = vpop.f32.mrf.mxu0
    %3162 = vdwg.mxu0
    %v3164 = vsel %vm897, %v3141, 0
    %v3167 = vsel %vm901, %v3143, 0
    %3169 = vmatpush.bf16.msra.mxu0 0
    %3170 = vmatpush.bf16.msra.mxu0 0
    %3171 = vmatpush.bf16.msra.mxu0 0
    %3172 = vmatpush.bf16.msra.mxu0 0
    %3173 = vmatpush.bf16.msra.mxu0 0
    %3174 = vmatpush.bf16.msra.mxu0 0
    %3175 = vmatpush.bf16.msra.mxu0 0
    %3176 = vmatpush.bf16.msra.mxu0 %v3167
    %3177 = vmatmul.bf16.gmra.mxu0 %v3164
    %v3178 = vpop.f32.mrf.mxu0
    %v3179 = vadd.f32 0.0, %v3178
    %v3180 = vpop.f32.mrf.mxu0
    %3181 = vdwg.mxu0
    %v3182 = vrot.slane %v3179, 4
    %v3183 = vsel %vm850, %v3182, %v3160
    %v3185 = vunpack.c.l.s4 1934713408
    %v3186 = vunpack.c.0.s8 %v3185
    %v3187 = vperm.slane %v3183, %v3186
    %v3188 = vrot.slane %v3187, 4
    %v3189 = vsel %vm850, 0.0, %v3188
    %3191 = vrot.lane.b32.xlu0 %v3189, 16
    %v3192 = vpop.permute.xlu0 %3191
    %v3194 = vsel %vm949, %v3187, %v3192
    %v3195 = vpack.c.bf16 %v3194, %v3194
    %v3197 = vsel %vm964, %v3195, 0
    %3199 = vmatpush.bf16.msra.mxu0 0
    %3200 = vmatpush.bf16.msra.mxu0 0
    %3201 = vmatpush.bf16.msra.mxu0 0
    %3202 = vmatpush.bf16.msra.mxu0 0
    %3203 = vmatpush.bf16.msra.mxu0 0
    %3204 = vmatpush.bf16.msra.mxu0 0
    %3205 = vmatpush.bf16.msra.mxu0 %v1833
    %3206 = vmatpush.bf16.msra.mxu0 %v1832
    %3207 = vmatmul.bf16.gmra.mxu0 %v3197
    %v3208 = vpop.f32.mrf.mxu0
    %v3209 = vadd.f32 0.0, %v3208
    %v3210 = vpop.f32.mrf.mxu0
    %3211 = vdwg.mxu0
    %v3212 = vxor.u32 %v3115, 2147483648
    %v3213 = vxor.u32 %v3117, 2147483648
    %v3214 = vmul.f32 %v3212, 1.442695
    %v3215 = vpow.pop %v3214
    %v3216 = vmul.f32 %v3213, 1.442695
    %v3217 = vpow.pop %v3216
    %v3218 = vadd.f32 %v3215, 1.0
    %v3219 = vadd.f32 %v3217, 1.0
    %v3220 = vrcp.pop %v3218
    %v3221 = vmul.f32 %v3218, %v3220
    %v3222 = vsub.f32 1.0, %v3221
    %v3223 = vmul.f32 %v3220, %v3222
    %v3224 = vadd.f32 %v3220, %v3223
    %vm3225 = vweird.f32 %v3218
    %vm3226 = vweird.f32 %v3220
    %vm3227 = vmor %vm3225, %vm3226
    %v3228 = vsel %vm3227, %v3220, %v3224
    %v3229 = vand.u32 2147483647, %v3218
    %vm3230 = vcmp.eq.f32.partialorder %v3229, 8.507059e+37
    %v3231 = vand.u32 %v3218, 2147483648
    %v3232 = vor.u32 1.1754944e-38, %v3231
    %v3233 = vsel %vm3230, %v3232, %v3228
    %v3234 = vmul.f32 1.0, %v3233
    %v3235 = vrcp.pop %v3219
    %v3236 = vmul.f32 %v3219, %v3235
    %v3237 = vsub.f32 1.0, %v3236
    %v3238 = vmul.f32 %v3235, %v3237
    %v3239 = vadd.f32 %v3235, %v3238
    %vm3240 = vweird.f32 %v3219
    %vm3241 = vweird.f32 %v3235
    %vm3242 = vmor %vm3240, %vm3241
    %v3243 = vsel %vm3242, %v3235, %v3239
    %v3244 = vand.u32 2147483647, %v3219
    %vm3245 = vcmp.eq.f32.partialorder %v3244, 8.507059e+37
    %v3246 = vand.u32 %v3219, 2147483648
    %v3247 = vor.u32 1.1754944e-38, %v3246
    %v3248 = vsel %vm3245, %v3247, %v3243
    %v3249 = vmul.f32 1.0, %v3248
    %v3252 = vrot.slane %v3234, 2
    %v3253 = vrot.slane %v3249, 2
    %v3256 = vsel %vm870, %v3252, 0.0
    %v3257 = vrot.slane %v3256, 4
    %v3258 = vadd.f32 %v3256, %v3257
    %v3259 = vrot.slane %v3258, 2
    %v3260 = vadd.f32 %v3258, %v3259
    %v3261 = vrot.slane %v3260, 1
    %v3262 = vadd.f32 %v3260, %v3261
    %v3263 = vsel %vm870, %v3253, 0.0
    %v3264 = vrot.slane %v3263, 4
    %v3265 = vadd.f32 %v3263, %v3264
    %v3266 = vrot.slane %v3265, 2
    %v3267 = vadd.f32 %v3265, %v3266
    %v3268 = vrot.slane %v3267, 1
    %v3269 = vadd.f32 %v3267, %v3268
    %v3270 = vmul.f32 %v3262, %v1045
    %v3271 = vmul.f32 %v3269, %v1045
    %v3272 = vmul.f32 %v3270, 0.999
    %v3273 = vmul.f32 %v3271, 0.999
    %v3274 = vlaneseq
    %v3275 = vshrl.u32 %v3274, 7
    %3277 = vset.pattern.permute.xlu0 %v3275
    %3278 = vperm.xlu0 %3277, %v3272
    %v3279 = vpop.permute.xlu0 %3278
    %v3280 = vlaneseq
    %v3281 = vshrl.u32 %v3280, 7
    %3283 = vset.pattern.permute.xlu0 %v3281
    %3284 = vperm.xlu0 %3283, %v3273
    %v3285 = vpop.permute.xlu0 %3284
    %v3286 = vsub.f32 1.0, %v3279
    %v3287 = vsub.f32 1.0, %v3285
    %v3288 = vmul.f32 %v2660, %v3286
    %v3289 = vmul.f32 %v2661, %v3287
    %v3290 = vrot.slane %v3078, 1
    %v3291 = vperm.slane %v3078, 0
    %v3292 = vperm.slane %v3290, 0
    %v3295 = vmul.f32 %v3279, %v3291
    %v3296 = vmul.f32 %v3285, %v3292
    %3299 = vrot.lane.b32.xlu0 %v3295, 80
    %v3300 = vpop.permute.xlu0 %3299
    %3301 = vrot.lane.b32.xlu0 %v3296, 80
    %v3302 = vpop.permute.xlu0 %3301
    %v3305 = vadd.f32 %v3288, %v3300
    %v3306 = vadd.f32 %v3289, %v3302
    %v3307 = vmul.f32 %v2768, %v2660
    %v3308 = vmul.f32 %v2769, %v2661
    %v3309 = vmul.f32 %v3017, %v3305
    %v3310 = vmul.f32 %v3018, %v3306
    %v3311 = vadd.f32 %v3307, %v3309
    %v3312 = vadd.f32 %v3308, %v3310
    %v3313 = vadd.f32 %v3078, %v3209
    %v3314 = vpack.c.bf16 %v3313, %v3313
    %v3316 = vsel %vm949, %v3314, 0
    %3318 = vmatpush.bf16.msra.mxu0 0
    %3319 = vmatpush.bf16.msra.mxu0 0
    %3320 = vmatpush.bf16.msra.mxu0 0
    %3321 = vmatpush.bf16.msra.mxu0 0
    %3322 = vmatpush.bf16.msra.mxu0 0
    %3323 = vmatpush.bf16.msra.mxu0 0
    %3324 = vmatpush.bf16.msra.mxu0 0
    %3325 = vmatpush.bf16.msra.mxu0 %v1960
    %3326 = vmatmul.bf16.gmra.mxu0 %v3316
    %v3327 = vpop.f32.mrf.mxu0
    %v3328 = vadd.f32 %v1954, %v3327
    %v3329 = vpop.f32.mrf.mxu0
    %3330 = vdwg.mxu0
    %v3331 = vmax.f32 %v3328, 0.0
    %v3332 = vpack.c.bf16 %v3331, %v3331
    %v3333 = vadd.f32 %v3063, %v3328
    %3335 = vrot.lane.b32.xlu0 %v3332, 64
    %v3336 = vpop.permute.xlu0 %3335
    %v3338 = vsel %vm815, %v3336, 0
    %3340 = vmatpush.bf16.msra.mxu0 0
    %3341 = vmatpush.bf16.msra.mxu0 0
    %3342 = vmatpush.bf16.msra.mxu0 0
    %3343 = vmatpush.bf16.msra.mxu0 0
    %3344 = vmatpush.bf16.msra.mxu0 %v2003
    %3345 = vmatpush.bf16.msra.mxu0 %v2002
    %3346 = vmatpush.bf16.msra.mxu0 %v2001
    %3347 = vmatpush.bf16.msra.mxu0 %v2000
    %3348 = vmatmul.bf16.gmra.mxu0 %v3338
    %v3349 = vpop.f32.mrf.mxu0
    %v3350 = vadd.f32 0.0, %v3349
    %v3351 = vpop.f32.mrf.mxu0
    %3352 = vdwg.mxu0
    %v3353 = vadd.f32 %v3333, %v3350
    %v3354 = vpack.c.bf16 %v3353, %v3353
    %v3356 = vsel %vm815, %v3354, 0
    %3358 = vmatpush.bf16.msra.mxu0 0
    %3359 = vmatpush.bf16.msra.mxu0 0
    %3360 = vmatpush.bf16.msra.mxu0 0
    %3361 = vmatpush.bf16.msra.mxu0 0
    %3362 = vmatpush.bf16.msra.mxu0 %v2048
    %3363 = vmatpush.bf16.msra.mxu0 %v2047
    %3364 = vmatpush.bf16.msra.mxu0 %v2046
    %3365 = vmatpush.bf16.msra.mxu0 %v2045
    %3366 = vmatmul.bf16.gmra.mxu0 %v3356
    %v3367 = vpop.f32.mrf.mxu0
    %v3368 = vadd.f32 %v2027, %v3367
    %v3369 = vpop.f32.mrf.mxu0
    %3370 = vdwg.mxu0
    %v3371 = vsel %vm2069, %v3368, -inf
    %3372 = vmax.xlane.f32.xlu0 %v3371
    %v3373 = vpop.xlane.xlu0 %3372
    %vm3374 = vcmp.ge.f32.partialorder %v3368, %v3373
    %v3375 = vsel %vm3374, %v1359, 64
    %v3376 = vsel %vm2069, %v3375, 2147483647
    %v3377 = vand.u32 %v3376, 65535
    %v3378 = vshra.s32 %v3376, 16
    %v3379 = vcvt.s32.f32 %v3377
    %v3380 = vcvt.s32.f32 %v3378
    %3381 = vmin.xlane.f32.xlu0 %v3380
    %v3382 = vpop.xlane.xlu0 %3381
    %vm3383 = vcmp.eq.f32.partialorder %v3380, %v3382
    %v3384 = vsel %vm3383, %v3379, inf
    %3385 = vmin.xlane.f32.xlu0 %v3384
    %v3386 = vpop.xlane.xlu0 %3385
    %v3387 = vcvt.f32.s32 %v3386
    %v3388 = vcvt.f32.s32 %v3382
    %v3389 = vshll.u32 %v3388, 16
    %v3390 = vadd.s32 %v3389, %v3387
    %vm3391 = vcmp.eq.s32.totalorder %v3390, 3
    %v3392 = vsel %vm3391, 1, 0
    %vm3393 = vcmp.gt.s32.totalorder %v2743, %v3392
    %v3394 = vsel %vm3393, %v2743, %v3392
    %vm3395 = vcmp.gt.s32.totalorder %v3394, 0
    %v3396 = vsel %vm3395, 1, 0
    %v3397 = vcvt.s32.f32 %v3396
    %vm3398 = vcmp.eq.s32.totalorder %v3390, %v1359
    %v3399 = vsel %vm3398, 1, 0
    %v3400 = vcvt.s32.f32 %v3399
    %v3401 = vpack.c.bf16 %v3400, %v3400
    %v3403 = vsel %vm815, %v3401, 0
    %3405 = vmatpush.bf16.msra.mxu0 0
    %3406 = vmatpush.bf16.msra.mxu0 0
    %3407 = vmatpush.bf16.msra.mxu0 0
    %3408 = vmatpush.bf16.msra.mxu0 0
    %3409 = vmatpush.bf16.msra.mxu0 %v1383
    %3410 = vmatpush.bf16.msra.mxu0 %v1382
    %3411 = vmatpush.bf16.msra.mxu0 %v1381
    %3412 = vmatpush.bf16.msra.mxu0 %v1380
    %3413 = vmatmul.bf16.gmra.mxu0 %v3403
    %v3414 = vpop.f32.mrf.mxu0
    %v3415 = vadd.f32 0.0, %v3414
    %v3416 = vpop.f32.mrf.mxu0
    %3417 = vdwg.mxu0
    %v3419 = vperm.slane %v3397, 0
    %v3420 = vperm.slane %v3397, 1
    %v3423 = vpack.c.bf16 %v3415, %v3415
    %v3425 = vsel %vm815, %v3423, 0
    %3427 = vmatpush.bf16.msra.mxu0 0
    %3428 = vmatpush.bf16.msra.mxu0 0
    %3429 = vmatpush.bf16.msra.mxu0 0
    %3430 = vmatpush.bf16.msra.mxu0 0
    %3431 = vmatpush.bf16.msra.mxu0 %v810
    %3432 = vmatpush.bf16.msra.mxu0 %v809
    %3433 = vmatpush.bf16.msra.mxu0 %v808
    %3434 = vmatpush.bf16.msra.mxu0 %v807
    %3435 = vmatmul.bf16.gmra.mxu0 %v3425
    %v3436 = vpop.f32.mrf.mxu0
    %v3437 = vadd.f32 %v789, %v3436
    %v3438 = vpop.f32.mrf.mxu0
    %3439 = vdwg.mxu0
    %3441 = vrot.lane.b32.xlu0 %v3437, 120
    %v3442 = vpop.permute.xlu0 %3441
    %3443 = vrot.lane.b32.xlu0 %v3437, 112
    %v3444 = vpop.permute.xlu0 %3443
    %3445 = vrot.lane.b32.xlu0 %v3437, 104
    %v3446 = vpop.permute.xlu0 %3445
    %3447 = vrot.lane.b32.xlu0 %v3442, 112
    %v3448 = vpop.permute.xlu0 %3447
    %3449 = vrot.lane.b32.xlu0 %v3444, 112
    %v3450 = vpop.permute.xlu0 %3449
    %3451 = vrot.lane.b32.xlu0 %v3446, 112
    %v3452 = vpop.permute.xlu0 %3451
    %v3457 = vrot.slane %v3450, 4
    %v3458 = vsel %vm850, %v3457, %v3444
    %v3460 = vunpack.c.l.s4 1983009808
    %v3461 = vunpack.c.0.s8 %v3460
    %v3462 = vperm.slane %v3458, %v3461
    %v3463 = vrot.slane %v3452, 4
    %v3464 = vsel %vm850, %v3463, %v3448
    %v3466 = vunpack.c.l.s4 1983009808
    %v3467 = vunpack.c.0.s8 %v3466
    %v3468 = vperm.slane %v3464, %v3467
    %v3469 = vrot.slane %v3468, 4
    %v3470 = vsel %vm850, %v3469, %v3462
    %v3472 = vunpack.c.l.s4 1934713408
    %v3473 = vunpack.c.0.s8 %v3472
    %v3474 = vperm.slane %v3470, %v3473
    %v3475 = vrot.slane %v3474, 4
    %v3476 = vsel %vm850, 0.0, %v3475
    %v3477 = vsel %vm870, %v3474, -inf
    %3478 = vmax.xlane.f32.xlu0 %v3477
    %v3479 = vpop.xlane.xlu0 %3478
    %v3480 = vsel %vm870, %v3476, -inf
    %3481 = vmax.xlane.f32.xlu0 %v3480
    %v3482 = vpop.xlane.xlu0 %3481
    %v3483 = vsub.f32 %v3474, %v3479
    %v3484 = vsub.f32 %v3476, %v3482
    %v3485 = vmul.f32 %v3483, 1.442695
    %v3486 = vpow.pop %v3485
    %v3487 = vmul.f32 %v3484, 1.442695
    %v3488 = vpow.pop %v3487
    %v3489 = vsel %vm870, %v3486, 0.0
    %3490 = vadd.xlane.f32.xlu0 %v3489
    %v3491 = vpop.xlane.xlu0 %3490
    %v3492 = vsel %vm870, %v3488, 0.0
    %3493 = vadd.xlane.f32.xlu0 %v3492
    %v3494 = vpop.xlane.xlu0 %3493
    %v3495 = vrcp.pop %v3491
    %v3496 = vrcp.pop %v3494
    %v3497 = vmul.f32 %v3486, %v3495
    %v3498 = vmul.f32 %v3488, %v3496
    %v3499 = vpack.c.bf16 %v3497, %v3497
    %v3500 = vpack.c.bf16 %v3498, %v3498
    %v3501 = vpack.c.bf16 %v3021, %v3021
    %v3502 = vpack.c.bf16 %v3022, %v3022
    %v3504 = vsel %vm897, %v3499, 0
    %v3507 = vsel %vm901, %v3501, 0
    %3509 = vmatpush.bf16.msra.mxu0 0
    %3510 = vmatpush.bf16.msra.mxu0 0
    %3511 = vmatpush.bf16.msra.mxu0 0
    %3512 = vmatpush.bf16.msra.mxu0 0
    %3513 = vmatpush.bf16.msra.mxu0 0
    %3514 = vmatpush.bf16.msra.mxu0 0
    %3515 = vmatpush.bf16.msra.mxu0 0
    %3516 = vmatpush.bf16.msra.mxu0 %v3507
    %3517 = vmatmul.bf16.gmra.mxu0 %v3504
    %v3518 = vpop.f32.mrf.mxu0
    %v3519 = vadd.f32 0.0, %v3518
    %v3520 = vpop.f32.mrf.mxu0
    %3521 = vdwg.mxu0
    %v3523 = vsel %vm897, %v3500, 0
    %v3526 = vsel %vm901, %v3502, 0
    %3528 = vmatpush.bf16.msra.mxu0 0
    %3529 = vmatpush.bf16.msra.mxu0 0
    %3530 = vmatpush.bf16.msra.mxu0 0
    %3531 = vmatpush.bf16.msra.mxu0 0
    %3532 = vmatpush.bf16.msra.mxu0 0
    %3533 = vmatpush.bf16.msra.mxu0 0
    %3534 = vmatpush.bf16.msra.mxu0 0
    %3535 = vmatpush.bf16.msra.mxu0 %v3526
    %3536 = vmatmul.bf16.gmra.mxu0 %v3523
    %v3537 = vpop.f32.mrf.mxu0
    %v3538 = vadd.f32 0.0, %v3537
    %v3539 = vpop.f32.mrf.mxu0
    %3540 = vdwg.mxu0
    %v3541 = vrot.slane %v3538, 4
    %v3542 = vsel %vm850, %v3541, %v3519
    %v3544 = vunpack.c.l.s4 1934713408
    %v3545 = vunpack.c.0.s8 %v3544
    %v3546 = vperm.slane %v3542, %v3545
    %v3547 = vrot.slane %v3546, 4
    %v3548 = vsel %vm850, 0.0, %v3547
    %3550 = vrot.lane.b32.xlu0 %v3548, 16
    %v3551 = vpop.permute.xlu0 %3550
    %v3553 = vsel %vm949, %v3546, %v3551
    %v3554 = vpack.c.bf16 %v3553, %v3553
    %v3556 = vsel %vm964, %v3554, 0
    %3558 = vmatpush.bf16.msra.mxu0 0
    %3559 = vmatpush.bf16.msra.mxu0 0
    %3560 = vmatpush.bf16.msra.mxu0 0
    %3561 = vmatpush.bf16.msra.mxu0 0
    %3562 = vmatpush.bf16.msra.mxu0 0
    %3563 = vmatpush.bf16.msra.mxu0 0
    %3564 = vmatpush.bf16.msra.mxu0 %v961
    %3565 = vmatpush.bf16.msra.mxu0 %v960
    %3566 = vmatmul.bf16.gmra.mxu0 %v3556
    %v3567 = vpop.f32.mrf.mxu0
    %v3568 = vadd.f32 0.0, %v3567
    %v3569 = vpop.f32.mrf.mxu0
    %3570 = vdwg.mxu0
    %v3571 = vxor.u32 %v3474, 2147483648
    %v3572 = vxor.u32 %v3476, 2147483648
    %v3573 = vmul.f32 %v3571, 1.442695
    %v3574 = vpow.pop %v3573
    %v3575 = vmul.f32 %v3572, 1.442695
    %v3576 = vpow.pop %v3575
    %v3577 = vadd.f32 %v3574, 1.0
    %v3578 = vadd.f32 %v3576, 1.0
    %v3579 = vrcp.pop %v3577
    %v3580 = vmul.f32 %v3577, %v3579
    %v3581 = vsub.f32 1.0, %v3580
    %v3582 = vmul.f32 %v3579, %v3581
    %v3583 = vadd.f32 %v3579, %v3582
    %vm3584 = vweird.f32 %v3577
    %vm3585 = vweird.f32 %v3579
    %vm3586 = vmor %vm3584, %vm3585
    %v3587 = vsel %vm3586, %v3579, %v3583
    %v3588 = vand.u32 2147483647, %v3577
    %vm3589 = vcmp.eq.f32.partialorder %v3588, 8.507059e+37
    %v3590 = vand.u32 %v3577, 2147483648
    %v3591 = vor.u32 1.1754944e-38, %v3590
    %v3592 = vsel %vm3589, %v3591, %v3587
    %v3593 = vmul.f32 1.0, %v3592
    %v3594 = vrcp.pop %v3578
    %v3595 = vmul.f32 %v3578, %v3594
    %v3596 = vsub.f32 1.0, %v3595
    %v3597 = vmul.f32 %v3594, %v3596
    %v3598 = vadd.f32 %v3594, %v3597
    %vm3599 = vweird.f32 %v3578
    %vm3600 = vweird.f32 %v3594
    %vm3601 = vmor %vm3599, %vm3600
    %v3602 = vsel %vm3601, %v3594, %v3598
    %v3603 = vand.u32 2147483647, %v3578
    %vm3604 = vcmp.eq.f32.partialorder %v3603, 8.507059e+37
    %v3605 = vand.u32 %v3578, 2147483648
    %v3606 = vor.u32 1.1754944e-38, %v3605
    %v3607 = vsel %vm3604, %v3606, %v3602
    %v3608 = vmul.f32 1.0, %v3607
    %v3611 = vrot.slane %v3593, 2
    %v3612 = vrot.slane %v3608, 2
    %v3615 = vsel %vm870, %v3611, 0.0
    %v3616 = vrot.slane %v3615, 4
    %v3617 = vadd.f32 %v3615, %v3616
    %v3618 = vrot.slane %v3617, 2
    %v3619 = vadd.f32 %v3617, %v3618
    %v3620 = vrot.slane %v3619, 1
    %v3621 = vadd.f32 %v3619, %v3620
    %v3622 = vsel %vm870, %v3612, 0.0
    %v3623 = vrot.slane %v3622, 4
    %v3624 = vadd.f32 %v3622, %v3623
    %v3625 = vrot.slane %v3624, 2
    %v3626 = vadd.f32 %v3624, %v3625
    %v3627 = vrot.slane %v3626, 1
    %v3628 = vadd.f32 %v3626, %v3627
    %v3629 = vmul.f32 %v3621, %v1045
    %v3630 = vmul.f32 %v3628, %v1045
    %v3631 = vmul.f32 %v3629, 0.999
    %v3632 = vmul.f32 %v3630, 0.999
    %v3633 = vlaneseq
    %v3634 = vshrl.u32 %v3633, 7
    %3636 = vset.pattern.permute.xlu0 %v3634
    %3637 = vperm.xlu0 %3636, %v3631
    %v3638 = vpop.permute.xlu0 %3637
    %v3639 = vlaneseq
    %v3640 = vshrl.u32 %v3639, 7
    %3642 = vset.pattern.permute.xlu0 %v3640
    %3643 = vperm.xlu0 %3642, %v3632
    %v3644 = vpop.permute.xlu0 %3643
    %v3645 = vsub.f32 1.0, %v3638
    %v3646 = vsub.f32 1.0, %v3644
    %v3647 = vmul.f32 %v3021, %v3645
    %v3648 = vmul.f32 %v3022, %v3646
    %v3649 = vrot.slane %v3437, 1
    %v3650 = vperm.slane %v3437, 0
    %v3651 = vperm.slane %v3649, 0
    %v3654 = vmul.f32 %v3638, %v3650
    %v3655 = vmul.f32 %v3644, %v3651
    %3658 = vrot.lane.b32.xlu0 %v3654, 80
    %v3659 = vpop.permute.xlu0 %3658
    %3660 = vrot.lane.b32.xlu0 %v3655, 80
    %v3661 = vpop.permute.xlu0 %3660
    %v3664 = vadd.f32 %v3647, %v3659
    %v3665 = vadd.f32 %v3648, %v3661
    %v3666 = vmul.f32 %v3419, %v3021
    %v3667 = vmul.f32 %v3420, %v3022
    %v3668 = vsub.f32 1.0, %v3419
    %v3669 = vsub.f32 1.0, %v3420
    %v3670 = vmul.f32 %v3668, %v3664
    %v3671 = vmul.f32 %v3669, %v3665
    %v3672 = vadd.f32 %v3666, %v3670
    %v3673 = vadd.f32 %v3667, %v3671
    %v3674 = vadd.f32 %v3437, %v3568
    %v3675 = vpack.c.bf16 %v3674, %v3674
    %v3677 = vsel %vm949, %v3675, 0
    %3679 = vmatpush.bf16.msra.mxu0 0
    %3680 = vmatpush.bf16.msra.mxu0 0
    %3681 = vmatpush.bf16.msra.mxu0 0
    %3682 = vmatpush.bf16.msra.mxu0 0
    %3683 = vmatpush.bf16.msra.mxu0 0
    %3684 = vmatpush.bf16.msra.mxu0 0
    %3685 = vmatpush.bf16.msra.mxu0 0
    %3686 = vmatpush.bf16.msra.mxu0 %v1096
    %3687 = vmatmul.bf16.gmra.mxu0 %v3677
    %v3688 = vpop.f32.mrf.mxu0
    %v3689 = vadd.f32 %v1090, %v3688
    %v3690 = vpop.f32.mrf.mxu0
    %3691 = vdwg.mxu0
    %v3692 = vmax.f32 %v3689, 0.0
    %v3693 = vpack.c.bf16 %v3692, %v3692
    %v3694 = vadd.f32 %v3415, %v3689
    %3696 = vrot.lane.b32.xlu0 %v3693, 64
    %v3697 = vpop.permute.xlu0 %3696
    %v3699 = vsel %vm815, %v3697, 0
    %3701 = vmatpush.bf16.msra.mxu0 0
    %3702 = vmatpush.bf16.msra.mxu0 0
    %3703 = vmatpush.bf16.msra.mxu0 0
    %3704 = vmatpush.bf16.msra.mxu0 0
    %3705 = vmatpush.bf16.msra.mxu0 %v1139
    %3706 = vmatpush.bf16.msra.mxu0 %v1138
    %3707 = vmatpush.bf16.msra.mxu0 %v1137
    %3708 = vmatpush.bf16.msra.mxu0 %v1136
    %3709 = vmatmul.bf16.gmra.mxu0 %v3699
    %v3710 = vpop.f32.mrf.mxu0
    %v3711 = vadd.f32 0.0, %v3710
    %v3712 = vpop.f32.mrf.mxu0
    %3713 = vdwg.mxu0
    %v3714 = vadd.f32 %v3694, %v3711
    %v3715 = vpack.c.bf16 %v3714, %v3714
    %v3717 = vsel %vm815, %v3715, 0
    %3719 = vmatpush.bf16.msra.mxu0 0
    %3720 = vmatpush.bf16.msra.mxu0 0
    %3721 = vmatpush.bf16.msra.mxu0 0
    %3722 = vmatpush.bf16.msra.mxu0 0
    %3723 = vmatpush.bf16.msra.mxu0 %v1184
    %3724 = vmatpush.bf16.msra.mxu0 %v1183
    %3725 = vmatpush.bf16.msra.mxu0 %v1182
    %3726 = vmatpush.bf16.msra.mxu0 %v1181
    %3727 = vmatmul.bf16.gmra.mxu0 %v3717
    %v3728 = vpop.f32.mrf.mxu0
    %v3729 = vadd.f32 %v1163, %v3728
    %v3730 = vpop.f32.mrf.mxu0
    %3731 = vdwg.mxu0
    %3733 = vrot.lane.b32.xlu0 %v3729, 120
    %v3734 = vpop.permute.xlu0 %3733
    %3735 = vrot.lane.b32.xlu0 %v3729, 112
    %v3736 = vpop.permute.xlu0 %3735
    %3737 = vrot.lane.b32.xlu0 %v3729, 104
    %v3738 = vpop.permute.xlu0 %3737
    %3739 = vrot.lane.b32.xlu0 %v3734, 112
    %v3740 = vpop.permute.xlu0 %3739
    %3741 = vrot.lane.b32.xlu0 %v3736, 112
    %v3742 = vpop.permute.xlu0 %3741
    %3743 = vrot.lane.b32.xlu0 %v3738, 112
    %v3744 = vpop.permute.xlu0 %3743
    %v3749 = vrot.slane %v3742, 4
    %v3750 = vsel %vm850, %v3749, %v3736
    %v3752 = vunpack.c.l.s4 1983009808
    %v3753 = vunpack.c.0.s8 %v3752
    %v3754 = vperm.slane %v3750, %v3753
    %v3755 = vrot.slane %v3744, 4
    %v3756 = vsel %vm850, %v3755, %v3740
    %v3758 = vunpack.c.l.s4 1983009808
    %v3759 = vunpack.c.0.s8 %v3758
    %v3760 = vperm.slane %v3756, %v3759
    %v3761 = vrot.slane %v3760, 4
    %v3762 = vsel %vm850, %v3761, %v3754
    %v3764 = vunpack.c.l.s4 1934713408
    %v3765 = vunpack.c.0.s8 %v3764
    %v3766 = vperm.slane %v3762, %v3765
    %v3767 = vrot.slane %v3766, 4
    %v3768 = vsel %vm850, 0.0, %v3767
    %v3769 = vsel %vm870, %v3766, -inf
    %3770 = vmax.xlane.f32.xlu0 %v3769
    %v3771 = vpop.xlane.xlu0 %3770
    %v3772 = vsel %vm870, %v3768, -inf
    %3773 = vmax.xlane.f32.xlu0 %v3772
    %v3774 = vpop.xlane.xlu0 %3773
    %v3775 = vsub.f32 %v3766, %v3771
    %v3776 = vsub.f32 %v3768, %v3774
    %v3777 = vmul.f32 %v3775, 1.442695
    %v3778 = vpow.pop %v3777
    %v3779 = vmul.f32 %v3776, 1.442695
    %v3780 = vpow.pop %v3779
    %v3781 = vsel %vm870, %v3778, 0.0
    %3782 = vadd.xlane.f32.xlu0 %v3781
    %v3783 = vpop.xlane.xlu0 %3782
    %v3784 = vsel %vm870, %v3780, 0.0
    %3785 = vadd.xlane.f32.xlu0 %v3784
    %v3786 = vpop.xlane.xlu0 %3785
    %v3787 = vrcp.pop %v3783
    %v3788 = vrcp.pop %v3786
    %v3789 = vmul.f32 %v3778, %v3787
    %v3790 = vmul.f32 %v3780, %v3788
    %v3791 = vpack.c.bf16 %v3789, %v3789
    %v3792 = vpack.c.bf16 %v3790, %v3790
    %v3793 = vpack.c.bf16 %v3311, %v3311
    %v3794 = vpack.c.bf16 %v3312, %v3312
    %v3796 = vsel %vm897, %v3791, 0
    %v3799 = vsel %vm901, %v3793, 0
    %3801 = vmatpush.bf16.msra.mxu0 0
    %3802 = vmatpush.bf16.msra.mxu0 0
    %3803 = vmatpush.bf16.msra.mxu0 0
    %3804 = vmatpush.bf16.msra.mxu0 0
    %3805 = vmatpush.bf16.msra.mxu0 0
    %3806 = vmatpush.bf16.msra.mxu0 0
    %3807 = vmatpush.bf16.msra.mxu0 0
    %3808 = vmatpush.bf16.msra.mxu0 %v3799
    %3809 = vmatmul.bf16.gmra.mxu0 %v3796
    %v3810 = vpop.f32.mrf.mxu0
    %v3811 = vadd.f32 0.0, %v3810
    %v3812 = vpop.f32.mrf.mxu0
    %3813 = vdwg.mxu0
    %v3815 = vsel %vm897, %v3792, 0
    %v3818 = vsel %vm901, %v3794, 0
    %3820 = vmatpush.bf16.msra.mxu0 0
    %3821 = vmatpush.bf16.msra.mxu0 0
    %3822 = vmatpush.bf16.msra.mxu0 0
    %3823 = vmatpush.bf16.msra.mxu0 0
    %3824 = vmatpush.bf16.msra.mxu0 0
    %3825 = vmatpush.bf16.msra.mxu0 0
    %3826 = vmatpush.bf16.msra.mxu0 0
    %3827 = vmatpush.bf16.msra.mxu0 %v3818
    %3828 = vmatmul.bf16.gmra.mxu0 %v3815
    %v3829 = vpop.f32.mrf.mxu0
    %v3830 = vadd.f32 0.0, %v3829
    %v3831 = vpop.f32.mrf.mxu0
    %3832 = vdwg.mxu0
    %v3833 = vrot.slane %v3830, 4
    %v3834 = vsel %vm850, %v3833, %v3811
    %v3836 = vunpack.c.l.s4 1934713408
    %v3837 = vunpack.c.0.s8 %v3836
    %v3838 = vperm.slane %v3834, %v3837
    %v3839 = vrot.slane %v3838, 4
    %v3840 = vsel %vm850, 0.0, %v3839
    %3842 = vrot.lane.b32.xlu0 %v3840, 16
    %v3843 = vpop.permute.xlu0 %3842
    %v3845 = vsel %vm949, %v3838, %v3843
    %v3846 = vpack.c.bf16 %v3845, %v3845
    %v3848 = vsel %vm964, %v3846, 0
    %3850 = vmatpush.bf16.msra.mxu0 0
    %3851 = vmatpush.bf16.msra.mxu0 0
    %3852 = vmatpush.bf16.msra.mxu0 0
    %3853 = vmatpush.bf16.msra.mxu0 0
    %3854 = vmatpush.bf16.msra.mxu0 0
    %3855 = vmatpush.bf16.msra.mxu0 0
    %3856 = vmatpush.bf16.msra.mxu0 %v1833
    %3857 = vmatpush.bf16.msra.mxu0 %v1832
    %3858 = vmatmul.bf16.gmra.mxu0 %v3848
    %v3859 = vpop.f32.mrf.mxu0
    %v3860 = vadd.f32 0.0, %v3859
    %v3861 = vpop.f32.mrf.mxu0
    %3862 = vdwg.mxu0
    %v3863 = vxor.u32 %v3766, 2147483648
    %v3864 = vxor.u32 %v3768, 2147483648
    %v3865 = vmul.f32 %v3863, 1.442695
    %v3866 = vpow.pop %v3865
    %v3867 = vmul.f32 %v3864, 1.442695
    %v3868 = vpow.pop %v3867
    %v3869 = vadd.f32 %v3866, 1.0
    %v3870 = vadd.f32 %v3868, 1.0
    %v3871 = vrcp.pop %v3869
    %v3872 = vmul.f32 %v3869, %v3871
    %v3873 = vsub.f32 1.0, %v3872
    %v3874 = vmul.f32 %v3871, %v3873
    %v3875 = vadd.f32 %v3871, %v3874
    %vm3876 = vweird.f32 %v3869
    %vm3877 = vweird.f32 %v3871
    %vm3878 = vmor %vm3876, %vm3877
    %v3879 = vsel %vm3878, %v3871, %v3875
    %v3880 = vand.u32 2147483647, %v3869
    %vm3881 = vcmp.eq.f32.partialorder %v3880, 8.507059e+37
    %v3882 = vand.u32 %v3869, 2147483648
    %v3883 = vor.u32 1.1754944e-38, %v3882
    %v3884 = vsel %vm3881, %v3883, %v3879
    %v3885 = vmul.f32 1.0, %v3884
    %v3886 = vrcp.pop %v3870
    %v3887 = vmul.f32 %v3870, %v3886
    %v3888 = vsub.f32 1.0, %v3887
    %v3889 = vmul.f32 %v3886, %v3888
    %v3890 = vadd.f32 %v3886, %v3889
    %vm3891 = vweird.f32 %v3870
    %vm3892 = vweird.f32 %v3886
    %vm3893 = vmor %vm3891, %vm3892
    %v3894 = vsel %vm3893, %v3886, %v3890
    %v3895 = vand.u32 2147483647, %v3870
    %vm3896 = vcmp.eq.f32.partialorder %v3895, 8.507059e+37
    %v3897 = vand.u32 %v3870, 2147483648
    %v3898 = vor.u32 1.1754944e-38, %v3897
    %v3899 = vsel %vm3896, %v3898, %v3894
    %v3900 = vmul.f32 1.0, %v3899
    %v3903 = vrot.slane %v3885, 2
    %v3904 = vrot.slane %v3900, 2
    %v3907 = vsel %vm870, %v3903, 0.0
    %v3908 = vrot.slane %v3907, 4
    %v3909 = vadd.f32 %v3907, %v3908
    %v3910 = vrot.slane %v3909, 2
    %v3911 = vadd.f32 %v3909, %v3910
    %v3912 = vrot.slane %v3911, 1
    %v3913 = vadd.f32 %v3911, %v3912
    %v3914 = vsel %vm870, %v3904, 0.0
    %v3915 = vrot.slane %v3914, 4
    %v3916 = vadd.f32 %v3914, %v3915
    %v3917 = vrot.slane %v3916, 2
    %v3918 = vadd.f32 %v3916, %v3917
    %v3919 = vrot.slane %v3918, 1
    %v3920 = vadd.f32 %v3918, %v3919
    %v3921 = vmul.f32 %v3913, %v1045
    %v3922 = vmul.f32 %v3920, %v1045
    %v3923 = vmul.f32 %v3921, 0.999
    %v3924 = vmul.f32 %v3922, 0.999
    %v3925 = vlaneseq
    %v3926 = vshrl.u32 %v3925, 7
    %3928 = vset.pattern.permute.xlu0 %v3926
    %3929 = vperm.xlu0 %3928, %v3923
    %v3930 = vpop.permute.xlu0 %3929
    %v3931 = vlaneseq
    %v3932 = vshrl.u32 %v3931, 7
    %3934 = vset.pattern.permute.xlu0 %v3932
    %3935 = vperm.xlu0 %3934, %v3924
    %v3936 = vpop.permute.xlu0 %3935
    %v3937 = vsub.f32 1.0, %v3930
    %v3938 = vsub.f32 1.0, %v3936
    %v3939 = vmul.f32 %v3311, %v3937
    %v3940 = vmul.f32 %v3312, %v3938
    %v3941 = vrot.slane %v3729, 1
    %v3942 = vperm.slane %v3729, 0
    %v3943 = vperm.slane %v3941, 0
    %v3946 = vmul.f32 %v3930, %v3942
    %v3947 = vmul.f32 %v3936, %v3943
    %3950 = vrot.lane.b32.xlu0 %v3946, 80
    %v3951 = vpop.permute.xlu0 %3950
    %3952 = vrot.lane.b32.xlu0 %v3947, 80
    %v3953 = vpop.permute.xlu0 %3952
    %v3956 = vadd.f32 %v3939, %v3951
    %v3957 = vadd.f32 %v3940, %v3953
    %v3958 = vmul.f32 %v3419, %v3311
    %v3959 = vmul.f32 %v3420, %v3312
    %v3960 = vmul.f32 %v3668, %v3956
    %v3961 = vmul.f32 %v3669, %v3957
    %v3962 = vadd.f32 %v3958, %v3960
    %v3963 = vadd.f32 %v3959, %v3961
    %v3964 = vadd.f32 %v3729, %v3860
    %v3965 = vpack.c.bf16 %v3964, %v3964
    %v3967 = vsel %vm949, %v3965, 0
    %3969 = vmatpush.bf16.msra.mxu0 0
    %3970 = vmatpush.bf16.msra.mxu0 0
    %3971 = vmatpush.bf16.msra.mxu0 0
    %3972 = vmatpush.bf16.msra.mxu0 0
    %3973 = vmatpush.bf16.msra.mxu0 0
    %3974 = vmatpush.bf16.msra.mxu0 0
    %3975 = vmatpush.bf16.msra.mxu0 0
    %3976 = vmatpush.bf16.msra.mxu0 %v1960
    %3977 = vmatmul.bf16.gmra.mxu0 %v3967
    %v3978 = vpop.f32.mrf.mxu0
    %v3979 = vadd.f32 %v1954, %v3978
    %v3980 = vpop.f32.mrf.mxu0
    %3981 = vdwg.mxu0
    %v3982 = vmax.f32 %v3979, 0.0
    %v3983 = vpack.c.bf16 %v3982, %v3982
    %v3984 = vadd.f32 %v3714, %v3979
    %3986 = vrot.lane.b32.xlu0 %v3983, 64
    %v3987 = vpop.permute.xlu0 %3986
    %v3989 = vsel %vm815, %v3987, 0
    %3991 = vmatpush.bf16.msra.mxu0 0
    %3992 = vmatpush.bf16.msra.mxu0 0
    %3993 = vmatpush.bf16.msra.mxu0 0
    %3994 = vmatpush.bf16.msra.mxu0 0
    %3995 = vmatpush.bf16.msra.mxu0 %v2003
    %3996 = vmatpush.bf16.msra.mxu0 %v2002
    %3997 = vmatpush.bf16.msra.mxu0 %v2001
    %3998 = vmatpush.bf16.msra.mxu0 %v2000
    %3999 = vmatmul.bf16.gmra.mxu0 %v3989
    %v4000 = vpop.f32.mrf.mxu0
    %v4001 = vadd.f32 0.0, %v4000
    %v4002 = vpop.f32.mrf.mxu0
    %4003 = vdwg.mxu0
    %v4004 = vadd.f32 %v3984, %v4001
    %v4005 = vpack.c.bf16 %v4004, %v4004
    %v4007 = vsel %vm815, %v4005, 0
    %4009 = vmatpush.bf16.msra.mxu0 0
    %4010 = vmatpush.bf16.msra.mxu0 0
    %4011 = vmatpush.bf16.msra.mxu0 0
    %4012 = vmatpush.bf16.msra.mxu0 0
    %4013 = vmatpush.bf16.msra.mxu0 %v2048
    %4014 = vmatpush.bf16.msra.mxu0 %v2047
    %4015 = vmatpush.bf16.msra.mxu0 %v2046
    %4016 = vmatpush.bf16.msra.mxu0 %v2045
    %4017 = vmatmul.bf16.gmra.mxu0 %v4007
    %v4018 = vpop.f32.mrf.mxu0
    %v4019 = vadd.f32 %v2027, %v4018
    %v4020 = vpop.f32.mrf.mxu0
    %4021 = vdwg.mxu0
    %v4022 = vsel %vm2069, %v4019, -inf
    %4023 = vmax.xlane.f32.xlu0 %v4022
    %v4024 = vpop.xlane.xlu0 %4023
    %vm4025 = vcmp.ge.f32.partialorder %v4019, %v4024
    %v4026 = vsel %vm4025, %v1359, 64
    %v4027 = vsel %vm2069, %v4026, 2147483647
    %v4028 = vand.u32 %v4027, 65535
    %v4029 = vshra.s32 %v4027, 16
    %v4030 = vcvt.s32.f32 %v4028
    %v4031 = vcvt.s32.f32 %v4029
    %4032 = vmin.xlane.f32.xlu0 %v4031
    %v4033 = vpop.xlane.xlu0 %4032
    %vm4034 = vcmp.eq.f32.partialorder %v4031, %v4033
    %v4035 = vsel %vm4034, %v4030, inf
    %4036 = vmin.xlane.f32.xlu0 %v4035
    %v4037 = vpop.xlane.xlu0 %4036
    %v4038 = vcvt.f32.s32 %v4037
    %v4039 = vcvt.f32.s32 %v4033
    %v4040 = vshll.u32 %v4039, 16
    %v4041 = vadd.s32 %v4040, %v4038
    %vm4042 = vcmp.eq.s32.totalorder %v4041, 3
    %v4043 = vsel %vm4042, 1, 0
    %vm4044 = vcmp.gt.s32.totalorder %v3394, %v4043
    %v4045 = vsel %vm4044, %v3394, %v4043
    %vm4046 = vcmp.gt.s32.totalorder %v4045, 0
    %v4047 = vsel %vm4046, 1, 0
    %v4048 = vcvt.s32.f32 %v4047
    %vm4049 = vcmp.eq.s32.totalorder %v4041, %v1359
    %v4050 = vsel %vm4049, 1, 0
    %v4051 = vcvt.s32.f32 %v4050
    %v4052 = vpack.c.bf16 %v4051, %v4051
    %v4054 = vsel %vm815, %v4052, 0
    %4056 = vmatpush.bf16.msra.mxu0 0
    %4057 = vmatpush.bf16.msra.mxu0 0
    %4058 = vmatpush.bf16.msra.mxu0 0
    %4059 = vmatpush.bf16.msra.mxu0 0
    %4060 = vmatpush.bf16.msra.mxu0 %v1383
    %4061 = vmatpush.bf16.msra.mxu0 %v1382
    %4062 = vmatpush.bf16.msra.mxu0 %v1381
    %4063 = vmatpush.bf16.msra.mxu0 %v1380
    %4064 = vmatmul.bf16.gmra.mxu0 %v4054
    %v4065 = vpop.f32.mrf.mxu0
    %v4066 = vadd.f32 0.0, %v4065
    %v4067 = vpop.f32.mrf.mxu0
    %4068 = vdwg.mxu0
    %v4070 = vperm.slane %v4048, 0
    %v4071 = vperm.slane %v4048, 1
    %v4074 = vpack.c.bf16 %v4066, %v4066
    %v4076 = vsel %vm815, %v4074, 0
    %4078 = vmatpush.bf16.msra.mxu0 0
    %4079 = vmatpush.bf16.msra.mxu0 0
    %4080 = vmatpush.bf16.msra.mxu0 0
    %4081 = vmatpush.bf16.msra.mxu0 0
    %4082 = vmatpush.bf16.msra.mxu0 %v810
    %4083 = vmatpush.bf16.msra.mxu0 %v809
    %4084 = vmatpush.bf16.msra.mxu0 %v808
    %4085 = vmatpush.bf16.msra.mxu0 %v807
    %4086 = vmatmul.bf16.gmra.mxu0 %v4076
    %v4087 = vpop.f32.mrf.mxu0
    %v4088 = vadd.f32 %v789, %v4087
    %v4089 = vpop.f32.mrf.mxu0
    %4090 = vdwg.mxu0
    %4092 = vrot.lane.b32.xlu0 %v4088, 120
    %v4093 = vpop.permute.xlu0 %4092
    %4094 = vrot.lane.b32.xlu0 %v4088, 112
    %v4095 = vpop.permute.xlu0 %4094
    %4096 = vrot.lane.b32.xlu0 %v4088, 104
    %v4097 = vpop.permute.xlu0 %4096
    %4098 = vrot.lane.b32.xlu0 %v4093, 112
    %v4099 = vpop.permute.xlu0 %4098
    %4100 = vrot.lane.b32.xlu0 %v4095, 112
    %v4101 = vpop.permute.xlu0 %4100
    %4102 = vrot.lane.b32.xlu0 %v4097, 112
    %v4103 = vpop.permute.xlu0 %4102
    %v4108 = vrot.slane %v4101, 4
    %v4109 = vsel %vm850, %v4108, %v4095
    %v4111 = vunpack.c.l.s4 1983009808
    %v4112 = vunpack.c.0.s8 %v4111
    %v4113 = vperm.slane %v4109, %v4112
    %v4114 = vrot.slane %v4103, 4
    %v4115 = vsel %vm850, %v4114, %v4099
    %v4117 = vunpack.c.l.s4 1983009808
    %v4118 = vunpack.c.0.s8 %v4117
    %v4119 = vperm.slane %v4115, %v4118
    %v4120 = vrot.slane %v4119, 4
    %v4121 = vsel %vm850, %v4120, %v4113
    %v4123 = vunpack.c.l.s4 1934713408
    %v4124 = vunpack.c.0.s8 %v4123
    %v4125 = vperm.slane %v4121, %v4124
    %v4126 = vrot.slane %v4125, 4
    %v4127 = vsel %vm850, 0.0, %v4126
    %v4128 = vsel %vm870, %v4125, -inf
    %4129 = vmax.xlane.f32.xlu0 %v4128
    %v4130 = vpop.xlane.xlu0 %4129
    %v4131 = vsel %vm870, %v4127, -inf
    %4132 = vmax.xlane.f32.xlu0 %v4131
    %v4133 = vpop.xlane.xlu0 %4132
    %v4134 = vsub.f32 %v4125, %v4130
    %v4135 = vsub.f32 %v4127, %v4133
    %v4136 = vmul.f32 %v4134, 1.442695
    %v4137 = vpow.pop %v4136
    %v4138 = vmul.f32 %v4135, 1.442695
    %v4139 = vpow.pop %v4138
    %v4140 = vsel %vm870, %v4137, 0.0
    %4141 = vadd.xlane.f32.xlu0 %v4140
    %v4142 = vpop.xlane.xlu0 %4141
    %v4143 = vsel %vm870, %v4139, 0.0
    %4144 = vadd.xlane.f32.xlu0 %v4143
    %v4145 = vpop.xlane.xlu0 %4144
    %v4146 = vrcp.pop %v4142
    %v4147 = vrcp.pop %v4145
    %v4148 = vmul.f32 %v4137, %v4146
    %v4149 = vmul.f32 %v4139, %v4147
    %v4150 = vpack.c.bf16 %v4148, %v4148
    %v4151 = vpack.c.bf16 %v4149, %v4149
    %v4152 = vpack.c.bf16 %v3672, %v3672
    %v4153 = vpack.c.bf16 %v3673, %v3673
    %v4155 = vsel %vm897, %v4150, 0
    %v4158 = vsel %vm901, %v4152, 0
    %4160 = vmatpush.bf16.msra.mxu0 0
    %4161 = vmatpush.bf16.msra.mxu0 0
    %4162 = vmatpush.bf16.msra.mxu0 0
    %4163 = vmatpush.bf16.msra.mxu0 0
    %4164 = vmatpush.bf16.msra.mxu0 0
    %4165 = vmatpush.bf16.msra.mxu0 0
    %4166 = vmatpush.bf16.msra.mxu0 0
    %4167 = vmatpush.bf16.msra.mxu0 %v4158
    %4168 = vmatmul.bf16.gmra.mxu0 %v4155
    %v4169 = vpop.f32.mrf.mxu0
    %v4170 = vadd.f32 0.0, %v4169
    %v4171 = vpop.f32.mrf.mxu0
    %4172 = vdwg.mxu0
    %v4174 = vsel %vm897, %v4151, 0
    %v4177 = vsel %vm901, %v4153, 0
    %4179 = vmatpush.bf16.msra.mxu0 0
    %4180 = vmatpush.bf16.msra.mxu0 0
    %4181 = vmatpush.bf16.msra.mxu0 0
    %4182 = vmatpush.bf16.msra.mxu0 0
    %4183 = vmatpush.bf16.msra.mxu0 0
    %4184 = vmatpush.bf16.msra.mxu0 0
    %4185 = vmatpush.bf16.msra.mxu0 0
    %4186 = vmatpush.bf16.msra.mxu0 %v4177
    %4187 = vmatmul.bf16.gmra.mxu0 %v4174
    %v4188 = vpop.f32.mrf.mxu0
    %v4189 = vadd.f32 0.0, %v4188
    %v4190 = vpop.f32.mrf.mxu0
    %4191 = vdwg.mxu0
    %v4192 = vrot.slane %v4189, 4
    %v4193 = vsel %vm850, %v4192, %v4170
    %v4195 = vunpack.c.l.s4 1934713408
    %v4196 = vunpack.c.0.s8 %v4195
    %v4197 = vperm.slane %v4193, %v4196
    %v4198 = vrot.slane %v4197, 4
    %v4199 = vsel %vm850, 0.0, %v4198
    %4201 = vrot.lane.b32.xlu0 %v4199, 16
    %v4202 = vpop.permute.xlu0 %4201
    %v4204 = vsel %vm949, %v4197, %v4202
    %v4205 = vpack.c.bf16 %v4204, %v4204
    %v4207 = vsel %vm964, %v4205, 0
    %4209 = vmatpush.bf16.msra.mxu0 0
    %4210 = vmatpush.bf16.msra.mxu0 0
    %4211 = vmatpush.bf16.msra.mxu0 0
    %4212 = vmatpush.bf16.msra.mxu0 0
    %4213 = vmatpush.bf16.msra.mxu0 0
    %4214 = vmatpush.bf16.msra.mxu0 0
    %4215 = vmatpush.bf16.msra.mxu0 %v961
    %4216 = vmatpush.bf16.msra.mxu0 %v960
    %4217 = vmatmul.bf16.gmra.mxu0 %v4207
    %v4218 = vpop.f32.mrf.mxu0
    %v4219 = vadd.f32 0.0, %v4218
    %v4220 = vpop.f32.mrf.mxu0
    %4221 = vdwg.mxu0
    %v4222 = vxor.u32 %v4125, 2147483648
    %v4223 = vxor.u32 %v4127, 2147483648
    %v4224 = vmul.f32 %v4222, 1.442695
    %v4225 = vpow.pop %v4224
    %v4226 = vmul.f32 %v4223, 1.442695
    %v4227 = vpow.pop %v4226
    %v4228 = vadd.f32 %v4225, 1.0
    %v4229 = vadd.f32 %v4227, 1.0
    %v4230 = vrcp.pop %v4228
    %v4231 = vmul.f32 %v4228, %v4230
    %v4232 = vsub.f32 1.0, %v4231
    %v4233 = vmul.f32 %v4230, %v4232
    %v4234 = vadd.f32 %v4230, %v4233
    %vm4235 = vweird.f32 %v4228
    %vm4236 = vweird.f32 %v4230
    %vm4237 = vmor %vm4235, %vm4236
    %v4238 = vsel %vm4237, %v4230, %v4234
    %v4239 = vand.u32 2147483647, %v4228
    %vm4240 = vcmp.eq.f32.partialorder %v4239, 8.507059e+37
    %v4241 = vand.u32 %v4228, 2147483648
    %v4242 = vor.u32 1.1754944e-38, %v4241
    %v4243 = vsel %vm4240, %v4242, %v4238
    %v4244 = vmul.f32 1.0, %v4243
    %v4245 = vrcp.pop %v4229
    %v4246 = vmul.f32 %v4229, %v4245
    %v4247 = vsub.f32 1.0, %v4246
    %v4248 = vmul.f32 %v4245, %v4247
    %v4249 = vadd.f32 %v4245, %v4248
    %vm4250 = vweird.f32 %v4229
    %vm4251 = vweird.f32 %v4245
    %vm4252 = vmor %vm4250, %vm4251
    %v4253 = vsel %vm4252, %v4245, %v4249
    %v4254 = vand.u32 2147483647, %v4229
    %vm4255 = vcmp.eq.f32.partialorder %v4254, 8.507059e+37
    %v4256 = vand.u32 %v4229, 2147483648
    %v4257 = vor.u32 1.1754944e-38, %v4256
    %v4258 = vsel %vm4255, %v4257, %v4253
    %v4259 = vmul.f32 1.0, %v4258
    %v4262 = vrot.slane %v4244, 2
    %v4263 = vrot.slane %v4259, 2
    %v4266 = vsel %vm870, %v4262, 0.0
    %v4267 = vrot.slane %v4266, 4
    %v4268 = vadd.f32 %v4266, %v4267
    %v4269 = vrot.slane %v4268, 2
    %v4270 = vadd.f32 %v4268, %v4269
    %v4271 = vrot.slane %v4270, 1
    %v4272 = vadd.f32 %v4270, %v4271
    %v4273 = vsel %vm870, %v4263, 0.0
    %v4274 = vrot.slane %v4273, 4
    %v4275 = vadd.f32 %v4273, %v4274
    %v4276 = vrot.slane %v4275, 2
    %v4277 = vadd.f32 %v4275, %v4276
    %v4278 = vrot.slane %v4277, 1
    %v4279 = vadd.f32 %v4277, %v4278
    %v4280 = vmul.f32 %v4272, %v1045
    %v4281 = vmul.f32 %v4279, %v1045
    %v4282 = vmul.f32 %v4280, 0.999
    %v4283 = vmul.f32 %v4281, 0.999
    %v4284 = vlaneseq
    %v4285 = vshrl.u32 %v4284, 7
    %4287 = vset.pattern.permute.xlu0 %v4285
    %4288 = vperm.xlu0 %4287, %v4282
    %v4289 = vpop.permute.xlu0 %4288
    %v4290 = vlaneseq
    %v4291 = vshrl.u32 %v4290, 7
    %4293 = vset.pattern.permute.xlu0 %v4291
    %4294 = vperm.xlu0 %4293, %v4283
    %v4295 = vpop.permute.xlu0 %4294
    %v4296 = vsub.f32 1.0, %v4289
    %v4297 = vsub.f32 1.0, %v4295
    %v4298 = vmul.f32 %v3672, %v4296
    %v4299 = vmul.f32 %v3673, %v4297
    %v4300 = vrot.slane %v4088, 1
    %v4301 = vperm.slane %v4088, 0
    %v4302 = vperm.slane %v4300, 0
    %v4305 = vmul.f32 %v4289, %v4301
    %v4306 = vmul.f32 %v4295, %v4302
    %4309 = vrot.lane.b32.xlu0 %v4305, 80
    %v4310 = vpop.permute.xlu0 %4309
    %4311 = vrot.lane.b32.xlu0 %v4306, 80
    %v4312 = vpop.permute.xlu0 %4311
    %v4315 = vadd.f32 %v4298, %v4310
    %v4316 = vadd.f32 %v4299, %v4312
    %v4317 = vmul.f32 %v4070, %v3672
    %v4318 = vmul.f32 %v4071, %v3673
    %v4319 = vsub.f32 1.0, %v4070
    %v4320 = vsub.f32 1.0, %v4071
    %v4321 = vmul.f32 %v4319, %v4315
    %v4322 = vmul.f32 %v4320, %v4316
    %v4323 = vadd.f32 %v4317, %v4321
    %v4324 = vadd.f32 %v4318, %v4322
    %v4325 = vadd.f32 %v4088, %v4219
    %v4326 = vpack.c.bf16 %v4325, %v4325
    %v4328 = vsel %vm949, %v4326, 0
    %4330 = vmatpush.bf16.msra.mxu0 0
    %4331 = vmatpush.bf16.msra.mxu0 0
    %4332 = vmatpush.bf16.msra.mxu0 0
    %4333 = vmatpush.bf16.msra.mxu0 0
    %4334 = vmatpush.bf16.msra.mxu0 0
    %4335 = vmatpush.bf16.msra.mxu0 0
    %4336 = vmatpush.bf16.msra.mxu0 0
    %4337 = vmatpush.bf16.msra.mxu0 %v1096
    %4338 = vmatmul.bf16.gmra.mxu0 %v4328
    %v4339 = vpop.f32.mrf.mxu0
    %v4340 = vadd.f32 %v1090, %v4339
    %v4341 = vpop.f32.mrf.mxu0
    %4342 = vdwg.mxu0
    %v4343 = vmax.f32 %v4340, 0.0
    %v4344 = vpack.c.bf16 %v4343, %v4343
    %v4345 = vadd.f32 %v4066, %v4340
    %4347 = vrot.lane.b32.xlu0 %v4344, 64
    %v4348 = vpop.permute.xlu0 %4347
    %v4350 = vsel %vm815, %v4348, 0
    %4352 = vmatpush.bf16.msra.mxu0 0
    %4353 = vmatpush.bf16.msra.mxu0 0
    %4354 = vmatpush.bf16.msra.mxu0 0
    %4355 = vmatpush.bf16.msra.mxu0 0
    %4356 = vmatpush.bf16.msra.mxu0 %v1139
    %4357 = vmatpush.bf16.msra.mxu0 %v1138
    %4358 = vmatpush.bf16.msra.mxu0 %v1137
    %4359 = vmatpush.bf16.msra.mxu0 %v1136
    %4360 = vmatmul.bf16.gmra.mxu0 %v4350
    %v4361 = vpop.f32.mrf.mxu0
    %v4362 = vadd.f32 0.0, %v4361
    %v4363 = vpop.f32.mrf.mxu0
    %4364 = vdwg.mxu0
    %v4365 = vadd.f32 %v4345, %v4362
    %v4366 = vpack.c.bf16 %v4365, %v4365
    %v4368 = vsel %vm815, %v4366, 0
    %4370 = vmatpush.bf16.msra.mxu0 0
    %4371 = vmatpush.bf16.msra.mxu0 0
    %4372 = vmatpush.bf16.msra.mxu0 0
    %4373 = vmatpush.bf16.msra.mxu0 0
    %4374 = vmatpush.bf16.msra.mxu0 %v1184
    %4375 = vmatpush.bf16.msra.mxu0 %v1183
    %4376 = vmatpush.bf16.msra.mxu0 %v1182
    %4377 = vmatpush.bf16.msra.mxu0 %v1181
    %4378 = vmatmul.bf16.gmra.mxu0 %v4368
    %v4379 = vpop.f32.mrf.mxu0
    %v4380 = vadd.f32 %v1163, %v4379
    %v4381 = vpop.f32.mrf.mxu0
    %4382 = vdwg.mxu0
    %4384 = vrot.lane.b32.xlu0 %v4380, 120
    %v4385 = vpop.permute.xlu0 %4384
    %4386 = vrot.lane.b32.xlu0 %v4380, 112
    %v4387 = vpop.permute.xlu0 %4386
    %4388 = vrot.lane.b32.xlu0 %v4380, 104
    %v4389 = vpop.permute.xlu0 %4388
    %4390 = vrot.lane.b32.xlu0 %v4385, 112
    %v4391 = vpop.permute.xlu0 %4390
    %4392 = vrot.lane.b32.xlu0 %v4387, 112
    %v4393 = vpop.permute.xlu0 %4392
    %4394 = vrot.lane.b32.xlu0 %v4389, 112
    %v4395 = vpop.permute.xlu0 %4394
    %v4400 = vrot.slane %v4393, 4
    %v4401 = vsel %vm850, %v4400, %v4387
    %v4403 = vunpack.c.l.s4 1983009808
    %v4404 = vunpack.c.0.s8 %v4403
    %v4405 = vperm.slane %v4401, %v4404
    %v4406 = vrot.slane %v4395, 4
    %v4407 = vsel %vm850, %v4406, %v4391
    %v4409 = vunpack.c.l.s4 1983009808
    %v4410 = vunpack.c.0.s8 %v4409
    %v4411 = vperm.slane %v4407, %v4410
    %v4412 = vrot.slane %v4411, 4
    %v4413 = vsel %vm850, %v4412, %v4405
    %v4415 = vunpack.c.l.s4 1934713408
    %v4416 = vunpack.c.0.s8 %v4415
    %v4417 = vperm.slane %v4413, %v4416
    %v4418 = vrot.slane %v4417, 4
    %v4419 = vsel %vm850, 0.0, %v4418
    %v4420 = vsel %vm870, %v4417, -inf
    %4421 = vmax.xlane.f32.xlu0 %v4420
    %v4422 = vpop.xlane.xlu0 %4421
    %v4423 = vsel %vm870, %v4419, -inf
    %4424 = vmax.xlane.f32.xlu0 %v4423
    %v4425 = vpop.xlane.xlu0 %4424
    %v4426 = vsub.f32 %v4417, %v4422
    %v4427 = vsub.f32 %v4419, %v4425
    %v4428 = vmul.f32 %v4426, 1.442695
    %v4429 = vpow.pop %v4428
    %v4430 = vmul.f32 %v4427, 1.442695
    %v4431 = vpow.pop %v4430
    %v4432 = vsel %vm870, %v4429, 0.0
    %4433 = vadd.xlane.f32.xlu0 %v4432
    %v4434 = vpop.xlane.xlu0 %4433
    %v4435 = vsel %vm870, %v4431, 0.0
    %4436 = vadd.xlane.f32.xlu0 %v4435
    %v4437 = vpop.xlane.xlu0 %4436
    %v4438 = vrcp.pop %v4434
    %v4439 = vrcp.pop %v4437
    %v4440 = vmul.f32 %v4429, %v4438
    %v4441 = vmul.f32 %v4431, %v4439
    %v4442 = vpack.c.bf16 %v4440, %v4440
    %v4443 = vpack.c.bf16 %v4441, %v4441
    %v4444 = vpack.c.bf16 %v3962, %v3962
    %v4445 = vpack.c.bf16 %v3963, %v3963
    %v4447 = vsel %vm897, %v4442, 0
    %v4450 = vsel %vm901, %v4444, 0
    %4452 = vmatpush.bf16.msra.mxu0 0
    %4453 = vmatpush.bf16.msra.mxu0 0
    %4454 = vmatpush.bf16.msra.mxu0 0
    %4455 = vmatpush.bf16.msra.mxu0 0
    %4456 = vmatpush.bf16.msra.mxu0 0
    %4457 = vmatpush.bf16.msra.mxu0 0
    %4458 = vmatpush.bf16.msra.mxu0 0
    %4459 = vmatpush.bf16.msra.mxu0 %v4450
    %4460 = vmatmul.bf16.gmra.mxu0 %v4447
    %v4461 = vpop.f32.mrf.mxu0
    %v4462 = vadd.f32 0.0, %v4461
    %v4463 = vpop.f32.mrf.mxu0
    %4464 = vdwg.mxu0
    %v4466 = vsel %vm897, %v4443, 0
    %v4469 = vsel %vm901, %v4445, 0
    %4471 = vmatpush.bf16.msra.mxu0 0
    %4472 = vmatpush.bf16.msra.mxu0 0
    %4473 = vmatpush.bf16.msra.mxu0 0
    %4474 = vmatpush.bf16.msra.mxu0 0
    %4475 = vmatpush.bf16.msra.mxu0 0
    %4476 = vmatpush.bf16.msra.mxu0 0
    %4477 = vmatpush.bf16.msra.mxu0 0
    %4478 = vmatpush.bf16.msra.mxu0 %v4469
    %4479 = vmatmul.bf16.gmra.mxu0 %v4466
    %v4480 = vpop.f32.mrf.mxu0
    %v4481 = vadd.f32 0.0, %v4480
    %v4482 = vpop.f32.mrf.mxu0
    %4483 = vdwg.mxu0
    %v4484 = vrot.slane %v4481, 4
    %v4485 = vsel %vm850, %v4484, %v4462
    %v4487 = vunpack.c.l.s4 1934713408
    %v4488 = vunpack.c.0.s8 %v4487
    %v4489 = vperm.slane %v4485, %v4488
    %v4490 = vrot.slane %v4489, 4
    %v4491 = vsel %vm850, 0.0, %v4490
    %4493 = vrot.lane.b32.xlu0 %v4491, 16
    %v4494 = vpop.permute.xlu0 %4493
    %v4496 = vsel %vm949, %v4489, %v4494
    %v4497 = vpack.c.bf16 %v4496, %v4496
    %v4499 = vsel %vm964, %v4497, 0
    %4501 = vmatpush.bf16.msra.mxu0 0
    %4502 = vmatpush.bf16.msra.mxu0 0
    %4503 = vmatpush.bf16.msra.mxu0 0
    %4504 = vmatpush.bf16.msra.mxu0 0
    %4505 = vmatpush.bf16.msra.mxu0 0
    %4506 = vmatpush.bf16.msra.mxu0 0
    %4507 = vmatpush.bf16.msra.mxu0 %v1833
    %4508 = vmatpush.bf16.msra.mxu0 %v1832
    %4509 = vmatmul.bf16.gmra.mxu0 %v4499
    %v4510 = vpop.f32.mrf.mxu0
    %v4511 = vadd.f32 0.0, %v4510
    %v4512 = vpop.f32.mrf.mxu0
    %4513 = vdwg.mxu0
    %v4514 = vxor.u32 %v4417, 2147483648
    %v4515 = vxor.u32 %v4419, 2147483648
    %v4516 = vmul.f32 %v4514, 1.442695
    %v4517 = vpow.pop %v4516
    %v4518 = vmul.f32 %v4515, 1.442695
    %v4519 = vpow.pop %v4518
    %v4520 = vadd.f32 %v4517, 1.0
    %v4521 = vadd.f32 %v4519, 1.0
    %v4522 = vrcp.pop %v4520
    %v4523 = vmul.f32 %v4520, %v4522
    %v4524 = vsub.f32 1.0, %v4523
    %v4525 = vmul.f32 %v4522, %v4524
    %v4526 = vadd.f32 %v4522, %v4525
    %vm4527 = vweird.f32 %v4520
    %vm4528 = vweird.f32 %v4522
    %vm4529 = vmor %vm4527, %vm4528
    %v4530 = vsel %vm4529, %v4522, %v4526
    %v4531 = vand.u32 2147483647, %v4520
    %vm4532 = vcmp.eq.f32.partialorder %v4531, 8.507059e+37
    %v4533 = vand.u32 %v4520, 2147483648
    %v4534 = vor.u32 1.1754944e-38, %v4533
    %v4535 = vsel %vm4532, %v4534, %v4530
    %v4536 = vmul.f32 1.0, %v4535
    %v4537 = vrcp.pop %v4521
    %v4538 = vmul.f32 %v4521, %v4537
    %v4539 = vsub.f32 1.0, %v4538
    %v4540 = vmul.f32 %v4537, %v4539
    %v4541 = vadd.f32 %v4537, %v4540
    %vm4542 = vweird.f32 %v4521
    %vm4543 = vweird.f32 %v4537
    %vm4544 = vmor %vm4542, %vm4543
    %v4545 = vsel %vm4544, %v4537, %v4541
    %v4546 = vand.u32 2147483647, %v4521
    %vm4547 = vcmp.eq.f32.partialorder %v4546, 8.507059e+37
    %v4548 = vand.u32 %v4521, 2147483648
    %v4549 = vor.u32 1.1754944e-38, %v4548
    %v4550 = vsel %vm4547, %v4549, %v4545
    %v4551 = vmul.f32 1.0, %v4550
    %v4554 = vrot.slane %v4536, 2
    %v4555 = vrot.slane %v4551, 2
    %v4558 = vsel %vm870, %v4554, 0.0
    %v4559 = vrot.slane %v4558, 4
    %v4560 = vadd.f32 %v4558, %v4559
    %v4561 = vrot.slane %v4560, 2
    %v4562 = vadd.f32 %v4560, %v4561
    %v4563 = vrot.slane %v4562, 1
    %v4564 = vadd.f32 %v4562, %v4563
    %v4565 = vsel %vm870, %v4555, 0.0
    %v4566 = vrot.slane %v4565, 4
    %v4567 = vadd.f32 %v4565, %v4566
    %v4568 = vrot.slane %v4567, 2
    %v4569 = vadd.f32 %v4567, %v4568
    %v4570 = vrot.slane %v4569, 1
    %v4571 = vadd.f32 %v4569, %v4570
    %v4572 = vmul.f32 %v4564, %v1045
    %v4573 = vmul.f32 %v4571, %v1045
    %v4574 = vmul.f32 %v4572, 0.999
    %v4575 = vmul.f32 %v4573, 0.999
    %v4576 = vlaneseq
    %v4577 = vshrl.u32 %v4576, 7
    %4579 = vset.pattern.permute.xlu0 %v4577
    %4580 = vperm.xlu0 %4579, %v4574
    %v4581 = vpop.permute.xlu0 %4580
    %v4582 = vlaneseq
    %v4583 = vshrl.u32 %v4582, 7
    %4585 = vset.pattern.permute.xlu0 %v4583
    %4586 = vperm.xlu0 %4585, %v4575
    %v4587 = vpop.permute.xlu0 %4586
    %v4588 = vsub.f32 1.0, %v4581
    %v4589 = vsub.f32 1.0, %v4587
    %v4590 = vmul.f32 %v3962, %v4588
    %v4591 = vmul.f32 %v3963, %v4589
    %v4592 = vrot.slane %v4380, 1
    %v4593 = vperm.slane %v4380, 0
    %v4594 = vperm.slane %v4592, 0
    %v4597 = vmul.f32 %v4581, %v4593
    %v4598 = vmul.f32 %v4587, %v4594
    %4601 = vrot.lane.b32.xlu0 %v4597, 80
    %v4602 = vpop.permute.xlu0 %4601
    %4603 = vrot.lane.b32.xlu0 %v4598, 80
    %v4604 = vpop.permute.xlu0 %4603
    %v4607 = vadd.f32 %v4590, %v4602
    %v4608 = vadd.f32 %v4591, %v4604
    %v4609 = vmul.f32 %v4070, %v3962
    %v4610 = vmul.f32 %v4071, %v3963
    %v4611 = vmul.f32 %v4319, %v4607
    %v4612 = vmul.f32 %v4320, %v4608
    %v4613 = vadd.f32 %v4609, %v4611
    %v4614 = vadd.f32 %v4610, %v4612
    %v4615 = vadd.f32 %v4380, %v4511
    %v4616 = vpack.c.bf16 %v4615, %v4615
    %v4618 = vsel %vm949, %v4616, 0
    %4620 = vmatpush.bf16.msra.mxu0 0
    %4621 = vmatpush.bf16.msra.mxu0 0
    %4622 = vmatpush.bf16.msra.mxu0 0
    %4623 = vmatpush.bf16.msra.mxu0 0
    %4624 = vmatpush.bf16.msra.mxu0 0
    %4625 = vmatpush.bf16.msra.mxu0 0
    %4626 = vmatpush.bf16.msra.mxu0 0
    %4627 = vmatpush.bf16.msra.mxu0 %v1960
    %4628 = vmatmul.bf16.gmra.mxu0 %v4618
    %v4629 = vpop.f32.mrf.mxu0
    %v4630 = vadd.f32 %v1954, %v4629
    %v4631 = vpop.f32.mrf.mxu0
    %4632 = vdwg.mxu0
    %v4633 = vmax.f32 %v4630, 0.0
    %v4634 = vpack.c.bf16 %v4633, %v4633
    %v4635 = vadd.f32 %v4365, %v4630
    %4637 = vrot.lane.b32.xlu0 %v4634, 64
    %v4638 = vpop.permute.xlu0 %4637
    %v4640 = vsel %vm815, %v4638, 0
    %4642 = vmatpush.bf16.msra.mxu0 0
    %4643 = vmatpush.bf16.msra.mxu0 0
    %4644 = vmatpush.bf16.msra.mxu0 0
    %4645 = vmatpush.bf16.msra.mxu0 0
    %4646 = vmatpush.bf16.msra.mxu0 %v2003
    %4647 = vmatpush.bf16.msra.mxu0 %v2002
    %4648 = vmatpush.bf16.msra.mxu0 %v2001
    %4649 = vmatpush.bf16.msra.mxu0 %v2000
    %4650 = vmatmul.bf16.gmra.mxu0 %v4640
    %v4651 = vpop.f32.mrf.mxu0
    %v4652 = vadd.f32 0.0, %v4651
    %v4653 = vpop.f32.mrf.mxu0
    %4654 = vdwg.mxu0
    %v4655 = vadd.f32 %v4635, %v4652
    %v4656 = vpack.c.bf16 %v4655, %v4655
    %v4658 = vsel %vm815, %v4656, 0
    %4660 = vmatpush.bf16.msra.mxu0 0
    %4661 = vmatpush.bf16.msra.mxu0 0
    %4662 = vmatpush.bf16.msra.mxu0 0
    %4663 = vmatpush.bf16.msra.mxu0 0
    %4664 = vmatpush.bf16.msra.mxu0 %v2048
    %4665 = vmatpush.bf16.msra.mxu0 %v2047
    %4666 = vmatpush.bf16.msra.mxu0 %v2046
    %4667 = vmatpush.bf16.msra.mxu0 %v2045
    %4668 = vmatmul.bf16.gmra.mxu0 %v4658
    %v4669 = vpop.f32.mrf.mxu0
    %v4670 = vadd.f32 %v2027, %v4669
    %v4671 = vpop.f32.mrf.mxu0
    %4672 = vdwg.mxu0
    %v4673 = vsel %vm2069, %v4670, -inf
    %4674 = vmax.xlane.f32.xlu0 %v4673
    %v4675 = vpop.xlane.xlu0 %4674
    %vm4676 = vcmp.ge.f32.partialorder %v4670, %v4675
    %v4677 = vsel %vm4676, %v1359, 64
    %v4678 = vsel %vm2069, %v4677, 2147483647
    %v4679 = vand.u32 %v4678, 65535
    %v4680 = vshra.s32 %v4678, 16
    %v4681 = vcvt.s32.f32 %v4679
    %v4682 = vcvt.s32.f32 %v4680
    %4683 = vmin.xlane.f32.xlu0 %v4682
    %v4684 = vpop.xlane.xlu0 %4683
    %vm4685 = vcmp.eq.f32.partialorder %v4682, %v4684
    %v4686 = vsel %vm4685, %v4681, inf
    %4687 = vmin.xlane.f32.xlu0 %v4686
    %v4688 = vpop.xlane.xlu0 %4687
    %v4689 = vcvt.f32.s32 %v4688
    %v4690 = vcvt.f32.s32 %v4684
    %v4691 = vshll.u32 %v4690, 16
    %v4692 = vadd.s32 %v4691, %v4689
    %vm4693 = vcmp.eq.s32.totalorder %v4692, 3
    %v4694 = vsel %vm4693, 1, 0
    %vm4695 = vcmp.gt.s32.totalorder %v4045, %v4694
    %v4696 = vsel %vm4695, %v4045, %v4694
    %vm4697 = vcmp.gt.s32.totalorder %v4696, 0
    %v4698 = vsel %vm4697, 1, 0
    %v4699 = vcvt.s32.f32 %v4698
    %vm4700 = vcmp.eq.s32.totalorder %v4692, %v1359
    %v4701 = vsel %vm4700, 1, 0
    %v4702 = vcvt.s32.f32 %v4701
    %v4703 = vpack.c.bf16 %v4702, %v4702
    %v4705 = vsel %vm815, %v4703, 0
    %4707 = vmatpush.bf16.msra.mxu0 0
    %4708 = vmatpush.bf16.msra.mxu0 0
    %4709 = vmatpush.bf16.msra.mxu0 0
    %4710 = vmatpush.bf16.msra.mxu0 0
    %4711 = vmatpush.bf16.msra.mxu0 %v1383
    %4712 = vmatpush.bf16.msra.mxu0 %v1382
    %4713 = vmatpush.bf16.msra.mxu0 %v1381
    %4714 = vmatpush.bf16.msra.mxu0 %v1380
    %4715 = vmatmul.bf16.gmra.mxu0 %v4705
    %v4716 = vpop.f32.mrf.mxu0
    %v4717 = vadd.f32 0.0, %v4716
    %v4718 = vpop.f32.mrf.mxu0
    %4719 = vdwg.mxu0
    %v4721 = vperm.slane %v4699, 0
    %v4722 = vperm.slane %v4699, 1
    %v4725 = vpack.c.bf16 %v4717, %v4717
    %v4727 = vsel %vm815, %v4725, 0
    %4729 = vmatpush.bf16.msra.mxu0 0
    %4730 = vmatpush.bf16.msra.mxu0 0
    %4731 = vmatpush.bf16.msra.mxu0 0
    %4732 = vmatpush.bf16.msra.mxu0 0
    %4733 = vmatpush.bf16.msra.mxu0 %v810
    %4734 = vmatpush.bf16.msra.mxu0 %v809
    %4735 = vmatpush.bf16.msra.mxu0 %v808
    %4736 = vmatpush.bf16.msra.mxu0 %v807
    %4737 = vmatmul.bf16.gmra.mxu0 %v4727
    %v4738 = vpop.f32.mrf.mxu0
    %v4739 = vadd.f32 %v789, %v4738
    %v4740 = vpop.f32.mrf.mxu0
    %4741 = vdwg.mxu0
    %4743 = vrot.lane.b32.xlu0 %v4739, 120
    %v4744 = vpop.permute.xlu0 %4743
    %4745 = vrot.lane.b32.xlu0 %v4739, 112
    %v4746 = vpop.permute.xlu0 %4745
    %4747 = vrot.lane.b32.xlu0 %v4739, 104
    %v4748 = vpop.permute.xlu0 %4747
    %4749 = vrot.lane.b32.xlu0 %v4744, 112
    %v4750 = vpop.permute.xlu0 %4749
    %4751 = vrot.lane.b32.xlu0 %v4746, 112
    %v4752 = vpop.permute.xlu0 %4751
    %4753 = vrot.lane.b32.xlu0 %v4748, 112
    %v4754 = vpop.permute.xlu0 %4753
    %v4759 = vrot.slane %v4752, 4
    %v4760 = vsel %vm850, %v4759, %v4746
    %v4762 = vunpack.c.l.s4 1983009808
    %v4763 = vunpack.c.0.s8 %v4762
    %v4764 = vperm.slane %v4760, %v4763
    %v4765 = vrot.slane %v4754, 4
    %v4766 = vsel %vm850, %v4765, %v4750
    %v4768 = vunpack.c.l.s4 1983009808
    %v4769 = vunpack.c.0.s8 %v4768
    %v4770 = vperm.slane %v4766, %v4769
    %v4771 = vrot.slane %v4770, 4
    %v4772 = vsel %vm850, %v4771, %v4764
    %v4774 = vunpack.c.l.s4 1934713408
    %v4775 = vunpack.c.0.s8 %v4774
    %v4776 = vperm.slane %v4772, %v4775
    %v4777 = vrot.slane %v4776, 4
    %v4778 = vsel %vm850, 0.0, %v4777
    %v4779 = vsel %vm870, %v4776, -inf
    %4780 = vmax.xlane.f32.xlu0 %v4779
    %v4781 = vpop.xlane.xlu0 %4780
    %v4782 = vsel %vm870, %v4778, -inf
    %4783 = vmax.xlane.f32.xlu0 %v4782
    %v4784 = vpop.xlane.xlu0 %4783
    %v4785 = vsub.f32 %v4776, %v4781
    %v4786 = vsub.f32 %v4778, %v4784
    %v4787 = vmul.f32 %v4785, 1.442695
    %v4788 = vpow.pop %v4787
    %v4789 = vmul.f32 %v4786, 1.442695
    %v4790 = vpow.pop %v4789
    %v4791 = vsel %vm870, %v4788, 0.0
    %4792 = vadd.xlane.f32.xlu0 %v4791
    %v4793 = vpop.xlane.xlu0 %4792
    %v4794 = vsel %vm870, %v4790, 0.0
    %4795 = vadd.xlane.f32.xlu0 %v4794
    %v4796 = vpop.xlane.xlu0 %4795
    %v4797 = vrcp.pop %v4793
    %v4798 = vrcp.pop %v4796
    %v4799 = vmul.f32 %v4788, %v4797
    %v4800 = vmul.f32 %v4790, %v4798
    %v4801 = vpack.c.bf16 %v4799, %v4799
    %v4802 = vpack.c.bf16 %v4800, %v4800
    %v4803 = vpack.c.bf16 %v4323, %v4323
    %v4804 = vpack.c.bf16 %v4324, %v4324
    %v4806 = vsel %vm897, %v4801, 0
    %v4809 = vsel %vm901, %v4803, 0
    %4811 = vmatpush.bf16.msra.mxu0 0
    %4812 = vmatpush.bf16.msra.mxu0 0
    %4813 = vmatpush.bf16.msra.mxu0 0
    %4814 = vmatpush.bf16.msra.mxu0 0
    %4815 = vmatpush.bf16.msra.mxu0 0
    %4816 = vmatpush.bf16.msra.mxu0 0
    %4817 = vmatpush.bf16.msra.mxu0 0
    %4818 = vmatpush.bf16.msra.mxu0 %v4809
    %4819 = vmatmul.bf16.gmra.mxu0 %v4806
    %v4820 = vpop.f32.mrf.mxu0
    %v4821 = vadd.f32 0.0, %v4820
    %v4822 = vpop.f32.mrf.mxu0
    %4823 = vdwg.mxu0
    %v4825 = vsel %vm897, %v4802, 0
    %v4828 = vsel %vm901, %v4804, 0
    %4830 = vmatpush.bf16.msra.mxu0 0
    %4831 = vmatpush.bf16.msra.mxu0 0
    %4832 = vmatpush.bf16.msra.mxu0 0
    %4833 = vmatpush.bf16.msra.mxu0 0
    %4834 = vmatpush.bf16.msra.mxu0 0
    %4835 = vmatpush.bf16.msra.mxu0 0
    %4836 = vmatpush.bf16.msra.mxu0 0
    %4837 = vmatpush.bf16.msra.mxu0 %v4828
    %4838 = vmatmul.bf16.gmra.mxu0 %v4825
    %v4839 = vpop.f32.mrf.mxu0
    %v4840 = vadd.f32 0.0, %v4839
    %v4841 = vpop.f32.mrf.mxu0
    %4842 = vdwg.mxu0
    %v4843 = vrot.slane %v4840, 4
    %v4844 = vsel %vm850, %v4843, %v4821
    %v4846 = vunpack.c.l.s4 1934713408
    %v4847 = vunpack.c.0.s8 %v4846
    %v4848 = vperm.slane %v4844, %v4847
    %v4849 = vrot.slane %v4848, 4
    %v4850 = vsel %vm850, 0.0, %v4849
    %4852 = vrot.lane.b32.xlu0 %v4850, 16
    %v4853 = vpop.permute.xlu0 %4852
    %v4855 = vsel %vm949, %v4848, %v4853
    %v4856 = vpack.c.bf16 %v4855, %v4855
    %v4858 = vsel %vm964, %v4856, 0
    %4860 = vmatpush.bf16.msra.mxu0 0
    %4861 = vmatpush.bf16.msra.mxu0 0
    %4862 = vmatpush.bf16.msra.mxu0 0
    %4863 = vmatpush.bf16.msra.mxu0 0
    %4864 = vmatpush.bf16.msra.mxu0 0
    %4865 = vmatpush.bf16.msra.mxu0 0
    %4866 = vmatpush.bf16.msra.mxu0 %v961
    %4867 = vmatpush.bf16.msra.mxu0 %v960
    %4868 = vmatmul.bf16.gmra.mxu0 %v4858
    %v4869 = vpop.f32.mrf.mxu0
    %v4870 = vadd.f32 0.0, %v4869
    %v4871 = vpop.f32.mrf.mxu0
    %4872 = vdwg.mxu0
    %v4873 = vxor.u32 %v4776, 2147483648
    %v4874 = vxor.u32 %v4778, 2147483648
    %v4875 = vmul.f32 %v4873, 1.442695
    %v4876 = vpow.pop %v4875
    %v4877 = vmul.f32 %v4874, 1.442695
    %v4878 = vpow.pop %v4877
    %v4879 = vadd.f32 %v4876, 1.0
    %v4880 = vadd.f32 %v4878, 1.0
    %v4881 = vrcp.pop %v4879
    %v4882 = vmul.f32 %v4879, %v4881
    %v4883 = vsub.f32 1.0, %v4882
    %v4884 = vmul.f32 %v4881, %v4883
    %v4885 = vadd.f32 %v4881, %v4884
    %vm4886 = vweird.f32 %v4879
    %vm4887 = vweird.f32 %v4881
    %vm4888 = vmor %vm4886, %vm4887
    %v4889 = vsel %vm4888, %v4881, %v4885
    %v4890 = vand.u32 2147483647, %v4879
    %vm4891 = vcmp.eq.f32.partialorder %v4890, 8.507059e+37
    %v4892 = vand.u32 %v4879, 2147483648
    %v4893 = vor.u32 1.1754944e-38, %v4892
    %v4894 = vsel %vm4891, %v4893, %v4889
    %v4895 = vmul.f32 1.0, %v4894
    %v4896 = vrcp.pop %v4880
    %v4897 = vmul.f32 %v4880, %v4896
    %v4898 = vsub.f32 1.0, %v4897
    %v4899 = vmul.f32 %v4896, %v4898
    %v4900 = vadd.f32 %v4896, %v4899
    %vm4901 = vweird.f32 %v4880
    %vm4902 = vweird.f32 %v4896
    %vm4903 = vmor %vm4901, %vm4902
    %v4904 = vsel %vm4903, %v4896, %v4900
    %v4905 = vand.u32 2147483647, %v4880
    %vm4906 = vcmp.eq.f32.partialorder %v4905, 8.507059e+37
    %v4907 = vand.u32 %v4880, 2147483648
    %v4908 = vor.u32 1.1754944e-38, %v4907
    %v4909 = vsel %vm4906, %v4908, %v4904
    %v4910 = vmul.f32 1.0, %v4909
    %v4913 = vrot.slane %v4895, 2
    %v4914 = vrot.slane %v4910, 2
    %v4917 = vsel %vm870, %v4913, 0.0
    %v4918 = vrot.slane %v4917, 4
    %v4919 = vadd.f32 %v4917, %v4918
    %v4920 = vrot.slane %v4919, 2
    %v4921 = vadd.f32 %v4919, %v4920
    %v4922 = vrot.slane %v4921, 1
    %v4923 = vadd.f32 %v4921, %v4922
    %v4924 = vsel %vm870, %v4914, 0.0
    %v4925 = vrot.slane %v4924, 4
    %v4926 = vadd.f32 %v4924, %v4925
    %v4927 = vrot.slane %v4926, 2
    %v4928 = vadd.f32 %v4926, %v4927
    %v4929 = vrot.slane %v4928, 1
    %v4930 = vadd.f32 %v4928, %v4929
    %v4931 = vmul.f32 %v4923, %v1045
    %v4932 = vmul.f32 %v4930, %v1045
    %v4933 = vmul.f32 %v4931, 0.999
    %v4934 = vmul.f32 %v4932, 0.999
    %v4935 = vlaneseq
    %v4936 = vshrl.u32 %v4935, 7
    %4938 = vset.pattern.permute.xlu0 %v4936
    %4939 = vperm.xlu0 %4938, %v4933
    %v4940 = vpop.permute.xlu0 %4939
    %v4941 = vlaneseq
    %v4942 = vshrl.u32 %v4941, 7
    %4944 = vset.pattern.permute.xlu0 %v4942
    %4945 = vperm.xlu0 %4944, %v4934
    %v4946 = vpop.permute.xlu0 %4945
    %v4947 = vsub.f32 1.0, %v4940
    %v4948 = vsub.f32 1.0, %v4946
    %v4949 = vmul.f32 %v4323, %v4947
    %v4950 = vmul.f32 %v4324, %v4948
    %v4951 = vrot.slane %v4739, 1
    %v4952 = vperm.slane %v4739, 0
    %v4953 = vperm.slane %v4951, 0
    %v4956 = vmul.f32 %v4940, %v4952
    %v4957 = vmul.f32 %v4946, %v4953
    %4960 = vrot.lane.b32.xlu0 %v4956, 80
    %v4961 = vpop.permute.xlu0 %4960
    %4962 = vrot.lane.b32.xlu0 %v4957, 80
    %v4963 = vpop.permute.xlu0 %4962
    %v4966 = vadd.f32 %v4949, %v4961
    %v4967 = vadd.f32 %v4950, %v4963
    %v4968 = vmul.f32 %v4721, %v4323
    %v4969 = vmul.f32 %v4722, %v4324
    %v4970 = vsub.f32 1.0, %v4721
    %v4971 = vsub.f32 1.0, %v4722
    %v4972 = vmul.f32 %v4970, %v4966
    %v4973 = vmul.f32 %v4971, %v4967
    %v4974 = vadd.f32 %v4968, %v4972
    %v4975 = vadd.f32 %v4969, %v4973
    %v4976 = vadd.f32 %v4739, %v4870
    %v4977 = vpack.c.bf16 %v4976, %v4976
    %v4979 = vsel %vm949, %v4977, 0
    %4981 = vmatpush.bf16.msra.mxu0 0
    %4982 = vmatpush.bf16.msra.mxu0 0
    %4983 = vmatpush.bf16.msra.mxu0 0
    %4984 = vmatpush.bf16.msra.mxu0 0
    %4985 = vmatpush.bf16.msra.mxu0 0
    %4986 = vmatpush.bf16.msra.mxu0 0
    %4987 = vmatpush.bf16.msra.mxu0 0
    %4988 = vmatpush.bf16.msra.mxu0 %v1096
    %4989 = vmatmul.bf16.gmra.mxu0 %v4979
    %v4990 = vpop.f32.mrf.mxu0
    %v4991 = vadd.f32 %v1090, %v4990
    %v4992 = vpop.f32.mrf.mxu0
    %4993 = vdwg.mxu0
    %v4994 = vmax.f32 %v4991, 0.0
    %v4995 = vpack.c.bf16 %v4994, %v4994
    %v4996 = vadd.f32 %v4717, %v4991
    %4998 = vrot.lane.b32.xlu0 %v4995, 64
    %v4999 = vpop.permute.xlu0 %4998
    %v5001 = vsel %vm815, %v4999, 0
    %5003 = vmatpush.bf16.msra.mxu0 0
    %5004 = vmatpush.bf16.msra.mxu0 0
    %5005 = vmatpush.bf16.msra.mxu0 0
    %5006 = vmatpush.bf16.msra.mxu0 0
    %5007 = vmatpush.bf16.msra.mxu0 %v1139
    %5008 = vmatpush.bf16.msra.mxu0 %v1138
    %5009 = vmatpush.bf16.msra.mxu0 %v1137
    %5010 = vmatpush.bf16.msra.mxu0 %v1136
    %5011 = vmatmul.bf16.gmra.mxu0 %v5001
    %v5012 = vpop.f32.mrf.mxu0
    %v5013 = vadd.f32 0.0, %v5012
    %v5014 = vpop.f32.mrf.mxu0
    %5015 = vdwg.mxu0
    %v5016 = vadd.f32 %v4996, %v5013
    %v5017 = vpack.c.bf16 %v5016, %v5016
    %v5019 = vsel %vm815, %v5017, 0
    %5021 = vmatpush.bf16.msra.mxu0 0
    %5022 = vmatpush.bf16.msra.mxu0 0
    %5023 = vmatpush.bf16.msra.mxu0 0
    %5024 = vmatpush.bf16.msra.mxu0 0
    %5025 = vmatpush.bf16.msra.mxu0 %v1184
    %5026 = vmatpush.bf16.msra.mxu0 %v1183
    %5027 = vmatpush.bf16.msra.mxu0 %v1182
    %5028 = vmatpush.bf16.msra.mxu0 %v1181
    %5029 = vmatmul.bf16.gmra.mxu0 %v5019
    %v5030 = vpop.f32.mrf.mxu0
    %v5031 = vadd.f32 %v1163, %v5030
    %v5032 = vpop.f32.mrf.mxu0
    %5033 = vdwg.mxu0
    %5035 = vrot.lane.b32.xlu0 %v5031, 120
    %v5036 = vpop.permute.xlu0 %5035
    %5037 = vrot.lane.b32.xlu0 %v5031, 112
    %v5038 = vpop.permute.xlu0 %5037
    %5039 = vrot.lane.b32.xlu0 %v5031, 104
    %v5040 = vpop.permute.xlu0 %5039
    %5041 = vrot.lane.b32.xlu0 %v5036, 112
    %v5042 = vpop.permute.xlu0 %5041
    %5043 = vrot.lane.b32.xlu0 %v5038, 112
    %v5044 = vpop.permute.xlu0 %5043
    %5045 = vrot.lane.b32.xlu0 %v5040, 112
    %v5046 = vpop.permute.xlu0 %5045
    %v5051 = vrot.slane %v5044, 4
    %v5052 = vsel %vm850, %v5051, %v5038
    %v5054 = vunpack.c.l.s4 1983009808
    %v5055 = vunpack.c.0.s8 %v5054
    %v5056 = vperm.slane %v5052, %v5055
    %v5057 = vrot.slane %v5046, 4
    %v5058 = vsel %vm850, %v5057, %v5042
    %v5060 = vunpack.c.l.s4 1983009808
    %v5061 = vunpack.c.0.s8 %v5060
    %v5062 = vperm.slane %v5058, %v5061
    %v5063 = vrot.slane %v5062, 4
    %v5064 = vsel %vm850, %v5063, %v5056
    %v5066 = vunpack.c.l.s4 1934713408
    %v5067 = vunpack.c.0.s8 %v5066
    %v5068 = vperm.slane %v5064, %v5067
    %v5069 = vrot.slane %v5068, 4
    %v5070 = vsel %vm850, 0.0, %v5069
    %v5071 = vsel %vm870, %v5068, -inf
    %5072 = vmax.xlane.f32.xlu0 %v5071
    %v5073 = vpop.xlane.xlu0 %5072
    %v5074 = vsel %vm870, %v5070, -inf
    %5075 = vmax.xlane.f32.xlu0 %v5074
    %v5076 = vpop.xlane.xlu0 %5075
    %v5077 = vsub.f32 %v5068, %v5073
    %v5078 = vsub.f32 %v5070, %v5076
    %v5079 = vmul.f32 %v5077, 1.442695
    %v5080 = vpow.pop %v5079
    %v5081 = vmul.f32 %v5078, 1.442695
    %v5082 = vpow.pop %v5081
    %v5083 = vsel %vm870, %v5080, 0.0
    %5084 = vadd.xlane.f32.xlu0 %v5083
    %v5085 = vpop.xlane.xlu0 %5084
    %v5086 = vsel %vm870, %v5082, 0.0
    %5087 = vadd.xlane.f32.xlu0 %v5086
    %v5088 = vpop.xlane.xlu0 %5087
    %v5089 = vrcp.pop %v5085
    %v5090 = vrcp.pop %v5088
    %v5091 = vmul.f32 %v5080, %v5089
    %v5092 = vmul.f32 %v5082, %v5090
    %v5093 = vpack.c.bf16 %v5091, %v5091
    %v5094 = vpack.c.bf16 %v5092, %v5092
    %v5095 = vpack.c.bf16 %v4613, %v4613
    %v5096 = vpack.c.bf16 %v4614, %v4614
    %v5098 = vsel %vm897, %v5093, 0
    %v5101 = vsel %vm901, %v5095, 0
    %5103 = vmatpush.bf16.msra.mxu0 0
    %5104 = vmatpush.bf16.msra.mxu0 0
    %5105 = vmatpush.bf16.msra.mxu0 0
    %5106 = vmatpush.bf16.msra.mxu0 0
    %5107 = vmatpush.bf16.msra.mxu0 0
    %5108 = vmatpush.bf16.msra.mxu0 0
    %5109 = vmatpush.bf16.msra.mxu0 0
    %5110 = vmatpush.bf16.msra.mxu0 %v5101
    %5111 = vmatmul.bf16.gmra.mxu0 %v5098
    %v5112 = vpop.f32.mrf.mxu0
    %v5113 = vadd.f32 0.0, %v5112
    %v5114 = vpop.f32.mrf.mxu0
    %5115 = vdwg.mxu0
    %v5117 = vsel %vm897, %v5094, 0
    %v5120 = vsel %vm901, %v5096, 0
    %5122 = vmatpush.bf16.msra.mxu0 0
    %5123 = vmatpush.bf16.msra.mxu0 0
    %5124 = vmatpush.bf16.msra.mxu0 0
    %5125 = vmatpush.bf16.msra.mxu0 0
    %5126 = vmatpush.bf16.msra.mxu0 0
    %5127 = vmatpush.bf16.msra.mxu0 0
    %5128 = vmatpush.bf16.msra.mxu0 0
    %5129 = vmatpush.bf16.msra.mxu0 %v5120
    %5130 = vmatmul.bf16.gmra.mxu0 %v5117
    %v5131 = vpop.f32.mrf.mxu0
    %v5132 = vadd.f32 0.0, %v5131
    %v5133 = vpop.f32.mrf.mxu0
    %5134 = vdwg.mxu0
    %v5135 = vrot.slane %v5132, 4
    %v5136 = vsel %vm850, %v5135, %v5113
    %v5138 = vunpack.c.l.s4 1934713408
    %v5139 = vunpack.c.0.s8 %v5138
    %v5140 = vperm.slane %v5136, %v5139
    %v5141 = vrot.slane %v5140, 4
    %v5142 = vsel %vm850, 0.0, %v5141
    %5144 = vrot.lane.b32.xlu0 %v5142, 16
    %v5145 = vpop.permute.xlu0 %5144
    %v5147 = vsel %vm949, %v5140, %v5145
    %v5148 = vpack.c.bf16 %v5147, %v5147
    %v5150 = vsel %vm964, %v5148, 0
    %5152 = vmatpush.bf16.msra.mxu0 0
    %5153 = vmatpush.bf16.msra.mxu0 0
    %5154 = vmatpush.bf16.msra.mxu0 0
    %5155 = vmatpush.bf16.msra.mxu0 0
    %5156 = vmatpush.bf16.msra.mxu0 0
    %5157 = vmatpush.bf16.msra.mxu0 0
    %5158 = vmatpush.bf16.msra.mxu0 %v1833
    %5159 = vmatpush.bf16.msra.mxu0 %v1832
    %5160 = vmatmul.bf16.gmra.mxu0 %v5150
    %v5161 = vpop.f32.mrf.mxu0
    %v5162 = vadd.f32 0.0, %v5161
    %v5163 = vpop.f32.mrf.mxu0
    %5164 = vdwg.mxu0
    %v5165 = vxor.u32 %v5068, 2147483648
    %v5166 = vxor.u32 %v5070, 2147483648
    %v5167 = vmul.f32 %v5165, 1.442695
    %v5168 = vpow.pop %v5167
    %v5169 = vmul.f32 %v5166, 1.442695
    %v5170 = vpow.pop %v5169
    %v5171 = vadd.f32 %v5168, 1.0
    %v5172 = vadd.f32 %v5170, 1.0
    %v5173 = vrcp.pop %v5171
    %v5174 = vmul.f32 %v5171, %v5173
    %v5175 = vsub.f32 1.0, %v5174
    %v5176 = vmul.f32 %v5173, %v5175
    %v5177 = vadd.f32 %v5173, %v5176
    %vm5178 = vweird.f32 %v5171
    %vm5179 = vweird.f32 %v5173
    %vm5180 = vmor %vm5178, %vm5179
    %v5181 = vsel %vm5180, %v5173, %v5177
    %v5182 = vand.u32 2147483647, %v5171
    %vm5183 = vcmp.eq.f32.partialorder %v5182, 8.507059e+37
    %v5184 = vand.u32 %v5171, 2147483648
    %v5185 = vor.u32 1.1754944e-38, %v5184
    %v5186 = vsel %vm5183, %v5185, %v5181
    %v5187 = vmul.f32 1.0, %v5186
    %v5188 = vrcp.pop %v5172
    %v5189 = vmul.f32 %v5172, %v5188
    %v5190 = vsub.f32 1.0, %v5189
    %v5191 = vmul.f32 %v5188, %v5190
    %v5192 = vadd.f32 %v5188, %v5191
    %vm5193 = vweird.f32 %v5172
    %vm5194 = vweird.f32 %v5188
    %vm5195 = vmor %vm5193, %vm5194
    %v5196 = vsel %vm5195, %v5188, %v5192
    %v5197 = vand.u32 2147483647, %v5172
    %vm5198 = vcmp.eq.f32.partialorder %v5197, 8.507059e+37
    %v5199 = vand.u32 %v5172, 2147483648
    %v5200 = vor.u32 1.1754944e-38, %v5199
    %v5201 = vsel %vm5198, %v5200, %v5196
    %v5202 = vmul.f32 1.0, %v5201
    %v5205 = vrot.slane %v5187, 2
    %v5206 = vrot.slane %v5202, 2
    %v5209 = vsel %vm870, %v5205, 0.0
    %v5210 = vrot.slane %v5209, 4
    %v5211 = vadd.f32 %v5209, %v5210
    %v5212 = vrot.slane %v5211, 2
    %v5213 = vadd.f32 %v5211, %v5212
    %v5214 = vrot.slane %v5213, 1
    %v5215 = vadd.f32 %v5213, %v5214
    %v5216 = vsel %vm870, %v5206, 0.0
    %v5217 = vrot.slane %v5216, 4
    %v5218 = vadd.f32 %v5216, %v5217
    %v5219 = vrot.slane %v5218, 2
    %v5220 = vadd.f32 %v5218, %v5219
    %v5221 = vrot.slane %v5220, 1
    %v5222 = vadd.f32 %v5220, %v5221
    %v5223 = vmul.f32 %v5215, %v1045
    %v5224 = vmul.f32 %v5222, %v1045
    %v5225 = vmul.f32 %v5223, 0.999
    %v5226 = vmul.f32 %v5224, 0.999
    %v5227 = vlaneseq
    %v5228 = vshrl.u32 %v5227, 7
    %5230 = vset.pattern.permute.xlu0 %v5228
    %5231 = vperm.xlu0 %5230, %v5225
    %v5232 = vpop.permute.xlu0 %5231
    %v5233 = vlaneseq
    %v5234 = vshrl.u32 %v5233, 7
    %5236 = vset.pattern.permute.xlu0 %v5234
    %5237 = vperm.xlu0 %5236, %v5226
    %v5238 = vpop.permute.xlu0 %5237
    %v5239 = vsub.f32 1.0, %v5232
    %v5240 = vsub.f32 1.0, %v5238
    %v5241 = vmul.f32 %v4613, %v5239
    %v5242 = vmul.f32 %v4614, %v5240
    %v5243 = vrot.slane %v5031, 1
    %v5244 = vperm.slane %v5031, 0
    %v5245 = vperm.slane %v5243, 0
    %v5248 = vmul.f32 %v5232, %v5244
    %v5249 = vmul.f32 %v5238, %v5245
    %5252 = vrot.lane.b32.xlu0 %v5248, 80
    %v5253 = vpop.permute.xlu0 %5252
    %5254 = vrot.lane.b32.xlu0 %v5249, 80
    %v5255 = vpop.permute.xlu0 %5254
    %v5258 = vadd.f32 %v5241, %v5253
    %v5259 = vadd.f32 %v5242, %v5255
    %v5260 = vmul.f32 %v4721, %v4613
    %v5261 = vmul.f32 %v4722, %v4614
    %v5262 = vmul.f32 %v4970, %v5258
    %v5263 = vmul.f32 %v4971, %v5259
    %v5264 = vadd.f32 %v5260, %v5262
    %v5265 = vadd.f32 %v5261, %v5263
    %v5266 = vadd.f32 %v5031, %v5162
    %v5267 = vpack.c.bf16 %v5266, %v5266
    %v5269 = vsel %vm949, %v5267, 0
    %5271 = vmatpush.bf16.msra.mxu0 0
    %5272 = vmatpush.bf16.msra.mxu0 0
    %5273 = vmatpush.bf16.msra.mxu0 0
    %5274 = vmatpush.bf16.msra.mxu0 0
    %5275 = vmatpush.bf16.msra.mxu0 0
    %5276 = vmatpush.bf16.msra.mxu0 0
    %5277 = vmatpush.bf16.msra.mxu0 0
    %5278 = vmatpush.bf16.msra.mxu0 %v1960
    %5279 = vmatmul.bf16.gmra.mxu0 %v5269
    %v5280 = vpop.f32.mrf.mxu0
    %v5281 = vadd.f32 %v1954, %v5280
    %v5282 = vpop.f32.mrf.mxu0
    %5283 = vdwg.mxu0
    %v5284 = vmax.f32 %v5281, 0.0
    %v5285 = vpack.c.bf16 %v5284, %v5284
    %v5286 = vadd.f32 %v5016, %v5281
    %5288 = vrot.lane.b32.xlu0 %v5285, 64
    %v5289 = vpop.permute.xlu0 %5288
    %v5291 = vsel %vm815, %v5289, 0
    %5293 = vmatpush.bf16.msra.mxu0 0
    %5294 = vmatpush.bf16.msra.mxu0 0
    %5295 = vmatpush.bf16.msra.mxu0 0
    %5296 = vmatpush.bf16.msra.mxu0 0
    %5297 = vmatpush.bf16.msra.mxu0 %v2003
    %5298 = vmatpush.bf16.msra.mxu0 %v2002
    %5299 = vmatpush.bf16.msra.mxu0 %v2001
    %5300 = vmatpush.bf16.msra.mxu0 %v2000
    %5301 = vmatmul.bf16.gmra.mxu0 %v5291
    %v5302 = vpop.f32.mrf.mxu0
    %v5303 = vadd.f32 0.0, %v5302
    %v5304 = vpop.f32.mrf.mxu0
    %5305 = vdwg.mxu0
    %v5306 = vadd.f32 %v5286, %v5303
    %v5307 = vpack.c.bf16 %v5306, %v5306
    %v5309 = vsel %vm815, %v5307, 0
    %5311 = vmatpush.bf16.msra.mxu0 0
    %5312 = vmatpush.bf16.msra.mxu0 0
    %5313 = vmatpush.bf16.msra.mxu0 0
    %5314 = vmatpush.bf16.msra.mxu0 0
    %5315 = vmatpush.bf16.msra.mxu0 %v2048
    %5316 = vmatpush.bf16.msra.mxu0 %v2047
    %5317 = vmatpush.bf16.msra.mxu0 %v2046
    %5318 = vmatpush.bf16.msra.mxu0 %v2045
    %5319 = vmatmul.bf16.gmra.mxu0 %v5309
    %v5320 = vpop.f32.mrf.mxu0
    %v5321 = vadd.f32 %v2027, %v5320
    %v5322 = vpop.f32.mrf.mxu0
    %5323 = vdwg.mxu0
    %v5324 = vsel %vm2069, %v5321, -inf
    %5325 = vmax.xlane.f32.xlu0 %v5324
    %v5326 = vpop.xlane.xlu0 %5325
    %vm5327 = vcmp.ge.f32.partialorder %v5321, %v5326
    %v5328 = vsel %vm5327, %v1359, 64
    %v5329 = vsel %vm2069, %v5328, 2147483647
    %v5330 = vand.u32 %v5329, 65535
    %v5331 = vshra.s32 %v5329, 16
    %v5332 = vcvt.s32.f32 %v5330
    %v5333 = vcvt.s32.f32 %v5331
    %5334 = vmin.xlane.f32.xlu0 %v5333
    %v5335 = vpop.xlane.xlu0 %5334
    %vm5336 = vcmp.eq.f32.partialorder %v5333, %v5335
    %v5337 = vsel %vm5336, %v5332, inf
    %5338 = vmin.xlane.f32.xlu0 %v5337
    %v5339 = vpop.xlane.xlu0 %5338
    %v5340 = vcvt.f32.s32 %v5339
    %v5341 = vcvt.f32.s32 %v5335
    %v5342 = vshll.u32 %v5341, 16
    %v5343 = vadd.s32 %v5342, %v5340
    %vm5344 = vcmask 7168
    %v5345 = vsel %vm5344, %v2089, %v2739
    %vm5346 = vcmask 15360
    %v5347 = vsel %vm5346, %v5345, %v3390
    %vm5348 = vcmask 23552
    %v5349 = vsel %vm5348, %v5347, %v4041
    %vm5350 = vcmask 31744
    %v5351 = vsel %vm5350, %v5349, %v4692
    %vm5352 = vcmask 39936
    %v5353 = vsel %vm5352, %v5351, %v5343
    %vm5354 = vcmask 41984
    %5355 = vst.msk [vmem:[#allocation11] sm:$0x3] %vm5354, %v5353
    %5356 = vst.msk [vmem:[#allocation12] sm:$0xff] %vm949, %v4974
    %5357 = vst.msk [vmem:[#allocation12 + $0x8] sm:$0xff] %vm949, %v4975
    %s5358 = scalar_lea.vmem [#allocation12], 16
    %5359 = vst.msk [vmem:[%s5358] sm:$0xff] %vm949, %v5264
    %5360 = vst.msk [vmem:[%s5358 + $0x8] sm:$0xff] %vm949, %v5265
    // Predicated region
    $region81: #{tpu_custom_call.1} parent=1 // pred_check
      _
    $region82: #{tpu_custom_call.1} parent=1 // pred_check_branch
      %5362 = sbr.rel (0) target = $region84
    $region83: #{tpu_custom_call.1} parent=1 // pred_region
      %5364 = vsyncadd [#allocation4], 0
      %s5366 = sshll.u32 [#allocation11], 4
      %s5367 = int_to_ptr.vmem [resolvable:$true] %s5366
      %s5368 = sshll.u32 %s13, 4
      %s5369 = int_to_ptr.hbm [resolvable:$true] %s5368
      %5371 = dma.vmem_to_hbm [thread:$0]  %s5367, 32, %s5369, [#allocation4]
    $region84: #{tpu_custom_call.1} parent=1 // pred_fallthru
      _
    // Predicated region
    $region85: #{tpu_custom_call.1} parent=1 // pred_check
      _
    $region86: #{tpu_custom_call.1} parent=1 // pred_check_branch
      %5373 = sbr.rel (0) target = $region88
    $region87: #{tpu_custom_call.1} parent=1 // pred_region
      %5375 = vsyncadd [#allocation13], 0
      %s5376 = sshll.u32 [#allocation12], 4
      %s5377 = int_to_ptr.vmem [resolvable:$true] %s5376
      %s5378 = sshll.u32 %s14, 4
      %s5379 = int_to_ptr.hbm [resolvable:$true] %s5378
      %5384 = dma.vmem_to_hbm [thread:$0]  %s5377, 512, %s5379, [#allocation13], 128, 128, 8
    $region88: #{tpu_custom_call.1} parent=1 // pred_fallthru
      _
    // Predicated region
    $region89: #{tpu_custom_call.1} parent=1 // pred_check
      _
    $region90: #{tpu_custom_call.1} parent=1 // pred_check_branch
      %5386 = sbr.rel (0) target = $region92
    $region91: #{tpu_custom_call.1} parent=1 // pred_region
      %5388 = dma.done [#allocation4], 32
    $region92: #{tpu_custom_call.1} parent=1 // pred_fallthru
      _
    // Predicated region
    $region93: #{tpu_custom_call.1} parent=1 // pred_check
      _
    $region94: #{tpu_custom_call.1} parent=1 // pred_check_branch
      %5390 = sbr.rel (0) target = $region96
    $region95: #{tpu_custom_call.1} parent=1 // pred_region
      %5392 = dma.done [#allocation13], 512
    $region96: #{tpu_custom_call.1} parent=1 // pred_fallthru
      _
    %5393 = vsyncpa [#allocation3], 1
    %5394 = vsyncpa [#allocation6], 1
    %5395 = vsyncpa [#allocation9], 1
    %5396 = vsyncpa [#allocation4], 1
    %5397 = vsyncpa [#allocation13], 1

</llo_original>
